<compile_context>
chip_gen: v7x
topology: tpu7x:2x2x1
jax: 0.10.0
libtpu: 0.0.40
codegen_flags: <defaults>
</compile_context>

<pallas_src>
import math
from functools import partial

import jax
import jax.numpy as jnp
from jax import lax
from jax.experimental import pallas as pl
from jax.experimental.pallas import tpu as pltpu

_HIGHEST = lax.Precision.HIGHEST
_VMEM_BUDGET = 24 * 1024 * 1024   # stay under the 32 MiB default scoped VMEM (v7x)


def _row_tile_bytes(tm, c, n_out, out_itemsize):
    """Rough per-step VMEM footprint (double-buffered blocks + f32 temporaries)."""
    return (2 * tm * c * 4                    # x block (f32, 2 buffers)
            + 2 * tm * n_out * out_itemsize   # output block (2 buffers)
            + 2 * c * n_out * 2               # bf16 weight (2 buffers)
            + 3 * tm * n_out * 4)             # y / centered / scale temporaries


def _pick_bh_tile(n_bh, w, c, n_out, out_itemsize):
    """(b,h) rows per grid step for the fused-shuffle path: large tiles to
    amortize ~0.35us/step, but >=2 grid blocks (v7x 2-TC balance) and within
    the VMEM budget."""
    th = min(max(1, 512 // w), n_bh)
    while th > 1 and (pl.cdiv(n_bh, th) < 2
                      or _row_tile_bytes(th * w, c, n_out, out_itemsize) > _VMEM_BUDGET):
        th = max(1, th // 2)
    return th


def _pick_row_tile(m, c, n_out, out_itemsize):
    """Row tile for the flat fallback path."""
    if m <= 8:
        return m
    for t in (512, 256, 128, 64, 32, 16, 8):
        if t <= m and (m >= 2 * t or t == 8) \
                and _row_tile_bytes(t, c, n_out, out_itemsize) <= _VMEM_BUDGET:
            return t
    return 8


def _normalized_tile(x_ref, w_ref, r_ref, b_ref, gam_ref, bet_ref, *, eps, cp):
    """Fused expand-matmul + grouped LayerNorm on a lane-dense (tm, n_out) tile."""
    # Expand matmul: bf16 operands, f32 accumulation.  The in-kernel cast of x
    # (VPU) is hidden under the MXU and avoids a wrapper-side HBM round trip.
    y = jnp.dot(x_ref[...].astype(jnp.bfloat16), w_ref[...],
                preferred_element_type=jnp.float32)                    # (tm, n_out)
    r = r_ref[...]            # (n_out, G) 0/1 group-reduce matrix (f32)
    bm = b_ref[...]           # (G, n_out) 0/1 group-broadcast matrix (f32)
    inv_cp = jnp.float32(1.0 / cp)

    # Narrow LN statistics: per-group sums via tiny matmuls (G = dim_scale**2).
    # Indicator matrices + HIGHEST precision keep the stats exact f32; the
    # 1/cp scale is a separate f32 multiply (exact for any cp).
    mu_g = jnp.dot(y, r, precision=_HIGHEST,
                   preferred_element_type=jnp.float32) * inv_cp        # (tm, G)
    mu = jnp.dot(mu_g, bm, precision=_HIGHEST,
                 preferred_element_type=jnp.float32)                   # (tm, n_out)
    yc = y - mu
    var_g = jnp.dot(yc * yc, r, precision=_HIGHEST,
                    preferred_element_type=jnp.float32) * inv_cp       # (tm, G)
    inv_g = lax.rsqrt(var_g + eps)        # EUP on the narrow stats only
    inv = jnp.dot(inv_g, bm, precision=_HIGHEST,
                  preferred_element_type=jnp.float32)                  # (tm, n_out)
    return yc * inv * gam_ref[...] + bet_ref[...]


def _expand_ln_shuffle_kernel(x_ref, w_ref, r_ref, b_ref, gam_ref, bet_ref,
                              o_ref, *, eps, cp, w_pix, p):
    # x block: (th*W, C)  ->  out block: (th, p1, W, p2*cp)
    out = _normalized_tile(x_ref, w_ref, r_ref, b_ref, gam_ref, bet_ref,
                           eps=eps, cp=cp).astype(o_ref.dtype)
    th = o_ref.shape[0]
    pw = p * cp                                  # lanes per p1 slice (== C)
    for p1 in range(p):                          # unrolled, p == dim_scale (small)
        o_ref[:, p1, :, :] = out[:, p1 * pw:(p1 + 1) * pw].reshape(th, w_pix, pw)


def _expand_ln_flat_kernel(x_ref, w_ref, r_ref, b_ref, gam_ref, bet_ref,
                           o_ref, *, eps, cp):
    out = _normalized_tile(x_ref, w_ref, r_ref, b_ref, gam_ref, bet_ref,
                           eps=eps, cp=cp)
    o_ref[...] = out.astype(o_ref.dtype)


def patch_expand2d(x, w_expand, gamma, beta, *, dim_scale=2, eps=1e-5,
                   out_dtype=None):
    """PatchExpand2D forward.
    x: (B, H, W, C); w_expand: (C, dim_scale*C)  (= torch Linear weight.T);
    gamma, beta: (C // dim_scale,).
    Returns (B, dim_scale*H, dim_scale*W, C // dim_scale)."""
    bsz, hh, ww, c = x.shape
    assert c % dim_scale == 0
    cp = c // dim_scale                    # output channels per pixel
    n_out = dim_scale * c                  # expand width = dim_scale**2 * cp
    n_groups = dim_scale * dim_scale
    out_dtype = x.dtype if out_dtype is None else jnp.dtype(out_dtype)
    out_itemsize = jnp.dtype(out_dtype).itemsize

    m = bsz * hh * ww
    x_rows = x.reshape(m, c)               # native dtype: single HBM read of x

    # Tiny 0/1 reduce / broadcast matrices for the LN group statistics.
    gidx = jnp.arange(n_out, dtype=jnp.int32) // cp
    grp = jnp.arange(n_groups, dtype=jnp.int32)
    r_mat = (gidx[:, None] == grp[None, :]).astype(jnp.float32)       # (n_out, G)
    b_mat = (grp[:, None] == gidx[None, :]).astype(jnp.float32)       # (G, n_out)

    gam_t = jnp.tile(gamma.astype(jnp.float32), n_groups).reshape(1, n_out)
    bet_t = jnp.tile(beta.astype(jnp.float32), n_groups).reshape(1, n_out)

    # Weight is small and reused every step: one-time bf16 cast in the wrapper.
    w_bf = w_expand.astype(jnp.bfloat16)

    flops = 2 * m * c * n_out + 8 * m * n_out * n_groups
    bytes_accessed = int(m * c * x.dtype.itemsize + c * n_out * 2
                         + m * n_out * out_itemsize)
    cost = pl.CostEstimate(flops=int(flops), transcendentals=int(m * n_groups),
                           bytes_accessed=bytes_accessed)

    common_in_specs = [
        pl.BlockSpec((c, n_out), lambda i: (0, 0)),
        pl.BlockSpec((n_out, n_groups), lambda i: (0, 0)),
        pl.BlockSpec((n_groups, n_out), lambda i: (0, 0)),
        pl.BlockSpec((1, n_out), lambda i: (0, 0)),
        pl.BlockSpec((1, n_out), lambda i: (0, 0)),
    ]
    cparams = pltpu.CompilerParams(dimension_semantics=("parallel",))

    if ww % 8 == 0:
        # Fused pixel-shuffle path: each grid step handles `th` full (b,h) rows
        # and writes the p1 halves of its tile to a (B*H, p1, W, p2*cp)
        # lane-dense output, so the final rearrange is a free reshape.
        n_bh = bsz * hh
        th = _pick_bh_tile(n_bh, ww, c, n_out, out_itemsize)
        y = pl.pallas_call(
            partial(_expand_ln_shuffle_kernel, eps=eps, cp=cp, w_pix=ww,
                    p=dim_scale),
            out_shape=jax.ShapeDtypeStruct(
                (n_bh, dim_scale, ww, dim_scale * cp), out_dtype),
            grid=(pl.cdiv(n_bh, th),),
            in_specs=[pl.BlockSpec((th * ww, c), lambda i: (i, 0))]
                     + common_in_specs,
            out_specs=pl.BlockSpec((th, dim_scale, ww, dim_scale * cp),
                                   lambda i: (i, 0, 0, 0)),
            compiler_params=cparams,
            cost_estimate=cost,
        )(x_rows, w_bf, r_mat, b_mat, gam_t, bet_t)
        # memory order is already (b, h, p1, w, p2, c): pure reshape, no copy.
        return y.reshape(bsz, hh * dim_scale, ww * dim_scale, cp)

    # Fallback (W not a multiple of 8): flat (m, n_out) output + XLA-side
    # pixel-shuffle transpose in the wrapper.
    tm = _pick_row_tile(m, c, n_out, out_itemsize)
    y = pl.pallas_call(
        partial(_expand_ln_flat_kernel, eps=eps, cp=cp),
        out_shape=jax.ShapeDtypeStruct((m, n_out), out_dtype),
        grid=(pl.cdiv(m, tm),),
        in_specs=[pl.BlockSpec((tm, c), lambda i: (i, 0))] + common_in_specs,
        out_specs=pl.BlockSpec((tm, n_out), lambda i: (i, 0)),
        compiler_params=cparams,
        cost_estimate=cost,
    )(x_rows, w_bf, r_mat, b_mat, gam_t, bet_t)
    y = y.reshape(bsz, hh, ww, dim_scale, dim_scale, cp)
    y = jnp.transpose(y, (0, 1, 3, 2, 4, 5))
    return y.reshape(bsz, hh * dim_scale, ww * dim_scale, cp)


def _reference(x, w_expand, gamma, beta, dim_scale=2, eps=1e-5):
    """Pure-JAX f32 reference of PatchExpand2D.forward (for validation)."""
    bsz, hh, ww, c = x.shape
    cp = c // dim_scale
    y = jnp.einsum("bhwc,cd->bhwd", x, w_expand)
    y = y.reshape(bsz, hh, ww, dim_scale, dim_scale, cp)
    y = jnp.transpose(y, (0, 1, 3, 2, 4, 5)).reshape(
        bsz, hh * dim_scale, ww * dim_scale, cp)
    mu = y.mean(-1, keepdims=True)
    var = ((y - mu) ** 2).mean(-1, keepdims=True)
    return (y - mu) / jnp.sqrt(var + eps) * gamma + beta


if __name__ == "__main__":
    key = jax.random.PRNGKey(0)
    dim = 32
    c = 2 * dim                 # module's self.dim = dim * 2 (input channel count)
    dim_scale = 2
    bsz, hh, ww = 2, 16, 16

    k1, k2, k3, k4 = jax.random.split(key, 4)
    x = jax.random.normal(k1, (bsz, hh, ww, c), jnp.float32)
    w_expand = jax.random.normal(k2, (c, dim_scale * c), jnp.float32) / math.sqrt(c)
    gamma = 1.0 + 0.1 * jax.random.normal(k3, (c // dim_scale,), jnp.float32)
    beta = 0.1 * jax.random.normal(k4, (c // dim_scale,), jnp.float32)

    fwd = jax.jit(partial(patch_expand2d, dim_scale=dim_scale))
    out = fwd(x, w_expand, gamma, beta)
    jax.block_until_ready(out)

    assert out.shape == (bsz, dim_scale * hh, dim_scale * ww, c // dim_scale)
    assert bool(jnp.isfinite(out).all())

    ref = _reference(x, w_expand, gamma, beta, dim_scale)
    err = float(jnp.max(jnp.abs(out - ref)))
    assert err < 5e-2, f"max abs err {err}"
    print("KERNEL_OK")
</pallas_src>

<mosaic_0001>
module attributes {stable_mosaic.version = 11 : i64} {
  func.func @_expand_ln_shuffle_kernel(%arg0: i32, %arg1: memref<256x64xf32, #tpu.memory_space<vmem>>, %arg2: memref<64x128xbf16, #tpu.memory_space<vmem>>, %arg3: memref<128x4xf32, #tpu.memory_space<vmem>>, %arg4: memref<4x128xf32, #tpu.memory_space<vmem>>, %arg5: memref<1x128xf32, #tpu.memory_space<vmem>>, %arg6: memref<1x128xf32, #tpu.memory_space<vmem>>, %arg7: memref<16x2x16x64xf32, #tpu.memory_space<vmem>>) attributes {dimension_semantics = [#tpu.dimension_semantics<parallel>], iteration_bounds = array<i64: 2>, scalar_prefetch = 0 : i64, scratch_operands = 0 : i64, tpu.core_type = #tpu.core_type<tc>, window_params = [{transform_indices = @transform_0, window_bounds = array<i64: 256, 64>}, {pipeline_mode = #tpu.pipeline_mode<synchronous>, transform_indices = @transform_1, window_bounds = array<i64: 64, 128>}, {pipeline_mode = #tpu.pipeline_mode<synchronous>, transform_indices = @transform_2, window_bounds = array<i64: 128, 4>}, {pipeline_mode = #tpu.pipeline_mode<synchronous>, transform_indices = @transform_3, window_bounds = array<i64: 4, 128>}, {pipeline_mode = #tpu.pipeline_mode<synchronous>, transform_indices = @transform_4, window_bounds = array<i64: 1, 128>}, {pipeline_mode = #tpu.pipeline_mode<synchronous>, transform_indices = @transform_5, window_bounds = array<i64: 1, 128>}, {transform_indices = @transform_6, window_bounds = array<i64: 16, 2, 16, 64>}]} {
    %c0 = arith.constant 0 : index
    %c0_0 = arith.constant 0 : index
    %0 = vector.load %arg1[%c0, %c0_0] : memref<256x64xf32, #tpu.memory_space<vmem>>, vector<256x64xf32>
    %1 = arith.truncf %0 : vector<256x64xf32> to vector<256x64xbf16>
    %c0_1 = arith.constant 0 : index
    %c0_2 = arith.constant 0 : index
    %2 = vector.load %arg2[%c0_1, %c0_2] : memref<64x128xbf16, #tpu.memory_space<vmem>>, vector<64x128xbf16>
    %cst = arith.constant dense<0.000000e+00> : vector<256x128xf32>
    %3 = tpu.matmul %1, %2, %cst {dimension_numbers = #tpu.dot_dimension_numbers<[1], [0], [0], [1], [0, 0, 1, 1], [], []>} : vector<256x64xbf16>, vector<64x128xbf16>, vector<256x128xf32> -> vector<256x128xf32>
    %c0_3 = arith.constant 0 : index
    %c0_4 = arith.constant 0 : index
    %4 = vector.load %arg3[%c0_3, %c0_4] : memref<128x4xf32, #tpu.memory_space<vmem>>, vector<128x4xf32>
    %c0_5 = arith.constant 0 : index
    %c0_6 = arith.constant 0 : index
    %5 = vector.load %arg4[%c0_5, %c0_6] : memref<4x128xf32, #tpu.memory_space<vmem>>, vector<4x128xf32>
    %cst_7 = arith.constant dense<0.000000e+00> : vector<256x4xf32>
    %6 = tpu.matmul %3, %4, %cst_7 {dimension_numbers = #tpu.dot_dimension_numbers<[1], [0], [0], [1], [0, 0, 1, 1], [], []>, precision = #tpu.contract_precision<fp32>} : vector<256x128xf32>, vector<128x4xf32>, vector<256x4xf32> -> vector<256x4xf32>
    %cst_8 = arith.constant 3.125000e-02 : f32
    %7 = vector.broadcast %cst_8 : f32 to vector<256x4xf32>
    %8 = arith.mulf %6, %7 : vector<256x4xf32>
    %cst_9 = arith.constant dense<0.000000e+00> : vector<256x128xf32>
    %9 = tpu.matmul %8, %5, %cst_9 {dimension_numbers = #tpu.dot_dimension_numbers<[1], [0], [0], [1], [0, 0, 1, 1], [], []>, precision = #tpu.contract_precision<fp32>} : vector<256x4xf32>, vector<4x128xf32>, vector<256x128xf32> -> vector<256x128xf32>
    %10 = arith.subf %3, %9 : vector<256x128xf32>
    %11 = arith.mulf %10, %10 : vector<256x128xf32>
    %cst_10 = arith.constant dense<0.000000e+00> : vector<256x4xf32>
    %12 = tpu.matmul %11, %4, %cst_10 {dimension_numbers = #tpu.dot_dimension_numbers<[1], [0], [0], [1], [0, 0, 1, 1], [], []>, precision = #tpu.contract_precision<fp32>} : vector<256x128xf32>, vector<128x4xf32>, vector<256x4xf32> -> vector<256x4xf32>
    %cst_11 = arith.constant 3.125000e-02 : f32
    %13 = vector.broadcast %cst_11 : f32 to vector<256x4xf32>
    %14 = arith.mulf %12, %13 : vector<256x4xf32>
    %cst_12 = arith.constant 9.99999974E-6 : f32
    %15 = vector.broadcast %cst_12 : f32 to vector<256x4xf32>
    %16 = arith.addf %14, %15 : vector<256x4xf32>
    %17 = math.rsqrt %16 : vector<256x4xf32>
    %cst_13 = arith.constant dense<0.000000e+00> : vector<256x128xf32>
    %18 = tpu.matmul %17, %5, %cst_13 {dimension_numbers = #tpu.dot_dimension_numbers<[1], [0], [0], [1], [0, 0, 1, 1], [], []>, precision = #tpu.contract_precision<fp32>} : vector<256x4xf32>, vector<4x128xf32>, vector<256x128xf32> -> vector<256x128xf32>
    %19 = arith.mulf %10, %18 : vector<256x128xf32>
    %c0_14 = arith.constant 0 : index
    %c0_15 = arith.constant 0 : index
    %20 = vector.load %arg5[%c0_14, %c0_15] : memref<1x128xf32, #tpu.memory_space<vmem>>, vector<1x128xf32>
    %21 = vector.broadcast %20 : vector<1x128xf32> to vector<256x128xf32>
    %22 = arith.mulf %19, %21 : vector<256x128xf32>
    %c0_16 = arith.constant 0 : index
    %c0_17 = arith.constant 0 : index
    %23 = vector.load %arg6[%c0_16, %c0_17] : memref<1x128xf32, #tpu.memory_space<vmem>>, vector<1x128xf32>
    %24 = vector.broadcast %23 : vector<1x128xf32> to vector<256x128xf32>
    %25 = arith.addf %22, %24 : vector<256x128xf32>
    %26 = vector.extract_strided_slice %25 {offsets = [0, 0], sizes = [256, 64], strides = [1, 1]} : vector<256x128xf32> to vector<256x64xf32>
    %27 = vector.shape_cast %26 : vector<256x64xf32> to vector<16x16x64xf32>
    %c0_18 = arith.constant 0 : index
    %c0_19 = arith.constant 0 : index
    %c0_20 = arith.constant 0 : index
    %c0_21 = arith.constant 0 : index
    %28 = vector.load %arg7[%c0_18, %c0_19, %c0_20, %c0_21] : memref<16x2x16x64xf32, #tpu.memory_space<vmem>>, vector<16x1x16x64xf32>
    %29 = vector.shape_cast %28 : vector<16x1x16x64xf32> to vector<16x16x64xf32>
    %30 = vector.shape_cast %27 : vector<16x16x64xf32> to vector<16x1x16x64xf32>
    tpu.vector_store %arg7[%c0_18, %c0_19, %c0_20, %c0_21], %30 {strides = array<i32>} : memref<16x2x16x64xf32, #tpu.memory_space<vmem>>, vector<16x1x16x64xf32>,
    %31 = vector.extract_strided_slice %25 {offsets = [0, 64], sizes = [256, 64], strides = [1, 1]} : vector<256x128xf32> to vector<256x64xf32>
    %32 = vector.shape_cast %31 : vector<256x64xf32> to vector<16x16x64xf32>
    %c0_22 = arith.constant 0 : index
    %c1 = arith.constant 1 : index
    %c0_23 = arith.constant 0 : index
    %c0_24 = arith.constant 0 : index
    %33 = vector.load %arg7[%c0_22, %c1, %c0_23, %c0_24] : memref<16x2x16x64xf32, #tpu.memory_space<vmem>>, vector<16x1x16x64xf32>
    %34 = vector.shape_cast %33 : vector<16x1x16x64xf32> to vector<16x16x64xf32>
    %35 = vector.shape_cast %32 : vector<16x16x64xf32> to vector<16x1x16x64xf32>
    tpu.vector_store %arg7[%c0_22, %c1, %c0_23, %c0_24], %35 {strides = array<i32>} : memref<16x2x16x64xf32, #tpu.memory_space<vmem>>, vector<16x1x16x64xf32>,
    return
  }
  func.func @transform_0(%arg0: i32) -> (i32, i32) {
    %c0_i32 = arith.constant 0 : i32
    %c0_i32_0 = arith.constant 0 : i32
    return %arg0, %c0_i32 : i32, i32
  }
  func.func @transform_1(%arg0: i32) -> (i32, i32) {
    %c0_i32 = arith.constant 0 : i32
    %c0_i32_0 = arith.constant 0 : i32
    %c0_i32_1 = arith.constant 0 : i32
    return %c0_i32, %c0_i32_0 : i32, i32
  }
  func.func @transform_2(%arg0: i32) -> (i32, i32) {
    %c0_i32 = arith.constant 0 : i32
    %c0_i32_0 = arith.constant 0 : i32
    %c0_i32_1 = arith.constant 0 : i32
    return %c0_i32, %c0_i32_0 : i32, i32
  }
  func.func @transform_3(%arg0: i32) -> (i32, i32) {
    %c0_i32 = arith.constant 0 : i32
    %c0_i32_0 = arith.constant 0 : i32
    %c0_i32_1 = arith.constant 0 : i32
    return %c0_i32, %c0_i32_0 : i32, i32
  }
  func.func @transform_4(%arg0: i32) -> (i32, i32) {
    %c0_i32 = arith.constant 0 : i32
    %c0_i32_0 = arith.constant 0 : i32
    %c0_i32_1 = arith.constant 0 : i32
    return %c0_i32, %c0_i32_0 : i32, i32
  }
  func.func @transform_5(%arg0: i32) -> (i32, i32) {
    %c0_i32 = arith.constant 0 : i32
    %c0_i32_0 = arith.constant 0 : i32
    %c0_i32_1 = arith.constant 0 : i32
    return %c0_i32, %c0_i32_0 : i32, i32
  }
  func.func @transform_6(%arg0: i32) -> (i32, i32, i32, i32) {
    %c0_i32 = arith.constant 0 : i32
    %c0_i32_0 = arith.constant 0 : i32
    %c0_i32_1 = arith.constant 0 : i32
    %c0_i32_2 = arith.constant 0 : i32
    return %arg0, %c0_i32, %c0_i32_0, %c0_i32_1 : i32, i32, i32, i32
  }
}

</mosaic_0001>

<llo_original>
// kernel: tile.13
$region0: #{tile.13}
  #allocation0 [shape = 's32[1]{0}', space=sflag, size = 0x4, scoped, tag = 'scoped memory for tile.13']
  %s0 = inlined_call_operand.vmem [shape: f32[32], index: 0, kind: input, shape index: {}]
  %s1 = inlined_call_operand.vmem [shape: f32[4,32], index: 1, kind: output, shape index: {}]
  // Predicated region
  $region2: #{tile.13} parent=0 // pred_check
    _
  $region3: #{tile.13} parent=0 // pred_check_branch
    %3 = sbr.rel (0) target = $region5
  $region4: #{tile.13} parent=0 // pred_region
    _
  $region5: #{tile.13} parent=0 // pred_fallthru
    _
  %v4 = vld [vmem:[%s0] ss:$0 sm:$0xff]
  %5 = vst [vmem:[%s1] sm:$0xf] %v4

// kernel: tile.14
$region0: #{tile.14}
  %s0 = inlined_call_operand.vmem [shape: f32[4,32], index: 0, kind: input, shape index: {}]
  %s1 = inlined_call_operand.vmem [shape: f32[1,128], index: 1, kind: output, shape index: {}]
  $region1: #{tile.14} parent=0
    #allocation0 [shape = 'u8[4096]{0}', space=vmem, size = 0x1000, scoped, tag = 'scoped mem for output reshape']
    #allocation1 [shape = 'u8[4096]{0}', space=vmem, size = 0x1000, scoped, tag = 'scoped mem for input reshape']
    %s3 = sshllo.u32 0, 4
    %v4 = vld [vmem:[%s0] sm:%s3]
    %5 = vst [vmem:[#allocation1] sm:%s3] %v4
    %v6 = vld [vmem:[#allocation1] sm:$0x1]
    %vm7 = vcmask 261120
    %8 = vst.msk [vmem:[#allocation0] sm:$0x1] %vm7, %v6
    %s9 = scalar_lea.vmem [#allocation1], 3
    %v10 = vld [vmem:[%s9] sm:$0x1]
    %11 = vrot.lane.b32.xlu0 %v10, 96
    %v12 = vpop.permute.xlu0 %11
    %vm13 = vcmask 1048320
    %14 = vst.msk [vmem:[#allocation0] sm:$0x1] %vm13, %v12
    %s15 = scalar_lea.vmem [#allocation1], 2
    %v16 = vld [vmem:[%s15] sm:$0x1]
    %17 = vrot.lane.b32.xlu0 %v16, 64
    %v18 = vpop.permute.xlu0 %17
    %vm19 = vcmask 785920
    %20 = vst.msk [vmem:[#allocation0] sm:$0x1] %vm19, %v18
    %s21 = scalar_lea.vmem [#allocation1], 1
    %v22 = vld [vmem:[%s21] sm:$0x1]
    %23 = vrot.lane.b32.xlu0 %v22, 32
    %v24 = vpop.permute.xlu0 %23
    %vm25 = vcmask 523520
    %26 = vst.msk [vmem:[#allocation0] sm:$0x1] %vm25, %v24
    %s28 = sshllo.u32 0, 1
    %v30 = vld [vmem:[#allocation0] sm:%s28]
    %s31 = sshllo.u32 0, 1
    %32 = vst [vmem:[%s1] sm:%s31] %v30

// kernel: patch_expand2d.1
$region0: #{patch_expand2d.1}
  #allocation0 [shape = 'u32[]', space=smem, size = 0x4, offset = 0x4, fixed_abs, tag = 'smem constant byte address 0x4 - core index']
  #allocation1 [shape = 'u32[144,128]{1,0:T(1,128)}', space=vmem, size = 0x12000, scoped, tag = 'internal scratch']
  %s0 = inlined_call_operand.hbm [shape: f32[512,64], index: 0, kind: input, shape index: {}]
  %s1 = inlined_call_operand.vmem [shape: bf16[64,128], index: 1, kind: input, shape index: {}]
  %s2 = inlined_call_operand.vmem [shape: f32[128,4], index: 2, kind: input, shape index: {}]
  %s3 = inlined_call_operand.vmem [shape: f32[4,128], index: 3, kind: input, shape index: {}]
  %s4 = inlined_call_operand.vmem [shape: f32[1,128], index: 4, kind: input, shape index: {}]
  %s5 = inlined_call_operand.vmem [shape: f32[1,128], index: 5, kind: input, shape index: {}]
  %s6 = inlined_call_operand.vmem [shape: f32[32,2,16,64], index: 6, kind: output, shape index: {}]
  %s7 = sld [smem:[#allocation0]]
  $region61: #{patch_expand2d.1} parent=0
    _
  %s9 = ssub.s32 1, %s7
  %s10 = scalar_select 0, %s9, %s7
  $region1: #{patch_expand2d.1} parent=0
    #allocation2 [shape = 'u8[262144]{0}', space=vmem, size = 0x40000, scoped, tag = 'input window, operand 0']
    #allocation3 [shape = 's32[2]{0}', space=sflag, size = 0x8, scoped, tag = 'scoped memory for patch_expand2d.1']
    %11 = vsyncpa [#allocation3], 0
    %s12 = scalar_lea.sflag [#allocation3], 1
    %13 = vsyncpa %s12, 0
    loop: start=0, step=1, limit=4
    $region2: #{patch_expand2d.1} parent=1 // loop_pre_header
      _
    $region3: #{patch_expand2d.1} parent=1 // loop_header
      %s15 = sphi 0, %s19
      %p16 = scmp.ge.s32.totalorder %s15, 4
      %s25 = sphi 0, %s27
      %s28 = sphi 0, %s25
      %s29 = sphi 0, %s28
      %s45 = sphi 0, %s29
      %s49 = sphi 0, %s49
      %s51 = sphi 0, %s49
      %s52 = sphi 0, %s51
      %s66 = sphi 0, %s52
      %s70 = sphi 0, %s70
      %s72 = sphi 0, %s70
      %s73 = sphi 0, %s72
      %s87 = sphi 0, %s73
      %s91 = sphi 0, %s91
      %s93 = sphi 0, %s91
      %s94 = sphi 0, %s93
      %s108 = sphi 0, %s94
      %s112 = sphi 0, %s112
      %s114 = sphi 0, %s112
      %s115 = sphi 0, %s114
      %s129 = sphi 0, %s115
      %s133 = sphi 0, %s133
      %s135 = sphi 0, %s133
      %s136 = sphi 0, %s135
      %s150 = sphi 0, %s136
      %s156 = sphi 0, %s158
      %s159 = sphi 0, %s156
      %s160 = sphi 0, %s159
      %s176 = sphi 0, %s160
    $region4: #{patch_expand2d.1} parent=1 // loop_header_branch
      %18 = sbr.rel (%p16) target = $region8
    $region5: #{patch_expand2d.1} parent=1 // loop_body
      %s20 = ssub.s32 %s15, 1
      %s21 = ssub.s32 %s15, 2
      %s22 = sadd.s32 %s15, 1
      %s23 = ssub.s32 %s15, %s22
      %p24 = scmp.eq.s32.totalorder %s23, 0
      %s26 = sadd.s32 %s25, 1
      %s27 = scalar_select %p24, %s25, %s26
      %p30 = pneg %p24
      %p31 = scmp.eq.s32.totalorder %s15, 1
      %p32 = por %p30, %p31
      %p33 = scmp.ne.s32.totalorder %s25, %s28
      %p34 = scmp.eq.s32.totalorder %s15, 0
      %p35 = por %p33, %p34
      %p36 = scmp.ne.s32.totalorder %s25, %s28
      %p37 = scmp.eq.s32.totalorder %s20, 1
      %p38 = por %p36, %p37
      %p39 = scmp.ne.s32.totalorder %s28, %s29
      %p40 = scmp.eq.s32.totalorder %s20, 0
      %p41 = por %p39, %p40
      %p42 = scmp.ne.s32.totalorder %s28, %s29
      %p43 = scmp.eq.s32.totalorder %s21, 1
      %p44 = por %p42, %p43
      %p46 = scmp.ne.s32.totalorder %s29, %s45
      %p47 = scmp.eq.s32.totalorder %s21, 0
      %p48 = por %p46, %p47
      %s50 = sadd.s32 %s49, 1
      %p53 = scmp.eq.s32.totalorder %s15, 1
      %p54 = scmp.ne.s32.totalorder %s49, %s51
      %p55 = scmp.eq.s32.totalorder %s15, 0
      %p56 = por %p54, %p55
      %p57 = scmp.ne.s32.totalorder %s49, %s51
      %p58 = scmp.eq.s32.totalorder %s20, 1
      %p59 = por %p57, %p58
      %p60 = scmp.ne.s32.totalorder %s51, %s52
      %p61 = scmp.eq.s32.totalorder %s20, 0
      %p62 = por %p60, %p61
      %p63 = scmp.ne.s32.totalorder %s51, %s52
      %p64 = scmp.eq.s32.totalorder %s21, 1
      %p65 = por %p63, %p64
      %p67 = scmp.ne.s32.totalorder %s52, %s66
      %p68 = scmp.eq.s32.totalorder %s21, 0
      %p69 = por %p67, %p68
      %s71 = sadd.s32 %s70, 1
      %p74 = scmp.eq.s32.totalorder %s15, 1
      %p75 = scmp.ne.s32.totalorder %s70, %s72
      %p76 = scmp.eq.s32.totalorder %s15, 0
      %p77 = por %p75, %p76
      %p78 = scmp.ne.s32.totalorder %s70, %s72
      %p79 = scmp.eq.s32.totalorder %s20, 1
      %p80 = por %p78, %p79
      %p81 = scmp.ne.s32.totalorder %s72, %s73
      %p82 = scmp.eq.s32.totalorder %s20, 0
      %p83 = por %p81, %p82
      %p84 = scmp.ne.s32.totalorder %s72, %s73
      %p85 = scmp.eq.s32.totalorder %s21, 1
      %p86 = por %p84, %p85
      %p88 = scmp.ne.s32.totalorder %s73, %s87
      %p89 = scmp.eq.s32.totalorder %s21, 0
      %p90 = por %p88, %p89
      %s92 = sadd.s32 %s91, 1
      %p95 = scmp.eq.s32.totalorder %s15, 1
      %p96 = scmp.ne.s32.totalorder %s91, %s93
      %p97 = scmp.eq.s32.totalorder %s15, 0
      %p98 = por %p96, %p97
      %p99 = scmp.ne.s32.totalorder %s91, %s93
      %p100 = scmp.eq.s32.totalorder %s20, 1
      %p101 = por %p99, %p100
      %p102 = scmp.ne.s32.totalorder %s93, %s94
      %p103 = scmp.eq.s32.totalorder %s20, 0
      %p104 = por %p102, %p103
      %p105 = scmp.ne.s32.totalorder %s93, %s94
      %p106 = scmp.eq.s32.totalorder %s21, 1
      %p107 = por %p105, %p106
      %p109 = scmp.ne.s32.totalorder %s94, %s108
      %p110 = scmp.eq.s32.totalorder %s21, 0
      %p111 = por %p109, %p110
      %s113 = sadd.s32 %s112, 1
      %p116 = scmp.eq.s32.totalorder %s15, 1
      %p117 = scmp.ne.s32.totalorder %s112, %s114
      %p118 = scmp.eq.s32.totalorder %s15, 0
      %p119 = por %p117, %p118
      %p120 = scmp.ne.s32.totalorder %s112, %s114
      %p121 = scmp.eq.s32.totalorder %s20, 1
      %p122 = por %p120, %p121
      %p123 = scmp.ne.s32.totalorder %s114, %s115
      %p124 = scmp.eq.s32.totalorder %s20, 0
      %p125 = por %p123, %p124
      %p126 = scmp.ne.s32.totalorder %s114, %s115
      %p127 = scmp.eq.s32.totalorder %s21, 1
      %p128 = por %p126, %p127
      %p130 = scmp.ne.s32.totalorder %s115, %s129
      %p131 = scmp.eq.s32.totalorder %s21, 0
      %p132 = por %p130, %p131
      %s134 = sadd.s32 %s133, 1
      %p137 = scmp.eq.s32.totalorder %s15, 1
      %p138 = scmp.ne.s32.totalorder %s133, %s135
      %p139 = scmp.eq.s32.totalorder %s15, 0
      %p140 = por %p138, %p139
      %p141 = scmp.ne.s32.totalorder %s133, %s135
      %p142 = scmp.eq.s32.totalorder %s20, 1
      %p143 = por %p141, %p142
      %p144 = scmp.ne.s32.totalorder %s135, %s136
      %p145 = scmp.eq.s32.totalorder %s20, 0
      %p146 = por %p144, %p145
      %p147 = scmp.ne.s32.totalorder %s135, %s136
      %p148 = scmp.eq.s32.totalorder %s21, 1
      %p149 = por %p147, %p148
      %p151 = scmp.ne.s32.totalorder %s136, %s150
      %p152 = scmp.eq.s32.totalorder %s21, 0
      %p153 = por %p151, %p152
      %s154 = ssub.s32 %s15, %s22
      %p155 = scmp.eq.s32.totalorder %s154, 0
      %s157 = sadd.s32 %s156, 1
      %s158 = scalar_select %p155, %s156, %s157
      %p161 = pneg %p155
      %p162 = scmp.eq.s32.totalorder %s15, 1
      %p163 = por %p161, %p162
      %p164 = scmp.ne.s32.totalorder %s156, %s159
      %p165 = scmp.eq.s32.totalorder %s15, 0
      %p166 = por %p164, %p165
      %p167 = scmp.ne.s32.totalorder %s156, %s159
      %p168 = scmp.eq.s32.totalorder %s20, 1
      %p169 = por %p167, %p168
      %p170 = scmp.ne.s32.totalorder %s159, %s160
      %p171 = scmp.eq.s32.totalorder %s20, 0
      %p172 = por %p170, %p171
      %p173 = scmp.ne.s32.totalorder %s159, %s160
      %p174 = scmp.eq.s32.totalorder %s21, 1
      %p175 = por %p173, %p174
      %p177 = scmp.ne.s32.totalorder %s160, %s176
      %p178 = scmp.eq.s32.totalorder %s21, 0
      %p179 = por %p177, %p178
      %p180 = scmp.le.s32.totalorder 1, %s15
      %p181 = scmp.lt.s32.totalorder %s15, 3
      %p182 = pnand %p180, %p181
      %p183 = pneg %p182
      // Predicated region
      $region9: #{patch_expand2d.1} parent=5 // pred_check
        _
      $region10: #{patch_expand2d.1} parent=5 // pred_check_branch
        %185 = sbr.rel (%p182) target = $region12
      $region11: #{patch_expand2d.1} parent=5 // pred_region
        %s186 = ssub.s32 %s15, 1
        // Predicated region
        $region13: #{patch_expand2d.1} parent=11 // pred_check
          %p187 = pneg %p62
        $region14: #{patch_expand2d.1} parent=11 // pred_check_branch
          %189 = sbr.rel (%p187) target = $region16
        $region15: #{patch_expand2d.1} parent=11 // pred_region
          _
        $region16: #{patch_expand2d.1} parent=11 // pred_fallthru
          _
        // Predicated region
        $region17: #{patch_expand2d.1} parent=11 // pred_check
          %p190 = pneg %p83
        $region18: #{patch_expand2d.1} parent=11 // pred_check_branch
          %192 = sbr.rel (%p190) target = $region20
        $region19: #{patch_expand2d.1} parent=11 // pred_region
          _
        $region20: #{patch_expand2d.1} parent=11 // pred_fallthru
          _
        // Predicated region
        $region21: #{patch_expand2d.1} parent=11 // pred_check
          %p193 = pneg %p104
        $region22: #{patch_expand2d.1} parent=11 // pred_check_branch
          %195 = sbr.rel (%p193) target = $region24
        $region23: #{patch_expand2d.1} parent=11 // pred_region
          _
        $region24: #{patch_expand2d.1} parent=11 // pred_fallthru
          _
        // Predicated region
        $region25: #{patch_expand2d.1} parent=11 // pred_check
          %p196 = pneg %p125
        $region26: #{patch_expand2d.1} parent=11 // pred_check_branch
          %198 = sbr.rel (%p196) target = $region28
        $region27: #{patch_expand2d.1} parent=11 // pred_region
          _
        $region28: #{patch_expand2d.1} parent=11 // pred_fallthru
          _
        // Predicated region
        $region29: #{patch_expand2d.1} parent=11 // pred_check
          %p199 = pneg %p146
        $region30: #{patch_expand2d.1} parent=11 // pred_check_branch
          %201 = sbr.rel (%p199) target = $region32
        $region31: #{patch_expand2d.1} parent=11 // pred_region
          _
        $region32: #{patch_expand2d.1} parent=11 // pred_fallthru
          _
      $region12: #{patch_expand2d.1} parent=5 // pred_fallthru
        _
      %p202 = scmp.lt.s32.totalorder %s15, 2
      // Predicated region
      $region33: #{patch_expand2d.1} parent=5 // pred_check
        %p203 = pneg %p202
      $region34: #{patch_expand2d.1} parent=5 // pred_check_branch
        %205 = sbr.rel (%p203) target = $region36
      $region35: #{patch_expand2d.1} parent=5 // pred_region
        // Predicated region
        $region37: #{patch_expand2d.1} parent=35 // pred_check
          %p206 = pneg %p35
        $region38: #{patch_expand2d.1} parent=35 // pred_check_branch
          %208 = sbr.rel (%p206) target = $region40
        $region39: #{patch_expand2d.1} parent=35 // pred_region
          %s209 = sand.u32 %s25, 1
          %s210 = scalar_lea.sflag [#allocation3], %s209
          %s211 = sand.u32 %s25, 1
          %s212 = smul.addr %s211, 256
          %s213 = scalar_lea.vmem [#allocation2], %s212
          %s214 = smul.u32 32, %s15
          %s216 = ssub.s32 4096, 4096
          %217 = vsyncadd %s210, %s216
          %s218 = smul.addr %s214, 128
          %s219 = scalar_lea.hbm %s0, %s218
          %s220 = sshll.u32 %s213, 4
          %s221 = int_to_ptr.vmem [resolvable:$true] %s220
          %226 = dma.hbm_to_vmem [thread:$0]  %s219, 4096, %s221, %s210, 128, 128, 8
        $region40: #{patch_expand2d.1} parent=35 // pred_fallthru
          _
      $region36: #{patch_expand2d.1} parent=5 // pred_fallthru
        _
      %p227 = scmp.le.s32.totalorder 1, %s15
      %p228 = scmp.lt.s32.totalorder %s15, 3
      %p229 = pnand %p227, %p228
      %p230 = pneg %p229
      // Predicated region
      $region41: #{patch_expand2d.1} parent=5 // pred_check
        _
      $region42: #{patch_expand2d.1} parent=5 // pred_check_branch
        %232 = sbr.rel (%p229) target = $region44
      $region43: #{patch_expand2d.1} parent=5 // pred_region
        %s233 = ssub.s32 %s15, 1
        %s234 = sand.u32 %s28, 1
        %s235 = scalar_lea.sflag [#allocation3], %s234
        %s236 = sand.u32 %s28, 1
        %s237 = smul.addr %s236, 256
        %s238 = scalar_lea.vmem [#allocation2], %s237
        // Predicated region
        $region45: #{patch_expand2d.1} parent=43 // pred_check
          %p239 = pneg %p41
        $region46: #{patch_expand2d.1} parent=43 // pred_check_branch
          %241 = sbr.rel (%p239) target = $region48
        $region47: #{patch_expand2d.1} parent=43 // pred_region
          %242 = dma.done %s235, 4096
        $region48: #{patch_expand2d.1} parent=43 // pred_fallthru
          _
        %s243 = sand.u32 %s28, 1
        %s244 = scalar_lea.sflag [#allocation3], %s243
        %s245 = sand.u32 %s28, 1
        %s246 = smul.addr %s245, 256
        %s247 = scalar_lea.vmem [#allocation2], %s246
        %p248 = pneg %p41
        %p249 = pneg %p38
        %p250 = pneg %p62
        %p251 = pneg %p59
        %p252 = pneg %p83
        %p253 = pneg %p80
        %p254 = pneg %p104
        %p255 = pneg %p101
        %p256 = pneg %p125
        %p257 = pneg %p122
        %p258 = pneg %p146
        %p259 = pneg %p143
        %p260 = pneg %p172
        %p261 = pneg %p169
        %s262 = smul.u32 16, %s20
        %p263 = scmp.lt.s32.totalorder %s262, 31
        %s264 = scalar_select %p263, %s262, 31
        %s265 = smul.addr %s264, 4
        %s266 = smul.addr %s265, 8
        %s267 = scalar_lea.vmem %s6, %s266
        %s268 = smul.u32 32, %s20
        %s269 = smul.u32 16, %s20
        %p270 = scmp.lt.s32.totalorder %s269, 31
        %s271 = scalar_select %p270, %s269, 31
        %s272 = smul.addr %s271, 4
        %s273 = smul.addr %s272, 8
        %s274 = scalar_lea.vmem %s6, %s273
        %s275 = smul.u32 16, %s20
        %v277 = vld [vmem:[%s238] sm:$0xff]
        %v278 = vld [vmem:[%s238 + $0x8] sm:$0xff]
        %v279 = vld [vmem:[%s238 + $0x10] sm:$0xff]
        %v280 = vld [vmem:[%s238 + $0x18] sm:$0xff]
        %v281 = vld [vmem:[%s238 + $0x20] sm:$0xff]
        %v282 = vld [vmem:[%s238 + $0x28] sm:$0xff]
        %v283 = vld [vmem:[%s238 + $0x30] sm:$0xff]
        %v284 = vld [vmem:[%s238 + $0x38] sm:$0xff]
        %v285 = vld [vmem:[%s238 + $0x40] sm:$0xff]
        %v286 = vld [vmem:[%s238 + $0x48] sm:$0xff]
        %v287 = vld [vmem:[%s238 + $0x50] sm:$0xff]
        %v288 = vld [vmem:[%s238 + $0x58] sm:$0xff]
        %v289 = vld [vmem:[%s238 + $0x60] sm:$0xff]
        %v290 = vld [vmem:[%s238 + $0x68] sm:$0xff]
        %v291 = vld [vmem:[%s238 + $0x70] sm:$0xff]
        %v292 = vld [vmem:[%s238 + $0x78] sm:$0xff]
        %v293 = vld [vmem:[%s238 + $0x80] sm:$0xff]
        %v294 = vld [vmem:[%s238 + $0x88] sm:$0xff]
        %v295 = vld [vmem:[%s238 + $0x90] sm:$0xff]
        %v296 = vld [vmem:[%s238 + $0x98] sm:$0xff]
        %v297 = vld [vmem:[%s238 + $0xa0] sm:$0xff]
        %v298 = vld [vmem:[%s238 + $0xa8] sm:$0xff]
        %v299 = vld [vmem:[%s238 + $0xb0] sm:$0xff]
        %v300 = vld [vmem:[%s238 + $0xb8] sm:$0xff]
        %v301 = vld [vmem:[%s238 + $0xc0] sm:$0xff]
        %v302 = vld [vmem:[%s238 + $0xc8] sm:$0xff]
        %v303 = vld [vmem:[%s238 + $0xd0] sm:$0xff]
        %v304 = vld [vmem:[%s238 + $0xd8] sm:$0xff]
        %v305 = vld [vmem:[%s238 + $0xe0] sm:$0xff]
        %v306 = vld [vmem:[%s238 + $0xe8] sm:$0xff]
        %v307 = vld [vmem:[%s238 + $0xf0] sm:$0xff]
        %v308 = vld [vmem:[%s238 + $0xf8] sm:$0xff]
        %v309 = vpack.c.bf16 %v278, %v277
        %v310 = vpack.c.bf16 %v280, %v279
        %v311 = vpack.c.bf16 %v282, %v281
        %v312 = vpack.c.bf16 %v284, %v283
        %v313 = vpack.c.bf16 %v286, %v285
        %v314 = vpack.c.bf16 %v288, %v287
        %v315 = vpack.c.bf16 %v290, %v289
        %v316 = vpack.c.bf16 %v292, %v291
        %v317 = vpack.c.bf16 %v294, %v293
        %v318 = vpack.c.bf16 %v296, %v295
        %v319 = vpack.c.bf16 %v298, %v297
        %v320 = vpack.c.bf16 %v300, %v299
        %v321 = vpack.c.bf16 %v302, %v301
        %v322 = vpack.c.bf16 %v304, %v303
        %v323 = vpack.c.bf16 %v306, %v305
        %v324 = vpack.c.bf16 %v308, %v307
        %v325 = vld [vmem:[%s1] sm:$0xf]
        %v326 = vld [vmem:[%s1 + $0x4] sm:$0xf]
        %v327 = vld [vmem:[%s1 + $0x8] sm:$0xf]
        %v328 = vld [vmem:[%s1 + $0xc] sm:$0xf]
        %v329 = vld [vmem:[%s1 + $0x10] sm:$0xf]
        %v330 = vld [vmem:[%s1 + $0x14] sm:$0xf]
        %v331 = vld [vmem:[%s1 + $0x18] sm:$0xf]
        %v332 = vld [vmem:[%s1 + $0x1c] sm:$0xf]
        %v341 = vunpack.c.l.b16 %v325
        %v342 = vunpack.c.l.b16 %v326
        %v343 = vunpack.c.l.b16 %v327
        %v344 = vunpack.c.l.b16 %v328
        %v345 = vunpack.c.l.b16 %v329
        %v346 = vunpack.c.l.b16 %v330
        %v347 = vunpack.c.l.b16 %v331
        %v348 = vunpack.c.l.b16 %v332
        %v349 = vpack.c.b16 %v342, %v341
        %v350 = vpack.c.b16 %v344, %v343
        %v351 = vpack.c.b16 %v346, %v345
        %v352 = vpack.c.b16 %v348, %v347
        %vm357 = vcmask 523264
        %v359 = vsel %vm357, %v309, 0
        %v362 = vsel %vm357, %v310, 0
        %v365 = vsel %vm357, %v311, 0
        %v368 = vsel %vm357, %v312, 0
        %v371 = vsel %vm357, %v313, 0
        %v374 = vsel %vm357, %v314, 0
        %v377 = vsel %vm357, %v315, 0
        %v380 = vsel %vm357, %v316, 0
        %v383 = vsel %vm357, %v317, 0
        %v386 = vsel %vm357, %v318, 0
        %v389 = vsel %vm357, %v319, 0
        %v392 = vsel %vm357, %v320, 0
        %v395 = vsel %vm357, %v321, 0
        %v398 = vsel %vm357, %v322, 0
        %v401 = vsel %vm357, %v323, 0
        %v404 = vsel %vm357, %v324, 0
        %406 = vmatprep.subr.bf16.mxu0 0
        %407 = vmatpush1.bf16.msra.mxu0 %v349
        %408 = vmatprep.subr.bf16.mxu0 0
        %409 = vmatpush1.bf16.msra.mxu0 %v350
        %410 = vmatprep.subr.bf16.mxu0 0
        %411 = vmatpush1.bf16.msra.mxu0 %v351
        %412 = vmatprep.subr.bf16.mxu0 0
        %413 = vmatpush1.bf16.msra.mxu0 %v352
        %414 = vmatprep.subr.bf16.mxu0 0
        %415 = vmatpush1.bf16.msra.mxu0 0
        %416 = vmatprep.subr.bf16.mxu0 0
        %417 = vmatpush1.bf16.msra.mxu0 0
        %418 = vmatprep.subr.bf16.mxu0 0
        %419 = vmatpush1.bf16.msra.mxu0 0
        %420 = vmatprep.subr.bf16.mxu0 0
        %421 = vmatpush1.bf16.msra.mxu0 0
        %422 = vmatprep.subr.bf16.mxu0 0
        %423 = vmatpush1.bf16.msra.mxu0 0
        %424 = vmatprep.subr.bf16.mxu0 0
        %425 = vmatpush1.bf16.msra.mxu0 0
        %426 = vmatprep.subr.bf16.mxu0 0
        %427 = vmatpush1.bf16.msra.mxu0 0
        %428 = vmatprep.subr.bf16.mxu0 0
        %429 = vmatpush1.bf16.msra.mxu0 0
        %430 = vmatprep.subr.bf16.mxu0 0
        %431 = vmatpush1.bf16.msra.mxu0 0
        %432 = vmatprep.subr.bf16.mxu0 0
        %433 = vmatpush1.bf16.msra.mxu0 0
        %434 = vmatprep.subr.bf16.mxu0 0
        %435 = vmatpush1.bf16.msra.mxu0 0
        %436 = vmatprep.subr.bf16.mxu0 0
        %437 = vmatpush1.bf16.msra.mxu0 0
        %438 = vmatprep.mubr.bf16.mxu0 0
        %439 = vmatmul.mubr.bf16.gmra.mrb[0].mxu0 %v359
        %v440 = vpop.f32.mrb[0].mxu0
        %v441 = vadd.f32 0.0, %v440
        %v442 = vpop.f32.mrb[0].mxu0
        %v443 = vpop.f32.mrb[0].mxu0
        %v444 = vadd.f32 0.0, %v443
        %v445 = vpop.f32.mrb[0].mxu0
        %446 = vmatprep.mubr.bf16.mxu0 0
        %447 = vmatmul.mubr.bf16.gmra.mrb[0].mxu0 %v362
        %v448 = vpop.f32.mrb[0].mxu0
        %v449 = vadd.f32 0.0, %v448
        %v450 = vpop.f32.mrb[0].mxu0
        %v451 = vpop.f32.mrb[0].mxu0
        %v452 = vadd.f32 0.0, %v451
        %v453 = vpop.f32.mrb[0].mxu0
        %454 = vmatprep.mubr.bf16.mxu0 0
        %455 = vmatmul.mubr.bf16.gmra.mrb[0].mxu0 %v365
        %v456 = vpop.f32.mrb[0].mxu0
        %v457 = vadd.f32 0.0, %v456
        %v458 = vpop.f32.mrb[0].mxu0
        %v459 = vpop.f32.mrb[0].mxu0
        %v460 = vadd.f32 0.0, %v459
        %v461 = vpop.f32.mrb[0].mxu0
        %462 = vmatprep.mubr.bf16.mxu0 0
        %463 = vmatmul.mubr.bf16.gmra.mrb[0].mxu0 %v368
        %v464 = vpop.f32.mrb[0].mxu0
        %v465 = vadd.f32 0.0, %v464
        %v466 = vpop.f32.mrb[0].mxu0
        %v467 = vpop.f32.mrb[0].mxu0
        %v468 = vadd.f32 0.0, %v467
        %v469 = vpop.f32.mrb[0].mxu0
        %470 = vmatprep.mubr.bf16.mxu0 0
        %471 = vmatmul.mubr.bf16.gmra.mrb[0].mxu0 %v371
        %v472 = vpop.f32.mrb[0].mxu0
        %v473 = vadd.f32 0.0, %v472
        %v474 = vpop.f32.mrb[0].mxu0
        %v475 = vpop.f32.mrb[0].mxu0
        %v476 = vadd.f32 0.0, %v475
        %v477 = vpop.f32.mrb[0].mxu0
        %478 = vmatprep.mubr.bf16.mxu0 0
        %479 = vmatmul.mubr.bf16.gmra.mrb[0].mxu0 %v374
        %v480 = vpop.f32.mrb[0].mxu0
        %v481 = vadd.f32 0.0, %v480
        %v482 = vpop.f32.mrb[0].mxu0
        %v483 = vpop.f32.mrb[0].mxu0
        %v484 = vadd.f32 0.0, %v483
        %v485 = vpop.f32.mrb[0].mxu0
        %486 = vmatprep.mubr.bf16.mxu0 0
        %487 = vmatmul.mubr.bf16.gmra.mrb[0].mxu0 %v377
        %v488 = vpop.f32.mrb[0].mxu0
        %v489 = vadd.f32 0.0, %v488
        %v490 = vpop.f32.mrb[0].mxu0
        %v491 = vpop.f32.mrb[0].mxu0
        %v492 = vadd.f32 0.0, %v491
        %v493 = vpop.f32.mrb[0].mxu0
        %494 = vmatprep.mubr.bf16.mxu0 0
        %495 = vmatmul.mubr.bf16.gmra.mrb[0].mxu0 %v380
        %v496 = vpop.f32.mrb[0].mxu0
        %v497 = vadd.f32 0.0, %v496
        %v498 = vpop.f32.mrb[0].mxu0
        %v499 = vpop.f32.mrb[0].mxu0
        %v500 = vadd.f32 0.0, %v499
        %v501 = vpop.f32.mrb[0].mxu0
        %502 = vmatprep.mubr.bf16.mxu0 0
        %503 = vmatmul.mubr.bf16.gmra.mrb[0].mxu0 %v383
        %v504 = vpop.f32.mrb[0].mxu0
        %v505 = vadd.f32 0.0, %v504
        %v506 = vpop.f32.mrb[0].mxu0
        %v507 = vpop.f32.mrb[0].mxu0
        %v508 = vadd.f32 0.0, %v507
        %v509 = vpop.f32.mrb[0].mxu0
        %510 = vmatprep.mubr.bf16.mxu0 0
        %511 = vmatmul.mubr.bf16.gmra.mrb[0].mxu0 %v386
        %v512 = vpop.f32.mrb[0].mxu0
        %v513 = vadd.f32 0.0, %v512
        %v514 = vpop.f32.mrb[0].mxu0
        %v515 = vpop.f32.mrb[0].mxu0
        %v516 = vadd.f32 0.0, %v515
        %v517 = vpop.f32.mrb[0].mxu0
        %518 = vmatprep.mubr.bf16.mxu0 0
        %519 = vmatmul.mubr.bf16.gmra.mrb[0].mxu0 %v389
        %v520 = vpop.f32.mrb[0].mxu0
        %v521 = vadd.f32 0.0, %v520
        %v522 = vpop.f32.mrb[0].mxu0
        %v523 = vpop.f32.mrb[0].mxu0
        %v524 = vadd.f32 0.0, %v523
        %v525 = vpop.f32.mrb[0].mxu0
        %526 = vmatprep.mubr.bf16.mxu0 0
        %527 = vmatmul.mubr.bf16.gmra.mrb[0].mxu0 %v392
        %v528 = vpop.f32.mrb[0].mxu0
        %v529 = vadd.f32 0.0, %v528
        %v530 = vpop.f32.mrb[0].mxu0
        %v531 = vpop.f32.mrb[0].mxu0
        %v532 = vadd.f32 0.0, %v531
        %v533 = vpop.f32.mrb[0].mxu0
        %534 = vmatprep.mubr.bf16.mxu0 0
        %535 = vmatmul.mubr.bf16.gmra.mrb[0].mxu0 %v395
        %v536 = vpop.f32.mrb[0].mxu0
        %v537 = vadd.f32 0.0, %v536
        %v538 = vpop.f32.mrb[0].mxu0
        %v539 = vpop.f32.mrb[0].mxu0
        %v540 = vadd.f32 0.0, %v539
        %v541 = vpop.f32.mrb[0].mxu0
        %542 = vmatprep.mubr.bf16.mxu0 0
        %543 = vmatmul.mubr.bf16.gmra.mrb[0].mxu0 %v398
        %v544 = vpop.f32.mrb[0].mxu0
        %v545 = vadd.f32 0.0, %v544
        %v546 = vpop.f32.mrb[0].mxu0
        %v547 = vpop.f32.mrb[0].mxu0
        %v548 = vadd.f32 0.0, %v547
        %v549 = vpop.f32.mrb[0].mxu0
        %550 = vmatprep.mubr.bf16.mxu0 0
        %551 = vmatmul.mubr.bf16.gmra.mrb[0].mxu0 %v401
        %v552 = vpop.f32.mrb[0].mxu0
        %v553 = vadd.f32 0.0, %v552
        %v554 = vpop.f32.mrb[0].mxu0
        %v555 = vpop.f32.mrb[0].mxu0
        %v556 = vadd.f32 0.0, %v555
        %v557 = vpop.f32.mrb[0].mxu0
        %558 = vmatprep.mubr.bf16.mxu0 0
        %559 = vmatmul.mubr.bf16.gmra.mrb[0].mxu0 %v404
        %v560 = vpop.f32.mrb[0].mxu0
        %v561 = vadd.f32 0.0, %v560
        %v562 = vpop.f32.mrb[0].mxu0
        %v563 = vpop.f32.mrb[0].mxu0
        %v564 = vadd.f32 0.0, %v563
        %v565 = vpop.f32.mrb[0].mxu0
        %566 = vdwg.mxu0
        %v567 = vld [vmem:[%s2] sm:$0xff]
        %v568 = vld [vmem:[%s2 + $0x8] sm:$0xff]
        %v569 = vld [vmem:[%s2 + $0x10] sm:$0xff]
        %v570 = vld [vmem:[%s2 + $0x18] sm:$0xff]
        %v571 = vld [vmem:[%s2 + $0x20] sm:$0xff]
        %v572 = vld [vmem:[%s2 + $0x28] sm:$0xff]
        %v573 = vld [vmem:[%s2 + $0x30] sm:$0xff]
        %v574 = vld [vmem:[%s2 + $0x38] sm:$0xff]
        %v575 = vld [vmem:[%s2 + $0x40] sm:$0xff]
        %v576 = vld [vmem:[%s2 + $0x48] sm:$0xff]
        %v577 = vld [vmem:[%s2 + $0x50] sm:$0xff]
        %v578 = vld [vmem:[%s2 + $0x58] sm:$0xff]
        %v579 = vld [vmem:[%s2 + $0x60] sm:$0xff]
        %v580 = vld [vmem:[%s2 + $0x68] sm:$0xff]
        %v581 = vld [vmem:[%s2 + $0x70] sm:$0xff]
        %v582 = vld [vmem:[%s2 + $0x78] sm:$0xff]
        %v583 = vld [vmem:[%s3] sm:$0xf]
        %584 = vmatprep.subr.mxu0 0.0
        %v585 = vand.u32 %v567, 4294901760
        %586 = vmatpush1.msra.mxu0 %v585
        %587 = vmatprep.subr.mxu0 0.0
        %v588 = vand.u32 %v568, 4294901760
        %589 = vmatpush1.msra.mxu0 %v588
        %590 = vmatprep.subr.mxu0 0.0
        %v591 = vand.u32 %v569, 4294901760
        %592 = vmatpush1.msra.mxu0 %v591
        %593 = vmatprep.subr.mxu0 0.0
        %v594 = vand.u32 %v570, 4294901760
        %595 = vmatpush1.msra.mxu0 %v594
        %596 = vmatprep.subr.mxu0 0.0
        %v597 = vand.u32 %v571, 4294901760
        %598 = vmatpush1.msra.mxu0 %v597
        %599 = vmatprep.subr.mxu0 0.0
        %v600 = vand.u32 %v572, 4294901760
        %601 = vmatpush1.msra.mxu0 %v600
        %602 = vmatprep.subr.mxu0 0.0
        %v603 = vand.u32 %v573, 4294901760
        %604 = vmatpush1.msra.mxu0 %v603
        %605 = vmatprep.subr.mxu0 0.0
        %v606 = vand.u32 %v574, 4294901760
        %607 = vmatpush1.msra.mxu0 %v606
        %608 = vmatprep.subr.mxu0 0.0
        %v609 = vand.u32 %v575, 4294901760
        %610 = vmatpush1.msra.mxu0 %v609
        %611 = vmatprep.subr.mxu0 0.0
        %v612 = vand.u32 %v576, 4294901760
        %613 = vmatpush1.msra.mxu0 %v612
        %614 = vmatprep.subr.mxu0 0.0
        %v615 = vand.u32 %v577, 4294901760
        %616 = vmatpush1.msra.mxu0 %v615
        %617 = vmatprep.subr.mxu0 0.0
        %v618 = vand.u32 %v578, 4294901760
        %619 = vmatpush1.msra.mxu0 %v618
        %620 = vmatprep.subr.mxu0 0.0
        %v621 = vand.u32 %v579, 4294901760
        %622 = vmatpush1.msra.mxu0 %v621
        %623 = vmatprep.subr.mxu0 0.0
        %v624 = vand.u32 %v580, 4294901760
        %625 = vmatpush1.msra.mxu0 %v624
        %626 = vmatprep.subr.mxu0 0.0
        %v627 = vand.u32 %v581, 4294901760
        %628 = vmatpush1.msra.mxu0 %v627
        %629 = vmatprep.subr.mxu0 0.0
        %v630 = vand.u32 %v582, 4294901760
        %631 = vmatpush1.msra.mxu0 %v630
        %632 = vmatprep.subr.mxu0 0.0
        %633 = vmatpush1.msra.mxu0 0.0
        %634 = vmatprep.subr.mxu0 0.0
        %635 = vmatpush1.msra.mxu0 0.0
        %636 = vmatprep.subr.mxu0 0.0
        %637 = vmatpush1.msra.mxu0 0.0
        %638 = vmatprep.subr.mxu0 0.0
        %639 = vmatpush1.msra.mxu0 0.0
        %640 = vmatprep.subr.mxu0 0.0
        %641 = vmatpush1.msra.mxu0 0.0
        %642 = vmatprep.subr.mxu0 0.0
        %643 = vmatpush1.msra.mxu0 0.0
        %644 = vmatprep.subr.mxu0 0.0
        %645 = vmatpush1.msra.mxu0 0.0
        %646 = vmatprep.subr.mxu0 0.0
        %647 = vmatpush1.msra.mxu0 0.0
        %648 = vmatprep.subr.mxu0 0.0
        %649 = vmatpush1.msra.mxu0 0.0
        %650 = vmatprep.subr.mxu0 0.0
        %651 = vmatpush1.msra.mxu0 0.0
        %652 = vmatprep.subr.mxu0 0.0
        %653 = vmatpush1.msra.mxu0 0.0
        %654 = vmatprep.subr.mxu0 0.0
        %655 = vmatpush1.msra.mxu0 0.0
        %656 = vmatprep.subr.mxu0 0.0
        %657 = vmatpush1.msra.mxu0 0.0
        %658 = vmatprep.subr.mxu0 0.0
        %659 = vmatpush1.msra.mxu0 0.0
        %660 = vmatprep.subr.mxu0 0.0
        %661 = vmatpush1.msra.mxu0 0.0
        %662 = vmatprep.subr.mxu0 0.0
        %663 = vmatpush1.msra.mxu0 0.0
        %664 = vmatprep.mubr.f32.mxu0 0.0
        %v665 = vand.u32 %v441, 4294901760
        %v666 = vsub.f32 %v441, %v665
        %v667 = vand.u32 %v666, 4294901760
        %v668 = vsub.f32 %v666, %v667
        %v669 = vand.u32 %v668, 4294901760
        %670 = vmatmul.mubr.f32.gmra.mrb[0].mxu0 %v669
        %v671 = vpop.f32.mrb[0].mxu0
        %v672 = vadd.f32 0.0, %v671
        %v673 = vpop.f32.mrb[0].mxu0
        %674 = vmatprep.mubr.f32.mxu0 0.0
        %v675 = vand.u32 %v444, 4294901760
        %v676 = vsub.f32 %v444, %v675
        %v677 = vand.u32 %v676, 4294901760
        %v678 = vsub.f32 %v676, %v677
        %v679 = vand.u32 %v678, 4294901760
        %680 = vmatmul.mubr.f32.gmra.mrb[0].mxu0 %v679
        %v681 = vpop.f32.mrb[0].mxu0
        %v682 = vadd.f32 0.0, %v681
        %v683 = vpop.f32.mrb[0].mxu0
        %684 = vmatprep.mubr.f32.mxu0 0.0
        %v685 = vand.u32 %v449, 4294901760
        %v686 = vsub.f32 %v449, %v685
        %v687 = vand.u32 %v686, 4294901760
        %v688 = vsub.f32 %v686, %v687
        %v689 = vand.u32 %v688, 4294901760
        %690 = vmatmul.mubr.f32.gmra.mrb[0].mxu0 %v689
        %v691 = vpop.f32.mrb[0].mxu0
        %v692 = vadd.f32 0.0, %v691
        %v693 = vpop.f32.mrb[0].mxu0
        %694 = vmatprep.mubr.f32.mxu0 0.0
        %v695 = vand.u32 %v452, 4294901760
        %v696 = vsub.f32 %v452, %v695
        %v697 = vand.u32 %v696, 4294901760
        %v698 = vsub.f32 %v696, %v697
        %v699 = vand.u32 %v698, 4294901760
        %700 = vmatmul.mubr.f32.gmra.mrb[0].mxu0 %v699
        %v701 = vpop.f32.mrb[0].mxu0
        %v702 = vadd.f32 0.0, %v701
        %v703 = vpop.f32.mrb[0].mxu0
        %704 = vmatprep.mubr.f32.mxu0 0.0
        %v705 = vand.u32 %v457, 4294901760
        %v706 = vsub.f32 %v457, %v705
        %v707 = vand.u32 %v706, 4294901760
        %v708 = vsub.f32 %v706, %v707
        %v709 = vand.u32 %v708, 4294901760
        %710 = vmatmul.mubr.f32.gmra.mrb[0].mxu0 %v709
        %v711 = vpop.f32.mrb[0].mxu0
        %v712 = vadd.f32 0.0, %v711
        %v713 = vpop.f32.mrb[0].mxu0
        %714 = vmatprep.mubr.f32.mxu0 0.0
        %v715 = vand.u32 %v460, 4294901760
        %v716 = vsub.f32 %v460, %v715
        %v717 = vand.u32 %v716, 4294901760
        %v718 = vsub.f32 %v716, %v717
        %v719 = vand.u32 %v718, 4294901760
        %720 = vmatmul.mubr.f32.gmra.mrb[0].mxu0 %v719
        %v721 = vpop.f32.mrb[0].mxu0
        %v722 = vadd.f32 0.0, %v721
        %v723 = vpop.f32.mrb[0].mxu0
        %724 = vmatprep.mubr.f32.mxu0 0.0
        %v725 = vand.u32 %v465, 4294901760
        %v726 = vsub.f32 %v465, %v725
        %v727 = vand.u32 %v726, 4294901760
        %v728 = vsub.f32 %v726, %v727
        %v729 = vand.u32 %v728, 4294901760
        %730 = vmatmul.mubr.f32.gmra.mrb[0].mxu0 %v729
        %v731 = vpop.f32.mrb[0].mxu0
        %v732 = vadd.f32 0.0, %v731
        %v733 = vpop.f32.mrb[0].mxu0
        %734 = vmatprep.mubr.f32.mxu0 0.0
        %v735 = vand.u32 %v468, 4294901760
        %v736 = vsub.f32 %v468, %v735
        %v737 = vand.u32 %v736, 4294901760
        %v738 = vsub.f32 %v736, %v737
        %v739 = vand.u32 %v738, 4294901760
        %740 = vmatmul.mubr.f32.gmra.mrb[0].mxu0 %v739
        %v741 = vpop.f32.mrb[0].mxu0
        %v742 = vadd.f32 0.0, %v741
        %v743 = vpop.f32.mrb[0].mxu0
        %744 = vmatprep.mubr.f32.mxu0 0.0
        %v745 = vand.u32 %v473, 4294901760
        %v746 = vsub.f32 %v473, %v745
        %v747 = vand.u32 %v746, 4294901760
        %v748 = vsub.f32 %v746, %v747
        %v749 = vand.u32 %v748, 4294901760
        %750 = vmatmul.mubr.f32.gmra.mrb[0].mxu0 %v749
        %v751 = vpop.f32.mrb[0].mxu0
        %v752 = vadd.f32 0.0, %v751
        %v753 = vpop.f32.mrb[0].mxu0
        %754 = vmatprep.mubr.f32.mxu0 0.0
        %v755 = vand.u32 %v476, 4294901760
        %v756 = vsub.f32 %v476, %v755
        %v757 = vand.u32 %v756, 4294901760
        %v758 = vsub.f32 %v756, %v757
        %v759 = vand.u32 %v758, 4294901760
        %760 = vmatmul.mubr.f32.gmra.mrb[0].mxu0 %v759
        %v761 = vpop.f32.mrb[0].mxu0
        %v762 = vadd.f32 0.0, %v761
        %v763 = vpop.f32.mrb[0].mxu0
        %764 = vmatprep.mubr.f32.mxu0 0.0
        %v765 = vand.u32 %v481, 4294901760
        %v766 = vsub.f32 %v481, %v765
        %v767 = vand.u32 %v766, 4294901760
        %v768 = vsub.f32 %v766, %v767
        %v769 = vand.u32 %v768, 4294901760
        %770 = vmatmul.mubr.f32.gmra.mrb[0].mxu0 %v769
        %v771 = vpop.f32.mrb[0].mxu0
        %v772 = vadd.f32 0.0, %v771
        %v773 = vpop.f32.mrb[0].mxu0
        %774 = vmatprep.mubr.f32.mxu0 0.0
        %v775 = vand.u32 %v484, 4294901760
        %v776 = vsub.f32 %v484, %v775
        %v777 = vand.u32 %v776, 4294901760
        %v778 = vsub.f32 %v776, %v777
        %v779 = vand.u32 %v778, 4294901760
        %780 = vmatmul.mubr.f32.gmra.mrb[0].mxu0 %v779
        %v781 = vpop.f32.mrb[0].mxu0
        %v782 = vadd.f32 0.0, %v781
        %v783 = vpop.f32.mrb[0].mxu0
        %784 = vmatprep.mubr.f32.mxu0 0.0
        %v785 = vand.u32 %v489, 4294901760
        %v786 = vsub.f32 %v489, %v785
        %v787 = vand.u32 %v786, 4294901760
        %v788 = vsub.f32 %v786, %v787
        %v789 = vand.u32 %v788, 4294901760
        %790 = vmatmul.mubr.f32.gmra.mrb[0].mxu0 %v789
        %v791 = vpop.f32.mrb[0].mxu0
        %v792 = vadd.f32 0.0, %v791
        %v793 = vpop.f32.mrb[0].mxu0
        %794 = vmatprep.mubr.f32.mxu0 0.0
        %v795 = vand.u32 %v492, 4294901760
        %v796 = vsub.f32 %v492, %v795
        %v797 = vand.u32 %v796, 4294901760
        %v798 = vsub.f32 %v796, %v797
        %v799 = vand.u32 %v798, 4294901760
        %800 = vmatmul.mubr.f32.gmra.mrb[0].mxu0 %v799
        %v801 = vpop.f32.mrb[0].mxu0
        %v802 = vadd.f32 0.0, %v801
        %v803 = vpop.f32.mrb[0].mxu0
        %804 = vmatprep.mubr.f32.mxu0 0.0
        %v805 = vand.u32 %v497, 4294901760
        %v806 = vsub.f32 %v497, %v805
        %v807 = vand.u32 %v806, 4294901760
        %v808 = vsub.f32 %v806, %v807
        %v809 = vand.u32 %v808, 4294901760
        %810 = vmatmul.mubr.f32.gmra.mrb[0].mxu0 %v809
        %v811 = vpop.f32.mrb[0].mxu0
        %v812 = vadd.f32 0.0, %v811
        %v813 = vpop.f32.mrb[0].mxu0
        %814 = vmatprep.mubr.f32.mxu0 0.0
        %v815 = vand.u32 %v500, 4294901760
        %v816 = vsub.f32 %v500, %v815
        %v817 = vand.u32 %v816, 4294901760
        %v818 = vsub.f32 %v816, %v817
        %v819 = vand.u32 %v818, 4294901760
        %820 = vmatmul.mubr.f32.gmra.mrb[0].mxu0 %v819
        %v821 = vpop.f32.mrb[0].mxu0
        %v822 = vadd.f32 0.0, %v821
        %v823 = vpop.f32.mrb[0].mxu0
        %824 = vmatprep.mubr.f32.mxu0 0.0
        %v825 = vand.u32 %v505, 4294901760
        %v826 = vsub.f32 %v505, %v825
        %v827 = vand.u32 %v826, 4294901760
        %v828 = vsub.f32 %v826, %v827
        %v829 = vand.u32 %v828, 4294901760
        %830 = vmatmul.mubr.f32.gmra.mrb[0].mxu0 %v829
        %v831 = vpop.f32.mrb[0].mxu0
        %v832 = vadd.f32 0.0, %v831
        %v833 = vpop.f32.mrb[0].mxu0
        %834 = vmatprep.mubr.f32.mxu0 0.0
        %v835 = vand.u32 %v508, 4294901760
        %v836 = vsub.f32 %v508, %v835
        %v837 = vand.u32 %v836, 4294901760
        %v838 = vsub.f32 %v836, %v837
        %v839 = vand.u32 %v838, 4294901760
        %840 = vmatmul.mubr.f32.gmra.mrb[0].mxu0 %v839
        %v841 = vpop.f32.mrb[0].mxu0
        %v842 = vadd.f32 0.0, %v841
        %v843 = vpop.f32.mrb[0].mxu0
        %844 = vmatprep.mubr.f32.mxu0 0.0
        %v845 = vand.u32 %v513, 4294901760
        %v846 = vsub.f32 %v513, %v845
        %v847 = vand.u32 %v846, 4294901760
        %v848 = vsub.f32 %v846, %v847
        %v849 = vand.u32 %v848, 4294901760
        %850 = vmatmul.mubr.f32.gmra.mrb[0].mxu0 %v849
        %v851 = vpop.f32.mrb[0].mxu0
        %v852 = vadd.f32 0.0, %v851
        %v853 = vpop.f32.mrb[0].mxu0
        %854 = vmatprep.mubr.f32.mxu0 0.0
        %v855 = vand.u32 %v516, 4294901760
        %v856 = vsub.f32 %v516, %v855
        %v857 = vand.u32 %v856, 4294901760
        %v858 = vsub.f32 %v856, %v857
        %v859 = vand.u32 %v858, 4294901760
        %860 = vmatmul.mubr.f32.gmra.mrb[0].mxu0 %v859
        %v861 = vpop.f32.mrb[0].mxu0
        %v862 = vadd.f32 0.0, %v861
        %v863 = vpop.f32.mrb[0].mxu0
        %864 = vmatprep.mubr.f32.mxu0 0.0
        %v865 = vand.u32 %v521, 4294901760
        %v866 = vsub.f32 %v521, %v865
        %v867 = vand.u32 %v866, 4294901760
        %v868 = vsub.f32 %v866, %v867
        %v869 = vand.u32 %v868, 4294901760
        %870 = vmatmul.mubr.f32.gmra.mrb[0].mxu0 %v869
        %v871 = vpop.f32.mrb[0].mxu0
        %v872 = vadd.f32 0.0, %v871
        %v873 = vpop.f32.mrb[0].mxu0
        %874 = vmatprep.mubr.f32.mxu0 0.0
        %v875 = vand.u32 %v524, 4294901760
        %v876 = vsub.f32 %v524, %v875
        %v877 = vand.u32 %v876, 4294901760
        %v878 = vsub.f32 %v876, %v877
        %v879 = vand.u32 %v878, 4294901760
        %880 = vmatmul.mubr.f32.gmra.mrb[0].mxu0 %v879
        %v881 = vpop.f32.mrb[0].mxu0
        %v882 = vadd.f32 0.0, %v881
        %v883 = vpop.f32.mrb[0].mxu0
        %884 = vmatprep.mubr.f32.mxu0 0.0
        %v885 = vand.u32 %v529, 4294901760
        %v886 = vsub.f32 %v529, %v885
        %v887 = vand.u32 %v886, 4294901760
        %v888 = vsub.f32 %v886, %v887
        %v889 = vand.u32 %v888, 4294901760
        %890 = vmatmul.mubr.f32.gmra.mrb[0].mxu0 %v889
        %v891 = vpop.f32.mrb[0].mxu0
        %v892 = vadd.f32 0.0, %v891
        %v893 = vpop.f32.mrb[0].mxu0
        %894 = vmatprep.mubr.f32.mxu0 0.0
        %v895 = vand.u32 %v532, 4294901760
        %v896 = vsub.f32 %v532, %v895
        %v897 = vand.u32 %v896, 4294901760
        %v898 = vsub.f32 %v896, %v897
        %v899 = vand.u32 %v898, 4294901760
        %900 = vmatmul.mubr.f32.gmra.mrb[0].mxu0 %v899
        %v901 = vpop.f32.mrb[0].mxu0
        %v902 = vadd.f32 0.0, %v901
        %v903 = vpop.f32.mrb[0].mxu0
        %904 = vmatprep.mubr.f32.mxu0 0.0
        %v905 = vand.u32 %v537, 4294901760
        %v906 = vsub.f32 %v537, %v905
        %v907 = vand.u32 %v906, 4294901760
        %v908 = vsub.f32 %v906, %v907
        %v909 = vand.u32 %v908, 4294901760
        %910 = vmatmul.mubr.f32.gmra.mrb[0].mxu0 %v909
        %v911 = vpop.f32.mrb[0].mxu0
        %v912 = vadd.f32 0.0, %v911
        %v913 = vpop.f32.mrb[0].mxu0
        %914 = vmatprep.mubr.f32.mxu0 0.0
        %v915 = vand.u32 %v540, 4294901760
        %v916 = vsub.f32 %v540, %v915
        %v917 = vand.u32 %v916, 4294901760
        %v918 = vsub.f32 %v916, %v917
        %v919 = vand.u32 %v918, 4294901760
        %920 = vmatmul.mubr.f32.gmra.mrb[0].mxu0 %v919
        %v921 = vpop.f32.mrb[0].mxu0
        %v922 = vadd.f32 0.0, %v921
        %v923 = vpop.f32.mrb[0].mxu0
        %924 = vmatprep.mubr.f32.mxu0 0.0
        %v925 = vand.u32 %v545, 4294901760
        %v926 = vsub.f32 %v545, %v925
        %v927 = vand.u32 %v926, 4294901760
        %v928 = vsub.f32 %v926, %v927
        %v929 = vand.u32 %v928, 4294901760
        %930 = vmatmul.mubr.f32.gmra.mrb[0].mxu0 %v929
        %v931 = vpop.f32.mrb[0].mxu0
        %v932 = vadd.f32 0.0, %v931
        %v933 = vpop.f32.mrb[0].mxu0
        %934 = vmatprep.mubr.f32.mxu0 0.0
        %v935 = vand.u32 %v548, 4294901760
        %v936 = vsub.f32 %v548, %v935
        %v937 = vand.u32 %v936, 4294901760
        %v938 = vsub.f32 %v936, %v937
        %v939 = vand.u32 %v938, 4294901760
        %940 = vmatmul.mubr.f32.gmra.mrb[0].mxu0 %v939
        %v941 = vpop.f32.mrb[0].mxu0
        %v942 = vadd.f32 0.0, %v941
        %v943 = vpop.f32.mrb[0].mxu0
        %944 = vmatprep.mubr.f32.mxu0 0.0
        %v945 = vand.u32 %v553, 4294901760
        %v946 = vsub.f32 %v553, %v945
        %v947 = vand.u32 %v946, 4294901760
        %v948 = vsub.f32 %v946, %v947
        %v949 = vand.u32 %v948, 4294901760
        %950 = vmatmul.mubr.f32.gmra.mrb[0].mxu0 %v949
        %v951 = vpop.f32.mrb[0].mxu0
        %v952 = vadd.f32 0.0, %v951
        %v953 = vpop.f32.mrb[0].mxu0
        %954 = vmatprep.mubr.f32.mxu0 0.0
        %v955 = vand.u32 %v556, 4294901760
        %v956 = vsub.f32 %v556, %v955
        %v957 = vand.u32 %v956, 4294901760
        %v958 = vsub.f32 %v956, %v957
        %v959 = vand.u32 %v958, 4294901760
        %960 = vmatmul.mubr.f32.gmra.mrb[0].mxu0 %v959
        %v961 = vpop.f32.mrb[0].mxu0
        %v962 = vadd.f32 0.0, %v961
        %v963 = vpop.f32.mrb[0].mxu0
        %964 = vmatprep.mubr.f32.mxu0 0.0
        %v965 = vand.u32 %v561, 4294901760
        %v966 = vsub.f32 %v561, %v965
        %v967 = vand.u32 %v966, 4294901760
        %v968 = vsub.f32 %v966, %v967
        %v969 = vand.u32 %v968, 4294901760
        %970 = vmatmul.mubr.f32.gmra.mrb[0].mxu0 %v969
        %v971 = vpop.f32.mrb[0].mxu0
        %v972 = vadd.f32 0.0, %v971
        %v973 = vpop.f32.mrb[0].mxu0
        %974 = vmatprep.mubr.f32.mxu0 0.0
        %v975 = vand.u32 %v564, 4294901760
        %v976 = vsub.f32 %v564, %v975
        %v977 = vand.u32 %v976, 4294901760
        %v978 = vsub.f32 %v976, %v977
        %v979 = vand.u32 %v978, 4294901760
        %980 = vmatmul.mubr.f32.gmra.mrb[0].mxu0 %v979
        %v981 = vpop.f32.mrb[0].mxu0
        %v982 = vadd.f32 0.0, %v981
        %v983 = vpop.f32.mrb[0].mxu0
        %984 = vdwg.mxu0
        %985 = vmatprep.subr.mxu0 0.0
        %v986 = vand.u32 %v567, 4294901760
        %v987 = vsub.f32 %v567, %v986
        %v988 = vand.u32 %v987, 4294901760
        %v989 = vsub.f32 %v987, %v988
        %v990 = vand.u32 %v989, 4294901760
        %991 = vmatpush1.msra.mxu0 %v990
        %992 = vmatprep.subr.mxu0 0.0
        %v993 = vand.u32 %v568, 4294901760
        %v994 = vsub.f32 %v568, %v993
        %v995 = vand.u32 %v994, 4294901760
        %v996 = vsub.f32 %v994, %v995
        %v997 = vand.u32 %v996, 4294901760
        %998 = vmatpush1.msra.mxu0 %v997
        %999 = vmatprep.subr.mxu0 0.0
        %v1000 = vand.u32 %v569, 4294901760
        %v1001 = vsub.f32 %v569, %v1000
        %v1002 = vand.u32 %v1001, 4294901760
        %v1003 = vsub.f32 %v1001, %v1002
        %v1004 = vand.u32 %v1003, 4294901760
        %1005 = vmatpush1.msra.mxu0 %v1004
        %1006 = vmatprep.subr.mxu0 0.0
        %v1007 = vand.u32 %v570, 4294901760
        %v1008 = vsub.f32 %v570, %v1007
        %v1009 = vand.u32 %v1008, 4294901760
        %v1010 = vsub.f32 %v1008, %v1009
        %v1011 = vand.u32 %v1010, 4294901760
        %1012 = vmatpush1.msra.mxu0 %v1011
        %1013 = vmatprep.subr.mxu0 0.0
        %v1014 = vand.u32 %v571, 4294901760
        %v1015 = vsub.f32 %v571, %v1014
        %v1016 = vand.u32 %v1015, 4294901760
        %v1017 = vsub.f32 %v1015, %v1016
        %v1018 = vand.u32 %v1017, 4294901760
        %1019 = vmatpush1.msra.mxu0 %v1018
        %1020 = vmatprep.subr.mxu0 0.0
        %v1021 = vand.u32 %v572, 4294901760
        %v1022 = vsub.f32 %v572, %v1021
        %v1023 = vand.u32 %v1022, 4294901760
        %v1024 = vsub.f32 %v1022, %v1023
        %v1025 = vand.u32 %v1024, 4294901760
        %1026 = vmatpush1.msra.mxu0 %v1025
        %1027 = vmatprep.subr.mxu0 0.0
        %v1028 = vand.u32 %v573, 4294901760
        %v1029 = vsub.f32 %v573, %v1028
        %v1030 = vand.u32 %v1029, 4294901760
        %v1031 = vsub.f32 %v1029, %v1030
        %v1032 = vand.u32 %v1031, 4294901760
        %1033 = vmatpush1.msra.mxu0 %v1032
        %1034 = vmatprep.subr.mxu0 0.0
        %v1035 = vand.u32 %v574, 4294901760
        %v1036 = vsub.f32 %v574, %v1035
        %v1037 = vand.u32 %v1036, 4294901760
        %v1038 = vsub.f32 %v1036, %v1037
        %v1039 = vand.u32 %v1038, 4294901760
        %1040 = vmatpush1.msra.mxu0 %v1039
        %1041 = vmatprep.subr.mxu0 0.0
        %v1042 = vand.u32 %v575, 4294901760
        %v1043 = vsub.f32 %v575, %v1042
        %v1044 = vand.u32 %v1043, 4294901760
        %v1045 = vsub.f32 %v1043, %v1044
        %v1046 = vand.u32 %v1045, 4294901760
        %1047 = vmatpush1.msra.mxu0 %v1046
        %1048 = vmatprep.subr.mxu0 0.0
        %v1049 = vand.u32 %v576, 4294901760
        %v1050 = vsub.f32 %v576, %v1049
        %v1051 = vand.u32 %v1050, 4294901760
        %v1052 = vsub.f32 %v1050, %v1051
        %v1053 = vand.u32 %v1052, 4294901760
        %1054 = vmatpush1.msra.mxu0 %v1053
        %1055 = vmatprep.subr.mxu0 0.0
        %v1056 = vand.u32 %v577, 4294901760
        %v1057 = vsub.f32 %v577, %v1056
        %v1058 = vand.u32 %v1057, 4294901760
        %v1059 = vsub.f32 %v1057, %v1058
        %v1060 = vand.u32 %v1059, 4294901760
        %1061 = vmatpush1.msra.mxu0 %v1060
        %1062 = vmatprep.subr.mxu0 0.0
        %v1063 = vand.u32 %v578, 4294901760
        %v1064 = vsub.f32 %v578, %v1063
        %v1065 = vand.u32 %v1064, 4294901760
        %v1066 = vsub.f32 %v1064, %v1065
        %v1067 = vand.u32 %v1066, 4294901760
        %1068 = vmatpush1.msra.mxu0 %v1067
        %1069 = vmatprep.subr.mxu0 0.0
        %v1070 = vand.u32 %v579, 4294901760
        %v1071 = vsub.f32 %v579, %v1070
        %v1072 = vand.u32 %v1071, 4294901760
        %v1073 = vsub.f32 %v1071, %v1072
        %v1074 = vand.u32 %v1073, 4294901760
        %1075 = vmatpush1.msra.mxu0 %v1074
        %1076 = vmatprep.subr.mxu0 0.0
        %v1077 = vand.u32 %v580, 4294901760
        %v1078 = vsub.f32 %v580, %v1077
        %v1079 = vand.u32 %v1078, 4294901760
        %v1080 = vsub.f32 %v1078, %v1079
        %v1081 = vand.u32 %v1080, 4294901760
        %1082 = vmatpush1.msra.mxu0 %v1081
        %1083 = vmatprep.subr.mxu0 0.0
        %v1084 = vand.u32 %v581, 4294901760
        %v1085 = vsub.f32 %v581, %v1084
        %v1086 = vand.u32 %v1085, 4294901760
        %v1087 = vsub.f32 %v1085, %v1086
        %v1088 = vand.u32 %v1087, 4294901760
        %1089 = vmatpush1.msra.mxu0 %v1088
        %1090 = vmatprep.subr.mxu0 0.0
        %v1091 = vand.u32 %v582, 4294901760
        %v1092 = vsub.f32 %v582, %v1091
        %v1093 = vand.u32 %v1092, 4294901760
        %v1094 = vsub.f32 %v1092, %v1093
        %v1095 = vand.u32 %v1094, 4294901760
        %1096 = vmatpush1.msra.mxu0 %v1095
        %1097 = vmatprep.subr.mxu0 0.0
        %1098 = vmatpush1.msra.mxu0 0.0
        %1099 = vmatprep.subr.mxu0 0.0
        %1100 = vmatpush1.msra.mxu0 0.0
        %1101 = vmatprep.subr.mxu0 0.0
        %1102 = vmatpush1.msra.mxu0 0.0
        %1103 = vmatprep.subr.mxu0 0.0
        %1104 = vmatpush1.msra.mxu0 0.0
        %1105 = vmatprep.subr.mxu0 0.0
        %1106 = vmatpush1.msra.mxu0 0.0
        %1107 = vmatprep.subr.mxu0 0.0
        %1108 = vmatpush1.msra.mxu0 0.0
        %1109 = vmatprep.subr.mxu0 0.0
        %1110 = vmatpush1.msra.mxu0 0.0
        %1111 = vmatprep.subr.mxu0 0.0
        %1112 = vmatpush1.msra.mxu0 0.0
        %1113 = vmatprep.subr.mxu0 0.0
        %1114 = vmatpush1.msra.mxu0 0.0
        %1115 = vmatprep.subr.mxu0 0.0
        %1116 = vmatpush1.msra.mxu0 0.0
        %1117 = vmatprep.subr.mxu0 0.0
        %1118 = vmatpush1.msra.mxu0 0.0
        %1119 = vmatprep.subr.mxu0 0.0
        %1120 = vmatpush1.msra.mxu0 0.0
        %1121 = vmatprep.subr.mxu0 0.0
        %1122 = vmatpush1.msra.mxu0 0.0
        %1123 = vmatprep.subr.mxu0 0.0
        %1124 = vmatpush1.msra.mxu0 0.0
        %1125 = vmatprep.subr.mxu0 0.0
        %1126 = vmatpush1.msra.mxu0 0.0
        %1127 = vmatprep.subr.mxu0 0.0
        %1128 = vmatpush1.msra.mxu0 0.0
        %1129 = vmatprep.mubr.f32.mxu0 0.0
        %v1130 = vand.u32 %v441, 4294901760
        %1131 = vmatmul.mubr.f32.gmra.mrb[0].mxu0 %v1130
        %v1132 = vpop.f32.mrb[0].mxu0
        %v1133 = vadd.f32 %v672, %v1132
        %v1134 = vpop.f32.mrb[0].mxu0
        %1135 = vmatprep.mubr.f32.mxu0 0.0
        %v1136 = vand.u32 %v444, 4294901760
        %1137 = vmatmul.mubr.f32.gmra.mrb[0].mxu0 %v1136
        %v1138 = vpop.f32.mrb[0].mxu0
        %v1139 = vadd.f32 %v682, %v1138
        %v1140 = vpop.f32.mrb[0].mxu0
        %1141 = vmatprep.mubr.f32.mxu0 0.0
        %v1142 = vand.u32 %v449, 4294901760
        %1143 = vmatmul.mubr.f32.gmra.mrb[0].mxu0 %v1142
        %v1144 = vpop.f32.mrb[0].mxu0
        %v1145 = vadd.f32 %v692, %v1144
        %v1146 = vpop.f32.mrb[0].mxu0
        %1147 = vmatprep.mubr.f32.mxu0 0.0
        %v1148 = vand.u32 %v452, 4294901760
        %1149 = vmatmul.mubr.f32.gmra.mrb[0].mxu0 %v1148
        %v1150 = vpop.f32.mrb[0].mxu0
        %v1151 = vadd.f32 %v702, %v1150
        %v1152 = vpop.f32.mrb[0].mxu0
        %1153 = vmatprep.mubr.f32.mxu0 0.0
        %v1154 = vand.u32 %v457, 4294901760
        %1155 = vmatmul.mubr.f32.gmra.mrb[0].mxu0 %v1154
        %v1156 = vpop.f32.mrb[0].mxu0
        %v1157 = vadd.f32 %v712, %v1156
        %v1158 = vpop.f32.mrb[0].mxu0
        %1159 = vmatprep.mubr.f32.mxu0 0.0
        %v1160 = vand.u32 %v460, 4294901760
        %1161 = vmatmul.mubr.f32.gmra.mrb[0].mxu0 %v1160
        %v1162 = vpop.f32.mrb[0].mxu0
        %v1163 = vadd.f32 %v722, %v1162
        %v1164 = vpop.f32.mrb[0].mxu0
        %1165 = vmatprep.mubr.f32.mxu0 0.0
        %v1166 = vand.u32 %v465, 4294901760
        %1167 = vmatmul.mubr.f32.gmra.mrb[0].mxu0 %v1166
        %v1168 = vpop.f32.mrb[0].mxu0
        %v1169 = vadd.f32 %v732, %v1168
        %v1170 = vpop.f32.mrb[0].mxu0
        %1171 = vmatprep.mubr.f32.mxu0 0.0
        %v1172 = vand.u32 %v468, 4294901760
        %1173 = vmatmul.mubr.f32.gmra.mrb[0].mxu0 %v1172
        %v1174 = vpop.f32.mrb[0].mxu0
        %v1175 = vadd.f32 %v742, %v1174
        %v1176 = vpop.f32.mrb[0].mxu0
        %1177 = vmatprep.mubr.f32.mxu0 0.0
        %v1178 = vand.u32 %v473, 4294901760
        %1179 = vmatmul.mubr.f32.gmra.mrb[0].mxu0 %v1178
        %v1180 = vpop.f32.mrb[0].mxu0
        %v1181 = vadd.f32 %v752, %v1180
        %v1182 = vpop.f32.mrb[0].mxu0
        %1183 = vmatprep.mubr.f32.mxu0 0.0
        %v1184 = vand.u32 %v476, 4294901760
        %1185 = vmatmul.mubr.f32.gmra.mrb[0].mxu0 %v1184
        %v1186 = vpop.f32.mrb[0].mxu0
        %v1187 = vadd.f32 %v762, %v1186
        %v1188 = vpop.f32.mrb[0].mxu0
        %1189 = vmatprep.mubr.f32.mxu0 0.0
        %v1190 = vand.u32 %v481, 4294901760
        %1191 = vmatmul.mubr.f32.gmra.mrb[0].mxu0 %v1190
        %v1192 = vpop.f32.mrb[0].mxu0
        %v1193 = vadd.f32 %v772, %v1192
        %v1194 = vpop.f32.mrb[0].mxu0
        %1195 = vmatprep.mubr.f32.mxu0 0.0
        %v1196 = vand.u32 %v484, 4294901760
        %1197 = vmatmul.mubr.f32.gmra.mrb[0].mxu0 %v1196
        %v1198 = vpop.f32.mrb[0].mxu0
        %v1199 = vadd.f32 %v782, %v1198
        %v1200 = vpop.f32.mrb[0].mxu0
        %1201 = vmatprep.mubr.f32.mxu0 0.0
        %v1202 = vand.u32 %v489, 4294901760
        %1203 = vmatmul.mubr.f32.gmra.mrb[0].mxu0 %v1202
        %v1204 = vpop.f32.mrb[0].mxu0
        %v1205 = vadd.f32 %v792, %v1204
        %v1206 = vpop.f32.mrb[0].mxu0
        %1207 = vmatprep.mubr.f32.mxu0 0.0
        %v1208 = vand.u32 %v492, 4294901760
        %1209 = vmatmul.mubr.f32.gmra.mrb[0].mxu0 %v1208
        %v1210 = vpop.f32.mrb[0].mxu0
        %v1211 = vadd.f32 %v802, %v1210
        %v1212 = vpop.f32.mrb[0].mxu0
        %1213 = vmatprep.mubr.f32.mxu0 0.0
        %v1214 = vand.u32 %v497, 4294901760
        %1215 = vmatmul.mubr.f32.gmra.mrb[0].mxu0 %v1214
        %v1216 = vpop.f32.mrb[0].mxu0
        %v1217 = vadd.f32 %v812, %v1216
        %v1218 = vpop.f32.mrb[0].mxu0
        %1219 = vmatprep.mubr.f32.mxu0 0.0
        %v1220 = vand.u32 %v500, 4294901760
        %1221 = vmatmul.mubr.f32.gmra.mrb[0].mxu0 %v1220
        %v1222 = vpop.f32.mrb[0].mxu0
        %v1223 = vadd.f32 %v822, %v1222
        %v1224 = vpop.f32.mrb[0].mxu0
        %1225 = vmatprep.mubr.f32.mxu0 0.0
        %v1226 = vand.u32 %v505, 4294901760
        %1227 = vmatmul.mubr.f32.gmra.mrb[0].mxu0 %v1226
        %v1228 = vpop.f32.mrb[0].mxu0
        %v1229 = vadd.f32 %v832, %v1228
        %v1230 = vpop.f32.mrb[0].mxu0
        %1231 = vmatprep.mubr.f32.mxu0 0.0
        %v1232 = vand.u32 %v508, 4294901760
        %1233 = vmatmul.mubr.f32.gmra.mrb[0].mxu0 %v1232
        %v1234 = vpop.f32.mrb[0].mxu0
        %v1235 = vadd.f32 %v842, %v1234
        %v1236 = vpop.f32.mrb[0].mxu0
        %1237 = vmatprep.mubr.f32.mxu0 0.0
        %v1238 = vand.u32 %v513, 4294901760
        %1239 = vmatmul.mubr.f32.gmra.mrb[0].mxu0 %v1238
        %v1240 = vpop.f32.mrb[0].mxu0
        %v1241 = vadd.f32 %v852, %v1240
        %v1242 = vpop.f32.mrb[0].mxu0
        %1243 = vmatprep.mubr.f32.mxu0 0.0
        %v1244 = vand.u32 %v516, 4294901760
        %1245 = vmatmul.mubr.f32.gmra.mrb[0].mxu0 %v1244
        %v1246 = vpop.f32.mrb[0].mxu0
        %v1247 = vadd.f32 %v862, %v1246
        %v1248 = vpop.f32.mrb[0].mxu0
        %1249 = vmatprep.mubr.f32.mxu0 0.0
        %v1250 = vand.u32 %v521, 4294901760
        %1251 = vmatmul.mubr.f32.gmra.mrb[0].mxu0 %v1250
        %v1252 = vpop.f32.mrb[0].mxu0
        %v1253 = vadd.f32 %v872, %v1252
        %v1254 = vpop.f32.mrb[0].mxu0
        %1255 = vmatprep.mubr.f32.mxu0 0.0
        %v1256 = vand.u32 %v524, 4294901760
        %1257 = vmatmul.mubr.f32.gmra.mrb[0].mxu0 %v1256
        %v1258 = vpop.f32.mrb[0].mxu0
        %v1259 = vadd.f32 %v882, %v1258
        %v1260 = vpop.f32.mrb[0].mxu0
        %1261 = vmatprep.mubr.f32.mxu0 0.0
        %v1262 = vand.u32 %v529, 4294901760
        %1263 = vmatmul.mubr.f32.gmra.mrb[0].mxu0 %v1262
        %v1264 = vpop.f32.mrb[0].mxu0
        %v1265 = vadd.f32 %v892, %v1264
        %v1266 = vpop.f32.mrb[0].mxu0
        %1267 = vmatprep.mubr.f32.mxu0 0.0
        %v1268 = vand.u32 %v532, 4294901760
        %1269 = vmatmul.mubr.f32.gmra.mrb[0].mxu0 %v1268
        %v1270 = vpop.f32.mrb[0].mxu0
        %v1271 = vadd.f32 %v902, %v1270
        %v1272 = vpop.f32.mrb[0].mxu0
        %1273 = vmatprep.mubr.f32.mxu0 0.0
        %v1274 = vand.u32 %v537, 4294901760
        %1275 = vmatmul.mubr.f32.gmra.mrb[0].mxu0 %v1274
        %v1276 = vpop.f32.mrb[0].mxu0
        %v1277 = vadd.f32 %v912, %v1276
        %v1278 = vpop.f32.mrb[0].mxu0
        %1279 = vmatprep.mubr.f32.mxu0 0.0
        %v1280 = vand.u32 %v540, 4294901760
        %1281 = vmatmul.mubr.f32.gmra.mrb[0].mxu0 %v1280
        %v1282 = vpop.f32.mrb[0].mxu0
        %v1283 = vadd.f32 %v922, %v1282
        %v1284 = vpop.f32.mrb[0].mxu0
        %1285 = vmatprep.mubr.f32.mxu0 0.0
        %v1286 = vand.u32 %v545, 4294901760
        %1287 = vmatmul.mubr.f32.gmra.mrb[0].mxu0 %v1286
        %v1288 = vpop.f32.mrb[0].mxu0
        %v1289 = vadd.f32 %v932, %v1288
        %v1290 = vpop.f32.mrb[0].mxu0
        %1291 = vmatprep.mubr.f32.mxu0 0.0
        %v1292 = vand.u32 %v548, 4294901760
        %1293 = vmatmul.mubr.f32.gmra.mrb[0].mxu0 %v1292
        %v1294 = vpop.f32.mrb[0].mxu0
        %v1295 = vadd.f32 %v942, %v1294
        %v1296 = vpop.f32.mrb[0].mxu0
        %1297 = vmatprep.mubr.f32.mxu0 0.0
        %v1298 = vand.u32 %v553, 4294901760
        %1299 = vmatmul.mubr.f32.gmra.mrb[0].mxu0 %v1298
        %v1300 = vpop.f32.mrb[0].mxu0
        %v1301 = vadd.f32 %v952, %v1300
        %v1302 = vpop.f32.mrb[0].mxu0
        %1303 = vmatprep.mubr.f32.mxu0 0.0
        %v1304 = vand.u32 %v556, 4294901760
        %1305 = vmatmul.mubr.f32.gmra.mrb[0].mxu0 %v1304
        %v1306 = vpop.f32.mrb[0].mxu0
        %v1307 = vadd.f32 %v962, %v1306
        %v1308 = vpop.f32.mrb[0].mxu0
        %1309 = vmatprep.mubr.f32.mxu0 0.0
        %v1310 = vand.u32 %v561, 4294901760
        %1311 = vmatmul.mubr.f32.gmra.mrb[0].mxu0 %v1310
        %v1312 = vpop.f32.mrb[0].mxu0
        %v1313 = vadd.f32 %v972, %v1312
        %v1314 = vpop.f32.mrb[0].mxu0
        %1315 = vmatprep.mubr.f32.mxu0 0.0
        %v1316 = vand.u32 %v564, 4294901760
        %1317 = vmatmul.mubr.f32.gmra.mrb[0].mxu0 %v1316
        %v1318 = vpop.f32.mrb[0].mxu0
        %v1319 = vadd.f32 %v982, %v1318
        %v1320 = vpop.f32.mrb[0].mxu0
        %1321 = vdwg.mxu0
        %1322 = vmatprep.subr.mxu0 0.0
        %v1323 = vand.u32 %v567, 4294901760
        %v1324 = vsub.f32 %v567, %v1323
        %1325 = vmatpush1.msra.mxu0 %v1324
        %1326 = vmatprep.subr.mxu0 0.0
        %v1327 = vand.u32 %v568, 4294901760
        %v1328 = vsub.f32 %v568, %v1327
        %1329 = vmatpush1.msra.mxu0 %v1328
        %1330 = vmatprep.subr.mxu0 0.0
        %v1331 = vand.u32 %v569, 4294901760
        %v1332 = vsub.f32 %v569, %v1331
        %1333 = vmatpush1.msra.mxu0 %v1332
        %1334 = vmatprep.subr.mxu0 0.0
        %v1335 = vand.u32 %v570, 4294901760
        %v1336 = vsub.f32 %v570, %v1335
        %1337 = vmatpush1.msra.mxu0 %v1336
        %1338 = vmatprep.subr.mxu0 0.0
        %v1339 = vand.u32 %v571, 4294901760
        %v1340 = vsub.f32 %v571, %v1339
        %1341 = vmatpush1.msra.mxu0 %v1340
        %1342 = vmatprep.subr.mxu0 0.0
        %v1343 = vand.u32 %v572, 4294901760
        %v1344 = vsub.f32 %v572, %v1343
        %1345 = vmatpush1.msra.mxu0 %v1344
        %1346 = vmatprep.subr.mxu0 0.0
        %v1347 = vand.u32 %v573, 4294901760
        %v1348 = vsub.f32 %v573, %v1347
        %1349 = vmatpush1.msra.mxu0 %v1348
        %1350 = vmatprep.subr.mxu0 0.0
        %v1351 = vand.u32 %v574, 4294901760
        %v1352 = vsub.f32 %v574, %v1351
        %1353 = vmatpush1.msra.mxu0 %v1352
        %1354 = vmatprep.subr.mxu0 0.0
        %v1355 = vand.u32 %v575, 4294901760
        %v1356 = vsub.f32 %v575, %v1355
        %1357 = vmatpush1.msra.mxu0 %v1356
        %1358 = vmatprep.subr.mxu0 0.0
        %v1359 = vand.u32 %v576, 4294901760
        %v1360 = vsub.f32 %v576, %v1359
        %1361 = vmatpush1.msra.mxu0 %v1360
        %1362 = vmatprep.subr.mxu0 0.0
        %v1363 = vand.u32 %v577, 4294901760
        %v1364 = vsub.f32 %v577, %v1363
        %1365 = vmatpush1.msra.mxu0 %v1364
        %1366 = vmatprep.subr.mxu0 0.0
        %v1367 = vand.u32 %v578, 4294901760
        %v1368 = vsub.f32 %v578, %v1367
        %1369 = vmatpush1.msra.mxu0 %v1368
        %1370 = vmatprep.subr.mxu0 0.0
        %v1371 = vand.u32 %v579, 4294901760
        %v1372 = vsub.f32 %v579, %v1371
        %1373 = vmatpush1.msra.mxu0 %v1372
        %1374 = vmatprep.subr.mxu0 0.0
        %v1375 = vand.u32 %v580, 4294901760
        %v1376 = vsub.f32 %v580, %v1375
        %1377 = vmatpush1.msra.mxu0 %v1376
        %1378 = vmatprep.subr.mxu0 0.0
        %v1379 = vand.u32 %v581, 4294901760
        %v1380 = vsub.f32 %v581, %v1379
        %1381 = vmatpush1.msra.mxu0 %v1380
        %1382 = vmatprep.subr.mxu0 0.0
        %v1383 = vand.u32 %v582, 4294901760
        %v1384 = vsub.f32 %v582, %v1383
        %1385 = vmatpush1.msra.mxu0 %v1384
        %1386 = vmatprep.subr.mxu0 0.0
        %1387 = vmatpush1.msra.mxu0 0.0
        %1388 = vmatprep.subr.mxu0 0.0
        %1389 = vmatpush1.msra.mxu0 0.0
        %1390 = vmatprep.subr.mxu0 0.0
        %1391 = vmatpush1.msra.mxu0 0.0
        %1392 = vmatprep.subr.mxu0 0.0
        %1393 = vmatpush1.msra.mxu0 0.0
        %1394 = vmatprep.subr.mxu0 0.0
        %1395 = vmatpush1.msra.mxu0 0.0
        %1396 = vmatprep.subr.mxu0 0.0
        %1397 = vmatpush1.msra.mxu0 0.0
        %1398 = vmatprep.subr.mxu0 0.0
        %1399 = vmatpush1.msra.mxu0 0.0
        %1400 = vmatprep.subr.mxu0 0.0
        %1401 = vmatpush1.msra.mxu0 0.0
        %1402 = vmatprep.subr.mxu0 0.0
        %1403 = vmatpush1.msra.mxu0 0.0
        %1404 = vmatprep.subr.mxu0 0.0
        %1405 = vmatpush1.msra.mxu0 0.0
        %1406 = vmatprep.subr.mxu0 0.0
        %1407 = vmatpush1.msra.mxu0 0.0
        %1408 = vmatprep.subr.mxu0 0.0
        %1409 = vmatpush1.msra.mxu0 0.0
        %1410 = vmatprep.subr.mxu0 0.0
        %1411 = vmatpush1.msra.mxu0 0.0
        %1412 = vmatprep.subr.mxu0 0.0
        %1413 = vmatpush1.msra.mxu0 0.0
        %1414 = vmatprep.subr.mxu0 0.0
        %1415 = vmatpush1.msra.mxu0 0.0
        %1416 = vmatprep.subr.mxu0 0.0
        %1417 = vmatpush1.msra.mxu0 0.0
        %1418 = vmatprep.mubr.f32.mxu0 0.0
        %v1419 = vand.u32 %v441, 4294901760
        %v1420 = vsub.f32 %v441, %v1419
        %1421 = vmatmul.mubr.f32.gmra.mrb[0].mxu0 %v1420
        %v1422 = vpop.f32.mrb[0].mxu0
        %v1423 = vadd.f32 %v1133, %v1422
        %v1424 = vpop.f32.mrb[0].mxu0
        %1425 = vmatprep.mubr.f32.mxu0 0.0
        %v1426 = vand.u32 %v444, 4294901760
        %v1427 = vsub.f32 %v444, %v1426
        %1428 = vmatmul.mubr.f32.gmra.mrb[0].mxu0 %v1427
        %v1429 = vpop.f32.mrb[0].mxu0
        %v1430 = vadd.f32 %v1139, %v1429
        %v1431 = vpop.f32.mrb[0].mxu0
        %1432 = vmatprep.mubr.f32.mxu0 0.0
        %v1433 = vand.u32 %v449, 4294901760
        %v1434 = vsub.f32 %v449, %v1433
        %1435 = vmatmul.mubr.f32.gmra.mrb[0].mxu0 %v1434
        %v1436 = vpop.f32.mrb[0].mxu0
        %v1437 = vadd.f32 %v1145, %v1436
        %v1438 = vpop.f32.mrb[0].mxu0
        %1439 = vmatprep.mubr.f32.mxu0 0.0
        %v1440 = vand.u32 %v452, 4294901760
        %v1441 = vsub.f32 %v452, %v1440
        %1442 = vmatmul.mubr.f32.gmra.mrb[0].mxu0 %v1441
        %v1443 = vpop.f32.mrb[0].mxu0
        %v1444 = vadd.f32 %v1151, %v1443
        %v1445 = vpop.f32.mrb[0].mxu0
        %1446 = vmatprep.mubr.f32.mxu0 0.0
        %v1447 = vand.u32 %v457, 4294901760
        %v1448 = vsub.f32 %v457, %v1447
        %1449 = vmatmul.mubr.f32.gmra.mrb[0].mxu0 %v1448
        %v1450 = vpop.f32.mrb[0].mxu0
        %v1451 = vadd.f32 %v1157, %v1450
        %v1452 = vpop.f32.mrb[0].mxu0
        %1453 = vmatprep.mubr.f32.mxu0 0.0
        %v1454 = vand.u32 %v460, 4294901760
        %v1455 = vsub.f32 %v460, %v1454
        %1456 = vmatmul.mubr.f32.gmra.mrb[0].mxu0 %v1455
        %v1457 = vpop.f32.mrb[0].mxu0
        %v1458 = vadd.f32 %v1163, %v1457
        %v1459 = vpop.f32.mrb[0].mxu0
        %1460 = vmatprep.mubr.f32.mxu0 0.0
        %v1461 = vand.u32 %v465, 4294901760
        %v1462 = vsub.f32 %v465, %v1461
        %1463 = vmatmul.mubr.f32.gmra.mrb[0].mxu0 %v1462
        %v1464 = vpop.f32.mrb[0].mxu0
        %v1465 = vadd.f32 %v1169, %v1464
        %v1466 = vpop.f32.mrb[0].mxu0
        %1467 = vmatprep.mubr.f32.mxu0 0.0
        %v1468 = vand.u32 %v468, 4294901760
        %v1469 = vsub.f32 %v468, %v1468
        %1470 = vmatmul.mubr.f32.gmra.mrb[0].mxu0 %v1469
        %v1471 = vpop.f32.mrb[0].mxu0
        %v1472 = vadd.f32 %v1175, %v1471
        %v1473 = vpop.f32.mrb[0].mxu0
        %1474 = vmatprep.mubr.f32.mxu0 0.0
        %v1475 = vand.u32 %v473, 4294901760
        %v1476 = vsub.f32 %v473, %v1475
        %1477 = vmatmul.mubr.f32.gmra.mrb[0].mxu0 %v1476
        %v1478 = vpop.f32.mrb[0].mxu0
        %v1479 = vadd.f32 %v1181, %v1478
        %v1480 = vpop.f32.mrb[0].mxu0
        %1481 = vmatprep.mubr.f32.mxu0 0.0
        %v1482 = vand.u32 %v476, 4294901760
        %v1483 = vsub.f32 %v476, %v1482
        %1484 = vmatmul.mubr.f32.gmra.mrb[0].mxu0 %v1483
        %v1485 = vpop.f32.mrb[0].mxu0
        %v1486 = vadd.f32 %v1187, %v1485
        %v1487 = vpop.f32.mrb[0].mxu0
        %1488 = vmatprep.mubr.f32.mxu0 0.0
        %v1489 = vand.u32 %v481, 4294901760
        %v1490 = vsub.f32 %v481, %v1489
        %1491 = vmatmul.mubr.f32.gmra.mrb[0].mxu0 %v1490
        %v1492 = vpop.f32.mrb[0].mxu0
        %v1493 = vadd.f32 %v1193, %v1492
        %v1494 = vpop.f32.mrb[0].mxu0
        %1495 = vmatprep.mubr.f32.mxu0 0.0
        %v1496 = vand.u32 %v484, 4294901760
        %v1497 = vsub.f32 %v484, %v1496
        %1498 = vmatmul.mubr.f32.gmra.mrb[0].mxu0 %v1497
        %v1499 = vpop.f32.mrb[0].mxu0
        %v1500 = vadd.f32 %v1199, %v1499
        %v1501 = vpop.f32.mrb[0].mxu0
        %1502 = vmatprep.mubr.f32.mxu0 0.0
        %v1503 = vand.u32 %v489, 4294901760
        %v1504 = vsub.f32 %v489, %v1503
        %1505 = vmatmul.mubr.f32.gmra.mrb[0].mxu0 %v1504
        %v1506 = vpop.f32.mrb[0].mxu0
        %v1507 = vadd.f32 %v1205, %v1506
        %v1508 = vpop.f32.mrb[0].mxu0
        %1509 = vmatprep.mubr.f32.mxu0 0.0
        %v1510 = vand.u32 %v492, 4294901760
        %v1511 = vsub.f32 %v492, %v1510
        %1512 = vmatmul.mubr.f32.gmra.mrb[0].mxu0 %v1511
        %v1513 = vpop.f32.mrb[0].mxu0
        %v1514 = vadd.f32 %v1211, %v1513
        %v1515 = vpop.f32.mrb[0].mxu0
        %1516 = vmatprep.mubr.f32.mxu0 0.0
        %v1517 = vand.u32 %v497, 4294901760
        %v1518 = vsub.f32 %v497, %v1517
        %1519 = vmatmul.mubr.f32.gmra.mrb[0].mxu0 %v1518
        %v1520 = vpop.f32.mrb[0].mxu0
        %v1521 = vadd.f32 %v1217, %v1520
        %v1522 = vpop.f32.mrb[0].mxu0
        %1523 = vmatprep.mubr.f32.mxu0 0.0
        %v1524 = vand.u32 %v500, 4294901760
        %v1525 = vsub.f32 %v500, %v1524
        %1526 = vmatmul.mubr.f32.gmra.mrb[0].mxu0 %v1525
        %v1527 = vpop.f32.mrb[0].mxu0
        %v1528 = vadd.f32 %v1223, %v1527
        %v1529 = vpop.f32.mrb[0].mxu0
        %1530 = vmatprep.mubr.f32.mxu0 0.0
        %v1531 = vand.u32 %v505, 4294901760
        %v1532 = vsub.f32 %v505, %v1531
        %1533 = vmatmul.mubr.f32.gmra.mrb[0].mxu0 %v1532
        %v1534 = vpop.f32.mrb[0].mxu0
        %v1535 = vadd.f32 %v1229, %v1534
        %v1536 = vpop.f32.mrb[0].mxu0
        %1537 = vmatprep.mubr.f32.mxu0 0.0
        %v1538 = vand.u32 %v508, 4294901760
        %v1539 = vsub.f32 %v508, %v1538
        %1540 = vmatmul.mubr.f32.gmra.mrb[0].mxu0 %v1539
        %v1541 = vpop.f32.mrb[0].mxu0
        %v1542 = vadd.f32 %v1235, %v1541
        %v1543 = vpop.f32.mrb[0].mxu0
        %1544 = vmatprep.mubr.f32.mxu0 0.0
        %v1545 = vand.u32 %v513, 4294901760
        %v1546 = vsub.f32 %v513, %v1545
        %1547 = vmatmul.mubr.f32.gmra.mrb[0].mxu0 %v1546
        %v1548 = vpop.f32.mrb[0].mxu0
        %v1549 = vadd.f32 %v1241, %v1548
        %v1550 = vpop.f32.mrb[0].mxu0
        %1551 = vmatprep.mubr.f32.mxu0 0.0
        %v1552 = vand.u32 %v516, 4294901760
        %v1553 = vsub.f32 %v516, %v1552
        %1554 = vmatmul.mubr.f32.gmra.mrb[0].mxu0 %v1553
        %v1555 = vpop.f32.mrb[0].mxu0
        %v1556 = vadd.f32 %v1247, %v1555
        %v1557 = vpop.f32.mrb[0].mxu0
        %1558 = vmatprep.mubr.f32.mxu0 0.0
        %v1559 = vand.u32 %v521, 4294901760
        %v1560 = vsub.f32 %v521, %v1559
        %1561 = vmatmul.mubr.f32.gmra.mrb[0].mxu0 %v1560
        %v1562 = vpop.f32.mrb[0].mxu0
        %v1563 = vadd.f32 %v1253, %v1562
        %v1564 = vpop.f32.mrb[0].mxu0
        %1565 = vmatprep.mubr.f32.mxu0 0.0
        %v1566 = vand.u32 %v524, 4294901760
        %v1567 = vsub.f32 %v524, %v1566
        %1568 = vmatmul.mubr.f32.gmra.mrb[0].mxu0 %v1567
        %v1569 = vpop.f32.mrb[0].mxu0
        %v1570 = vadd.f32 %v1259, %v1569
        %v1571 = vpop.f32.mrb[0].mxu0
        %1572 = vmatprep.mubr.f32.mxu0 0.0
        %v1573 = vand.u32 %v529, 4294901760
        %v1574 = vsub.f32 %v529, %v1573
        %1575 = vmatmul.mubr.f32.gmra.mrb[0].mxu0 %v1574
        %v1576 = vpop.f32.mrb[0].mxu0
        %v1577 = vadd.f32 %v1265, %v1576
        %v1578 = vpop.f32.mrb[0].mxu0
        %1579 = vmatprep.mubr.f32.mxu0 0.0
        %v1580 = vand.u32 %v532, 4294901760
        %v1581 = vsub.f32 %v532, %v1580
        %1582 = vmatmul.mubr.f32.gmra.mrb[0].mxu0 %v1581
        %v1583 = vpop.f32.mrb[0].mxu0
        %v1584 = vadd.f32 %v1271, %v1583
        %v1585 = vpop.f32.mrb[0].mxu0
        %1586 = vmatprep.mubr.f32.mxu0 0.0
        %v1587 = vand.u32 %v537, 4294901760
        %v1588 = vsub.f32 %v537, %v1587
        %1589 = vmatmul.mubr.f32.gmra.mrb[0].mxu0 %v1588
        %v1590 = vpop.f32.mrb[0].mxu0
        %v1591 = vadd.f32 %v1277, %v1590
        %v1592 = vpop.f32.mrb[0].mxu0
        %1593 = vmatprep.mubr.f32.mxu0 0.0
        %v1594 = vand.u32 %v540, 4294901760
        %v1595 = vsub.f32 %v540, %v1594
        %1596 = vmatmul.mubr.f32.gmra.mrb[0].mxu0 %v1595
        %v1597 = vpop.f32.mrb[0].mxu0
        %v1598 = vadd.f32 %v1283, %v1597
        %v1599 = vpop.f32.mrb[0].mxu0
        %1600 = vmatprep.mubr.f32.mxu0 0.0
        %v1601 = vand.u32 %v545, 4294901760
        %v1602 = vsub.f32 %v545, %v1601
        %1603 = vmatmul.mubr.f32.gmra.mrb[0].mxu0 %v1602
        %v1604 = vpop.f32.mrb[0].mxu0
        %v1605 = vadd.f32 %v1289, %v1604
        %v1606 = vpop.f32.mrb[0].mxu0
        %1607 = vmatprep.mubr.f32.mxu0 0.0
        %v1608 = vand.u32 %v548, 4294901760
        %v1609 = vsub.f32 %v548, %v1608
        %1610 = vmatmul.mubr.f32.gmra.mrb[0].mxu0 %v1609
        %v1611 = vpop.f32.mrb[0].mxu0
        %v1612 = vadd.f32 %v1295, %v1611
        %v1613 = vpop.f32.mrb[0].mxu0
        %1614 = vmatprep.mubr.f32.mxu0 0.0
        %v1615 = vand.u32 %v553, 4294901760
        %v1616 = vsub.f32 %v553, %v1615
        %1617 = vmatmul.mubr.f32.gmra.mrb[0].mxu0 %v1616
        %v1618 = vpop.f32.mrb[0].mxu0
        %v1619 = vadd.f32 %v1301, %v1618
        %v1620 = vpop.f32.mrb[0].mxu0
        %1621 = vmatprep.mubr.f32.mxu0 0.0
        %v1622 = vand.u32 %v556, 4294901760
        %v1623 = vsub.f32 %v556, %v1622
        %1624 = vmatmul.mubr.f32.gmra.mrb[0].mxu0 %v1623
        %v1625 = vpop.f32.mrb[0].mxu0
        %v1626 = vadd.f32 %v1307, %v1625
        %v1627 = vpop.f32.mrb[0].mxu0
        %1628 = vmatprep.mubr.f32.mxu0 0.0
        %v1629 = vand.u32 %v561, 4294901760
        %v1630 = vsub.f32 %v561, %v1629
        %1631 = vmatmul.mubr.f32.gmra.mrb[0].mxu0 %v1630
        %v1632 = vpop.f32.mrb[0].mxu0
        %v1633 = vadd.f32 %v1313, %v1632
        %v1634 = vpop.f32.mrb[0].mxu0
        %1635 = vmatprep.mubr.f32.mxu0 0.0
        %v1636 = vand.u32 %v564, 4294901760
        %v1637 = vsub.f32 %v564, %v1636
        %1638 = vmatmul.mubr.f32.gmra.mrb[0].mxu0 %v1637
        %v1639 = vpop.f32.mrb[0].mxu0
        %v1640 = vadd.f32 %v1319, %v1639
        %v1641 = vpop.f32.mrb[0].mxu0
        %1642 = vdwg.mxu0
        %1643 = vmatprep.subr.mxu0 0.0
        %v1644 = vand.u32 %v567, 4294901760
        %1645 = vmatpush1.msra.mxu0 %v1644
        %1646 = vmatprep.subr.mxu0 0.0
        %v1647 = vand.u32 %v568, 4294901760
        %1648 = vmatpush1.msra.mxu0 %v1647
        %1649 = vmatprep.subr.mxu0 0.0
        %v1650 = vand.u32 %v569, 4294901760
        %1651 = vmatpush1.msra.mxu0 %v1650
        %1652 = vmatprep.subr.mxu0 0.0
        %v1653 = vand.u32 %v570, 4294901760
        %1654 = vmatpush1.msra.mxu0 %v1653
        %1655 = vmatprep.subr.mxu0 0.0
        %v1656 = vand.u32 %v571, 4294901760
        %1657 = vmatpush1.msra.mxu0 %v1656
        %1658 = vmatprep.subr.mxu0 0.0
        %v1659 = vand.u32 %v572, 4294901760
        %1660 = vmatpush1.msra.mxu0 %v1659
        %1661 = vmatprep.subr.mxu0 0.0
        %v1662 = vand.u32 %v573, 4294901760
        %1663 = vmatpush1.msra.mxu0 %v1662
        %1664 = vmatprep.subr.mxu0 0.0
        %v1665 = vand.u32 %v574, 4294901760
        %1666 = vmatpush1.msra.mxu0 %v1665
        %1667 = vmatprep.subr.mxu0 0.0
        %v1668 = vand.u32 %v575, 4294901760
        %1669 = vmatpush1.msra.mxu0 %v1668
        %1670 = vmatprep.subr.mxu0 0.0
        %v1671 = vand.u32 %v576, 4294901760
        %1672 = vmatpush1.msra.mxu0 %v1671
        %1673 = vmatprep.subr.mxu0 0.0
        %v1674 = vand.u32 %v577, 4294901760
        %1675 = vmatpush1.msra.mxu0 %v1674
        %1676 = vmatprep.subr.mxu0 0.0
        %v1677 = vand.u32 %v578, 4294901760
        %1678 = vmatpush1.msra.mxu0 %v1677
        %1679 = vmatprep.subr.mxu0 0.0
        %v1680 = vand.u32 %v579, 4294901760
        %1681 = vmatpush1.msra.mxu0 %v1680
        %1682 = vmatprep.subr.mxu0 0.0
        %v1683 = vand.u32 %v580, 4294901760
        %1684 = vmatpush1.msra.mxu0 %v1683
        %1685 = vmatprep.subr.mxu0 0.0
        %v1686 = vand.u32 %v581, 4294901760
        %1687 = vmatpush1.msra.mxu0 %v1686
        %1688 = vmatprep.subr.mxu0 0.0
        %v1689 = vand.u32 %v582, 4294901760
        %1690 = vmatpush1.msra.mxu0 %v1689
        %1691 = vmatprep.subr.mxu0 0.0
        %1692 = vmatpush1.msra.mxu0 0.0
        %1693 = vmatprep.subr.mxu0 0.0
        %1694 = vmatpush1.msra.mxu0 0.0
        %1695 = vmatprep.subr.mxu0 0.0
        %1696 = vmatpush1.msra.mxu0 0.0
        %1697 = vmatprep.subr.mxu0 0.0
        %1698 = vmatpush1.msra.mxu0 0.0
        %1699 = vmatprep.subr.mxu0 0.0
        %1700 = vmatpush1.msra.mxu0 0.0
        %1701 = vmatprep.subr.mxu0 0.0
        %1702 = vmatpush1.msra.mxu0 0.0
        %1703 = vmatprep.subr.mxu0 0.0
        %1704 = vmatpush1.msra.mxu0 0.0
        %1705 = vmatprep.subr.mxu0 0.0
        %1706 = vmatpush1.msra.mxu0 0.0
        %1707 = vmatprep.subr.mxu0 0.0
        %1708 = vmatpush1.msra.mxu0 0.0
        %1709 = vmatprep.subr.mxu0 0.0
        %1710 = vmatpush1.msra.mxu0 0.0
        %1711 = vmatprep.subr.mxu0 0.0
        %1712 = vmatpush1.msra.mxu0 0.0
        %1713 = vmatprep.subr.mxu0 0.0
        %1714 = vmatpush1.msra.mxu0 0.0
        %1715 = vmatprep.subr.mxu0 0.0
        %1716 = vmatpush1.msra.mxu0 0.0
        %1717 = vmatprep.subr.mxu0 0.0
        %1718 = vmatpush1.msra.mxu0 0.0
        %1719 = vmatprep.subr.mxu0 0.0
        %1720 = vmatpush1.msra.mxu0 0.0
        %1721 = vmatprep.subr.mxu0 0.0
        %1722 = vmatpush1.msra.mxu0 0.0
        %1723 = vmatprep.mubr.f32.mxu0 0.0
        %v1724 = vand.u32 %v441, 4294901760
        %v1725 = vsub.f32 %v441, %v1724
        %v1726 = vand.u32 %v1725, 4294901760
        %1727 = vmatmul.mubr.f32.gmra.mrb[0].mxu0 %v1726
        %v1728 = vpop.f32.mrb[0].mxu0
        %v1729 = vadd.f32 %v1423, %v1728
        %v1730 = vpop.f32.mrb[0].mxu0
        %1731 = vmatprep.mubr.f32.mxu0 0.0
        %v1732 = vand.u32 %v444, 4294901760
        %v1733 = vsub.f32 %v444, %v1732
        %v1734 = vand.u32 %v1733, 4294901760
        %1735 = vmatmul.mubr.f32.gmra.mrb[0].mxu0 %v1734
        %v1736 = vpop.f32.mrb[0].mxu0
        %v1737 = vadd.f32 %v1430, %v1736
        %v1738 = vpop.f32.mrb[0].mxu0
        %1739 = vmatprep.mubr.f32.mxu0 0.0
        %v1740 = vand.u32 %v449, 4294901760
        %v1741 = vsub.f32 %v449, %v1740
        %v1742 = vand.u32 %v1741, 4294901760
        %1743 = vmatmul.mubr.f32.gmra.mrb[0].mxu0 %v1742
        %v1744 = vpop.f32.mrb[0].mxu0
        %v1745 = vadd.f32 %v1437, %v1744
        %v1746 = vpop.f32.mrb[0].mxu0
        %1747 = vmatprep.mubr.f32.mxu0 0.0
        %v1748 = vand.u32 %v452, 4294901760
        %v1749 = vsub.f32 %v452, %v1748
        %v1750 = vand.u32 %v1749, 4294901760
        %1751 = vmatmul.mubr.f32.gmra.mrb[0].mxu0 %v1750
        %v1752 = vpop.f32.mrb[0].mxu0
        %v1753 = vadd.f32 %v1444, %v1752
        %v1754 = vpop.f32.mrb[0].mxu0
        %1755 = vmatprep.mubr.f32.mxu0 0.0
        %v1756 = vand.u32 %v457, 4294901760
        %v1757 = vsub.f32 %v457, %v1756
        %v1758 = vand.u32 %v1757, 4294901760
        %1759 = vmatmul.mubr.f32.gmra.mrb[0].mxu0 %v1758
        %v1760 = vpop.f32.mrb[0].mxu0
        %v1761 = vadd.f32 %v1451, %v1760
        %v1762 = vpop.f32.mrb[0].mxu0
        %1763 = vmatprep.mubr.f32.mxu0 0.0
        %v1764 = vand.u32 %v460, 4294901760
        %v1765 = vsub.f32 %v460, %v1764
        %v1766 = vand.u32 %v1765, 4294901760
        %1767 = vmatmul.mubr.f32.gmra.mrb[0].mxu0 %v1766
        %v1768 = vpop.f32.mrb[0].mxu0
        %v1769 = vadd.f32 %v1458, %v1768
        %v1770 = vpop.f32.mrb[0].mxu0
        %1771 = vmatprep.mubr.f32.mxu0 0.0
        %v1772 = vand.u32 %v465, 4294901760
        %v1773 = vsub.f32 %v465, %v1772
        %v1774 = vand.u32 %v1773, 4294901760
        %1775 = vmatmul.mubr.f32.gmra.mrb[0].mxu0 %v1774
        %v1776 = vpop.f32.mrb[0].mxu0
        %v1777 = vadd.f32 %v1465, %v1776
        %v1778 = vpop.f32.mrb[0].mxu0
        %1779 = vmatprep.mubr.f32.mxu0 0.0
        %v1780 = vand.u32 %v468, 4294901760
        %v1781 = vsub.f32 %v468, %v1780
        %v1782 = vand.u32 %v1781, 4294901760
        %1783 = vmatmul.mubr.f32.gmra.mrb[0].mxu0 %v1782
        %v1784 = vpop.f32.mrb[0].mxu0
        %v1785 = vadd.f32 %v1472, %v1784
        %v1786 = vpop.f32.mrb[0].mxu0
        %1787 = vmatprep.mubr.f32.mxu0 0.0
        %v1788 = vand.u32 %v473, 4294901760
        %v1789 = vsub.f32 %v473, %v1788
        %v1790 = vand.u32 %v1789, 4294901760
        %1791 = vmatmul.mubr.f32.gmra.mrb[0].mxu0 %v1790
        %v1792 = vpop.f32.mrb[0].mxu0
        %v1793 = vadd.f32 %v1479, %v1792
        %v1794 = vpop.f32.mrb[0].mxu0
        %1795 = vmatprep.mubr.f32.mxu0 0.0
        %v1796 = vand.u32 %v476, 4294901760
        %v1797 = vsub.f32 %v476, %v1796
        %v1798 = vand.u32 %v1797, 4294901760
        %1799 = vmatmul.mubr.f32.gmra.mrb[0].mxu0 %v1798
        %v1800 = vpop.f32.mrb[0].mxu0
        %v1801 = vadd.f32 %v1486, %v1800
        %v1802 = vpop.f32.mrb[0].mxu0
        %1803 = vmatprep.mubr.f32.mxu0 0.0
        %v1804 = vand.u32 %v481, 4294901760
        %v1805 = vsub.f32 %v481, %v1804
        %v1806 = vand.u32 %v1805, 4294901760
        %1807 = vmatmul.mubr.f32.gmra.mrb[0].mxu0 %v1806
        %v1808 = vpop.f32.mrb[0].mxu0
        %v1809 = vadd.f32 %v1493, %v1808
        %v1810 = vpop.f32.mrb[0].mxu0
        %1811 = vmatprep.mubr.f32.mxu0 0.0
        %v1812 = vand.u32 %v484, 4294901760
        %v1813 = vsub.f32 %v484, %v1812
        %v1814 = vand.u32 %v1813, 4294901760
        %1815 = vmatmul.mubr.f32.gmra.mrb[0].mxu0 %v1814
        %v1816 = vpop.f32.mrb[0].mxu0
        %v1817 = vadd.f32 %v1500, %v1816
        %v1818 = vpop.f32.mrb[0].mxu0
        %1819 = vmatprep.mubr.f32.mxu0 0.0
        %v1820 = vand.u32 %v489, 4294901760
        %v1821 = vsub.f32 %v489, %v1820
        %v1822 = vand.u32 %v1821, 4294901760
        %1823 = vmatmul.mubr.f32.gmra.mrb[0].mxu0 %v1822
        %v1824 = vpop.f32.mrb[0].mxu0
        %v1825 = vadd.f32 %v1507, %v1824
        %v1826 = vpop.f32.mrb[0].mxu0
        %1827 = vmatprep.mubr.f32.mxu0 0.0
        %v1828 = vand.u32 %v492, 4294901760
        %v1829 = vsub.f32 %v492, %v1828
        %v1830 = vand.u32 %v1829, 4294901760
        %1831 = vmatmul.mubr.f32.gmra.mrb[0].mxu0 %v1830
        %v1832 = vpop.f32.mrb[0].mxu0
        %v1833 = vadd.f32 %v1514, %v1832
        %v1834 = vpop.f32.mrb[0].mxu0
        %1835 = vmatprep.mubr.f32.mxu0 0.0
        %v1836 = vand.u32 %v497, 4294901760
        %v1837 = vsub.f32 %v497, %v1836
        %v1838 = vand.u32 %v1837, 4294901760
        %1839 = vmatmul.mubr.f32.gmra.mrb[0].mxu0 %v1838
        %v1840 = vpop.f32.mrb[0].mxu0
        %v1841 = vadd.f32 %v1521, %v1840
        %v1842 = vpop.f32.mrb[0].mxu0
        %1843 = vmatprep.mubr.f32.mxu0 0.0
        %v1844 = vand.u32 %v500, 4294901760
        %v1845 = vsub.f32 %v500, %v1844
        %v1846 = vand.u32 %v1845, 4294901760
        %1847 = vmatmul.mubr.f32.gmra.mrb[0].mxu0 %v1846
        %v1848 = vpop.f32.mrb[0].mxu0
        %v1849 = vadd.f32 %v1528, %v1848
        %v1850 = vpop.f32.mrb[0].mxu0
        %1851 = vmatprep.mubr.f32.mxu0 0.0
        %v1852 = vand.u32 %v505, 4294901760
        %v1853 = vsub.f32 %v505, %v1852
        %v1854 = vand.u32 %v1853, 4294901760
        %1855 = vmatmul.mubr.f32.gmra.mrb[0].mxu0 %v1854
        %v1856 = vpop.f32.mrb[0].mxu0
        %v1857 = vadd.f32 %v1535, %v1856
        %v1858 = vpop.f32.mrb[0].mxu0
        %1859 = vmatprep.mubr.f32.mxu0 0.0
        %v1860 = vand.u32 %v508, 4294901760
        %v1861 = vsub.f32 %v508, %v1860
        %v1862 = vand.u32 %v1861, 4294901760
        %1863 = vmatmul.mubr.f32.gmra.mrb[0].mxu0 %v1862
        %v1864 = vpop.f32.mrb[0].mxu0
        %v1865 = vadd.f32 %v1542, %v1864
        %v1866 = vpop.f32.mrb[0].mxu0
        %1867 = vmatprep.mubr.f32.mxu0 0.0
        %v1868 = vand.u32 %v513, 4294901760
        %v1869 = vsub.f32 %v513, %v1868
        %v1870 = vand.u32 %v1869, 4294901760
        %1871 = vmatmul.mubr.f32.gmra.mrb[0].mxu0 %v1870
        %v1872 = vpop.f32.mrb[0].mxu0
        %v1873 = vadd.f32 %v1549, %v1872
        %v1874 = vpop.f32.mrb[0].mxu0
        %1875 = vmatprep.mubr.f32.mxu0 0.0
        %v1876 = vand.u32 %v516, 4294901760
        %v1877 = vsub.f32 %v516, %v1876
        %v1878 = vand.u32 %v1877, 4294901760
        %1879 = vmatmul.mubr.f32.gmra.mrb[0].mxu0 %v1878
        %v1880 = vpop.f32.mrb[0].mxu0
        %v1881 = vadd.f32 %v1556, %v1880
        %v1882 = vpop.f32.mrb[0].mxu0
        %1883 = vmatprep.mubr.f32.mxu0 0.0
        %v1884 = vand.u32 %v521, 4294901760
        %v1885 = vsub.f32 %v521, %v1884
        %v1886 = vand.u32 %v1885, 4294901760
        %1887 = vmatmul.mubr.f32.gmra.mrb[0].mxu0 %v1886
        %v1888 = vpop.f32.mrb[0].mxu0
        %v1889 = vadd.f32 %v1563, %v1888
        %v1890 = vpop.f32.mrb[0].mxu0
        %1891 = vmatprep.mubr.f32.mxu0 0.0
        %v1892 = vand.u32 %v524, 4294901760
        %v1893 = vsub.f32 %v524, %v1892
        %v1894 = vand.u32 %v1893, 4294901760
        %1895 = vmatmul.mubr.f32.gmra.mrb[0].mxu0 %v1894
        %v1896 = vpop.f32.mrb[0].mxu0
        %v1897 = vadd.f32 %v1570, %v1896
        %v1898 = vpop.f32.mrb[0].mxu0
        %1899 = vmatprep.mubr.f32.mxu0 0.0
        %v1900 = vand.u32 %v529, 4294901760
        %v1901 = vsub.f32 %v529, %v1900
        %v1902 = vand.u32 %v1901, 4294901760
        %1903 = vmatmul.mubr.f32.gmra.mrb[0].mxu0 %v1902
        %v1904 = vpop.f32.mrb[0].mxu0
        %v1905 = vadd.f32 %v1577, %v1904
        %v1906 = vpop.f32.mrb[0].mxu0
        %1907 = vmatprep.mubr.f32.mxu0 0.0
        %v1908 = vand.u32 %v532, 4294901760
        %v1909 = vsub.f32 %v532, %v1908
        %v1910 = vand.u32 %v1909, 4294901760
        %1911 = vmatmul.mubr.f32.gmra.mrb[0].mxu0 %v1910
        %v1912 = vpop.f32.mrb[0].mxu0
        %v1913 = vadd.f32 %v1584, %v1912
        %v1914 = vpop.f32.mrb[0].mxu0
        %1915 = vmatprep.mubr.f32.mxu0 0.0
        %v1916 = vand.u32 %v537, 4294901760
        %v1917 = vsub.f32 %v537, %v1916
        %v1918 = vand.u32 %v1917, 4294901760
        %1919 = vmatmul.mubr.f32.gmra.mrb[0].mxu0 %v1918
        %v1920 = vpop.f32.mrb[0].mxu0
        %v1921 = vadd.f32 %v1591, %v1920
        %v1922 = vpop.f32.mrb[0].mxu0
        %1923 = vmatprep.mubr.f32.mxu0 0.0
        %v1924 = vand.u32 %v540, 4294901760
        %v1925 = vsub.f32 %v540, %v1924
        %v1926 = vand.u32 %v1925, 4294901760
        %1927 = vmatmul.mubr.f32.gmra.mrb[0].mxu0 %v1926
        %v1928 = vpop.f32.mrb[0].mxu0
        %v1929 = vadd.f32 %v1598, %v1928
        %v1930 = vpop.f32.mrb[0].mxu0
        %1931 = vmatprep.mubr.f32.mxu0 0.0
        %v1932 = vand.u32 %v545, 4294901760
        %v1933 = vsub.f32 %v545, %v1932
        %v1934 = vand.u32 %v1933, 4294901760
        %1935 = vmatmul.mubr.f32.gmra.mrb[0].mxu0 %v1934
        %v1936 = vpop.f32.mrb[0].mxu0
        %v1937 = vadd.f32 %v1605, %v1936
        %v1938 = vpop.f32.mrb[0].mxu0
        %1939 = vmatprep.mubr.f32.mxu0 0.0
        %v1940 = vand.u32 %v548, 4294901760
        %v1941 = vsub.f32 %v548, %v1940
        %v1942 = vand.u32 %v1941, 4294901760
        %1943 = vmatmul.mubr.f32.gmra.mrb[0].mxu0 %v1942
        %v1944 = vpop.f32.mrb[0].mxu0
        %v1945 = vadd.f32 %v1612, %v1944
        %v1946 = vpop.f32.mrb[0].mxu0
        %1947 = vmatprep.mubr.f32.mxu0 0.0
        %v1948 = vand.u32 %v553, 4294901760
        %v1949 = vsub.f32 %v553, %v1948
        %v1950 = vand.u32 %v1949, 4294901760
        %1951 = vmatmul.mubr.f32.gmra.mrb[0].mxu0 %v1950
        %v1952 = vpop.f32.mrb[0].mxu0
        %v1953 = vadd.f32 %v1619, %v1952
        %v1954 = vpop.f32.mrb[0].mxu0
        %1955 = vmatprep.mubr.f32.mxu0 0.0
        %v1956 = vand.u32 %v556, 4294901760
        %v1957 = vsub.f32 %v556, %v1956
        %v1958 = vand.u32 %v1957, 4294901760
        %1959 = vmatmul.mubr.f32.gmra.mrb[0].mxu0 %v1958
        %v1960 = vpop.f32.mrb[0].mxu0
        %v1961 = vadd.f32 %v1626, %v1960
        %v1962 = vpop.f32.mrb[0].mxu0
        %1963 = vmatprep.mubr.f32.mxu0 0.0
        %v1964 = vand.u32 %v561, 4294901760
        %v1965 = vsub.f32 %v561, %v1964
        %v1966 = vand.u32 %v1965, 4294901760
        %1967 = vmatmul.mubr.f32.gmra.mrb[0].mxu0 %v1966
        %v1968 = vpop.f32.mrb[0].mxu0
        %v1969 = vadd.f32 %v1633, %v1968
        %v1970 = vpop.f32.mrb[0].mxu0
        %1971 = vmatprep.mubr.f32.mxu0 0.0
        %v1972 = vand.u32 %v564, 4294901760
        %v1973 = vsub.f32 %v564, %v1972
        %v1974 = vand.u32 %v1973, 4294901760
        %1975 = vmatmul.mubr.f32.gmra.mrb[0].mxu0 %v1974
        %v1976 = vpop.f32.mrb[0].mxu0
        %v1977 = vadd.f32 %v1640, %v1976
        %v1978 = vpop.f32.mrb[0].mxu0
        %1979 = vdwg.mxu0
        %1980 = vmatprep.subr.mxu0 0.0
        %v1981 = vand.u32 %v567, 4294901760
        %v1982 = vsub.f32 %v567, %v1981
        %v1983 = vand.u32 %v1982, 4294901760
        %1984 = vmatpush1.msra.mxu0 %v1983
        %1985 = vmatprep.subr.mxu0 0.0
        %v1986 = vand.u32 %v568, 4294901760
        %v1987 = vsub.f32 %v568, %v1986
        %v1988 = vand.u32 %v1987, 4294901760
        %1989 = vmatpush1.msra.mxu0 %v1988
        %1990 = vmatprep.subr.mxu0 0.0
        %v1991 = vand.u32 %v569, 4294901760
        %v1992 = vsub.f32 %v569, %v1991
        %v1993 = vand.u32 %v1992, 4294901760
        %1994 = vmatpush1.msra.mxu0 %v1993
        %1995 = vmatprep.subr.mxu0 0.0
        %v1996 = vand.u32 %v570, 4294901760
        %v1997 = vsub.f32 %v570, %v1996
        %v1998 = vand.u32 %v1997, 4294901760
        %1999 = vmatpush1.msra.mxu0 %v1998
        %2000 = vmatprep.subr.mxu0 0.0
        %v2001 = vand.u32 %v571, 4294901760
        %v2002 = vsub.f32 %v571, %v2001
        %v2003 = vand.u32 %v2002, 4294901760
        %2004 = vmatpush1.msra.mxu0 %v2003
        %2005 = vmatprep.subr.mxu0 0.0
        %v2006 = vand.u32 %v572, 4294901760
        %v2007 = vsub.f32 %v572, %v2006
        %v2008 = vand.u32 %v2007, 4294901760
        %2009 = vmatpush1.msra.mxu0 %v2008
        %2010 = vmatprep.subr.mxu0 0.0
        %v2011 = vand.u32 %v573, 4294901760
        %v2012 = vsub.f32 %v573, %v2011
        %v2013 = vand.u32 %v2012, 4294901760
        %2014 = vmatpush1.msra.mxu0 %v2013
        %2015 = vmatprep.subr.mxu0 0.0
        %v2016 = vand.u32 %v574, 4294901760
        %v2017 = vsub.f32 %v574, %v2016
        %v2018 = vand.u32 %v2017, 4294901760
        %2019 = vmatpush1.msra.mxu0 %v2018
        %2020 = vmatprep.subr.mxu0 0.0
        %v2021 = vand.u32 %v575, 4294901760
        %v2022 = vsub.f32 %v575, %v2021
        %v2023 = vand.u32 %v2022, 4294901760
        %2024 = vmatpush1.msra.mxu0 %v2023
        %2025 = vmatprep.subr.mxu0 0.0
        %v2026 = vand.u32 %v576, 4294901760
        %v2027 = vsub.f32 %v576, %v2026
        %v2028 = vand.u32 %v2027, 4294901760
        %2029 = vmatpush1.msra.mxu0 %v2028
        %2030 = vmatprep.subr.mxu0 0.0
        %v2031 = vand.u32 %v577, 4294901760
        %v2032 = vsub.f32 %v577, %v2031
        %v2033 = vand.u32 %v2032, 4294901760
        %2034 = vmatpush1.msra.mxu0 %v2033
        %2035 = vmatprep.subr.mxu0 0.0
        %v2036 = vand.u32 %v578, 4294901760
        %v2037 = vsub.f32 %v578, %v2036
        %v2038 = vand.u32 %v2037, 4294901760
        %2039 = vmatpush1.msra.mxu0 %v2038
        %2040 = vmatprep.subr.mxu0 0.0
        %v2041 = vand.u32 %v579, 4294901760
        %v2042 = vsub.f32 %v579, %v2041
        %v2043 = vand.u32 %v2042, 4294901760
        %2044 = vmatpush1.msra.mxu0 %v2043
        %2045 = vmatprep.subr.mxu0 0.0
        %v2046 = vand.u32 %v580, 4294901760
        %v2047 = vsub.f32 %v580, %v2046
        %v2048 = vand.u32 %v2047, 4294901760
        %2049 = vmatpush1.msra.mxu0 %v2048
        %2050 = vmatprep.subr.mxu0 0.0
        %v2051 = vand.u32 %v581, 4294901760
        %v2052 = vsub.f32 %v581, %v2051
        %v2053 = vand.u32 %v2052, 4294901760
        %2054 = vmatpush1.msra.mxu0 %v2053
        %2055 = vmatprep.subr.mxu0 0.0
        %v2056 = vand.u32 %v582, 4294901760
        %v2057 = vsub.f32 %v582, %v2056
        %v2058 = vand.u32 %v2057, 4294901760
        %2059 = vmatpush1.msra.mxu0 %v2058
        %2060 = vmatprep.subr.mxu0 0.0
        %2061 = vmatpush1.msra.mxu0 0.0
        %2062 = vmatprep.subr.mxu0 0.0
        %2063 = vmatpush1.msra.mxu0 0.0
        %2064 = vmatprep.subr.mxu0 0.0
        %2065 = vmatpush1.msra.mxu0 0.0
        %2066 = vmatprep.subr.mxu0 0.0
        %2067 = vmatpush1.msra.mxu0 0.0
        %2068 = vmatprep.subr.mxu0 0.0
        %2069 = vmatpush1.msra.mxu0 0.0
        %2070 = vmatprep.subr.mxu0 0.0
        %2071 = vmatpush1.msra.mxu0 0.0
        %2072 = vmatprep.subr.mxu0 0.0
        %2073 = vmatpush1.msra.mxu0 0.0
        %2074 = vmatprep.subr.mxu0 0.0
        %2075 = vmatpush1.msra.mxu0 0.0
        %2076 = vmatprep.subr.mxu0 0.0
        %2077 = vmatpush1.msra.mxu0 0.0
        %2078 = vmatprep.subr.mxu0 0.0
        %2079 = vmatpush1.msra.mxu0 0.0
        %2080 = vmatprep.subr.mxu0 0.0
        %2081 = vmatpush1.msra.mxu0 0.0
        %2082 = vmatprep.subr.mxu0 0.0
        %2083 = vmatpush1.msra.mxu0 0.0
        %2084 = vmatprep.subr.mxu0 0.0
        %2085 = vmatpush1.msra.mxu0 0.0
        %2086 = vmatprep.subr.mxu0 0.0
        %2087 = vmatpush1.msra.mxu0 0.0
        %2088 = vmatprep.subr.mxu0 0.0
        %2089 = vmatpush1.msra.mxu0 0.0
        %2090 = vmatprep.subr.mxu0 0.0
        %2091 = vmatpush1.msra.mxu0 0.0
        %2092 = vmatprep.mubr.f32.mxu0 0.0
        %v2093 = vand.u32 %v441, 4294901760
        %2094 = vmatmul.mubr.f32.gmra.mrb[0].mxu0 %v2093
        %v2095 = vpop.f32.mrb[0].mxu0
        %v2096 = vadd.f32 %v1729, %v2095
        %v2097 = vpop.f32.mrb[0].mxu0
        %2098 = vmatprep.mubr.f32.mxu0 0.0
        %v2099 = vand.u32 %v444, 4294901760
        %2100 = vmatmul.mubr.f32.gmra.mrb[0].mxu0 %v2099
        %v2101 = vpop.f32.mrb[0].mxu0
        %v2102 = vadd.f32 %v1737, %v2101
        %v2103 = vpop.f32.mrb[0].mxu0
        %2104 = vmatprep.mubr.f32.mxu0 0.0
        %v2105 = vand.u32 %v449, 4294901760
        %2106 = vmatmul.mubr.f32.gmra.mrb[0].mxu0 %v2105
        %v2107 = vpop.f32.mrb[0].mxu0
        %v2108 = vadd.f32 %v1745, %v2107
        %v2109 = vpop.f32.mrb[0].mxu0
        %2110 = vmatprep.mubr.f32.mxu0 0.0
        %v2111 = vand.u32 %v452, 4294901760
        %2112 = vmatmul.mubr.f32.gmra.mrb[0].mxu0 %v2111
        %v2113 = vpop.f32.mrb[0].mxu0
        %v2114 = vadd.f32 %v1753, %v2113
        %v2115 = vpop.f32.mrb[0].mxu0
        %2116 = vmatprep.mubr.f32.mxu0 0.0
        %v2117 = vand.u32 %v457, 4294901760
        %2118 = vmatmul.mubr.f32.gmra.mrb[0].mxu0 %v2117
        %v2119 = vpop.f32.mrb[0].mxu0
        %v2120 = vadd.f32 %v1761, %v2119
        %v2121 = vpop.f32.mrb[0].mxu0
        %2122 = vmatprep.mubr.f32.mxu0 0.0
        %v2123 = vand.u32 %v460, 4294901760
        %2124 = vmatmul.mubr.f32.gmra.mrb[0].mxu0 %v2123
        %v2125 = vpop.f32.mrb[0].mxu0
        %v2126 = vadd.f32 %v1769, %v2125
        %v2127 = vpop.f32.mrb[0].mxu0
        %2128 = vmatprep.mubr.f32.mxu0 0.0
        %v2129 = vand.u32 %v465, 4294901760
        %2130 = vmatmul.mubr.f32.gmra.mrb[0].mxu0 %v2129
        %v2131 = vpop.f32.mrb[0].mxu0
        %v2132 = vadd.f32 %v1777, %v2131
        %v2133 = vpop.f32.mrb[0].mxu0
        %2134 = vmatprep.mubr.f32.mxu0 0.0
        %v2135 = vand.u32 %v468, 4294901760
        %2136 = vmatmul.mubr.f32.gmra.mrb[0].mxu0 %v2135
        %v2137 = vpop.f32.mrb[0].mxu0
        %v2138 = vadd.f32 %v1785, %v2137
        %v2139 = vpop.f32.mrb[0].mxu0
        %2140 = vmatprep.mubr.f32.mxu0 0.0
        %v2141 = vand.u32 %v473, 4294901760
        %2142 = vmatmul.mubr.f32.gmra.mrb[0].mxu0 %v2141
        %v2143 = vpop.f32.mrb[0].mxu0
        %v2144 = vadd.f32 %v1793, %v2143
        %v2145 = vpop.f32.mrb[0].mxu0
        %2146 = vmatprep.mubr.f32.mxu0 0.0
        %v2147 = vand.u32 %v476, 4294901760
        %2148 = vmatmul.mubr.f32.gmra.mrb[0].mxu0 %v2147
        %v2149 = vpop.f32.mrb[0].mxu0
        %v2150 = vadd.f32 %v1801, %v2149
        %v2151 = vpop.f32.mrb[0].mxu0
        %2152 = vmatprep.mubr.f32.mxu0 0.0
        %v2153 = vand.u32 %v481, 4294901760
        %2154 = vmatmul.mubr.f32.gmra.mrb[0].mxu0 %v2153
        %v2155 = vpop.f32.mrb[0].mxu0
        %v2156 = vadd.f32 %v1809, %v2155
        %v2157 = vpop.f32.mrb[0].mxu0
        %2158 = vmatprep.mubr.f32.mxu0 0.0
        %v2159 = vand.u32 %v484, 4294901760
        %2160 = vmatmul.mubr.f32.gmra.mrb[0].mxu0 %v2159
        %v2161 = vpop.f32.mrb[0].mxu0
        %v2162 = vadd.f32 %v1817, %v2161
        %v2163 = vpop.f32.mrb[0].mxu0
        %2164 = vmatprep.mubr.f32.mxu0 0.0
        %v2165 = vand.u32 %v489, 4294901760
        %2166 = vmatmul.mubr.f32.gmra.mrb[0].mxu0 %v2165
        %v2167 = vpop.f32.mrb[0].mxu0
        %v2168 = vadd.f32 %v1825, %v2167
        %v2169 = vpop.f32.mrb[0].mxu0
        %2170 = vmatprep.mubr.f32.mxu0 0.0
        %v2171 = vand.u32 %v492, 4294901760
        %2172 = vmatmul.mubr.f32.gmra.mrb[0].mxu0 %v2171
        %v2173 = vpop.f32.mrb[0].mxu0
        %v2174 = vadd.f32 %v1833, %v2173
        %v2175 = vpop.f32.mrb[0].mxu0
        %2176 = vmatprep.mubr.f32.mxu0 0.0
        %v2177 = vand.u32 %v497, 4294901760
        %2178 = vmatmul.mubr.f32.gmra.mrb[0].mxu0 %v2177
        %v2179 = vpop.f32.mrb[0].mxu0
        %v2180 = vadd.f32 %v1841, %v2179
        %v2181 = vpop.f32.mrb[0].mxu0
        %2182 = vmatprep.mubr.f32.mxu0 0.0
        %v2183 = vand.u32 %v500, 4294901760
        %2184 = vmatmul.mubr.f32.gmra.mrb[0].mxu0 %v2183
        %v2185 = vpop.f32.mrb[0].mxu0
        %v2186 = vadd.f32 %v1849, %v2185
        %v2187 = vpop.f32.mrb[0].mxu0
        %2188 = vmatprep.mubr.f32.mxu0 0.0
        %v2189 = vand.u32 %v505, 4294901760
        %2190 = vmatmul.mubr.f32.gmra.mrb[0].mxu0 %v2189
        %v2191 = vpop.f32.mrb[0].mxu0
        %v2192 = vadd.f32 %v1857, %v2191
        %v2193 = vpop.f32.mrb[0].mxu0
        %2194 = vmatprep.mubr.f32.mxu0 0.0
        %v2195 = vand.u32 %v508, 4294901760
        %2196 = vmatmul.mubr.f32.gmra.mrb[0].mxu0 %v2195
        %v2197 = vpop.f32.mrb[0].mxu0
        %v2198 = vadd.f32 %v1865, %v2197
        %v2199 = vpop.f32.mrb[0].mxu0
        %2200 = vmatprep.mubr.f32.mxu0 0.0
        %v2201 = vand.u32 %v513, 4294901760
        %2202 = vmatmul.mubr.f32.gmra.mrb[0].mxu0 %v2201
        %v2203 = vpop.f32.mrb[0].mxu0
        %v2204 = vadd.f32 %v1873, %v2203
        %v2205 = vpop.f32.mrb[0].mxu0
        %2206 = vmatprep.mubr.f32.mxu0 0.0
        %v2207 = vand.u32 %v516, 4294901760
        %2208 = vmatmul.mubr.f32.gmra.mrb[0].mxu0 %v2207
        %v2209 = vpop.f32.mrb[0].mxu0
        %v2210 = vadd.f32 %v1881, %v2209
        %v2211 = vpop.f32.mrb[0].mxu0
        %2212 = vmatprep.mubr.f32.mxu0 0.0
        %v2213 = vand.u32 %v521, 4294901760
        %2214 = vmatmul.mubr.f32.gmra.mrb[0].mxu0 %v2213
        %v2215 = vpop.f32.mrb[0].mxu0
        %v2216 = vadd.f32 %v1889, %v2215
        %v2217 = vpop.f32.mrb[0].mxu0
        %2218 = vmatprep.mubr.f32.mxu0 0.0
        %v2219 = vand.u32 %v524, 4294901760
        %2220 = vmatmul.mubr.f32.gmra.mrb[0].mxu0 %v2219
        %v2221 = vpop.f32.mrb[0].mxu0
        %v2222 = vadd.f32 %v1897, %v2221
        %v2223 = vpop.f32.mrb[0].mxu0
        %2224 = vmatprep.mubr.f32.mxu0 0.0
        %v2225 = vand.u32 %v529, 4294901760
        %2226 = vmatmul.mubr.f32.gmra.mrb[0].mxu0 %v2225
        %v2227 = vpop.f32.mrb[0].mxu0
        %v2228 = vadd.f32 %v1905, %v2227
        %v2229 = vpop.f32.mrb[0].mxu0
        %2230 = vmatprep.mubr.f32.mxu0 0.0
        %v2231 = vand.u32 %v532, 4294901760
        %2232 = vmatmul.mubr.f32.gmra.mrb[0].mxu0 %v2231
        %v2233 = vpop.f32.mrb[0].mxu0
        %v2234 = vadd.f32 %v1913, %v2233
        %v2235 = vpop.f32.mrb[0].mxu0
        %2236 = vmatprep.mubr.f32.mxu0 0.0
        %v2237 = vand.u32 %v537, 4294901760
        %2238 = vmatmul.mubr.f32.gmra.mrb[0].mxu0 %v2237
        %v2239 = vpop.f32.mrb[0].mxu0
        %v2240 = vadd.f32 %v1921, %v2239
        %v2241 = vpop.f32.mrb[0].mxu0
        %2242 = vmatprep.mubr.f32.mxu0 0.0
        %v2243 = vand.u32 %v540, 4294901760
        %2244 = vmatmul.mubr.f32.gmra.mrb[0].mxu0 %v2243
        %v2245 = vpop.f32.mrb[0].mxu0
        %v2246 = vadd.f32 %v1929, %v2245
        %v2247 = vpop.f32.mrb[0].mxu0
        %2248 = vmatprep.mubr.f32.mxu0 0.0
        %v2249 = vand.u32 %v545, 4294901760
        %2250 = vmatmul.mubr.f32.gmra.mrb[0].mxu0 %v2249
        %v2251 = vpop.f32.mrb[0].mxu0
        %v2252 = vadd.f32 %v1937, %v2251
        %v2253 = vpop.f32.mrb[0].mxu0
        %2254 = vmatprep.mubr.f32.mxu0 0.0
        %v2255 = vand.u32 %v548, 4294901760
        %2256 = vmatmul.mubr.f32.gmra.mrb[0].mxu0 %v2255
        %v2257 = vpop.f32.mrb[0].mxu0
        %v2258 = vadd.f32 %v1945, %v2257
        %v2259 = vpop.f32.mrb[0].mxu0
        %2260 = vmatprep.mubr.f32.mxu0 0.0
        %v2261 = vand.u32 %v553, 4294901760
        %2262 = vmatmul.mubr.f32.gmra.mrb[0].mxu0 %v2261
        %v2263 = vpop.f32.mrb[0].mxu0
        %v2264 = vadd.f32 %v1953, %v2263
        %v2265 = vpop.f32.mrb[0].mxu0
        %2266 = vmatprep.mubr.f32.mxu0 0.0
        %v2267 = vand.u32 %v556, 4294901760
        %2268 = vmatmul.mubr.f32.gmra.mrb[0].mxu0 %v2267
        %v2269 = vpop.f32.mrb[0].mxu0
        %v2270 = vadd.f32 %v1961, %v2269
        %v2271 = vpop.f32.mrb[0].mxu0
        %2272 = vmatprep.mubr.f32.mxu0 0.0
        %v2273 = vand.u32 %v561, 4294901760
        %2274 = vmatmul.mubr.f32.gmra.mrb[0].mxu0 %v2273
        %v2275 = vpop.f32.mrb[0].mxu0
        %v2276 = vadd.f32 %v1969, %v2275
        %v2277 = vpop.f32.mrb[0].mxu0
        %2278 = vmatprep.mubr.f32.mxu0 0.0
        %v2279 = vand.u32 %v564, 4294901760
        %2280 = vmatmul.mubr.f32.gmra.mrb[0].mxu0 %v2279
        %v2281 = vpop.f32.mrb[0].mxu0
        %v2282 = vadd.f32 %v1977, %v2281
        %v2283 = vpop.f32.mrb[0].mxu0
        %2284 = vdwg.mxu0
        %2285 = vmatprep.subr.mxu0 0.0
        %v2286 = vand.u32 %v567, 4294901760
        %2287 = vmatpush1.msra.mxu0 %v2286
        %2288 = vmatprep.subr.mxu0 0.0
        %v2289 = vand.u32 %v568, 4294901760
        %2290 = vmatpush1.msra.mxu0 %v2289
        %2291 = vmatprep.subr.mxu0 0.0
        %v2292 = vand.u32 %v569, 4294901760
        %2293 = vmatpush1.msra.mxu0 %v2292
        %2294 = vmatprep.subr.mxu0 0.0
        %v2295 = vand.u32 %v570, 4294901760
        %2296 = vmatpush1.msra.mxu0 %v2295
        %2297 = vmatprep.subr.mxu0 0.0
        %v2298 = vand.u32 %v571, 4294901760
        %2299 = vmatpush1.msra.mxu0 %v2298
        %2300 = vmatprep.subr.mxu0 0.0
        %v2301 = vand.u32 %v572, 4294901760
        %2302 = vmatpush1.msra.mxu0 %v2301
        %2303 = vmatprep.subr.mxu0 0.0
        %v2304 = vand.u32 %v573, 4294901760
        %2305 = vmatpush1.msra.mxu0 %v2304
        %2306 = vmatprep.subr.mxu0 0.0
        %v2307 = vand.u32 %v574, 4294901760
        %2308 = vmatpush1.msra.mxu0 %v2307
        %2309 = vmatprep.subr.mxu0 0.0
        %v2310 = vand.u32 %v575, 4294901760
        %2311 = vmatpush1.msra.mxu0 %v2310
        %2312 = vmatprep.subr.mxu0 0.0
        %v2313 = vand.u32 %v576, 4294901760
        %2314 = vmatpush1.msra.mxu0 %v2313
        %2315 = vmatprep.subr.mxu0 0.0
        %v2316 = vand.u32 %v577, 4294901760
        %2317 = vmatpush1.msra.mxu0 %v2316
        %2318 = vmatprep.subr.mxu0 0.0
        %v2319 = vand.u32 %v578, 4294901760
        %2320 = vmatpush1.msra.mxu0 %v2319
        %2321 = vmatprep.subr.mxu0 0.0
        %v2322 = vand.u32 %v579, 4294901760
        %2323 = vmatpush1.msra.mxu0 %v2322
        %2324 = vmatprep.subr.mxu0 0.0
        %v2325 = vand.u32 %v580, 4294901760
        %2326 = vmatpush1.msra.mxu0 %v2325
        %2327 = vmatprep.subr.mxu0 0.0
        %v2328 = vand.u32 %v581, 4294901760
        %2329 = vmatpush1.msra.mxu0 %v2328
        %2330 = vmatprep.subr.mxu0 0.0
        %v2331 = vand.u32 %v582, 4294901760
        %2332 = vmatpush1.msra.mxu0 %v2331
        %2333 = vmatprep.subr.mxu0 0.0
        %2334 = vmatpush1.msra.mxu0 0.0
        %2335 = vmatprep.subr.mxu0 0.0
        %2336 = vmatpush1.msra.mxu0 0.0
        %2337 = vmatprep.subr.mxu0 0.0
        %2338 = vmatpush1.msra.mxu0 0.0
        %2339 = vmatprep.subr.mxu0 0.0
        %2340 = vmatpush1.msra.mxu0 0.0
        %2341 = vmatprep.subr.mxu0 0.0
        %2342 = vmatpush1.msra.mxu0 0.0
        %2343 = vmatprep.subr.mxu0 0.0
        %2344 = vmatpush1.msra.mxu0 0.0
        %2345 = vmatprep.subr.mxu0 0.0
        %2346 = vmatpush1.msra.mxu0 0.0
        %2347 = vmatprep.subr.mxu0 0.0
        %2348 = vmatpush1.msra.mxu0 0.0
        %2349 = vmatprep.subr.mxu0 0.0
        %2350 = vmatpush1.msra.mxu0 0.0
        %2351 = vmatprep.subr.mxu0 0.0
        %2352 = vmatpush1.msra.mxu0 0.0
        %2353 = vmatprep.subr.mxu0 0.0
        %2354 = vmatpush1.msra.mxu0 0.0
        %2355 = vmatprep.subr.mxu0 0.0
        %2356 = vmatpush1.msra.mxu0 0.0
        %2357 = vmatprep.subr.mxu0 0.0
        %2358 = vmatpush1.msra.mxu0 0.0
        %2359 = vmatprep.subr.mxu0 0.0
        %2360 = vmatpush1.msra.mxu0 0.0
        %2361 = vmatprep.subr.mxu0 0.0
        %2362 = vmatpush1.msra.mxu0 0.0
        %2363 = vmatprep.subr.mxu0 0.0
        %2364 = vmatpush1.msra.mxu0 0.0
        %2365 = vmatprep.mubr.f32.mxu0 0.0
        %v2366 = vand.u32 %v441, 4294901760
        %2367 = vmatmul.mubr.f32.gmra.mrb[0].mxu0 %v2366
        %v2368 = vpop.f32.mrb[0].mxu0
        %v2369 = vadd.f32 %v2096, %v2368
        %v2370 = vpop.f32.mrb[0].mxu0
        %2371 = vmatprep.mubr.f32.mxu0 0.0
        %v2372 = vand.u32 %v444, 4294901760
        %2373 = vmatmul.mubr.f32.gmra.mrb[0].mxu0 %v2372
        %v2374 = vpop.f32.mrb[0].mxu0
        %v2375 = vadd.f32 %v2102, %v2374
        %v2376 = vpop.f32.mrb[0].mxu0
        %2377 = vmatprep.mubr.f32.mxu0 0.0
        %v2378 = vand.u32 %v449, 4294901760
        %2379 = vmatmul.mubr.f32.gmra.mrb[0].mxu0 %v2378
        %v2380 = vpop.f32.mrb[0].mxu0
        %v2381 = vadd.f32 %v2108, %v2380
        %v2382 = vpop.f32.mrb[0].mxu0
        %2383 = vmatprep.mubr.f32.mxu0 0.0
        %v2384 = vand.u32 %v452, 4294901760
        %2385 = vmatmul.mubr.f32.gmra.mrb[0].mxu0 %v2384
        %v2386 = vpop.f32.mrb[0].mxu0
        %v2387 = vadd.f32 %v2114, %v2386
        %v2388 = vpop.f32.mrb[0].mxu0
        %2389 = vmatprep.mubr.f32.mxu0 0.0
        %v2390 = vand.u32 %v457, 4294901760
        %2391 = vmatmul.mubr.f32.gmra.mrb[0].mxu0 %v2390
        %v2392 = vpop.f32.mrb[0].mxu0
        %v2393 = vadd.f32 %v2120, %v2392
        %v2394 = vpop.f32.mrb[0].mxu0
        %2395 = vmatprep.mubr.f32.mxu0 0.0
        %v2396 = vand.u32 %v460, 4294901760
        %2397 = vmatmul.mubr.f32.gmra.mrb[0].mxu0 %v2396
        %v2398 = vpop.f32.mrb[0].mxu0
        %v2399 = vadd.f32 %v2126, %v2398
        %v2400 = vpop.f32.mrb[0].mxu0
        %2401 = vmatprep.mubr.f32.mxu0 0.0
        %v2402 = vand.u32 %v465, 4294901760
        %2403 = vmatmul.mubr.f32.gmra.mrb[0].mxu0 %v2402
        %v2404 = vpop.f32.mrb[0].mxu0
        %v2405 = vadd.f32 %v2132, %v2404
        %v2406 = vpop.f32.mrb[0].mxu0
        %2407 = vmatprep.mubr.f32.mxu0 0.0
        %v2408 = vand.u32 %v468, 4294901760
        %2409 = vmatmul.mubr.f32.gmra.mrb[0].mxu0 %v2408
        %v2410 = vpop.f32.mrb[0].mxu0
        %v2411 = vadd.f32 %v2138, %v2410
        %v2412 = vpop.f32.mrb[0].mxu0
        %2413 = vmatprep.mubr.f32.mxu0 0.0
        %v2414 = vand.u32 %v473, 4294901760
        %2415 = vmatmul.mubr.f32.gmra.mrb[0].mxu0 %v2414
        %v2416 = vpop.f32.mrb[0].mxu0
        %v2417 = vadd.f32 %v2144, %v2416
        %v2418 = vpop.f32.mrb[0].mxu0
        %2419 = vmatprep.mubr.f32.mxu0 0.0
        %v2420 = vand.u32 %v476, 4294901760
        %2421 = vmatmul.mubr.f32.gmra.mrb[0].mxu0 %v2420
        %v2422 = vpop.f32.mrb[0].mxu0
        %v2423 = vadd.f32 %v2150, %v2422
        %v2424 = vpop.f32.mrb[0].mxu0
        %2425 = vmatprep.mubr.f32.mxu0 0.0
        %v2426 = vand.u32 %v481, 4294901760
        %2427 = vmatmul.mubr.f32.gmra.mrb[0].mxu0 %v2426
        %v2428 = vpop.f32.mrb[0].mxu0
        %v2429 = vadd.f32 %v2156, %v2428
        %v2430 = vpop.f32.mrb[0].mxu0
        %2431 = vmatprep.mubr.f32.mxu0 0.0
        %v2432 = vand.u32 %v484, 4294901760
        %2433 = vmatmul.mubr.f32.gmra.mrb[0].mxu0 %v2432
        %v2434 = vpop.f32.mrb[0].mxu0
        %v2435 = vadd.f32 %v2162, %v2434
        %v2436 = vpop.f32.mrb[0].mxu0
        %2437 = vmatprep.mubr.f32.mxu0 0.0
        %v2438 = vand.u32 %v489, 4294901760
        %2439 = vmatmul.mubr.f32.gmra.mrb[0].mxu0 %v2438
        %v2440 = vpop.f32.mrb[0].mxu0
        %v2441 = vadd.f32 %v2168, %v2440
        %v2442 = vpop.f32.mrb[0].mxu0
        %2443 = vmatprep.mubr.f32.mxu0 0.0
        %v2444 = vand.u32 %v492, 4294901760
        %2445 = vmatmul.mubr.f32.gmra.mrb[0].mxu0 %v2444
        %v2446 = vpop.f32.mrb[0].mxu0
        %v2447 = vadd.f32 %v2174, %v2446
        %v2448 = vpop.f32.mrb[0].mxu0
        %2449 = vmatprep.mubr.f32.mxu0 0.0
        %v2450 = vand.u32 %v497, 4294901760
        %2451 = vmatmul.mubr.f32.gmra.mrb[0].mxu0 %v2450
        %v2452 = vpop.f32.mrb[0].mxu0
        %v2453 = vadd.f32 %v2180, %v2452
        %v2454 = vpop.f32.mrb[0].mxu0
        %2455 = vmatprep.mubr.f32.mxu0 0.0
        %v2456 = vand.u32 %v500, 4294901760
        %2457 = vmatmul.mubr.f32.gmra.mrb[0].mxu0 %v2456
        %v2458 = vpop.f32.mrb[0].mxu0
        %v2459 = vadd.f32 %v2186, %v2458
        %v2460 = vpop.f32.mrb[0].mxu0
        %2461 = vmatprep.mubr.f32.mxu0 0.0
        %v2462 = vand.u32 %v505, 4294901760
        %2463 = vmatmul.mubr.f32.gmra.mrb[0].mxu0 %v2462
        %v2464 = vpop.f32.mrb[0].mxu0
        %v2465 = vadd.f32 %v2192, %v2464
        %v2466 = vpop.f32.mrb[0].mxu0
        %2467 = vmatprep.mubr.f32.mxu0 0.0
        %v2468 = vand.u32 %v508, 4294901760
        %2469 = vmatmul.mubr.f32.gmra.mrb[0].mxu0 %v2468
        %v2470 = vpop.f32.mrb[0].mxu0
        %v2471 = vadd.f32 %v2198, %v2470
        %v2472 = vpop.f32.mrb[0].mxu0
        %2473 = vmatprep.mubr.f32.mxu0 0.0
        %v2474 = vand.u32 %v513, 4294901760
        %2475 = vmatmul.mubr.f32.gmra.mrb[0].mxu0 %v2474
        %v2476 = vpop.f32.mrb[0].mxu0
        %v2477 = vadd.f32 %v2204, %v2476
        %v2478 = vpop.f32.mrb[0].mxu0
        %2479 = vmatprep.mubr.f32.mxu0 0.0
        %v2480 = vand.u32 %v516, 4294901760
        %2481 = vmatmul.mubr.f32.gmra.mrb[0].mxu0 %v2480
        %v2482 = vpop.f32.mrb[0].mxu0
        %v2483 = vadd.f32 %v2210, %v2482
        %v2484 = vpop.f32.mrb[0].mxu0
        %2485 = vmatprep.mubr.f32.mxu0 0.0
        %v2486 = vand.u32 %v521, 4294901760
        %2487 = vmatmul.mubr.f32.gmra.mrb[0].mxu0 %v2486
        %v2488 = vpop.f32.mrb[0].mxu0
        %v2489 = vadd.f32 %v2216, %v2488
        %v2490 = vpop.f32.mrb[0].mxu0
        %2491 = vmatprep.mubr.f32.mxu0 0.0
        %v2492 = vand.u32 %v524, 4294901760
        %2493 = vmatmul.mubr.f32.gmra.mrb[0].mxu0 %v2492
        %v2494 = vpop.f32.mrb[0].mxu0
        %v2495 = vadd.f32 %v2222, %v2494
        %v2496 = vpop.f32.mrb[0].mxu0
        %2497 = vmatprep.mubr.f32.mxu0 0.0
        %v2498 = vand.u32 %v529, 4294901760
        %2499 = vmatmul.mubr.f32.gmra.mrb[0].mxu0 %v2498
        %v2500 = vpop.f32.mrb[0].mxu0
        %v2501 = vadd.f32 %v2228, %v2500
        %v2502 = vpop.f32.mrb[0].mxu0
        %2503 = vmatprep.mubr.f32.mxu0 0.0
        %v2504 = vand.u32 %v532, 4294901760
        %2505 = vmatmul.mubr.f32.gmra.mrb[0].mxu0 %v2504
        %v2506 = vpop.f32.mrb[0].mxu0
        %v2507 = vadd.f32 %v2234, %v2506
        %v2508 = vpop.f32.mrb[0].mxu0
        %2509 = vmatprep.mubr.f32.mxu0 0.0
        %v2510 = vand.u32 %v537, 4294901760
        %2511 = vmatmul.mubr.f32.gmra.mrb[0].mxu0 %v2510
        %v2512 = vpop.f32.mrb[0].mxu0
        %v2513 = vadd.f32 %v2240, %v2512
        %v2514 = vpop.f32.mrb[0].mxu0
        %2515 = vmatprep.mubr.f32.mxu0 0.0
        %v2516 = vand.u32 %v540, 4294901760
        %2517 = vmatmul.mubr.f32.gmra.mrb[0].mxu0 %v2516
        %v2518 = vpop.f32.mrb[0].mxu0
        %v2519 = vadd.f32 %v2246, %v2518
        %v2520 = vpop.f32.mrb[0].mxu0
        %2521 = vmatprep.mubr.f32.mxu0 0.0
        %v2522 = vand.u32 %v545, 4294901760
        %2523 = vmatmul.mubr.f32.gmra.mrb[0].mxu0 %v2522
        %v2524 = vpop.f32.mrb[0].mxu0
        %v2525 = vadd.f32 %v2252, %v2524
        %v2526 = vpop.f32.mrb[0].mxu0
        %2527 = vmatprep.mubr.f32.mxu0 0.0
        %v2528 = vand.u32 %v548, 4294901760
        %2529 = vmatmul.mubr.f32.gmra.mrb[0].mxu0 %v2528
        %v2530 = vpop.f32.mrb[0].mxu0
        %v2531 = vadd.f32 %v2258, %v2530
        %v2532 = vpop.f32.mrb[0].mxu0
        %2533 = vmatprep.mubr.f32.mxu0 0.0
        %v2534 = vand.u32 %v553, 4294901760
        %2535 = vmatmul.mubr.f32.gmra.mrb[0].mxu0 %v2534
        %v2536 = vpop.f32.mrb[0].mxu0
        %v2537 = vadd.f32 %v2264, %v2536
        %v2538 = vpop.f32.mrb[0].mxu0
        %2539 = vmatprep.mubr.f32.mxu0 0.0
        %v2540 = vand.u32 %v556, 4294901760
        %2541 = vmatmul.mubr.f32.gmra.mrb[0].mxu0 %v2540
        %v2542 = vpop.f32.mrb[0].mxu0
        %v2543 = vadd.f32 %v2270, %v2542
        %v2544 = vpop.f32.mrb[0].mxu0
        %2545 = vmatprep.mubr.f32.mxu0 0.0
        %v2546 = vand.u32 %v561, 4294901760
        %2547 = vmatmul.mubr.f32.gmra.mrb[0].mxu0 %v2546
        %v2548 = vpop.f32.mrb[0].mxu0
        %v2549 = vadd.f32 %v2276, %v2548
        %v2550 = vpop.f32.mrb[0].mxu0
        %2551 = vmatprep.mubr.f32.mxu0 0.0
        %v2552 = vand.u32 %v564, 4294901760
        %2553 = vmatmul.mubr.f32.gmra.mrb[0].mxu0 %v2552
        %v2554 = vpop.f32.mrb[0].mxu0
        %v2555 = vadd.f32 %v2282, %v2554
        %v2556 = vpop.f32.mrb[0].mxu0
        %2557 = vdwg.mxu0
        %v2558 = vmul.f32 %v2369, 0.03125
        %v2559 = vmul.f32 %v2375, 0.03125
        %v2560 = vmul.f32 %v2381, 0.03125
        %v2561 = vmul.f32 %v2387, 0.03125
        %v2562 = vmul.f32 %v2393, 0.03125
        %v2563 = vmul.f32 %v2399, 0.03125
        %v2564 = vmul.f32 %v2405, 0.03125
        %v2565 = vmul.f32 %v2411, 0.03125
        %v2566 = vmul.f32 %v2417, 0.03125
        %v2567 = vmul.f32 %v2423, 0.03125
        %v2568 = vmul.f32 %v2429, 0.03125
        %v2569 = vmul.f32 %v2435, 0.03125
        %v2570 = vmul.f32 %v2441, 0.03125
        %v2571 = vmul.f32 %v2447, 0.03125
        %v2572 = vmul.f32 %v2453, 0.03125
        %v2573 = vmul.f32 %v2459, 0.03125
        %v2574 = vmul.f32 %v2465, 0.03125
        %v2575 = vmul.f32 %v2471, 0.03125
        %v2576 = vmul.f32 %v2477, 0.03125
        %v2577 = vmul.f32 %v2483, 0.03125
        %v2578 = vmul.f32 %v2489, 0.03125
        %v2579 = vmul.f32 %v2495, 0.03125
        %v2580 = vmul.f32 %v2501, 0.03125
        %v2581 = vmul.f32 %v2507, 0.03125
        %v2582 = vmul.f32 %v2513, 0.03125
        %v2583 = vmul.f32 %v2519, 0.03125
        %v2584 = vmul.f32 %v2525, 0.03125
        %v2585 = vmul.f32 %v2531, 0.03125
        %v2586 = vmul.f32 %v2537, 0.03125
        %v2587 = vmul.f32 %v2543, 0.03125
        %v2588 = vmul.f32 %v2549, 0.03125
        %v2589 = vmul.f32 %v2555, 0.03125
        %vm2590 = vcmask 31744
        %v2592 = vsel %vm2590, %v2558, 0
        %v2595 = vsel %vm2590, %v2559, 0
        %v2598 = vsel %vm2590, %v2560, 0
        %v2601 = vsel %vm2590, %v2561, 0
        %v2604 = vsel %vm2590, %v2562, 0
        %v2607 = vsel %vm2590, %v2563, 0
        %v2610 = vsel %vm2590, %v2564, 0
        %v2613 = vsel %vm2590, %v2565, 0
        %v2616 = vsel %vm2590, %v2566, 0
        %v2619 = vsel %vm2590, %v2567, 0
        %v2622 = vsel %vm2590, %v2568, 0
        %v2625 = vsel %vm2590, %v2569, 0
        %v2628 = vsel %vm2590, %v2570, 0
        %v2631 = vsel %vm2590, %v2571, 0
        %v2634 = vsel %vm2590, %v2572, 0
        %v2637 = vsel %vm2590, %v2573, 0
        %v2640 = vsel %vm2590, %v2574, 0
        %v2643 = vsel %vm2590, %v2575, 0
        %v2646 = vsel %vm2590, %v2576, 0
        %v2649 = vsel %vm2590, %v2577, 0
        %v2652 = vsel %vm2590, %v2578, 0
        %v2655 = vsel %vm2590, %v2579, 0
        %v2658 = vsel %vm2590, %v2580, 0
        %v2661 = vsel %vm2590, %v2581, 0
        %v2664 = vsel %vm2590, %v2582, 0
        %v2667 = vsel %vm2590, %v2583, 0
        %v2670 = vsel %vm2590, %v2584, 0
        %v2673 = vsel %vm2590, %v2585, 0
        %v2676 = vsel %vm2590, %v2586, 0
        %v2679 = vsel %vm2590, %v2587, 0
        %v2682 = vsel %vm2590, %v2588, 0
        %v2685 = vsel %vm2590, %v2589, 0
        %vm2687 = vcmask 1043456
        %v2689 = vsel %vm2687, %v583, 0
        %2691 = vmatprep.subr.mxu0 0.0
        %v2692 = vand.u32 %v2689, 4294901760
        %2693 = vmatpush1.msra.mxu0 %v2692
        %2694 = vmatprep.subr.mxu0 0.0
        %2695 = vmatpush1.msra.mxu0 0.0
        %2696 = vmatprep.subr.mxu0 0.0
        %2697 = vmatpush1.msra.mxu0 0.0
        %2698 = vmatprep.subr.mxu0 0.0
        %2699 = vmatpush1.msra.mxu0 0.0
        %2700 = vmatprep.subr.mxu0 0.0
        %2701 = vmatpush1.msra.mxu0 0.0
        %2702 = vmatprep.subr.mxu0 0.0
        %2703 = vmatpush1.msra.mxu0 0.0
        %2704 = vmatprep.subr.mxu0 0.0
        %2705 = vmatpush1.msra.mxu0 0.0
        %2706 = vmatprep.subr.mxu0 0.0
        %2707 = vmatpush1.msra.mxu0 0.0
        %2708 = vmatprep.subr.mxu0 0.0
        %2709 = vmatpush1.msra.mxu0 0.0
        %2710 = vmatprep.subr.mxu0 0.0
        %2711 = vmatpush1.msra.mxu0 0.0
        %2712 = vmatprep.subr.mxu0 0.0
        %2713 = vmatpush1.msra.mxu0 0.0
        %2714 = vmatprep.subr.mxu0 0.0
        %2715 = vmatpush1.msra.mxu0 0.0
        %2716 = vmatprep.subr.mxu0 0.0
        %2717 = vmatpush1.msra.mxu0 0.0
        %2718 = vmatprep.subr.mxu0 0.0
        %2719 = vmatpush1.msra.mxu0 0.0
        %2720 = vmatprep.subr.mxu0 0.0
        %2721 = vmatpush1.msra.mxu0 0.0
        %2722 = vmatprep.subr.mxu0 0.0
        %2723 = vmatpush1.msra.mxu0 0.0
        %2724 = vmatprep.subr.mxu0 0.0
        %2725 = vmatpush1.msra.mxu0 0.0
        %2726 = vmatprep.subr.mxu0 0.0
        %2727 = vmatpush1.msra.mxu0 0.0
        %2728 = vmatprep.subr.mxu0 0.0
        %2729 = vmatpush1.msra.mxu0 0.0
        %2730 = vmatprep.subr.mxu0 0.0
        %2731 = vmatpush1.msra.mxu0 0.0
        %2732 = vmatprep.subr.mxu0 0.0
        %2733 = vmatpush1.msra.mxu0 0.0
        %2734 = vmatprep.subr.mxu0 0.0
        %2735 = vmatpush1.msra.mxu0 0.0
        %2736 = vmatprep.subr.mxu0 0.0
        %2737 = vmatpush1.msra.mxu0 0.0
        %2738 = vmatprep.subr.mxu0 0.0
        %2739 = vmatpush1.msra.mxu0 0.0
        %2740 = vmatprep.subr.mxu0 0.0
        %2741 = vmatpush1.msra.mxu0 0.0
        %2742 = vmatprep.subr.mxu0 0.0
        %2743 = vmatpush1.msra.mxu0 0.0
        %2744 = vmatprep.subr.mxu0 0.0
        %2745 = vmatpush1.msra.mxu0 0.0
        %2746 = vmatprep.subr.mxu0 0.0
        %2747 = vmatpush1.msra.mxu0 0.0
        %2748 = vmatprep.subr.mxu0 0.0
        %2749 = vmatpush1.msra.mxu0 0.0
        %2750 = vmatprep.subr.mxu0 0.0
        %2751 = vmatpush1.msra.mxu0 0.0
        %2752 = vmatprep.subr.mxu0 0.0
        %2753 = vmatpush1.msra.mxu0 0.0
        %2754 = vmatprep.subr.mxu0 0.0
        %2755 = vmatpush1.msra.mxu0 0.0
        %2756 = vmatprep.mubr.f32.mxu0 0.0
        %v2757 = vand.u32 %v2592, 4294901760
        %v2758 = vsub.f32 %v2592, %v2757
        %v2759 = vand.u32 %v2758, 4294901760
        %v2760 = vsub.f32 %v2758, %v2759
        %v2761 = vand.u32 %v2760, 4294901760
        %2762 = vmatmul.mubr.f32.gmra.mrb[0].mxu0 %v2761
        %v2763 = vpop.f32.mrb[0].mxu0
        %v2764 = vadd.f32 0.0, %v2763
        %v2765 = vpop.f32.mrb[0].mxu0
        %2766 = vmatprep.mubr.f32.mxu0 0.0
        %v2767 = vand.u32 %v2595, 4294901760
        %v2768 = vsub.f32 %v2595, %v2767
        %v2769 = vand.u32 %v2768, 4294901760
        %v2770 = vsub.f32 %v2768, %v2769
        %v2771 = vand.u32 %v2770, 4294901760
        %2772 = vmatmul.mubr.f32.gmra.mrb[0].mxu0 %v2771
        %v2773 = vpop.f32.mrb[0].mxu0
        %v2774 = vadd.f32 0.0, %v2773
        %v2775 = vpop.f32.mrb[0].mxu0
        %2776 = vmatprep.mubr.f32.mxu0 0.0
        %v2777 = vand.u32 %v2598, 4294901760
        %v2778 = vsub.f32 %v2598, %v2777
        %v2779 = vand.u32 %v2778, 4294901760
        %v2780 = vsub.f32 %v2778, %v2779
        %v2781 = vand.u32 %v2780, 4294901760
        %2782 = vmatmul.mubr.f32.gmra.mrb[0].mxu0 %v2781
        %v2783 = vpop.f32.mrb[0].mxu0
        %v2784 = vadd.f32 0.0, %v2783
        %v2785 = vpop.f32.mrb[0].mxu0
        %2786 = vmatprep.mubr.f32.mxu0 0.0
        %v2787 = vand.u32 %v2601, 4294901760
        %v2788 = vsub.f32 %v2601, %v2787
        %v2789 = vand.u32 %v2788, 4294901760
        %v2790 = vsub.f32 %v2788, %v2789
        %v2791 = vand.u32 %v2790, 4294901760
        %2792 = vmatmul.mubr.f32.gmra.mrb[0].mxu0 %v2791
        %v2793 = vpop.f32.mrb[0].mxu0
        %v2794 = vadd.f32 0.0, %v2793
        %v2795 = vpop.f32.mrb[0].mxu0
        %2796 = vmatprep.mubr.f32.mxu0 0.0
        %v2797 = vand.u32 %v2604, 4294901760
        %v2798 = vsub.f32 %v2604, %v2797
        %v2799 = vand.u32 %v2798, 4294901760
        %v2800 = vsub.f32 %v2798, %v2799
        %v2801 = vand.u32 %v2800, 4294901760
        %2802 = vmatmul.mubr.f32.gmra.mrb[0].mxu0 %v2801
        %v2803 = vpop.f32.mrb[0].mxu0
        %v2804 = vadd.f32 0.0, %v2803
        %v2805 = vpop.f32.mrb[0].mxu0
        %2806 = vmatprep.mubr.f32.mxu0 0.0
        %v2807 = vand.u32 %v2607, 4294901760
        %v2808 = vsub.f32 %v2607, %v2807
        %v2809 = vand.u32 %v2808, 4294901760
        %v2810 = vsub.f32 %v2808, %v2809
        %v2811 = vand.u32 %v2810, 4294901760
        %2812 = vmatmul.mubr.f32.gmra.mrb[0].mxu0 %v2811
        %v2813 = vpop.f32.mrb[0].mxu0
        %v2814 = vadd.f32 0.0, %v2813
        %v2815 = vpop.f32.mrb[0].mxu0
        %2816 = vmatprep.mubr.f32.mxu0 0.0
        %v2817 = vand.u32 %v2610, 4294901760
        %v2818 = vsub.f32 %v2610, %v2817
        %v2819 = vand.u32 %v2818, 4294901760
        %v2820 = vsub.f32 %v2818, %v2819
        %v2821 = vand.u32 %v2820, 4294901760
        %2822 = vmatmul.mubr.f32.gmra.mrb[0].mxu0 %v2821
        %v2823 = vpop.f32.mrb[0].mxu0
        %v2824 = vadd.f32 0.0, %v2823
        %v2825 = vpop.f32.mrb[0].mxu0
        %2826 = vmatprep.mubr.f32.mxu0 0.0
        %v2827 = vand.u32 %v2613, 4294901760
        %v2828 = vsub.f32 %v2613, %v2827
        %v2829 = vand.u32 %v2828, 4294901760
        %v2830 = vsub.f32 %v2828, %v2829
        %v2831 = vand.u32 %v2830, 4294901760
        %2832 = vmatmul.mubr.f32.gmra.mrb[0].mxu0 %v2831
        %v2833 = vpop.f32.mrb[0].mxu0
        %v2834 = vadd.f32 0.0, %v2833
        %v2835 = vpop.f32.mrb[0].mxu0
        %2836 = vmatprep.mubr.f32.mxu0 0.0
        %v2837 = vand.u32 %v2616, 4294901760
        %v2838 = vsub.f32 %v2616, %v2837
        %v2839 = vand.u32 %v2838, 4294901760
        %v2840 = vsub.f32 %v2838, %v2839
        %v2841 = vand.u32 %v2840, 4294901760
        %2842 = vmatmul.mubr.f32.gmra.mrb[0].mxu0 %v2841
        %v2843 = vpop.f32.mrb[0].mxu0
        %v2844 = vadd.f32 0.0, %v2843
        %v2845 = vpop.f32.mrb[0].mxu0
        %2846 = vmatprep.mubr.f32.mxu0 0.0
        %v2847 = vand.u32 %v2619, 4294901760
        %v2848 = vsub.f32 %v2619, %v2847
        %v2849 = vand.u32 %v2848, 4294901760
        %v2850 = vsub.f32 %v2848, %v2849
        %v2851 = vand.u32 %v2850, 4294901760
        %2852 = vmatmul.mubr.f32.gmra.mrb[0].mxu0 %v2851
        %v2853 = vpop.f32.mrb[0].mxu0
        %v2854 = vadd.f32 0.0, %v2853
        %v2855 = vpop.f32.mrb[0].mxu0
        %2856 = vmatprep.mubr.f32.mxu0 0.0
        %v2857 = vand.u32 %v2622, 4294901760
        %v2858 = vsub.f32 %v2622, %v2857
        %v2859 = vand.u32 %v2858, 4294901760
        %v2860 = vsub.f32 %v2858, %v2859
        %v2861 = vand.u32 %v2860, 4294901760
        %2862 = vmatmul.mubr.f32.gmra.mrb[0].mxu0 %v2861
        %v2863 = vpop.f32.mrb[0].mxu0
        %v2864 = vadd.f32 0.0, %v2863
        %v2865 = vpop.f32.mrb[0].mxu0
        %2866 = vmatprep.mubr.f32.mxu0 0.0
        %v2867 = vand.u32 %v2625, 4294901760
        %v2868 = vsub.f32 %v2625, %v2867
        %v2869 = vand.u32 %v2868, 4294901760
        %v2870 = vsub.f32 %v2868, %v2869
        %v2871 = vand.u32 %v2870, 4294901760
        %2872 = vmatmul.mubr.f32.gmra.mrb[0].mxu0 %v2871
        %v2873 = vpop.f32.mrb[0].mxu0
        %v2874 = vadd.f32 0.0, %v2873
        %v2875 = vpop.f32.mrb[0].mxu0
        %2876 = vmatprep.mubr.f32.mxu0 0.0
        %v2877 = vand.u32 %v2628, 4294901760
        %v2878 = vsub.f32 %v2628, %v2877
        %v2879 = vand.u32 %v2878, 4294901760
        %v2880 = vsub.f32 %v2878, %v2879
        %v2881 = vand.u32 %v2880, 4294901760
        %2882 = vmatmul.mubr.f32.gmra.mrb[0].mxu0 %v2881
        %v2883 = vpop.f32.mrb[0].mxu0
        %v2884 = vadd.f32 0.0, %v2883
        %v2885 = vpop.f32.mrb[0].mxu0
        %2886 = vmatprep.mubr.f32.mxu0 0.0
        %v2887 = vand.u32 %v2631, 4294901760
        %v2888 = vsub.f32 %v2631, %v2887
        %v2889 = vand.u32 %v2888, 4294901760
        %v2890 = vsub.f32 %v2888, %v2889
        %v2891 = vand.u32 %v2890, 4294901760
        %2892 = vmatmul.mubr.f32.gmra.mrb[0].mxu0 %v2891
        %v2893 = vpop.f32.mrb[0].mxu0
        %v2894 = vadd.f32 0.0, %v2893
        %v2895 = vpop.f32.mrb[0].mxu0
        %2896 = vmatprep.mubr.f32.mxu0 0.0
        %v2897 = vand.u32 %v2634, 4294901760
        %v2898 = vsub.f32 %v2634, %v2897
        %v2899 = vand.u32 %v2898, 4294901760
        %v2900 = vsub.f32 %v2898, %v2899
        %v2901 = vand.u32 %v2900, 4294901760
        %2902 = vmatmul.mubr.f32.gmra.mrb[0].mxu0 %v2901
        %v2903 = vpop.f32.mrb[0].mxu0
        %v2904 = vadd.f32 0.0, %v2903
        %v2905 = vpop.f32.mrb[0].mxu0
        %2906 = vmatprep.mubr.f32.mxu0 0.0
        %v2907 = vand.u32 %v2637, 4294901760
        %v2908 = vsub.f32 %v2637, %v2907
        %v2909 = vand.u32 %v2908, 4294901760
        %v2910 = vsub.f32 %v2908, %v2909
        %v2911 = vand.u32 %v2910, 4294901760
        %2912 = vmatmul.mubr.f32.gmra.mrb[0].mxu0 %v2911
        %v2913 = vpop.f32.mrb[0].mxu0
        %v2914 = vadd.f32 0.0, %v2913
        %v2915 = vpop.f32.mrb[0].mxu0
        %2916 = vmatprep.mubr.f32.mxu0 0.0
        %v2917 = vand.u32 %v2640, 4294901760
        %v2918 = vsub.f32 %v2640, %v2917
        %v2919 = vand.u32 %v2918, 4294901760
        %v2920 = vsub.f32 %v2918, %v2919
        %v2921 = vand.u32 %v2920, 4294901760
        %2922 = vmatmul.mubr.f32.gmra.mrb[0].mxu0 %v2921
        %v2923 = vpop.f32.mrb[0].mxu0
        %v2924 = vadd.f32 0.0, %v2923
        %v2925 = vpop.f32.mrb[0].mxu0
        %2926 = vmatprep.mubr.f32.mxu0 0.0
        %v2927 = vand.u32 %v2643, 4294901760
        %v2928 = vsub.f32 %v2643, %v2927
        %v2929 = vand.u32 %v2928, 4294901760
        %v2930 = vsub.f32 %v2928, %v2929
        %v2931 = vand.u32 %v2930, 4294901760
        %2932 = vmatmul.mubr.f32.gmra.mrb[0].mxu0 %v2931
        %v2933 = vpop.f32.mrb[0].mxu0
        %v2934 = vadd.f32 0.0, %v2933
        %v2935 = vpop.f32.mrb[0].mxu0
        %2936 = vmatprep.mubr.f32.mxu0 0.0
        %v2937 = vand.u32 %v2646, 4294901760
        %v2938 = vsub.f32 %v2646, %v2937
        %v2939 = vand.u32 %v2938, 4294901760
        %v2940 = vsub.f32 %v2938, %v2939
        %v2941 = vand.u32 %v2940, 4294901760
        %2942 = vmatmul.mubr.f32.gmra.mrb[0].mxu0 %v2941
        %v2943 = vpop.f32.mrb[0].mxu0
        %v2944 = vadd.f32 0.0, %v2943
        %v2945 = vpop.f32.mrb[0].mxu0
        %2946 = vmatprep.mubr.f32.mxu0 0.0
        %v2947 = vand.u32 %v2649, 4294901760
        %v2948 = vsub.f32 %v2649, %v2947
        %v2949 = vand.u32 %v2948, 4294901760
        %v2950 = vsub.f32 %v2948, %v2949
        %v2951 = vand.u32 %v2950, 4294901760
        %2952 = vmatmul.mubr.f32.gmra.mrb[0].mxu0 %v2951
        %v2953 = vpop.f32.mrb[0].mxu0
        %v2954 = vadd.f32 0.0, %v2953
        %v2955 = vpop.f32.mrb[0].mxu0
        %2956 = vmatprep.mubr.f32.mxu0 0.0
        %v2957 = vand.u32 %v2652, 4294901760
        %v2958 = vsub.f32 %v2652, %v2957
        %v2959 = vand.u32 %v2958, 4294901760
        %v2960 = vsub.f32 %v2958, %v2959
        %v2961 = vand.u32 %v2960, 4294901760
        %2962 = vmatmul.mubr.f32.gmra.mrb[0].mxu0 %v2961
        %v2963 = vpop.f32.mrb[0].mxu0
        %v2964 = vadd.f32 0.0, %v2963
        %v2965 = vpop.f32.mrb[0].mxu0
        %2966 = vmatprep.mubr.f32.mxu0 0.0
        %v2967 = vand.u32 %v2655, 4294901760
        %v2968 = vsub.f32 %v2655, %v2967
        %v2969 = vand.u32 %v2968, 4294901760
        %v2970 = vsub.f32 %v2968, %v2969
        %v2971 = vand.u32 %v2970, 4294901760
        %2972 = vmatmul.mubr.f32.gmra.mrb[0].mxu0 %v2971
        %v2973 = vpop.f32.mrb[0].mxu0
        %v2974 = vadd.f32 0.0, %v2973
        %v2975 = vpop.f32.mrb[0].mxu0
        %2976 = vmatprep.mubr.f32.mxu0 0.0
        %v2977 = vand.u32 %v2658, 4294901760
        %v2978 = vsub.f32 %v2658, %v2977
        %v2979 = vand.u32 %v2978, 4294901760
        %v2980 = vsub.f32 %v2978, %v2979
        %v2981 = vand.u32 %v2980, 4294901760
        %2982 = vmatmul.mubr.f32.gmra.mrb[0].mxu0 %v2981
        %v2983 = vpop.f32.mrb[0].mxu0
        %v2984 = vadd.f32 0.0, %v2983
        %v2985 = vpop.f32.mrb[0].mxu0
        %2986 = vmatprep.mubr.f32.mxu0 0.0
        %v2987 = vand.u32 %v2661, 4294901760
        %v2988 = vsub.f32 %v2661, %v2987
        %v2989 = vand.u32 %v2988, 4294901760
        %v2990 = vsub.f32 %v2988, %v2989
        %v2991 = vand.u32 %v2990, 4294901760
        %2992 = vmatmul.mubr.f32.gmra.mrb[0].mxu0 %v2991
        %v2993 = vpop.f32.mrb[0].mxu0
        %v2994 = vadd.f32 0.0, %v2993
        %v2995 = vpop.f32.mrb[0].mxu0
        %2996 = vmatprep.mubr.f32.mxu0 0.0
        %v2997 = vand.u32 %v2664, 4294901760
        %v2998 = vsub.f32 %v2664, %v2997
        %v2999 = vand.u32 %v2998, 4294901760
        %v3000 = vsub.f32 %v2998, %v2999
        %v3001 = vand.u32 %v3000, 4294901760
        %3002 = vmatmul.mubr.f32.gmra.mrb[0].mxu0 %v3001
        %v3003 = vpop.f32.mrb[0].mxu0
        %v3004 = vadd.f32 0.0, %v3003
        %v3005 = vpop.f32.mrb[0].mxu0
        %3006 = vmatprep.mubr.f32.mxu0 0.0
        %v3007 = vand.u32 %v2667, 4294901760
        %v3008 = vsub.f32 %v2667, %v3007
        %v3009 = vand.u32 %v3008, 4294901760
        %v3010 = vsub.f32 %v3008, %v3009
        %v3011 = vand.u32 %v3010, 4294901760
        %3012 = vmatmul.mubr.f32.gmra.mrb[0].mxu0 %v3011
        %v3013 = vpop.f32.mrb[0].mxu0
        %v3014 = vadd.f32 0.0, %v3013
        %v3015 = vpop.f32.mrb[0].mxu0
        %3016 = vmatprep.mubr.f32.mxu0 0.0
        %v3017 = vand.u32 %v2670, 4294901760
        %v3018 = vsub.f32 %v2670, %v3017
        %v3019 = vand.u32 %v3018, 4294901760
        %v3020 = vsub.f32 %v3018, %v3019
        %v3021 = vand.u32 %v3020, 4294901760
        %3022 = vmatmul.mubr.f32.gmra.mrb[0].mxu0 %v3021
        %v3023 = vpop.f32.mrb[0].mxu0
        %v3024 = vadd.f32 0.0, %v3023
        %v3025 = vpop.f32.mrb[0].mxu0
        %3026 = vmatprep.mubr.f32.mxu0 0.0
        %v3027 = vand.u32 %v2673, 4294901760
        %v3028 = vsub.f32 %v2673, %v3027
        %v3029 = vand.u32 %v3028, 4294901760
        %v3030 = vsub.f32 %v3028, %v3029
        %v3031 = vand.u32 %v3030, 4294901760
        %3032 = vmatmul.mubr.f32.gmra.mrb[0].mxu0 %v3031
        %v3033 = vpop.f32.mrb[0].mxu0
        %v3034 = vadd.f32 0.0, %v3033
        %v3035 = vpop.f32.mrb[0].mxu0
        %3036 = vmatprep.mubr.f32.mxu0 0.0
        %v3037 = vand.u32 %v2676, 4294901760
        %v3038 = vsub.f32 %v2676, %v3037
        %v3039 = vand.u32 %v3038, 4294901760
        %v3040 = vsub.f32 %v3038, %v3039
        %v3041 = vand.u32 %v3040, 4294901760
        %3042 = vmatmul.mubr.f32.gmra.mrb[0].mxu0 %v3041
        %v3043 = vpop.f32.mrb[0].mxu0
        %v3044 = vadd.f32 0.0, %v3043
        %v3045 = vpop.f32.mrb[0].mxu0
        %3046 = vmatprep.mubr.f32.mxu0 0.0
        %v3047 = vand.u32 %v2679, 4294901760
        %v3048 = vsub.f32 %v2679, %v3047
        %v3049 = vand.u32 %v3048, 4294901760
        %v3050 = vsub.f32 %v3048, %v3049
        %v3051 = vand.u32 %v3050, 4294901760
        %3052 = vmatmul.mubr.f32.gmra.mrb[0].mxu0 %v3051
        %v3053 = vpop.f32.mrb[0].mxu0
        %v3054 = vadd.f32 0.0, %v3053
        %v3055 = vpop.f32.mrb[0].mxu0
        %3056 = vmatprep.mubr.f32.mxu0 0.0
        %v3057 = vand.u32 %v2682, 4294901760
        %v3058 = vsub.f32 %v2682, %v3057
        %v3059 = vand.u32 %v3058, 4294901760
        %v3060 = vsub.f32 %v3058, %v3059
        %v3061 = vand.u32 %v3060, 4294901760
        %3062 = vmatmul.mubr.f32.gmra.mrb[0].mxu0 %v3061
        %v3063 = vpop.f32.mrb[0].mxu0
        %v3064 = vadd.f32 0.0, %v3063
        %v3065 = vpop.f32.mrb[0].mxu0
        %3066 = vmatprep.mubr.f32.mxu0 0.0
        %v3067 = vand.u32 %v2685, 4294901760
        %v3068 = vsub.f32 %v2685, %v3067
        %v3069 = vand.u32 %v3068, 4294901760
        %v3070 = vsub.f32 %v3068, %v3069
        %v3071 = vand.u32 %v3070, 4294901760
        %3072 = vmatmul.mubr.f32.gmra.mrb[0].mxu0 %v3071
        %v3073 = vpop.f32.mrb[0].mxu0
        %v3074 = vadd.f32 0.0, %v3073
        %v3075 = vpop.f32.mrb[0].mxu0
        %3076 = vdwg.mxu0
        %3077 = vmatprep.subr.mxu0 0.0
        %v3078 = vand.u32 %v2689, 4294901760
        %v3079 = vsub.f32 %v2689, %v3078
        %v3080 = vand.u32 %v3079, 4294901760
        %v3081 = vsub.f32 %v3079, %v3080
        %v3082 = vand.u32 %v3081, 4294901760
        %3083 = vmatpush1.msra.mxu0 %v3082
        %3084 = vmatprep.subr.mxu0 0.0
        %3085 = vmatpush1.msra.mxu0 0.0
        %3086 = vmatprep.subr.mxu0 0.0
        %3087 = vmatpush1.msra.mxu0 0.0
        %3088 = vmatprep.subr.mxu0 0.0
        %3089 = vmatpush1.msra.mxu0 0.0
        %3090 = vmatprep.subr.mxu0 0.0
        %3091 = vmatpush1.msra.mxu0 0.0
        %3092 = vmatprep.subr.mxu0 0.0
        %3093 = vmatpush1.msra.mxu0 0.0
        %3094 = vmatprep.subr.mxu0 0.0
        %3095 = vmatpush1.msra.mxu0 0.0
        %3096 = vmatprep.subr.mxu0 0.0
        %3097 = vmatpush1.msra.mxu0 0.0
        %3098 = vmatprep.subr.mxu0 0.0
        %3099 = vmatpush1.msra.mxu0 0.0
        %3100 = vmatprep.subr.mxu0 0.0
        %3101 = vmatpush1.msra.mxu0 0.0
        %3102 = vmatprep.subr.mxu0 0.0
        %3103 = vmatpush1.msra.mxu0 0.0
        %3104 = vmatprep.subr.mxu0 0.0
        %3105 = vmatpush1.msra.mxu0 0.0
        %3106 = vmatprep.subr.mxu0 0.0
        %3107 = vmatpush1.msra.mxu0 0.0
        %3108 = vmatprep.subr.mxu0 0.0
        %3109 = vmatpush1.msra.mxu0 0.0
        %3110 = vmatprep.subr.mxu0 0.0
        %3111 = vmatpush1.msra.mxu0 0.0
        %3112 = vmatprep.subr.mxu0 0.0
        %3113 = vmatpush1.msra.mxu0 0.0
        %3114 = vmatprep.subr.mxu0 0.0
        %3115 = vmatpush1.msra.mxu0 0.0
        %3116 = vmatprep.subr.mxu0 0.0
        %3117 = vmatpush1.msra.mxu0 0.0
        %3118 = vmatprep.subr.mxu0 0.0
        %3119 = vmatpush1.msra.mxu0 0.0
        %3120 = vmatprep.subr.mxu0 0.0
        %3121 = vmatpush1.msra.mxu0 0.0
        %3122 = vmatprep.subr.mxu0 0.0
        %3123 = vmatpush1.msra.mxu0 0.0
        %3124 = vmatprep.subr.mxu0 0.0
        %3125 = vmatpush1.msra.mxu0 0.0
        %3126 = vmatprep.subr.mxu0 0.0
        %3127 = vmatpush1.msra.mxu0 0.0
        %3128 = vmatprep.subr.mxu0 0.0
        %3129 = vmatpush1.msra.mxu0 0.0
        %3130 = vmatprep.subr.mxu0 0.0
        %3131 = vmatpush1.msra.mxu0 0.0
        %3132 = vmatprep.subr.mxu0 0.0
        %3133 = vmatpush1.msra.mxu0 0.0
        %3134 = vmatprep.subr.mxu0 0.0
        %3135 = vmatpush1.msra.mxu0 0.0
        %3136 = vmatprep.subr.mxu0 0.0
        %3137 = vmatpush1.msra.mxu0 0.0
        %3138 = vmatprep.subr.mxu0 0.0
        %3139 = vmatpush1.msra.mxu0 0.0
        %3140 = vmatprep.subr.mxu0 0.0
        %3141 = vmatpush1.msra.mxu0 0.0
        %3142 = vmatprep.subr.mxu0 0.0
        %3143 = vmatpush1.msra.mxu0 0.0
        %3144 = vmatprep.subr.mxu0 0.0
        %3145 = vmatpush1.msra.mxu0 0.0
        %3146 = vmatprep.mubr.f32.mxu0 0.0
        %v3147 = vand.u32 %v2592, 4294901760
        %3148 = vmatmul.mubr.f32.gmra.mrb[0].mxu0 %v3147
        %v3149 = vpop.f32.mrb[0].mxu0
        %v3150 = vadd.f32 %v2764, %v3149
        %v3151 = vpop.f32.mrb[0].mxu0
        %3152 = vmatprep.mubr.f32.mxu0 0.0
        %v3153 = vand.u32 %v2595, 4294901760
        %3154 = vmatmul.mubr.f32.gmra.mrb[0].mxu0 %v3153
        %v3155 = vpop.f32.mrb[0].mxu0
        %v3156 = vadd.f32 %v2774, %v3155
        %v3157 = vpop.f32.mrb[0].mxu0
        %3158 = vmatprep.mubr.f32.mxu0 0.0
        %v3159 = vand.u32 %v2598, 4294901760
        %3160 = vmatmul.mubr.f32.gmra.mrb[0].mxu0 %v3159
        %v3161 = vpop.f32.mrb[0].mxu0
        %v3162 = vadd.f32 %v2784, %v3161
        %v3163 = vpop.f32.mrb[0].mxu0
        %3164 = vmatprep.mubr.f32.mxu0 0.0
        %v3165 = vand.u32 %v2601, 4294901760
        %3166 = vmatmul.mubr.f32.gmra.mrb[0].mxu0 %v3165
        %v3167 = vpop.f32.mrb[0].mxu0
        %v3168 = vadd.f32 %v2794, %v3167
        %v3169 = vpop.f32.mrb[0].mxu0
        %3170 = vmatprep.mubr.f32.mxu0 0.0
        %v3171 = vand.u32 %v2604, 4294901760
        %3172 = vmatmul.mubr.f32.gmra.mrb[0].mxu0 %v3171
        %v3173 = vpop.f32.mrb[0].mxu0
        %v3174 = vadd.f32 %v2804, %v3173
        %v3175 = vpop.f32.mrb[0].mxu0
        %3176 = vmatprep.mubr.f32.mxu0 0.0
        %v3177 = vand.u32 %v2607, 4294901760
        %3178 = vmatmul.mubr.f32.gmra.mrb[0].mxu0 %v3177
        %v3179 = vpop.f32.mrb[0].mxu0
        %v3180 = vadd.f32 %v2814, %v3179
        %v3181 = vpop.f32.mrb[0].mxu0
        %3182 = vmatprep.mubr.f32.mxu0 0.0
        %v3183 = vand.u32 %v2610, 4294901760
        %3184 = vmatmul.mubr.f32.gmra.mrb[0].mxu0 %v3183
        %v3185 = vpop.f32.mrb[0].mxu0
        %v3186 = vadd.f32 %v2824, %v3185
        %v3187 = vpop.f32.mrb[0].mxu0
        %3188 = vmatprep.mubr.f32.mxu0 0.0
        %v3189 = vand.u32 %v2613, 4294901760
        %3190 = vmatmul.mubr.f32.gmra.mrb[0].mxu0 %v3189
        %v3191 = vpop.f32.mrb[0].mxu0
        %v3192 = vadd.f32 %v2834, %v3191
        %v3193 = vpop.f32.mrb[0].mxu0
        %3194 = vmatprep.mubr.f32.mxu0 0.0
        %v3195 = vand.u32 %v2616, 4294901760
        %3196 = vmatmul.mubr.f32.gmra.mrb[0].mxu0 %v3195
        %v3197 = vpop.f32.mrb[0].mxu0
        %v3198 = vadd.f32 %v2844, %v3197
        %v3199 = vpop.f32.mrb[0].mxu0
        %3200 = vmatprep.mubr.f32.mxu0 0.0
        %v3201 = vand.u32 %v2619, 4294901760
        %3202 = vmatmul.mubr.f32.gmra.mrb[0].mxu0 %v3201
        %v3203 = vpop.f32.mrb[0].mxu0
        %v3204 = vadd.f32 %v2854, %v3203
        %v3205 = vpop.f32.mrb[0].mxu0
        %3206 = vmatprep.mubr.f32.mxu0 0.0
        %v3207 = vand.u32 %v2622, 4294901760
        %3208 = vmatmul.mubr.f32.gmra.mrb[0].mxu0 %v3207
        %v3209 = vpop.f32.mrb[0].mxu0
        %v3210 = vadd.f32 %v2864, %v3209
        %v3211 = vpop.f32.mrb[0].mxu0
        %3212 = vmatprep.mubr.f32.mxu0 0.0
        %v3213 = vand.u32 %v2625, 4294901760
        %3214 = vmatmul.mubr.f32.gmra.mrb[0].mxu0 %v3213
        %v3215 = vpop.f32.mrb[0].mxu0
        %v3216 = vadd.f32 %v2874, %v3215
        %v3217 = vpop.f32.mrb[0].mxu0
        %3218 = vmatprep.mubr.f32.mxu0 0.0
        %v3219 = vand.u32 %v2628, 4294901760
        %3220 = vmatmul.mubr.f32.gmra.mrb[0].mxu0 %v3219
        %v3221 = vpop.f32.mrb[0].mxu0
        %v3222 = vadd.f32 %v2884, %v3221
        %v3223 = vpop.f32.mrb[0].mxu0
        %3224 = vmatprep.mubr.f32.mxu0 0.0
        %v3225 = vand.u32 %v2631, 4294901760
        %3226 = vmatmul.mubr.f32.gmra.mrb[0].mxu0 %v3225
        %v3227 = vpop.f32.mrb[0].mxu0
        %v3228 = vadd.f32 %v2894, %v3227
        %v3229 = vpop.f32.mrb[0].mxu0
        %3230 = vmatprep.mubr.f32.mxu0 0.0
        %v3231 = vand.u32 %v2634, 4294901760
        %3232 = vmatmul.mubr.f32.gmra.mrb[0].mxu0 %v3231
        %v3233 = vpop.f32.mrb[0].mxu0
        %v3234 = vadd.f32 %v2904, %v3233
        %v3235 = vpop.f32.mrb[0].mxu0
        %3236 = vmatprep.mubr.f32.mxu0 0.0
        %v3237 = vand.u32 %v2637, 4294901760
        %3238 = vmatmul.mubr.f32.gmra.mrb[0].mxu0 %v3237
        %v3239 = vpop.f32.mrb[0].mxu0
        %v3240 = vadd.f32 %v2914, %v3239
        %v3241 = vpop.f32.mrb[0].mxu0
        %3242 = vmatprep.mubr.f32.mxu0 0.0
        %v3243 = vand.u32 %v2640, 4294901760
        %3244 = vmatmul.mubr.f32.gmra.mrb[0].mxu0 %v3243
        %v3245 = vpop.f32.mrb[0].mxu0
        %v3246 = vadd.f32 %v2924, %v3245
        %v3247 = vpop.f32.mrb[0].mxu0
        %3248 = vmatprep.mubr.f32.mxu0 0.0
        %v3249 = vand.u32 %v2643, 4294901760
        %3250 = vmatmul.mubr.f32.gmra.mrb[0].mxu0 %v3249
        %v3251 = vpop.f32.mrb[0].mxu0
        %v3252 = vadd.f32 %v2934, %v3251
        %v3253 = vpop.f32.mrb[0].mxu0
        %3254 = vmatprep.mubr.f32.mxu0 0.0
        %v3255 = vand.u32 %v2646, 4294901760
        %3256 = vmatmul.mubr.f32.gmra.mrb[0].mxu0 %v3255
        %v3257 = vpop.f32.mrb[0].mxu0
        %v3258 = vadd.f32 %v2944, %v3257
        %v3259 = vpop.f32.mrb[0].mxu0
        %3260 = vmatprep.mubr.f32.mxu0 0.0
        %v3261 = vand.u32 %v2649, 4294901760
        %3262 = vmatmul.mubr.f32.gmra.mrb[0].mxu0 %v3261
        %v3263 = vpop.f32.mrb[0].mxu0
        %v3264 = vadd.f32 %v2954, %v3263
        %v3265 = vpop.f32.mrb[0].mxu0
        %3266 = vmatprep.mubr.f32.mxu0 0.0
        %v3267 = vand.u32 %v2652, 4294901760
        %3268 = vmatmul.mubr.f32.gmra.mrb[0].mxu0 %v3267
        %v3269 = vpop.f32.mrb[0].mxu0
        %v3270 = vadd.f32 %v2964, %v3269
        %v3271 = vpop.f32.mrb[0].mxu0
        %3272 = vmatprep.mubr.f32.mxu0 0.0
        %v3273 = vand.u32 %v2655, 4294901760
        %3274 = vmatmul.mubr.f32.gmra.mrb[0].mxu0 %v3273
        %v3275 = vpop.f32.mrb[0].mxu0
        %v3276 = vadd.f32 %v2974, %v3275
        %v3277 = vpop.f32.mrb[0].mxu0
        %3278 = vmatprep.mubr.f32.mxu0 0.0
        %v3279 = vand.u32 %v2658, 4294901760
        %3280 = vmatmul.mubr.f32.gmra.mrb[0].mxu0 %v3279
        %v3281 = vpop.f32.mrb[0].mxu0
        %v3282 = vadd.f32 %v2984, %v3281
        %v3283 = vpop.f32.mrb[0].mxu0
        %3284 = vmatprep.mubr.f32.mxu0 0.0
        %v3285 = vand.u32 %v2661, 4294901760
        %3286 = vmatmul.mubr.f32.gmra.mrb[0].mxu0 %v3285
        %v3287 = vpop.f32.mrb[0].mxu0
        %v3288 = vadd.f32 %v2994, %v3287
        %v3289 = vpop.f32.mrb[0].mxu0
        %3290 = vmatprep.mubr.f32.mxu0 0.0
        %v3291 = vand.u32 %v2664, 4294901760
        %3292 = vmatmul.mubr.f32.gmra.mrb[0].mxu0 %v3291
        %v3293 = vpop.f32.mrb[0].mxu0
        %v3294 = vadd.f32 %v3004, %v3293
        %v3295 = vpop.f32.mrb[0].mxu0
        %3296 = vmatprep.mubr.f32.mxu0 0.0
        %v3297 = vand.u32 %v2667, 4294901760
        %3298 = vmatmul.mubr.f32.gmra.mrb[0].mxu0 %v3297
        %v3299 = vpop.f32.mrb[0].mxu0
        %v3300 = vadd.f32 %v3014, %v3299
        %v3301 = vpop.f32.mrb[0].mxu0
        %3302 = vmatprep.mubr.f32.mxu0 0.0
        %v3303 = vand.u32 %v2670, 4294901760
        %3304 = vmatmul.mubr.f32.gmra.mrb[0].mxu0 %v3303
        %v3305 = vpop.f32.mrb[0].mxu0
        %v3306 = vadd.f32 %v3024, %v3305
        %v3307 = vpop.f32.mrb[0].mxu0
        %3308 = vmatprep.mubr.f32.mxu0 0.0
        %v3309 = vand.u32 %v2673, 4294901760
        %3310 = vmatmul.mubr.f32.gmra.mrb[0].mxu0 %v3309
        %v3311 = vpop.f32.mrb[0].mxu0
        %v3312 = vadd.f32 %v3034, %v3311
        %v3313 = vpop.f32.mrb[0].mxu0
        %3314 = vmatprep.mubr.f32.mxu0 0.0
        %v3315 = vand.u32 %v2676, 4294901760
        %3316 = vmatmul.mubr.f32.gmra.mrb[0].mxu0 %v3315
        %v3317 = vpop.f32.mrb[0].mxu0
        %v3318 = vadd.f32 %v3044, %v3317
        %v3319 = vpop.f32.mrb[0].mxu0
        %3320 = vmatprep.mubr.f32.mxu0 0.0
        %v3321 = vand.u32 %v2679, 4294901760
        %3322 = vmatmul.mubr.f32.gmra.mrb[0].mxu0 %v3321
        %v3323 = vpop.f32.mrb[0].mxu0
        %v3324 = vadd.f32 %v3054, %v3323
        %v3325 = vpop.f32.mrb[0].mxu0
        %3326 = vmatprep.mubr.f32.mxu0 0.0
        %v3327 = vand.u32 %v2682, 4294901760
        %3328 = vmatmul.mubr.f32.gmra.mrb[0].mxu0 %v3327
        %v3329 = vpop.f32.mrb[0].mxu0
        %v3330 = vadd.f32 %v3064, %v3329
        %v3331 = vpop.f32.mrb[0].mxu0
        %3332 = vmatprep.mubr.f32.mxu0 0.0
        %v3333 = vand.u32 %v2685, 4294901760
        %3334 = vmatmul.mubr.f32.gmra.mrb[0].mxu0 %v3333
        %v3335 = vpop.f32.mrb[0].mxu0
        %v3336 = vadd.f32 %v3074, %v3335
        %v3337 = vpop.f32.mrb[0].mxu0
        %3338 = vdwg.mxu0
        %3339 = vmatprep.subr.mxu0 0.0
        %v3340 = vand.u32 %v2689, 4294901760
        %v3341 = vsub.f32 %v2689, %v3340
        %3342 = vmatpush1.msra.mxu0 %v3341
        %3343 = vmatprep.subr.mxu0 0.0
        %3344 = vmatpush1.msra.mxu0 0.0
        %3345 = vmatprep.subr.mxu0 0.0
        %3346 = vmatpush1.msra.mxu0 0.0
        %3347 = vmatprep.subr.mxu0 0.0
        %3348 = vmatpush1.msra.mxu0 0.0
        %3349 = vmatprep.subr.mxu0 0.0
        %3350 = vmatpush1.msra.mxu0 0.0
        %3351 = vmatprep.subr.mxu0 0.0
        %3352 = vmatpush1.msra.mxu0 0.0
        %3353 = vmatprep.subr.mxu0 0.0
        %3354 = vmatpush1.msra.mxu0 0.0
        %3355 = vmatprep.subr.mxu0 0.0
        %3356 = vmatpush1.msra.mxu0 0.0
        %3357 = vmatprep.subr.mxu0 0.0
        %3358 = vmatpush1.msra.mxu0 0.0
        %3359 = vmatprep.subr.mxu0 0.0
        %3360 = vmatpush1.msra.mxu0 0.0
        %3361 = vmatprep.subr.mxu0 0.0
        %3362 = vmatpush1.msra.mxu0 0.0
        %3363 = vmatprep.subr.mxu0 0.0
        %3364 = vmatpush1.msra.mxu0 0.0
        %3365 = vmatprep.subr.mxu0 0.0
        %3366 = vmatpush1.msra.mxu0 0.0
        %3367 = vmatprep.subr.mxu0 0.0
        %3368 = vmatpush1.msra.mxu0 0.0
        %3369 = vmatprep.subr.mxu0 0.0
        %3370 = vmatpush1.msra.mxu0 0.0
        %3371 = vmatprep.subr.mxu0 0.0
        %3372 = vmatpush1.msra.mxu0 0.0
        %3373 = vmatprep.subr.mxu0 0.0
        %3374 = vmatpush1.msra.mxu0 0.0
        %3375 = vmatprep.subr.mxu0 0.0
        %3376 = vmatpush1.msra.mxu0 0.0
        %3377 = vmatprep.subr.mxu0 0.0
        %3378 = vmatpush1.msra.mxu0 0.0
        %3379 = vmatprep.subr.mxu0 0.0
        %3380 = vmatpush1.msra.mxu0 0.0
        %3381 = vmatprep.subr.mxu0 0.0
        %3382 = vmatpush1.msra.mxu0 0.0
        %3383 = vmatprep.subr.mxu0 0.0
        %3384 = vmatpush1.msra.mxu0 0.0
        %3385 = vmatprep.subr.mxu0 0.0
        %3386 = vmatpush1.msra.mxu0 0.0
        %3387 = vmatprep.subr.mxu0 0.0
        %3388 = vmatpush1.msra.mxu0 0.0
        %3389 = vmatprep.subr.mxu0 0.0
        %3390 = vmatpush1.msra.mxu0 0.0
        %3391 = vmatprep.subr.mxu0 0.0
        %3392 = vmatpush1.msra.mxu0 0.0
        %3393 = vmatprep.subr.mxu0 0.0
        %3394 = vmatpush1.msra.mxu0 0.0
        %3395 = vmatprep.subr.mxu0 0.0
        %3396 = vmatpush1.msra.mxu0 0.0
        %3397 = vmatprep.subr.mxu0 0.0
        %3398 = vmatpush1.msra.mxu0 0.0
        %3399 = vmatprep.subr.mxu0 0.0
        %3400 = vmatpush1.msra.mxu0 0.0
        %3401 = vmatprep.subr.mxu0 0.0
        %3402 = vmatpush1.msra.mxu0 0.0
        %3403 = vmatprep.subr.mxu0 0.0
        %3404 = vmatpush1.msra.mxu0 0.0
        %3405 = vmatprep.mubr.f32.mxu0 0.0
        %v3406 = vand.u32 %v2592, 4294901760
        %v3407 = vsub.f32 %v2592, %v3406
        %3408 = vmatmul.mubr.f32.gmra.mrb[0].mxu0 %v3407
        %v3409 = vpop.f32.mrb[0].mxu0
        %v3410 = vadd.f32 %v3150, %v3409
        %v3411 = vpop.f32.mrb[0].mxu0
        %3412 = vmatprep.mubr.f32.mxu0 0.0
        %v3413 = vand.u32 %v2595, 4294901760
        %v3414 = vsub.f32 %v2595, %v3413
        %3415 = vmatmul.mubr.f32.gmra.mrb[0].mxu0 %v3414
        %v3416 = vpop.f32.mrb[0].mxu0
        %v3417 = vadd.f32 %v3156, %v3416
        %v3418 = vpop.f32.mrb[0].mxu0
        %3419 = vmatprep.mubr.f32.mxu0 0.0
        %v3420 = vand.u32 %v2598, 4294901760
        %v3421 = vsub.f32 %v2598, %v3420
        %3422 = vmatmul.mubr.f32.gmra.mrb[0].mxu0 %v3421
        %v3423 = vpop.f32.mrb[0].mxu0
        %v3424 = vadd.f32 %v3162, %v3423
        %v3425 = vpop.f32.mrb[0].mxu0
        %3426 = vmatprep.mubr.f32.mxu0 0.0
        %v3427 = vand.u32 %v2601, 4294901760
        %v3428 = vsub.f32 %v2601, %v3427
        %3429 = vmatmul.mubr.f32.gmra.mrb[0].mxu0 %v3428
        %v3430 = vpop.f32.mrb[0].mxu0
        %v3431 = vadd.f32 %v3168, %v3430
        %v3432 = vpop.f32.mrb[0].mxu0
        %3433 = vmatprep.mubr.f32.mxu0 0.0
        %v3434 = vand.u32 %v2604, 4294901760
        %v3435 = vsub.f32 %v2604, %v3434
        %3436 = vmatmul.mubr.f32.gmra.mrb[0].mxu0 %v3435
        %v3437 = vpop.f32.mrb[0].mxu0
        %v3438 = vadd.f32 %v3174, %v3437
        %v3439 = vpop.f32.mrb[0].mxu0
        %3440 = vmatprep.mubr.f32.mxu0 0.0
        %v3441 = vand.u32 %v2607, 4294901760
        %v3442 = vsub.f32 %v2607, %v3441
        %3443 = vmatmul.mubr.f32.gmra.mrb[0].mxu0 %v3442
        %v3444 = vpop.f32.mrb[0].mxu0
        %v3445 = vadd.f32 %v3180, %v3444
        %v3446 = vpop.f32.mrb[0].mxu0
        %3447 = vmatprep.mubr.f32.mxu0 0.0
        %v3448 = vand.u32 %v2610, 4294901760
        %v3449 = vsub.f32 %v2610, %v3448
        %3450 = vmatmul.mubr.f32.gmra.mrb[0].mxu0 %v3449
        %v3451 = vpop.f32.mrb[0].mxu0
        %v3452 = vadd.f32 %v3186, %v3451
        %v3453 = vpop.f32.mrb[0].mxu0
        %3454 = vmatprep.mubr.f32.mxu0 0.0
        %v3455 = vand.u32 %v2613, 4294901760
        %v3456 = vsub.f32 %v2613, %v3455
        %3457 = vmatmul.mubr.f32.gmra.mrb[0].mxu0 %v3456
        %v3458 = vpop.f32.mrb[0].mxu0
        %v3459 = vadd.f32 %v3192, %v3458
        %v3460 = vpop.f32.mrb[0].mxu0
        %3461 = vmatprep.mubr.f32.mxu0 0.0
        %v3462 = vand.u32 %v2616, 4294901760
        %v3463 = vsub.f32 %v2616, %v3462
        %3464 = vmatmul.mubr.f32.gmra.mrb[0].mxu0 %v3463
        %v3465 = vpop.f32.mrb[0].mxu0
        %v3466 = vadd.f32 %v3198, %v3465
        %v3467 = vpop.f32.mrb[0].mxu0
        %3468 = vmatprep.mubr.f32.mxu0 0.0
        %v3469 = vand.u32 %v2619, 4294901760
        %v3470 = vsub.f32 %v2619, %v3469
        %3471 = vmatmul.mubr.f32.gmra.mrb[0].mxu0 %v3470
        %v3472 = vpop.f32.mrb[0].mxu0
        %v3473 = vadd.f32 %v3204, %v3472
        %v3474 = vpop.f32.mrb[0].mxu0
        %3475 = vmatprep.mubr.f32.mxu0 0.0
        %v3476 = vand.u32 %v2622, 4294901760
        %v3477 = vsub.f32 %v2622, %v3476
        %3478 = vmatmul.mubr.f32.gmra.mrb[0].mxu0 %v3477
        %v3479 = vpop.f32.mrb[0].mxu0
        %v3480 = vadd.f32 %v3210, %v3479
        %v3481 = vpop.f32.mrb[0].mxu0
        %3482 = vmatprep.mubr.f32.mxu0 0.0
        %v3483 = vand.u32 %v2625, 4294901760
        %v3484 = vsub.f32 %v2625, %v3483
        %3485 = vmatmul.mubr.f32.gmra.mrb[0].mxu0 %v3484
        %v3486 = vpop.f32.mrb[0].mxu0
        %v3487 = vadd.f32 %v3216, %v3486
        %v3488 = vpop.f32.mrb[0].mxu0
        %3489 = vmatprep.mubr.f32.mxu0 0.0
        %v3490 = vand.u32 %v2628, 4294901760
        %v3491 = vsub.f32 %v2628, %v3490
        %3492 = vmatmul.mubr.f32.gmra.mrb[0].mxu0 %v3491
        %v3493 = vpop.f32.mrb[0].mxu0
        %v3494 = vadd.f32 %v3222, %v3493
        %v3495 = vpop.f32.mrb[0].mxu0
        %3496 = vmatprep.mubr.f32.mxu0 0.0
        %v3497 = vand.u32 %v2631, 4294901760
        %v3498 = vsub.f32 %v2631, %v3497
        %3499 = vmatmul.mubr.f32.gmra.mrb[0].mxu0 %v3498
        %v3500 = vpop.f32.mrb[0].mxu0
        %v3501 = vadd.f32 %v3228, %v3500
        %v3502 = vpop.f32.mrb[0].mxu0
        %3503 = vmatprep.mubr.f32.mxu0 0.0
        %v3504 = vand.u32 %v2634, 4294901760
        %v3505 = vsub.f32 %v2634, %v3504
        %3506 = vmatmul.mubr.f32.gmra.mrb[0].mxu0 %v3505
        %v3507 = vpop.f32.mrb[0].mxu0
        %v3508 = vadd.f32 %v3234, %v3507
        %v3509 = vpop.f32.mrb[0].mxu0
        %3510 = vmatprep.mubr.f32.mxu0 0.0
        %v3511 = vand.u32 %v2637, 4294901760
        %v3512 = vsub.f32 %v2637, %v3511
        %3513 = vmatmul.mubr.f32.gmra.mrb[0].mxu0 %v3512
        %v3514 = vpop.f32.mrb[0].mxu0
        %v3515 = vadd.f32 %v3240, %v3514
        %v3516 = vpop.f32.mrb[0].mxu0
        %3517 = vmatprep.mubr.f32.mxu0 0.0
        %v3518 = vand.u32 %v2640, 4294901760
        %v3519 = vsub.f32 %v2640, %v3518
        %3520 = vmatmul.mubr.f32.gmra.mrb[0].mxu0 %v3519
        %v3521 = vpop.f32.mrb[0].mxu0
        %v3522 = vadd.f32 %v3246, %v3521
        %v3523 = vpop.f32.mrb[0].mxu0
        %3524 = vmatprep.mubr.f32.mxu0 0.0
        %v3525 = vand.u32 %v2643, 4294901760
        %v3526 = vsub.f32 %v2643, %v3525
        %3527 = vmatmul.mubr.f32.gmra.mrb[0].mxu0 %v3526
        %v3528 = vpop.f32.mrb[0].mxu0
        %v3529 = vadd.f32 %v3252, %v3528
        %v3530 = vpop.f32.mrb[0].mxu0
        %3531 = vmatprep.mubr.f32.mxu0 0.0
        %v3532 = vand.u32 %v2646, 4294901760
        %v3533 = vsub.f32 %v2646, %v3532
        %3534 = vmatmul.mubr.f32.gmra.mrb[0].mxu0 %v3533
        %v3535 = vpop.f32.mrb[0].mxu0
        %v3536 = vadd.f32 %v3258, %v3535
        %v3537 = vpop.f32.mrb[0].mxu0
        %3538 = vmatprep.mubr.f32.mxu0 0.0
        %v3539 = vand.u32 %v2649, 4294901760
        %v3540 = vsub.f32 %v2649, %v3539
        %3541 = vmatmul.mubr.f32.gmra.mrb[0].mxu0 %v3540
        %v3542 = vpop.f32.mrb[0].mxu0
        %v3543 = vadd.f32 %v3264, %v3542
        %v3544 = vpop.f32.mrb[0].mxu0
        %3545 = vmatprep.mubr.f32.mxu0 0.0
        %v3546 = vand.u32 %v2652, 4294901760
        %v3547 = vsub.f32 %v2652, %v3546
        %3548 = vmatmul.mubr.f32.gmra.mrb[0].mxu0 %v3547
        %v3549 = vpop.f32.mrb[0].mxu0
        %v3550 = vadd.f32 %v3270, %v3549
        %v3551 = vpop.f32.mrb[0].mxu0
        %3552 = vmatprep.mubr.f32.mxu0 0.0
        %v3553 = vand.u32 %v2655, 4294901760
        %v3554 = vsub.f32 %v2655, %v3553
        %3555 = vmatmul.mubr.f32.gmra.mrb[0].mxu0 %v3554
        %v3556 = vpop.f32.mrb[0].mxu0
        %v3557 = vadd.f32 %v3276, %v3556
        %v3558 = vpop.f32.mrb[0].mxu0
        %3559 = vmatprep.mubr.f32.mxu0 0.0
        %v3560 = vand.u32 %v2658, 4294901760
        %v3561 = vsub.f32 %v2658, %v3560
        %3562 = vmatmul.mubr.f32.gmra.mrb[0].mxu0 %v3561
        %v3563 = vpop.f32.mrb[0].mxu0
        %v3564 = vadd.f32 %v3282, %v3563
        %v3565 = vpop.f32.mrb[0].mxu0
        %3566 = vmatprep.mubr.f32.mxu0 0.0
        %v3567 = vand.u32 %v2661, 4294901760
        %v3568 = vsub.f32 %v2661, %v3567
        %3569 = vmatmul.mubr.f32.gmra.mrb[0].mxu0 %v3568
        %v3570 = vpop.f32.mrb[0].mxu0
        %v3571 = vadd.f32 %v3288, %v3570
        %v3572 = vpop.f32.mrb[0].mxu0
        %3573 = vmatprep.mubr.f32.mxu0 0.0
        %v3574 = vand.u32 %v2664, 4294901760
        %v3575 = vsub.f32 %v2664, %v3574
        %3576 = vmatmul.mubr.f32.gmra.mrb[0].mxu0 %v3575
        %v3577 = vpop.f32.mrb[0].mxu0
        %v3578 = vadd.f32 %v3294, %v3577
        %v3579 = vpop.f32.mrb[0].mxu0
        %3580 = vmatprep.mubr.f32.mxu0 0.0
        %v3581 = vand.u32 %v2667, 4294901760
        %v3582 = vsub.f32 %v2667, %v3581
        %3583 = vmatmul.mubr.f32.gmra.mrb[0].mxu0 %v3582
        %v3584 = vpop.f32.mrb[0].mxu0
        %v3585 = vadd.f32 %v3300, %v3584
        %v3586 = vpop.f32.mrb[0].mxu0
        %3587 = vmatprep.mubr.f32.mxu0 0.0
        %v3588 = vand.u32 %v2670, 4294901760
        %v3589 = vsub.f32 %v2670, %v3588
        %3590 = vmatmul.mubr.f32.gmra.mrb[0].mxu0 %v3589
        %v3591 = vpop.f32.mrb[0].mxu0
        %v3592 = vadd.f32 %v3306, %v3591
        %v3593 = vpop.f32.mrb[0].mxu0
        %3594 = vmatprep.mubr.f32.mxu0 0.0
        %v3595 = vand.u32 %v2673, 4294901760
        %v3596 = vsub.f32 %v2673, %v3595
        %3597 = vmatmul.mubr.f32.gmra.mrb[0].mxu0 %v3596
        %v3598 = vpop.f32.mrb[0].mxu0
        %v3599 = vadd.f32 %v3312, %v3598
        %v3600 = vpop.f32.mrb[0].mxu0
        %3601 = vmatprep.mubr.f32.mxu0 0.0
        %v3602 = vand.u32 %v2676, 4294901760
        %v3603 = vsub.f32 %v2676, %v3602
        %3604 = vmatmul.mubr.f32.gmra.mrb[0].mxu0 %v3603
        %v3605 = vpop.f32.mrb[0].mxu0
        %v3606 = vadd.f32 %v3318, %v3605
        %v3607 = vpop.f32.mrb[0].mxu0
        %3608 = vmatprep.mubr.f32.mxu0 0.0
        %v3609 = vand.u32 %v2679, 4294901760
        %v3610 = vsub.f32 %v2679, %v3609
        %3611 = vmatmul.mubr.f32.gmra.mrb[0].mxu0 %v3610
        %v3612 = vpop.f32.mrb[0].mxu0
        %v3613 = vadd.f32 %v3324, %v3612
        %v3614 = vpop.f32.mrb[0].mxu0
        %3615 = vmatprep.mubr.f32.mxu0 0.0
        %v3616 = vand.u32 %v2682, 4294901760
        %v3617 = vsub.f32 %v2682, %v3616
        %3618 = vmatmul.mubr.f32.gmra.mrb[0].mxu0 %v3617
        %v3619 = vpop.f32.mrb[0].mxu0
        %v3620 = vadd.f32 %v3330, %v3619
        %v3621 = vpop.f32.mrb[0].mxu0
        %3622 = vmatprep.mubr.f32.mxu0 0.0
        %v3623 = vand.u32 %v2685, 4294901760
        %v3624 = vsub.f32 %v2685, %v3623
        %3625 = vmatmul.mubr.f32.gmra.mrb[0].mxu0 %v3624
        %v3626 = vpop.f32.mrb[0].mxu0
        %v3627 = vadd.f32 %v3336, %v3626
        %v3628 = vpop.f32.mrb[0].mxu0
        %3629 = vdwg.mxu0
        %3630 = vmatprep.subr.mxu0 0.0
        %v3631 = vand.u32 %v2689, 4294901760
        %3632 = vmatpush1.msra.mxu0 %v3631
        %3633 = vmatprep.subr.mxu0 0.0
        %3634 = vmatpush1.msra.mxu0 0.0
        %3635 = vmatprep.subr.mxu0 0.0
        %3636 = vmatpush1.msra.mxu0 0.0
        %3637 = vmatprep.subr.mxu0 0.0
        %3638 = vmatpush1.msra.mxu0 0.0
        %3639 = vmatprep.subr.mxu0 0.0
        %3640 = vmatpush1.msra.mxu0 0.0
        %3641 = vmatprep.subr.mxu0 0.0
        %3642 = vmatpush1.msra.mxu0 0.0
        %3643 = vmatprep.subr.mxu0 0.0
        %3644 = vmatpush1.msra.mxu0 0.0
        %3645 = vmatprep.subr.mxu0 0.0
        %3646 = vmatpush1.msra.mxu0 0.0
        %3647 = vmatprep.subr.mxu0 0.0
        %3648 = vmatpush1.msra.mxu0 0.0
        %3649 = vmatprep.subr.mxu0 0.0
        %3650 = vmatpush1.msra.mxu0 0.0
        %3651 = vmatprep.subr.mxu0 0.0
        %3652 = vmatpush1.msra.mxu0 0.0
        %3653 = vmatprep.subr.mxu0 0.0
        %3654 = vmatpush1.msra.mxu0 0.0
        %3655 = vmatprep.subr.mxu0 0.0
        %3656 = vmatpush1.msra.mxu0 0.0
        %3657 = vmatprep.subr.mxu0 0.0
        %3658 = vmatpush1.msra.mxu0 0.0
        %3659 = vmatprep.subr.mxu0 0.0
        %3660 = vmatpush1.msra.mxu0 0.0
        %3661 = vmatprep.subr.mxu0 0.0
        %3662 = vmatpush1.msra.mxu0 0.0
        %3663 = vmatprep.subr.mxu0 0.0
        %3664 = vmatpush1.msra.mxu0 0.0
        %3665 = vmatprep.subr.mxu0 0.0
        %3666 = vmatpush1.msra.mxu0 0.0
        %3667 = vmatprep.subr.mxu0 0.0
        %3668 = vmatpush1.msra.mxu0 0.0
        %3669 = vmatprep.subr.mxu0 0.0
        %3670 = vmatpush1.msra.mxu0 0.0
        %3671 = vmatprep.subr.mxu0 0.0
        %3672 = vmatpush1.msra.mxu0 0.0
        %3673 = vmatprep.subr.mxu0 0.0
        %3674 = vmatpush1.msra.mxu0 0.0
        %3675 = vmatprep.subr.mxu0 0.0
        %3676 = vmatpush1.msra.mxu0 0.0
        %3677 = vmatprep.subr.mxu0 0.0
        %3678 = vmatpush1.msra.mxu0 0.0
        %3679 = vmatprep.subr.mxu0 0.0
        %3680 = vmatpush1.msra.mxu0 0.0
        %3681 = vmatprep.subr.mxu0 0.0
        %3682 = vmatpush1.msra.mxu0 0.0
        %3683 = vmatprep.subr.mxu0 0.0
        %3684 = vmatpush1.msra.mxu0 0.0
        %3685 = vmatprep.subr.mxu0 0.0
        %3686 = vmatpush1.msra.mxu0 0.0
        %3687 = vmatprep.subr.mxu0 0.0
        %3688 = vmatpush1.msra.mxu0 0.0
        %3689 = vmatprep.subr.mxu0 0.0
        %3690 = vmatpush1.msra.mxu0 0.0
        %3691 = vmatprep.subr.mxu0 0.0
        %3692 = vmatpush1.msra.mxu0 0.0
        %3693 = vmatprep.subr.mxu0 0.0
        %3694 = vmatpush1.msra.mxu0 0.0
        %3695 = vmatprep.mubr.f32.mxu0 0.0
        %v3696 = vand.u32 %v2592, 4294901760
        %v3697 = vsub.f32 %v2592, %v3696
        %v3698 = vand.u32 %v3697, 4294901760
        %3699 = vmatmul.mubr.f32.gmra.mrb[0].mxu0 %v3698
        %v3700 = vpop.f32.mrb[0].mxu0
        %v3701 = vadd.f32 %v3410, %v3700
        %v3702 = vpop.f32.mrb[0].mxu0
        %3703 = vmatprep.mubr.f32.mxu0 0.0
        %v3704 = vand.u32 %v2595, 4294901760
        %v3705 = vsub.f32 %v2595, %v3704
        %v3706 = vand.u32 %v3705, 4294901760
        %3707 = vmatmul.mubr.f32.gmra.mrb[0].mxu0 %v3706
        %v3708 = vpop.f32.mrb[0].mxu0
        %v3709 = vadd.f32 %v3417, %v3708
        %v3710 = vpop.f32.mrb[0].mxu0
        %3711 = vmatprep.mubr.f32.mxu0 0.0
        %v3712 = vand.u32 %v2598, 4294901760
        %v3713 = vsub.f32 %v2598, %v3712
        %v3714 = vand.u32 %v3713, 4294901760
        %3715 = vmatmul.mubr.f32.gmra.mrb[0].mxu0 %v3714
        %v3716 = vpop.f32.mrb[0].mxu0
        %v3717 = vadd.f32 %v3424, %v3716
        %v3718 = vpop.f32.mrb[0].mxu0
        %3719 = vmatprep.mubr.f32.mxu0 0.0
        %v3720 = vand.u32 %v2601, 4294901760
        %v3721 = vsub.f32 %v2601, %v3720
        %v3722 = vand.u32 %v3721, 4294901760
        %3723 = vmatmul.mubr.f32.gmra.mrb[0].mxu0 %v3722
        %v3724 = vpop.f32.mrb[0].mxu0
        %v3725 = vadd.f32 %v3431, %v3724
        %v3726 = vpop.f32.mrb[0].mxu0
        %3727 = vmatprep.mubr.f32.mxu0 0.0
        %v3728 = vand.u32 %v2604, 4294901760
        %v3729 = vsub.f32 %v2604, %v3728
        %v3730 = vand.u32 %v3729, 4294901760
        %3731 = vmatmul.mubr.f32.gmra.mrb[0].mxu0 %v3730
        %v3732 = vpop.f32.mrb[0].mxu0
        %v3733 = vadd.f32 %v3438, %v3732
        %v3734 = vpop.f32.mrb[0].mxu0
        %3735 = vmatprep.mubr.f32.mxu0 0.0
        %v3736 = vand.u32 %v2607, 4294901760
        %v3737 = vsub.f32 %v2607, %v3736
        %v3738 = vand.u32 %v3737, 4294901760
        %3739 = vmatmul.mubr.f32.gmra.mrb[0].mxu0 %v3738
        %v3740 = vpop.f32.mrb[0].mxu0
        %v3741 = vadd.f32 %v3445, %v3740
        %v3742 = vpop.f32.mrb[0].mxu0
        %3743 = vmatprep.mubr.f32.mxu0 0.0
        %v3744 = vand.u32 %v2610, 4294901760
        %v3745 = vsub.f32 %v2610, %v3744
        %v3746 = vand.u32 %v3745, 4294901760
        %3747 = vmatmul.mubr.f32.gmra.mrb[0].mxu0 %v3746
        %v3748 = vpop.f32.mrb[0].mxu0
        %v3749 = vadd.f32 %v3452, %v3748
        %v3750 = vpop.f32.mrb[0].mxu0
        %3751 = vmatprep.mubr.f32.mxu0 0.0
        %v3752 = vand.u32 %v2613, 4294901760
        %v3753 = vsub.f32 %v2613, %v3752
        %v3754 = vand.u32 %v3753, 4294901760
        %3755 = vmatmul.mubr.f32.gmra.mrb[0].mxu0 %v3754
        %v3756 = vpop.f32.mrb[0].mxu0
        %v3757 = vadd.f32 %v3459, %v3756
        %v3758 = vpop.f32.mrb[0].mxu0
        %3759 = vmatprep.mubr.f32.mxu0 0.0
        %v3760 = vand.u32 %v2616, 4294901760
        %v3761 = vsub.f32 %v2616, %v3760
        %v3762 = vand.u32 %v3761, 4294901760
        %3763 = vmatmul.mubr.f32.gmra.mrb[0].mxu0 %v3762
        %v3764 = vpop.f32.mrb[0].mxu0
        %v3765 = vadd.f32 %v3466, %v3764
        %v3766 = vpop.f32.mrb[0].mxu0
        %3767 = vmatprep.mubr.f32.mxu0 0.0
        %v3768 = vand.u32 %v2619, 4294901760
        %v3769 = vsub.f32 %v2619, %v3768
        %v3770 = vand.u32 %v3769, 4294901760
        %3771 = vmatmul.mubr.f32.gmra.mrb[0].mxu0 %v3770
        %v3772 = vpop.f32.mrb[0].mxu0
        %v3773 = vadd.f32 %v3473, %v3772
        %v3774 = vpop.f32.mrb[0].mxu0
        %3775 = vmatprep.mubr.f32.mxu0 0.0
        %v3776 = vand.u32 %v2622, 4294901760
        %v3777 = vsub.f32 %v2622, %v3776
        %v3778 = vand.u32 %v3777, 4294901760
        %3779 = vmatmul.mubr.f32.gmra.mrb[0].mxu0 %v3778
        %v3780 = vpop.f32.mrb[0].mxu0
        %v3781 = vadd.f32 %v3480, %v3780
        %v3782 = vpop.f32.mrb[0].mxu0
        %3783 = vmatprep.mubr.f32.mxu0 0.0
        %v3784 = vand.u32 %v2625, 4294901760
        %v3785 = vsub.f32 %v2625, %v3784
        %v3786 = vand.u32 %v3785, 4294901760
        %3787 = vmatmul.mubr.f32.gmra.mrb[0].mxu0 %v3786
        %v3788 = vpop.f32.mrb[0].mxu0
        %v3789 = vadd.f32 %v3487, %v3788
        %v3790 = vpop.f32.mrb[0].mxu0
        %3791 = vmatprep.mubr.f32.mxu0 0.0
        %v3792 = vand.u32 %v2628, 4294901760
        %v3793 = vsub.f32 %v2628, %v3792
        %v3794 = vand.u32 %v3793, 4294901760
        %3795 = vmatmul.mubr.f32.gmra.mrb[0].mxu0 %v3794
        %v3796 = vpop.f32.mrb[0].mxu0
        %v3797 = vadd.f32 %v3494, %v3796
        %v3798 = vpop.f32.mrb[0].mxu0
        %3799 = vmatprep.mubr.f32.mxu0 0.0
        %v3800 = vand.u32 %v2631, 4294901760
        %v3801 = vsub.f32 %v2631, %v3800
        %v3802 = vand.u32 %v3801, 4294901760
        %3803 = vmatmul.mubr.f32.gmra.mrb[0].mxu0 %v3802
        %v3804 = vpop.f32.mrb[0].mxu0
        %v3805 = vadd.f32 %v3501, %v3804
        %v3806 = vpop.f32.mrb[0].mxu0
        %3807 = vmatprep.mubr.f32.mxu0 0.0
        %v3808 = vand.u32 %v2634, 4294901760
        %v3809 = vsub.f32 %v2634, %v3808
        %v3810 = vand.u32 %v3809, 4294901760
        %3811 = vmatmul.mubr.f32.gmra.mrb[0].mxu0 %v3810
        %v3812 = vpop.f32.mrb[0].mxu0
        %v3813 = vadd.f32 %v3508, %v3812
        %v3814 = vpop.f32.mrb[0].mxu0
        %3815 = vmatprep.mubr.f32.mxu0 0.0
        %v3816 = vand.u32 %v2637, 4294901760
        %v3817 = vsub.f32 %v2637, %v3816
        %v3818 = vand.u32 %v3817, 4294901760
        %3819 = vmatmul.mubr.f32.gmra.mrb[0].mxu0 %v3818
        %v3820 = vpop.f32.mrb[0].mxu0
        %v3821 = vadd.f32 %v3515, %v3820
        %v3822 = vpop.f32.mrb[0].mxu0
        %3823 = vmatprep.mubr.f32.mxu0 0.0
        %v3824 = vand.u32 %v2640, 4294901760
        %v3825 = vsub.f32 %v2640, %v3824
        %v3826 = vand.u32 %v3825, 4294901760
        %3827 = vmatmul.mubr.f32.gmra.mrb[0].mxu0 %v3826
        %v3828 = vpop.f32.mrb[0].mxu0
        %v3829 = vadd.f32 %v3522, %v3828
        %v3830 = vpop.f32.mrb[0].mxu0
        %3831 = vmatprep.mubr.f32.mxu0 0.0
        %v3832 = vand.u32 %v2643, 4294901760
        %v3833 = vsub.f32 %v2643, %v3832
        %v3834 = vand.u32 %v3833, 4294901760
        %3835 = vmatmul.mubr.f32.gmra.mrb[0].mxu0 %v3834
        %v3836 = vpop.f32.mrb[0].mxu0
        %v3837 = vadd.f32 %v3529, %v3836
        %v3838 = vpop.f32.mrb[0].mxu0
        %3839 = vmatprep.mubr.f32.mxu0 0.0
        %v3840 = vand.u32 %v2646, 4294901760
        %v3841 = vsub.f32 %v2646, %v3840
        %v3842 = vand.u32 %v3841, 4294901760
        %3843 = vmatmul.mubr.f32.gmra.mrb[0].mxu0 %v3842
        %v3844 = vpop.f32.mrb[0].mxu0
        %v3845 = vadd.f32 %v3536, %v3844
        %v3846 = vpop.f32.mrb[0].mxu0
        %3847 = vmatprep.mubr.f32.mxu0 0.0
        %v3848 = vand.u32 %v2649, 4294901760
        %v3849 = vsub.f32 %v2649, %v3848
        %v3850 = vand.u32 %v3849, 4294901760
        %3851 = vmatmul.mubr.f32.gmra.mrb[0].mxu0 %v3850
        %v3852 = vpop.f32.mrb[0].mxu0
        %v3853 = vadd.f32 %v3543, %v3852
        %v3854 = vpop.f32.mrb[0].mxu0
        %3855 = vmatprep.mubr.f32.mxu0 0.0
        %v3856 = vand.u32 %v2652, 4294901760
        %v3857 = vsub.f32 %v2652, %v3856
        %v3858 = vand.u32 %v3857, 4294901760
        %3859 = vmatmul.mubr.f32.gmra.mrb[0].mxu0 %v3858
        %v3860 = vpop.f32.mrb[0].mxu0
        %v3861 = vadd.f32 %v3550, %v3860
        %v3862 = vpop.f32.mrb[0].mxu0
        %3863 = vmatprep.mubr.f32.mxu0 0.0
        %v3864 = vand.u32 %v2655, 4294901760
        %v3865 = vsub.f32 %v2655, %v3864
        %v3866 = vand.u32 %v3865, 4294901760
        %3867 = vmatmul.mubr.f32.gmra.mrb[0].mxu0 %v3866
        %v3868 = vpop.f32.mrb[0].mxu0
        %v3869 = vadd.f32 %v3557, %v3868
        %v3870 = vpop.f32.mrb[0].mxu0
        %3871 = vmatprep.mubr.f32.mxu0 0.0
        %v3872 = vand.u32 %v2658, 4294901760
        %v3873 = vsub.f32 %v2658, %v3872
        %v3874 = vand.u32 %v3873, 4294901760
        %3875 = vmatmul.mubr.f32.gmra.mrb[0].mxu0 %v3874
        %v3876 = vpop.f32.mrb[0].mxu0
        %v3877 = vadd.f32 %v3564, %v3876
        %v3878 = vpop.f32.mrb[0].mxu0
        %3879 = vmatprep.mubr.f32.mxu0 0.0
        %v3880 = vand.u32 %v2661, 4294901760
        %v3881 = vsub.f32 %v2661, %v3880
        %v3882 = vand.u32 %v3881, 4294901760
        %3883 = vmatmul.mubr.f32.gmra.mrb[0].mxu0 %v3882
        %v3884 = vpop.f32.mrb[0].mxu0
        %v3885 = vadd.f32 %v3571, %v3884
        %v3886 = vpop.f32.mrb[0].mxu0
        %3887 = vmatprep.mubr.f32.mxu0 0.0
        %v3888 = vand.u32 %v2664, 4294901760
        %v3889 = vsub.f32 %v2664, %v3888
        %v3890 = vand.u32 %v3889, 4294901760
        %3891 = vmatmul.mubr.f32.gmra.mrb[0].mxu0 %v3890
        %v3892 = vpop.f32.mrb[0].mxu0
        %v3893 = vadd.f32 %v3578, %v3892
        %v3894 = vpop.f32.mrb[0].mxu0
        %3895 = vmatprep.mubr.f32.mxu0 0.0
        %v3896 = vand.u32 %v2667, 4294901760
        %v3897 = vsub.f32 %v2667, %v3896
        %v3898 = vand.u32 %v3897, 4294901760
        %3899 = vmatmul.mubr.f32.gmra.mrb[0].mxu0 %v3898
        %v3900 = vpop.f32.mrb[0].mxu0
        %v3901 = vadd.f32 %v3585, %v3900
        %v3902 = vpop.f32.mrb[0].mxu0
        %3903 = vmatprep.mubr.f32.mxu0 0.0
        %v3904 = vand.u32 %v2670, 4294901760
        %v3905 = vsub.f32 %v2670, %v3904
        %v3906 = vand.u32 %v3905, 4294901760
        %3907 = vmatmul.mubr.f32.gmra.mrb[0].mxu0 %v3906
        %v3908 = vpop.f32.mrb[0].mxu0
        %v3909 = vadd.f32 %v3592, %v3908
        %v3910 = vpop.f32.mrb[0].mxu0
        %3911 = vmatprep.mubr.f32.mxu0 0.0
        %v3912 = vand.u32 %v2673, 4294901760
        %v3913 = vsub.f32 %v2673, %v3912
        %v3914 = vand.u32 %v3913, 4294901760
        %3915 = vmatmul.mubr.f32.gmra.mrb[0].mxu0 %v3914
        %v3916 = vpop.f32.mrb[0].mxu0
        %v3917 = vadd.f32 %v3599, %v3916
        %v3918 = vpop.f32.mrb[0].mxu0
        %3919 = vmatprep.mubr.f32.mxu0 0.0
        %v3920 = vand.u32 %v2676, 4294901760
        %v3921 = vsub.f32 %v2676, %v3920
        %v3922 = vand.u32 %v3921, 4294901760
        %3923 = vmatmul.mubr.f32.gmra.mrb[0].mxu0 %v3922
        %v3924 = vpop.f32.mrb[0].mxu0
        %v3925 = vadd.f32 %v3606, %v3924
        %v3926 = vpop.f32.mrb[0].mxu0
        %3927 = vmatprep.mubr.f32.mxu0 0.0
        %v3928 = vand.u32 %v2679, 4294901760
        %v3929 = vsub.f32 %v2679, %v3928
        %v3930 = vand.u32 %v3929, 4294901760
        %3931 = vmatmul.mubr.f32.gmra.mrb[0].mxu0 %v3930
        %v3932 = vpop.f32.mrb[0].mxu0
        %v3933 = vadd.f32 %v3613, %v3932
        %v3934 = vpop.f32.mrb[0].mxu0
        %3935 = vmatprep.mubr.f32.mxu0 0.0
        %v3936 = vand.u32 %v2682, 4294901760
        %v3937 = vsub.f32 %v2682, %v3936
        %v3938 = vand.u32 %v3937, 4294901760
        %3939 = vmatmul.mubr.f32.gmra.mrb[0].mxu0 %v3938
        %v3940 = vpop.f32.mrb[0].mxu0
        %v3941 = vadd.f32 %v3620, %v3940
        %v3942 = vpop.f32.mrb[0].mxu0
        %3943 = vmatprep.mubr.f32.mxu0 0.0
        %v3944 = vand.u32 %v2685, 4294901760
        %v3945 = vsub.f32 %v2685, %v3944
        %v3946 = vand.u32 %v3945, 4294901760
        %3947 = vmatmul.mubr.f32.gmra.mrb[0].mxu0 %v3946
        %v3948 = vpop.f32.mrb[0].mxu0
        %v3949 = vadd.f32 %v3627, %v3948
        %v3950 = vpop.f32.mrb[0].mxu0
        %3951 = vdwg.mxu0
        %3952 = vmatprep.subr.mxu0 0.0
        %v3953 = vand.u32 %v2689, 4294901760
        %v3954 = vsub.f32 %v2689, %v3953
        %v3955 = vand.u32 %v3954, 4294901760
        %3956 = vmatpush1.msra.mxu0 %v3955
        %3957 = vmatprep.subr.mxu0 0.0
        %3958 = vmatpush1.msra.mxu0 0.0
        %3959 = vmatprep.subr.mxu0 0.0
        %3960 = vmatpush1.msra.mxu0 0.0
        %3961 = vmatprep.subr.mxu0 0.0
        %3962 = vmatpush1.msra.mxu0 0.0
        %3963 = vmatprep.subr.mxu0 0.0
        %3964 = vmatpush1.msra.mxu0 0.0
        %3965 = vmatprep.subr.mxu0 0.0
        %3966 = vmatpush1.msra.mxu0 0.0
        %3967 = vmatprep.subr.mxu0 0.0
        %3968 = vmatpush1.msra.mxu0 0.0
        %3969 = vmatprep.subr.mxu0 0.0
        %3970 = vmatpush1.msra.mxu0 0.0
        %3971 = vmatprep.subr.mxu0 0.0
        %3972 = vmatpush1.msra.mxu0 0.0
        %3973 = vmatprep.subr.mxu0 0.0
        %3974 = vmatpush1.msra.mxu0 0.0
        %3975 = vmatprep.subr.mxu0 0.0
        %3976 = vmatpush1.msra.mxu0 0.0
        %3977 = vmatprep.subr.mxu0 0.0
        %3978 = vmatpush1.msra.mxu0 0.0
        %3979 = vmatprep.subr.mxu0 0.0
        %3980 = vmatpush1.msra.mxu0 0.0
        %3981 = vmatprep.subr.mxu0 0.0
        %3982 = vmatpush1.msra.mxu0 0.0
        %3983 = vmatprep.subr.mxu0 0.0
        %3984 = vmatpush1.msra.mxu0 0.0
        %3985 = vmatprep.subr.mxu0 0.0
        %3986 = vmatpush1.msra.mxu0 0.0
        %3987 = vmatprep.subr.mxu0 0.0
        %3988 = vmatpush1.msra.mxu0 0.0
        %3989 = vmatprep.subr.mxu0 0.0
        %3990 = vmatpush1.msra.mxu0 0.0
        %3991 = vmatprep.subr.mxu0 0.0
        %3992 = vmatpush1.msra.mxu0 0.0
        %3993 = vmatprep.subr.mxu0 0.0
        %3994 = vmatpush1.msra.mxu0 0.0
        %3995 = vmatprep.subr.mxu0 0.0
        %3996 = vmatpush1.msra.mxu0 0.0
        %3997 = vmatprep.subr.mxu0 0.0
        %3998 = vmatpush1.msra.mxu0 0.0
        %3999 = vmatprep.subr.mxu0 0.0
        %4000 = vmatpush1.msra.mxu0 0.0
        %4001 = vmatprep.subr.mxu0 0.0
        %4002 = vmatpush1.msra.mxu0 0.0
        %4003 = vmatprep.subr.mxu0 0.0
        %4004 = vmatpush1.msra.mxu0 0.0
        %4005 = vmatprep.subr.mxu0 0.0
        %4006 = vmatpush1.msra.mxu0 0.0
        %4007 = vmatprep.subr.mxu0 0.0
        %4008 = vmatpush1.msra.mxu0 0.0
        %4009 = vmatprep.subr.mxu0 0.0
        %4010 = vmatpush1.msra.mxu0 0.0
        %4011 = vmatprep.subr.mxu0 0.0
        %4012 = vmatpush1.msra.mxu0 0.0
        %4013 = vmatprep.subr.mxu0 0.0
        %4014 = vmatpush1.msra.mxu0 0.0
        %4015 = vmatprep.subr.mxu0 0.0
        %4016 = vmatpush1.msra.mxu0 0.0
        %4017 = vmatprep.subr.mxu0 0.0
        %4018 = vmatpush1.msra.mxu0 0.0
        %4019 = vmatprep.mubr.f32.mxu0 0.0
        %v4020 = vand.u32 %v2592, 4294901760
        %4021 = vmatmul.mubr.f32.gmra.mrb[0].mxu0 %v4020
        %v4022 = vpop.f32.mrb[0].mxu0
        %v4023 = vadd.f32 %v3701, %v4022
        %v4024 = vpop.f32.mrb[0].mxu0
        %4025 = vmatprep.mubr.f32.mxu0 0.0
        %v4026 = vand.u32 %v2595, 4294901760
        %4027 = vmatmul.mubr.f32.gmra.mrb[0].mxu0 %v4026
        %v4028 = vpop.f32.mrb[0].mxu0
        %v4029 = vadd.f32 %v3709, %v4028
        %v4030 = vpop.f32.mrb[0].mxu0
        %4031 = vmatprep.mubr.f32.mxu0 0.0
        %v4032 = vand.u32 %v2598, 4294901760
        %4033 = vmatmul.mubr.f32.gmra.mrb[0].mxu0 %v4032
        %v4034 = vpop.f32.mrb[0].mxu0
        %v4035 = vadd.f32 %v3717, %v4034
        %v4036 = vpop.f32.mrb[0].mxu0
        %4037 = vmatprep.mubr.f32.mxu0 0.0
        %v4038 = vand.u32 %v2601, 4294901760
        %4039 = vmatmul.mubr.f32.gmra.mrb[0].mxu0 %v4038
        %v4040 = vpop.f32.mrb[0].mxu0
        %v4041 = vadd.f32 %v3725, %v4040
        %v4042 = vpop.f32.mrb[0].mxu0
        %4043 = vmatprep.mubr.f32.mxu0 0.0
        %v4044 = vand.u32 %v2604, 4294901760
        %4045 = vmatmul.mubr.f32.gmra.mrb[0].mxu0 %v4044
        %v4046 = vpop.f32.mrb[0].mxu0
        %v4047 = vadd.f32 %v3733, %v4046
        %v4048 = vpop.f32.mrb[0].mxu0
        %4049 = vmatprep.mubr.f32.mxu0 0.0
        %v4050 = vand.u32 %v2607, 4294901760
        %4051 = vmatmul.mubr.f32.gmra.mrb[0].mxu0 %v4050
        %v4052 = vpop.f32.mrb[0].mxu0
        %v4053 = vadd.f32 %v3741, %v4052
        %v4054 = vpop.f32.mrb[0].mxu0
        %4055 = vmatprep.mubr.f32.mxu0 0.0
        %v4056 = vand.u32 %v2610, 4294901760
        %4057 = vmatmul.mubr.f32.gmra.mrb[0].mxu0 %v4056
        %v4058 = vpop.f32.mrb[0].mxu0
        %v4059 = vadd.f32 %v3749, %v4058
        %v4060 = vpop.f32.mrb[0].mxu0
        %4061 = vmatprep.mubr.f32.mxu0 0.0
        %v4062 = vand.u32 %v2613, 4294901760
        %4063 = vmatmul.mubr.f32.gmra.mrb[0].mxu0 %v4062
        %v4064 = vpop.f32.mrb[0].mxu0
        %v4065 = vadd.f32 %v3757, %v4064
        %v4066 = vpop.f32.mrb[0].mxu0
        %4067 = vmatprep.mubr.f32.mxu0 0.0
        %v4068 = vand.u32 %v2616, 4294901760
        %4069 = vmatmul.mubr.f32.gmra.mrb[0].mxu0 %v4068
        %v4070 = vpop.f32.mrb[0].mxu0
        %v4071 = vadd.f32 %v3765, %v4070
        %v4072 = vpop.f32.mrb[0].mxu0
        %4073 = vmatprep.mubr.f32.mxu0 0.0
        %v4074 = vand.u32 %v2619, 4294901760
        %4075 = vmatmul.mubr.f32.gmra.mrb[0].mxu0 %v4074
        %v4076 = vpop.f32.mrb[0].mxu0
        %v4077 = vadd.f32 %v3773, %v4076
        %v4078 = vpop.f32.mrb[0].mxu0
        %4079 = vmatprep.mubr.f32.mxu0 0.0
        %v4080 = vand.u32 %v2622, 4294901760
        %4081 = vmatmul.mubr.f32.gmra.mrb[0].mxu0 %v4080
        %v4082 = vpop.f32.mrb[0].mxu0
        %v4083 = vadd.f32 %v3781, %v4082
        %v4084 = vpop.f32.mrb[0].mxu0
        %4085 = vmatprep.mubr.f32.mxu0 0.0
        %v4086 = vand.u32 %v2625, 4294901760
        %4087 = vmatmul.mubr.f32.gmra.mrb[0].mxu0 %v4086
        %v4088 = vpop.f32.mrb[0].mxu0
        %v4089 = vadd.f32 %v3789, %v4088
        %v4090 = vpop.f32.mrb[0].mxu0
        %4091 = vmatprep.mubr.f32.mxu0 0.0
        %v4092 = vand.u32 %v2628, 4294901760
        %4093 = vmatmul.mubr.f32.gmra.mrb[0].mxu0 %v4092
        %v4094 = vpop.f32.mrb[0].mxu0
        %v4095 = vadd.f32 %v3797, %v4094
        %v4096 = vpop.f32.mrb[0].mxu0
        %4097 = vmatprep.mubr.f32.mxu0 0.0
        %v4098 = vand.u32 %v2631, 4294901760
        %4099 = vmatmul.mubr.f32.gmra.mrb[0].mxu0 %v4098
        %v4100 = vpop.f32.mrb[0].mxu0
        %v4101 = vadd.f32 %v3805, %v4100
        %v4102 = vpop.f32.mrb[0].mxu0
        %4103 = vmatprep.mubr.f32.mxu0 0.0
        %v4104 = vand.u32 %v2634, 4294901760
        %4105 = vmatmul.mubr.f32.gmra.mrb[0].mxu0 %v4104
        %v4106 = vpop.f32.mrb[0].mxu0
        %v4107 = vadd.f32 %v3813, %v4106
        %v4108 = vpop.f32.mrb[0].mxu0
        %4109 = vmatprep.mubr.f32.mxu0 0.0
        %v4110 = vand.u32 %v2637, 4294901760
        %4111 = vmatmul.mubr.f32.gmra.mrb[0].mxu0 %v4110
        %v4112 = vpop.f32.mrb[0].mxu0
        %v4113 = vadd.f32 %v3821, %v4112
        %v4114 = vpop.f32.mrb[0].mxu0
        %4115 = vmatprep.mubr.f32.mxu0 0.0
        %v4116 = vand.u32 %v2640, 4294901760
        %4117 = vmatmul.mubr.f32.gmra.mrb[0].mxu0 %v4116
        %v4118 = vpop.f32.mrb[0].mxu0
        %v4119 = vadd.f32 %v3829, %v4118
        %v4120 = vpop.f32.mrb[0].mxu0
        %4121 = vmatprep.mubr.f32.mxu0 0.0
        %v4122 = vand.u32 %v2643, 4294901760
        %4123 = vmatmul.mubr.f32.gmra.mrb[0].mxu0 %v4122
        %v4124 = vpop.f32.mrb[0].mxu0
        %v4125 = vadd.f32 %v3837, %v4124
        %v4126 = vpop.f32.mrb[0].mxu0
        %4127 = vmatprep.mubr.f32.mxu0 0.0
        %v4128 = vand.u32 %v2646, 4294901760
        %4129 = vmatmul.mubr.f32.gmra.mrb[0].mxu0 %v4128
        %v4130 = vpop.f32.mrb[0].mxu0
        %v4131 = vadd.f32 %v3845, %v4130
        %v4132 = vpop.f32.mrb[0].mxu0
        %4133 = vmatprep.mubr.f32.mxu0 0.0
        %v4134 = vand.u32 %v2649, 4294901760
        %4135 = vmatmul.mubr.f32.gmra.mrb[0].mxu0 %v4134
        %v4136 = vpop.f32.mrb[0].mxu0
        %v4137 = vadd.f32 %v3853, %v4136
        %v4138 = vpop.f32.mrb[0].mxu0
        %4139 = vmatprep.mubr.f32.mxu0 0.0
        %v4140 = vand.u32 %v2652, 4294901760
        %4141 = vmatmul.mubr.f32.gmra.mrb[0].mxu0 %v4140
        %v4142 = vpop.f32.mrb[0].mxu0
        %v4143 = vadd.f32 %v3861, %v4142
        %v4144 = vpop.f32.mrb[0].mxu0
        %4145 = vmatprep.mubr.f32.mxu0 0.0
        %v4146 = vand.u32 %v2655, 4294901760
        %4147 = vmatmul.mubr.f32.gmra.mrb[0].mxu0 %v4146
        %v4148 = vpop.f32.mrb[0].mxu0
        %v4149 = vadd.f32 %v3869, %v4148
        %v4150 = vpop.f32.mrb[0].mxu0
        %4151 = vmatprep.mubr.f32.mxu0 0.0
        %v4152 = vand.u32 %v2658, 4294901760
        %4153 = vmatmul.mubr.f32.gmra.mrb[0].mxu0 %v4152
        %v4154 = vpop.f32.mrb[0].mxu0
        %v4155 = vadd.f32 %v3877, %v4154
        %v4156 = vpop.f32.mrb[0].mxu0
        %4157 = vmatprep.mubr.f32.mxu0 0.0
        %v4158 = vand.u32 %v2661, 4294901760
        %4159 = vmatmul.mubr.f32.gmra.mrb[0].mxu0 %v4158
        %v4160 = vpop.f32.mrb[0].mxu0
        %v4161 = vadd.f32 %v3885, %v4160
        %v4162 = vpop.f32.mrb[0].mxu0
        %4163 = vmatprep.mubr.f32.mxu0 0.0
        %v4164 = vand.u32 %v2664, 4294901760
        %4165 = vmatmul.mubr.f32.gmra.mrb[0].mxu0 %v4164
        %v4166 = vpop.f32.mrb[0].mxu0
        %v4167 = vadd.f32 %v3893, %v4166
        %v4168 = vpop.f32.mrb[0].mxu0
        %4169 = vmatprep.mubr.f32.mxu0 0.0
        %v4170 = vand.u32 %v2667, 4294901760
        %4171 = vmatmul.mubr.f32.gmra.mrb[0].mxu0 %v4170
        %v4172 = vpop.f32.mrb[0].mxu0
        %v4173 = vadd.f32 %v3901, %v4172
        %v4174 = vpop.f32.mrb[0].mxu0
        %4175 = vmatprep.mubr.f32.mxu0 0.0
        %v4176 = vand.u32 %v2670, 4294901760
        %4177 = vmatmul.mubr.f32.gmra.mrb[0].mxu0 %v4176
        %v4178 = vpop.f32.mrb[0].mxu0
        %v4179 = vadd.f32 %v3909, %v4178
        %v4180 = vpop.f32.mrb[0].mxu0
        %4181 = vmatprep.mubr.f32.mxu0 0.0
        %v4182 = vand.u32 %v2673, 4294901760
        %4183 = vmatmul.mubr.f32.gmra.mrb[0].mxu0 %v4182
        %v4184 = vpop.f32.mrb[0].mxu0
        %v4185 = vadd.f32 %v3917, %v4184
        %v4186 = vpop.f32.mrb[0].mxu0
        %4187 = vmatprep.mubr.f32.mxu0 0.0
        %v4188 = vand.u32 %v2676, 4294901760
        %4189 = vmatmul.mubr.f32.gmra.mrb[0].mxu0 %v4188
        %v4190 = vpop.f32.mrb[0].mxu0
        %v4191 = vadd.f32 %v3925, %v4190
        %v4192 = vpop.f32.mrb[0].mxu0
        %4193 = vmatprep.mubr.f32.mxu0 0.0
        %v4194 = vand.u32 %v2679, 4294901760
        %4195 = vmatmul.mubr.f32.gmra.mrb[0].mxu0 %v4194
        %v4196 = vpop.f32.mrb[0].mxu0
        %v4197 = vadd.f32 %v3933, %v4196
        %v4198 = vpop.f32.mrb[0].mxu0
        %4199 = vmatprep.mubr.f32.mxu0 0.0
        %v4200 = vand.u32 %v2682, 4294901760
        %4201 = vmatmul.mubr.f32.gmra.mrb[0].mxu0 %v4200
        %v4202 = vpop.f32.mrb[0].mxu0
        %v4203 = vadd.f32 %v3941, %v4202
        %v4204 = vpop.f32.mrb[0].mxu0
        %4205 = vmatprep.mubr.f32.mxu0 0.0
        %v4206 = vand.u32 %v2685, 4294901760
        %4207 = vmatmul.mubr.f32.gmra.mrb[0].mxu0 %v4206
        %v4208 = vpop.f32.mrb[0].mxu0
        %v4209 = vadd.f32 %v3949, %v4208
        %v4210 = vpop.f32.mrb[0].mxu0
        %4211 = vdwg.mxu0
        %4212 = vmatprep.subr.mxu0 0.0
        %v4213 = vand.u32 %v2689, 4294901760
        %4214 = vmatpush1.msra.mxu0 %v4213
        %4215 = vmatprep.subr.mxu0 0.0
        %4216 = vmatpush1.msra.mxu0 0.0
        %4217 = vmatprep.subr.mxu0 0.0
        %4218 = vmatpush1.msra.mxu0 0.0
        %4219 = vmatprep.subr.mxu0 0.0
        %4220 = vmatpush1.msra.mxu0 0.0
        %4221 = vmatprep.subr.mxu0 0.0
        %4222 = vmatpush1.msra.mxu0 0.0
        %4223 = vmatprep.subr.mxu0 0.0
        %4224 = vmatpush1.msra.mxu0 0.0
        %4225 = vmatprep.subr.mxu0 0.0
        %4226 = vmatpush1.msra.mxu0 0.0
        %4227 = vmatprep.subr.mxu0 0.0
        %4228 = vmatpush1.msra.mxu0 0.0
        %4229 = vmatprep.subr.mxu0 0.0
        %4230 = vmatpush1.msra.mxu0 0.0
        %4231 = vmatprep.subr.mxu0 0.0
        %4232 = vmatpush1.msra.mxu0 0.0
        %4233 = vmatprep.subr.mxu0 0.0
        %4234 = vmatpush1.msra.mxu0 0.0
        %4235 = vmatprep.subr.mxu0 0.0
        %4236 = vmatpush1.msra.mxu0 0.0
        %4237 = vmatprep.subr.mxu0 0.0
        %4238 = vmatpush1.msra.mxu0 0.0
        %4239 = vmatprep.subr.mxu0 0.0
        %4240 = vmatpush1.msra.mxu0 0.0
        %4241 = vmatprep.subr.mxu0 0.0
        %4242 = vmatpush1.msra.mxu0 0.0
        %4243 = vmatprep.subr.mxu0 0.0
        %4244 = vmatpush1.msra.mxu0 0.0
        %4245 = vmatprep.subr.mxu0 0.0
        %4246 = vmatpush1.msra.mxu0 0.0
        %4247 = vmatprep.subr.mxu0 0.0
        %4248 = vmatpush1.msra.mxu0 0.0
        %4249 = vmatprep.subr.mxu0 0.0
        %4250 = vmatpush1.msra.mxu0 0.0
        %4251 = vmatprep.subr.mxu0 0.0
        %4252 = vmatpush1.msra.mxu0 0.0
        %4253 = vmatprep.subr.mxu0 0.0
        %4254 = vmatpush1.msra.mxu0 0.0
        %4255 = vmatprep.subr.mxu0 0.0
        %4256 = vmatpush1.msra.mxu0 0.0
        %4257 = vmatprep.subr.mxu0 0.0
        %4258 = vmatpush1.msra.mxu0 0.0
        %4259 = vmatprep.subr.mxu0 0.0
        %4260 = vmatpush1.msra.mxu0 0.0
        %4261 = vmatprep.subr.mxu0 0.0
        %4262 = vmatpush1.msra.mxu0 0.0
        %4263 = vmatprep.subr.mxu0 0.0
        %4264 = vmatpush1.msra.mxu0 0.0
        %4265 = vmatprep.subr.mxu0 0.0
        %4266 = vmatpush1.msra.mxu0 0.0
        %4267 = vmatprep.subr.mxu0 0.0
        %4268 = vmatpush1.msra.mxu0 0.0
        %4269 = vmatprep.subr.mxu0 0.0
        %4270 = vmatpush1.msra.mxu0 0.0
        %4271 = vmatprep.subr.mxu0 0.0
        %4272 = vmatpush1.msra.mxu0 0.0
        %4273 = vmatprep.subr.mxu0 0.0
        %4274 = vmatpush1.msra.mxu0 0.0
        %4275 = vmatprep.subr.mxu0 0.0
        %4276 = vmatpush1.msra.mxu0 0.0
        %4277 = vmatprep.mubr.f32.mxu0 0.0
        %v4278 = vand.u32 %v2592, 4294901760
        %4279 = vmatmul.mubr.f32.gmra.mrb[0].mxu0 %v4278
        %v4280 = vpop.f32.mrb[0].mxu0
        %v4281 = vadd.f32 %v4023, %v4280
        %v4282 = vpop.f32.mrb[0].mxu0
        %4283 = vmatprep.mubr.f32.mxu0 0.0
        %v4284 = vand.u32 %v2595, 4294901760
        %4285 = vmatmul.mubr.f32.gmra.mrb[0].mxu0 %v4284
        %v4286 = vpop.f32.mrb[0].mxu0
        %v4287 = vadd.f32 %v4029, %v4286
        %v4288 = vpop.f32.mrb[0].mxu0
        %4289 = vmatprep.mubr.f32.mxu0 0.0
        %v4290 = vand.u32 %v2598, 4294901760
        %4291 = vmatmul.mubr.f32.gmra.mrb[0].mxu0 %v4290
        %v4292 = vpop.f32.mrb[0].mxu0
        %v4293 = vadd.f32 %v4035, %v4292
        %v4294 = vpop.f32.mrb[0].mxu0
        %4295 = vmatprep.mubr.f32.mxu0 0.0
        %v4296 = vand.u32 %v2601, 4294901760
        %4297 = vmatmul.mubr.f32.gmra.mrb[0].mxu0 %v4296
        %v4298 = vpop.f32.mrb[0].mxu0
        %v4299 = vadd.f32 %v4041, %v4298
        %v4300 = vpop.f32.mrb[0].mxu0
        %4301 = vmatprep.mubr.f32.mxu0 0.0
        %v4302 = vand.u32 %v2604, 4294901760
        %4303 = vmatmul.mubr.f32.gmra.mrb[0].mxu0 %v4302
        %v4304 = vpop.f32.mrb[0].mxu0
        %v4305 = vadd.f32 %v4047, %v4304
        %v4306 = vpop.f32.mrb[0].mxu0
        %4307 = vmatprep.mubr.f32.mxu0 0.0
        %v4308 = vand.u32 %v2607, 4294901760
        %4309 = vmatmul.mubr.f32.gmra.mrb[0].mxu0 %v4308
        %v4310 = vpop.f32.mrb[0].mxu0
        %v4311 = vadd.f32 %v4053, %v4310
        %v4312 = vpop.f32.mrb[0].mxu0
        %4313 = vmatprep.mubr.f32.mxu0 0.0
        %v4314 = vand.u32 %v2610, 4294901760
        %4315 = vmatmul.mubr.f32.gmra.mrb[0].mxu0 %v4314
        %v4316 = vpop.f32.mrb[0].mxu0
        %v4317 = vadd.f32 %v4059, %v4316
        %v4318 = vpop.f32.mrb[0].mxu0
        %4319 = vmatprep.mubr.f32.mxu0 0.0
        %v4320 = vand.u32 %v2613, 4294901760
        %4321 = vmatmul.mubr.f32.gmra.mrb[0].mxu0 %v4320
        %v4322 = vpop.f32.mrb[0].mxu0
        %v4323 = vadd.f32 %v4065, %v4322
        %v4324 = vpop.f32.mrb[0].mxu0
        %4325 = vmatprep.mubr.f32.mxu0 0.0
        %v4326 = vand.u32 %v2616, 4294901760
        %4327 = vmatmul.mubr.f32.gmra.mrb[0].mxu0 %v4326
        %v4328 = vpop.f32.mrb[0].mxu0
        %v4329 = vadd.f32 %v4071, %v4328
        %v4330 = vpop.f32.mrb[0].mxu0
        %4331 = vmatprep.mubr.f32.mxu0 0.0
        %v4332 = vand.u32 %v2619, 4294901760
        %4333 = vmatmul.mubr.f32.gmra.mrb[0].mxu0 %v4332
        %v4334 = vpop.f32.mrb[0].mxu0
        %v4335 = vadd.f32 %v4077, %v4334
        %v4336 = vpop.f32.mrb[0].mxu0
        %4337 = vmatprep.mubr.f32.mxu0 0.0
        %v4338 = vand.u32 %v2622, 4294901760
        %4339 = vmatmul.mubr.f32.gmra.mrb[0].mxu0 %v4338
        %v4340 = vpop.f32.mrb[0].mxu0
        %v4341 = vadd.f32 %v4083, %v4340
        %v4342 = vpop.f32.mrb[0].mxu0
        %4343 = vmatprep.mubr.f32.mxu0 0.0
        %v4344 = vand.u32 %v2625, 4294901760
        %4345 = vmatmul.mubr.f32.gmra.mrb[0].mxu0 %v4344
        %v4346 = vpop.f32.mrb[0].mxu0
        %v4347 = vadd.f32 %v4089, %v4346
        %v4348 = vpop.f32.mrb[0].mxu0
        %4349 = vmatprep.mubr.f32.mxu0 0.0
        %v4350 = vand.u32 %v2628, 4294901760
        %4351 = vmatmul.mubr.f32.gmra.mrb[0].mxu0 %v4350
        %v4352 = vpop.f32.mrb[0].mxu0
        %v4353 = vadd.f32 %v4095, %v4352
        %v4354 = vpop.f32.mrb[0].mxu0
        %4355 = vmatprep.mubr.f32.mxu0 0.0
        %v4356 = vand.u32 %v2631, 4294901760
        %4357 = vmatmul.mubr.f32.gmra.mrb[0].mxu0 %v4356
        %v4358 = vpop.f32.mrb[0].mxu0
        %v4359 = vadd.f32 %v4101, %v4358
        %v4360 = vpop.f32.mrb[0].mxu0
        %4361 = vmatprep.mubr.f32.mxu0 0.0
        %v4362 = vand.u32 %v2634, 4294901760
        %4363 = vmatmul.mubr.f32.gmra.mrb[0].mxu0 %v4362
        %v4364 = vpop.f32.mrb[0].mxu0
        %v4365 = vadd.f32 %v4107, %v4364
        %v4366 = vpop.f32.mrb[0].mxu0
        %4367 = vmatprep.mubr.f32.mxu0 0.0
        %v4368 = vand.u32 %v2637, 4294901760
        %4369 = vmatmul.mubr.f32.gmra.mrb[0].mxu0 %v4368
        %v4370 = vpop.f32.mrb[0].mxu0
        %v4371 = vadd.f32 %v4113, %v4370
        %v4372 = vpop.f32.mrb[0].mxu0
        %4373 = vmatprep.mubr.f32.mxu0 0.0
        %v4374 = vand.u32 %v2640, 4294901760
        %4375 = vmatmul.mubr.f32.gmra.mrb[0].mxu0 %v4374
        %v4376 = vpop.f32.mrb[0].mxu0
        %v4377 = vadd.f32 %v4119, %v4376
        %v4378 = vpop.f32.mrb[0].mxu0
        %4379 = vmatprep.mubr.f32.mxu0 0.0
        %v4380 = vand.u32 %v2643, 4294901760
        %4381 = vmatmul.mubr.f32.gmra.mrb[0].mxu0 %v4380
        %v4382 = vpop.f32.mrb[0].mxu0
        %v4383 = vadd.f32 %v4125, %v4382
        %v4384 = vpop.f32.mrb[0].mxu0
        %4385 = vmatprep.mubr.f32.mxu0 0.0
        %v4386 = vand.u32 %v2646, 4294901760
        %4387 = vmatmul.mubr.f32.gmra.mrb[0].mxu0 %v4386
        %v4388 = vpop.f32.mrb[0].mxu0
        %v4389 = vadd.f32 %v4131, %v4388
        %v4390 = vpop.f32.mrb[0].mxu0
        %4391 = vmatprep.mubr.f32.mxu0 0.0
        %v4392 = vand.u32 %v2649, 4294901760
        %4393 = vmatmul.mubr.f32.gmra.mrb[0].mxu0 %v4392
        %v4394 = vpop.f32.mrb[0].mxu0
        %v4395 = vadd.f32 %v4137, %v4394
        %v4396 = vpop.f32.mrb[0].mxu0
        %4397 = vmatprep.mubr.f32.mxu0 0.0
        %v4398 = vand.u32 %v2652, 4294901760
        %4399 = vmatmul.mubr.f32.gmra.mrb[0].mxu0 %v4398
        %v4400 = vpop.f32.mrb[0].mxu0
        %v4401 = vadd.f32 %v4143, %v4400
        %v4402 = vpop.f32.mrb[0].mxu0
        %4403 = vmatprep.mubr.f32.mxu0 0.0
        %v4404 = vand.u32 %v2655, 4294901760
        %4405 = vmatmul.mubr.f32.gmra.mrb[0].mxu0 %v4404
        %v4406 = vpop.f32.mrb[0].mxu0
        %v4407 = vadd.f32 %v4149, %v4406
        %v4408 = vpop.f32.mrb[0].mxu0
        %4409 = vmatprep.mubr.f32.mxu0 0.0
        %v4410 = vand.u32 %v2658, 4294901760
        %4411 = vmatmul.mubr.f32.gmra.mrb[0].mxu0 %v4410
        %v4412 = vpop.f32.mrb[0].mxu0
        %v4413 = vadd.f32 %v4155, %v4412
        %v4414 = vpop.f32.mrb[0].mxu0
        %4415 = vmatprep.mubr.f32.mxu0 0.0
        %v4416 = vand.u32 %v2661, 4294901760
        %4417 = vmatmul.mubr.f32.gmra.mrb[0].mxu0 %v4416
        %v4418 = vpop.f32.mrb[0].mxu0
        %v4419 = vadd.f32 %v4161, %v4418
        %v4420 = vpop.f32.mrb[0].mxu0
        %4421 = vmatprep.mubr.f32.mxu0 0.0
        %v4422 = vand.u32 %v2664, 4294901760
        %4423 = vmatmul.mubr.f32.gmra.mrb[0].mxu0 %v4422
        %v4424 = vpop.f32.mrb[0].mxu0
        %v4425 = vadd.f32 %v4167, %v4424
        %v4426 = vpop.f32.mrb[0].mxu0
        %4427 = vmatprep.mubr.f32.mxu0 0.0
        %v4428 = vand.u32 %v2667, 4294901760
        %4429 = vmatmul.mubr.f32.gmra.mrb[0].mxu0 %v4428
        %v4430 = vpop.f32.mrb[0].mxu0
        %v4431 = vadd.f32 %v4173, %v4430
        %v4432 = vpop.f32.mrb[0].mxu0
        %4433 = vmatprep.mubr.f32.mxu0 0.0
        %v4434 = vand.u32 %v2670, 4294901760
        %4435 = vmatmul.mubr.f32.gmra.mrb[0].mxu0 %v4434
        %v4436 = vpop.f32.mrb[0].mxu0
        %v4437 = vadd.f32 %v4179, %v4436
        %v4438 = vpop.f32.mrb[0].mxu0
        %4439 = vmatprep.mubr.f32.mxu0 0.0
        %v4440 = vand.u32 %v2673, 4294901760
        %4441 = vmatmul.mubr.f32.gmra.mrb[0].mxu0 %v4440
        %v4442 = vpop.f32.mrb[0].mxu0
        %v4443 = vadd.f32 %v4185, %v4442
        %v4444 = vpop.f32.mrb[0].mxu0
        %4445 = vmatprep.mubr.f32.mxu0 0.0
        %v4446 = vand.u32 %v2676, 4294901760
        %4447 = vmatmul.mubr.f32.gmra.mrb[0].mxu0 %v4446
        %v4448 = vpop.f32.mrb[0].mxu0
        %v4449 = vadd.f32 %v4191, %v4448
        %v4450 = vpop.f32.mrb[0].mxu0
        %4451 = vmatprep.mubr.f32.mxu0 0.0
        %v4452 = vand.u32 %v2679, 4294901760
        %4453 = vmatmul.mubr.f32.gmra.mrb[0].mxu0 %v4452
        %v4454 = vpop.f32.mrb[0].mxu0
        %v4455 = vadd.f32 %v4197, %v4454
        %v4456 = vpop.f32.mrb[0].mxu0
        %4457 = vmatprep.mubr.f32.mxu0 0.0
        %v4458 = vand.u32 %v2682, 4294901760
        %4459 = vmatmul.mubr.f32.gmra.mrb[0].mxu0 %v4458
        %v4460 = vpop.f32.mrb[0].mxu0
        %v4461 = vadd.f32 %v4203, %v4460
        %v4462 = vpop.f32.mrb[0].mxu0
        %4463 = vmatprep.mubr.f32.mxu0 0.0
        %v4464 = vand.u32 %v2685, 4294901760
        %4465 = vmatmul.mubr.f32.gmra.mrb[0].mxu0 %v4464
        %v4466 = vpop.f32.mrb[0].mxu0
        %v4467 = vadd.f32 %v4209, %v4466
        %v4468 = vpop.f32.mrb[0].mxu0
        %4469 = vdwg.mxu0
        %v4470 = vsub.f32 %v441, %v4281
        %v4471 = vsub.f32 %v444, %v4287
        %v4472 = vsub.f32 %v449, %v4293
        %v4473 = vsub.f32 %v452, %v4299
        %v4474 = vsub.f32 %v457, %v4305
        %v4475 = vsub.f32 %v460, %v4311
        %v4476 = vsub.f32 %v465, %v4317
        %v4477 = vsub.f32 %v468, %v4323
        %v4478 = vsub.f32 %v473, %v4329
        %v4479 = vsub.f32 %v476, %v4335
        %v4480 = vsub.f32 %v481, %v4341
        %v4481 = vsub.f32 %v484, %v4347
        %v4482 = vsub.f32 %v489, %v4353
        %v4483 = vsub.f32 %v492, %v4359
        %v4484 = vsub.f32 %v497, %v4365
        %v4485 = vsub.f32 %v500, %v4371
        %v4486 = vsub.f32 %v505, %v4377
        %v4487 = vsub.f32 %v508, %v4383
        %v4488 = vsub.f32 %v513, %v4389
        %v4489 = vsub.f32 %v516, %v4395
        %v4490 = vsub.f32 %v521, %v4401
        %v4491 = vsub.f32 %v524, %v4407
        %v4492 = vsub.f32 %v529, %v4413
        %v4493 = vsub.f32 %v532, %v4419
        %v4494 = vsub.f32 %v537, %v4425
        %v4495 = vsub.f32 %v540, %v4431
        %v4496 = vsub.f32 %v545, %v4437
        %v4497 = vsub.f32 %v548, %v4443
        %v4498 = vsub.f32 %v553, %v4449
        %v4499 = vsub.f32 %v556, %v4455
        %v4500 = vsub.f32 %v561, %v4461
        %v4501 = vsub.f32 %v564, %v4467
        %v4502 = vmul.f32 %v4470, %v4470
        %v4503 = vmul.f32 %v4471, %v4471
        %v4504 = vmul.f32 %v4472, %v4472
        %v4505 = vmul.f32 %v4473, %v4473
        %v4506 = vmul.f32 %v4474, %v4474
        %v4507 = vmul.f32 %v4475, %v4475
        %v4508 = vmul.f32 %v4476, %v4476
        %v4509 = vmul.f32 %v4477, %v4477
        %v4510 = vmul.f32 %v4478, %v4478
        %v4511 = vmul.f32 %v4479, %v4479
        %v4512 = vmul.f32 %v4480, %v4480
        %v4513 = vmul.f32 %v4481, %v4481
        %v4514 = vmul.f32 %v4482, %v4482
        %v4515 = vmul.f32 %v4483, %v4483
        %v4516 = vmul.f32 %v4484, %v4484
        %v4517 = vmul.f32 %v4485, %v4485
        %v4518 = vmul.f32 %v4486, %v4486
        %v4519 = vmul.f32 %v4487, %v4487
        %v4520 = vmul.f32 %v4488, %v4488
        %v4521 = vmul.f32 %v4489, %v4489
        %v4522 = vmul.f32 %v4490, %v4490
        %v4523 = vmul.f32 %v4491, %v4491
        %v4524 = vmul.f32 %v4492, %v4492
        %v4525 = vmul.f32 %v4493, %v4493
        %v4526 = vmul.f32 %v4494, %v4494
        %v4527 = vmul.f32 %v4495, %v4495
        %v4528 = vmul.f32 %v4496, %v4496
        %v4529 = vmul.f32 %v4497, %v4497
        %v4530 = vmul.f32 %v4498, %v4498
        %v4531 = vmul.f32 %v4499, %v4499
        %v4532 = vmul.f32 %v4500, %v4500
        %v4533 = vmul.f32 %v4501, %v4501
        %4534 = vmatprep.subr.mxu0 0.0
        %v4535 = vand.u32 %v567, 4294901760
        %4536 = vmatpush1.msra.mxu0 %v4535
        %4537 = vmatprep.subr.mxu0 0.0
        %v4538 = vand.u32 %v568, 4294901760
        %4539 = vmatpush1.msra.mxu0 %v4538
        %4540 = vmatprep.subr.mxu0 0.0
        %v4541 = vand.u32 %v569, 4294901760
        %4542 = vmatpush1.msra.mxu0 %v4541
        %4543 = vmatprep.subr.mxu0 0.0
        %v4544 = vand.u32 %v570, 4294901760
        %4545 = vmatpush1.msra.mxu0 %v4544
        %4546 = vmatprep.subr.mxu0 0.0
        %v4547 = vand.u32 %v571, 4294901760
        %4548 = vmatpush1.msra.mxu0 %v4547
        %4549 = vmatprep.subr.mxu0 0.0
        %v4550 = vand.u32 %v572, 4294901760
        %4551 = vmatpush1.msra.mxu0 %v4550
        %4552 = vmatprep.subr.mxu0 0.0
        %v4553 = vand.u32 %v573, 4294901760
        %4554 = vmatpush1.msra.mxu0 %v4553
        %4555 = vmatprep.subr.mxu0 0.0
        %v4556 = vand.u32 %v574, 4294901760
        %4557 = vmatpush1.msra.mxu0 %v4556
        %4558 = vmatprep.subr.mxu0 0.0
        %v4559 = vand.u32 %v575, 4294901760
        %4560 = vmatpush1.msra.mxu0 %v4559
        %4561 = vmatprep.subr.mxu0 0.0
        %v4562 = vand.u32 %v576, 4294901760
        %4563 = vmatpush1.msra.mxu0 %v4562
        %4564 = vmatprep.subr.mxu0 0.0
        %v4565 = vand.u32 %v577, 4294901760
        %4566 = vmatpush1.msra.mxu0 %v4565
        %4567 = vmatprep.subr.mxu0 0.0
        %v4568 = vand.u32 %v578, 4294901760
        %4569 = vmatpush1.msra.mxu0 %v4568
        %4570 = vmatprep.subr.mxu0 0.0
        %v4571 = vand.u32 %v579, 4294901760
        %4572 = vmatpush1.msra.mxu0 %v4571
        %4573 = vmatprep.subr.mxu0 0.0
        %v4574 = vand.u32 %v580, 4294901760
        %4575 = vmatpush1.msra.mxu0 %v4574
        %4576 = vmatprep.subr.mxu0 0.0
        %v4577 = vand.u32 %v581, 4294901760
        %4578 = vmatpush1.msra.mxu0 %v4577
        %4579 = vmatprep.subr.mxu0 0.0
        %v4580 = vand.u32 %v582, 4294901760
        %4581 = vmatpush1.msra.mxu0 %v4580
        %4582 = vmatprep.subr.mxu0 0.0
        %4583 = vmatpush1.msra.mxu0 0.0
        %4584 = vmatprep.subr.mxu0 0.0
        %4585 = vmatpush1.msra.mxu0 0.0
        %4586 = vmatprep.subr.mxu0 0.0
        %4587 = vmatpush1.msra.mxu0 0.0
        %4588 = vmatprep.subr.mxu0 0.0
        %4589 = vmatpush1.msra.mxu0 0.0
        %4590 = vmatprep.subr.mxu0 0.0
        %4591 = vmatpush1.msra.mxu0 0.0
        %4592 = vmatprep.subr.mxu0 0.0
        %4593 = vmatpush1.msra.mxu0 0.0
        %4594 = vmatprep.subr.mxu0 0.0
        %4595 = vmatpush1.msra.mxu0 0.0
        %4596 = vmatprep.subr.mxu0 0.0
        %4597 = vmatpush1.msra.mxu0 0.0
        %4598 = vmatprep.subr.mxu0 0.0
        %4599 = vmatpush1.msra.mxu0 0.0
        %4600 = vmatprep.subr.mxu0 0.0
        %4601 = vmatpush1.msra.mxu0 0.0
        %4602 = vmatprep.subr.mxu0 0.0
        %4603 = vmatpush1.msra.mxu0 0.0
        %4604 = vmatprep.subr.mxu0 0.0
        %4605 = vmatpush1.msra.mxu0 0.0
        %4606 = vmatprep.subr.mxu0 0.0
        %4607 = vmatpush1.msra.mxu0 0.0
        %4608 = vmatprep.subr.mxu0 0.0
        %4609 = vmatpush1.msra.mxu0 0.0
        %4610 = vmatprep.subr.mxu0 0.0
        %4611 = vmatpush1.msra.mxu0 0.0
        %4612 = vmatprep.subr.mxu0 0.0
        %4613 = vmatpush1.msra.mxu0 0.0
        %4614 = vmatprep.mubr.f32.mxu0 0.0
        %v4615 = vand.u32 %v4502, 4294901760
        %v4616 = vsub.f32 %v4502, %v4615
        %v4617 = vand.u32 %v4616, 4294901760
        %v4618 = vsub.f32 %v4616, %v4617
        %v4619 = vand.u32 %v4618, 4294901760
        %4620 = vmatmul.mubr.f32.gmra.mrb[0].mxu0 %v4619
        %v4621 = vpop.f32.mrb[0].mxu0
        %v4622 = vadd.f32 0.0, %v4621
        %v4623 = vpop.f32.mrb[0].mxu0
        %4624 = vmatprep.mubr.f32.mxu0 0.0
        %v4625 = vand.u32 %v4503, 4294901760
        %v4626 = vsub.f32 %v4503, %v4625
        %v4627 = vand.u32 %v4626, 4294901760
        %v4628 = vsub.f32 %v4626, %v4627
        %v4629 = vand.u32 %v4628, 4294901760
        %4630 = vmatmul.mubr.f32.gmra.mrb[0].mxu0 %v4629
        %v4631 = vpop.f32.mrb[0].mxu0
        %v4632 = vadd.f32 0.0, %v4631
        %v4633 = vpop.f32.mrb[0].mxu0
        %4634 = vmatprep.mubr.f32.mxu0 0.0
        %v4635 = vand.u32 %v4504, 4294901760
        %v4636 = vsub.f32 %v4504, %v4635
        %v4637 = vand.u32 %v4636, 4294901760
        %v4638 = vsub.f32 %v4636, %v4637
        %v4639 = vand.u32 %v4638, 4294901760
        %4640 = vmatmul.mubr.f32.gmra.mrb[0].mxu0 %v4639
        %v4641 = vpop.f32.mrb[0].mxu0
        %v4642 = vadd.f32 0.0, %v4641
        %v4643 = vpop.f32.mrb[0].mxu0
        %4644 = vmatprep.mubr.f32.mxu0 0.0
        %v4645 = vand.u32 %v4505, 4294901760
        %v4646 = vsub.f32 %v4505, %v4645
        %v4647 = vand.u32 %v4646, 4294901760
        %v4648 = vsub.f32 %v4646, %v4647
        %v4649 = vand.u32 %v4648, 4294901760
        %4650 = vmatmul.mubr.f32.gmra.mrb[0].mxu0 %v4649
        %v4651 = vpop.f32.mrb[0].mxu0
        %v4652 = vadd.f32 0.0, %v4651
        %v4653 = vpop.f32.mrb[0].mxu0
        %4654 = vmatprep.mubr.f32.mxu0 0.0
        %v4655 = vand.u32 %v4506, 4294901760
        %v4656 = vsub.f32 %v4506, %v4655
        %v4657 = vand.u32 %v4656, 4294901760
        %v4658 = vsub.f32 %v4656, %v4657
        %v4659 = vand.u32 %v4658, 4294901760
        %4660 = vmatmul.mubr.f32.gmra.mrb[0].mxu0 %v4659
        %v4661 = vpop.f32.mrb[0].mxu0
        %v4662 = vadd.f32 0.0, %v4661
        %v4663 = vpop.f32.mrb[0].mxu0
        %4664 = vmatprep.mubr.f32.mxu0 0.0
        %v4665 = vand.u32 %v4507, 4294901760
        %v4666 = vsub.f32 %v4507, %v4665
        %v4667 = vand.u32 %v4666, 4294901760
        %v4668 = vsub.f32 %v4666, %v4667
        %v4669 = vand.u32 %v4668, 4294901760
        %4670 = vmatmul.mubr.f32.gmra.mrb[0].mxu0 %v4669
        %v4671 = vpop.f32.mrb[0].mxu0
        %v4672 = vadd.f32 0.0, %v4671
        %v4673 = vpop.f32.mrb[0].mxu0
        %4674 = vmatprep.mubr.f32.mxu0 0.0
        %v4675 = vand.u32 %v4508, 4294901760
        %v4676 = vsub.f32 %v4508, %v4675
        %v4677 = vand.u32 %v4676, 4294901760
        %v4678 = vsub.f32 %v4676, %v4677
        %v4679 = vand.u32 %v4678, 4294901760
        %4680 = vmatmul.mubr.f32.gmra.mrb[0].mxu0 %v4679
        %v4681 = vpop.f32.mrb[0].mxu0
        %v4682 = vadd.f32 0.0, %v4681
        %v4683 = vpop.f32.mrb[0].mxu0
        %4684 = vmatprep.mubr.f32.mxu0 0.0
        %v4685 = vand.u32 %v4509, 4294901760
        %v4686 = vsub.f32 %v4509, %v4685
        %v4687 = vand.u32 %v4686, 4294901760
        %v4688 = vsub.f32 %v4686, %v4687
        %v4689 = vand.u32 %v4688, 4294901760
        %4690 = vmatmul.mubr.f32.gmra.mrb[0].mxu0 %v4689
        %v4691 = vpop.f32.mrb[0].mxu0
        %v4692 = vadd.f32 0.0, %v4691
        %v4693 = vpop.f32.mrb[0].mxu0
        %4694 = vmatprep.mubr.f32.mxu0 0.0
        %v4695 = vand.u32 %v4510, 4294901760
        %v4696 = vsub.f32 %v4510, %v4695
        %v4697 = vand.u32 %v4696, 4294901760
        %v4698 = vsub.f32 %v4696, %v4697
        %v4699 = vand.u32 %v4698, 4294901760
        %4700 = vmatmul.mubr.f32.gmra.mrb[0].mxu0 %v4699
        %v4701 = vpop.f32.mrb[0].mxu0
        %v4702 = vadd.f32 0.0, %v4701
        %v4703 = vpop.f32.mrb[0].mxu0
        %4704 = vmatprep.mubr.f32.mxu0 0.0
        %v4705 = vand.u32 %v4511, 4294901760
        %v4706 = vsub.f32 %v4511, %v4705
        %v4707 = vand.u32 %v4706, 4294901760
        %v4708 = vsub.f32 %v4706, %v4707
        %v4709 = vand.u32 %v4708, 4294901760
        %4710 = vmatmul.mubr.f32.gmra.mrb[0].mxu0 %v4709
        %v4711 = vpop.f32.mrb[0].mxu0
        %v4712 = vadd.f32 0.0, %v4711
        %v4713 = vpop.f32.mrb[0].mxu0
        %4714 = vmatprep.mubr.f32.mxu0 0.0
        %v4715 = vand.u32 %v4512, 4294901760
        %v4716 = vsub.f32 %v4512, %v4715
        %v4717 = vand.u32 %v4716, 4294901760
        %v4718 = vsub.f32 %v4716, %v4717
        %v4719 = vand.u32 %v4718, 4294901760
        %4720 = vmatmul.mubr.f32.gmra.mrb[0].mxu0 %v4719
        %v4721 = vpop.f32.mrb[0].mxu0
        %v4722 = vadd.f32 0.0, %v4721
        %v4723 = vpop.f32.mrb[0].mxu0
        %4724 = vmatprep.mubr.f32.mxu0 0.0
        %v4725 = vand.u32 %v4513, 4294901760
        %v4726 = vsub.f32 %v4513, %v4725
        %v4727 = vand.u32 %v4726, 4294901760
        %v4728 = vsub.f32 %v4726, %v4727
        %v4729 = vand.u32 %v4728, 4294901760
        %4730 = vmatmul.mubr.f32.gmra.mrb[0].mxu0 %v4729
        %v4731 = vpop.f32.mrb[0].mxu0
        %v4732 = vadd.f32 0.0, %v4731
        %v4733 = vpop.f32.mrb[0].mxu0
        %4734 = vmatprep.mubr.f32.mxu0 0.0
        %v4735 = vand.u32 %v4514, 4294901760
        %v4736 = vsub.f32 %v4514, %v4735
        %v4737 = vand.u32 %v4736, 4294901760
        %v4738 = vsub.f32 %v4736, %v4737
        %v4739 = vand.u32 %v4738, 4294901760
        %4740 = vmatmul.mubr.f32.gmra.mrb[0].mxu0 %v4739
        %v4741 = vpop.f32.mrb[0].mxu0
        %v4742 = vadd.f32 0.0, %v4741
        %v4743 = vpop.f32.mrb[0].mxu0
        %4744 = vmatprep.mubr.f32.mxu0 0.0
        %v4745 = vand.u32 %v4515, 4294901760
        %v4746 = vsub.f32 %v4515, %v4745
        %v4747 = vand.u32 %v4746, 4294901760
        %v4748 = vsub.f32 %v4746, %v4747
        %v4749 = vand.u32 %v4748, 4294901760
        %4750 = vmatmul.mubr.f32.gmra.mrb[0].mxu0 %v4749
        %v4751 = vpop.f32.mrb[0].mxu0
        %v4752 = vadd.f32 0.0, %v4751
        %v4753 = vpop.f32.mrb[0].mxu0
        %4754 = vmatprep.mubr.f32.mxu0 0.0
        %v4755 = vand.u32 %v4516, 4294901760
        %v4756 = vsub.f32 %v4516, %v4755
        %v4757 = vand.u32 %v4756, 4294901760
        %v4758 = vsub.f32 %v4756, %v4757
        %v4759 = vand.u32 %v4758, 4294901760
        %4760 = vmatmul.mubr.f32.gmra.mrb[0].mxu0 %v4759
        %v4761 = vpop.f32.mrb[0].mxu0
        %v4762 = vadd.f32 0.0, %v4761
        %v4763 = vpop.f32.mrb[0].mxu0
        %4764 = vmatprep.mubr.f32.mxu0 0.0
        %v4765 = vand.u32 %v4517, 4294901760
        %v4766 = vsub.f32 %v4517, %v4765
        %v4767 = vand.u32 %v4766, 4294901760
        %v4768 = vsub.f32 %v4766, %v4767
        %v4769 = vand.u32 %v4768, 4294901760
        %4770 = vmatmul.mubr.f32.gmra.mrb[0].mxu0 %v4769
        %v4771 = vpop.f32.mrb[0].mxu0
        %v4772 = vadd.f32 0.0, %v4771
        %v4773 = vpop.f32.mrb[0].mxu0
        %4774 = vmatprep.mubr.f32.mxu0 0.0
        %v4775 = vand.u32 %v4518, 4294901760
        %v4776 = vsub.f32 %v4518, %v4775
        %v4777 = vand.u32 %v4776, 4294901760
        %v4778 = vsub.f32 %v4776, %v4777
        %v4779 = vand.u32 %v4778, 4294901760
        %4780 = vmatmul.mubr.f32.gmra.mrb[0].mxu0 %v4779
        %v4781 = vpop.f32.mrb[0].mxu0
        %v4782 = vadd.f32 0.0, %v4781
        %v4783 = vpop.f32.mrb[0].mxu0
        %4784 = vmatprep.mubr.f32.mxu0 0.0
        %v4785 = vand.u32 %v4519, 4294901760
        %v4786 = vsub.f32 %v4519, %v4785
        %v4787 = vand.u32 %v4786, 4294901760
        %v4788 = vsub.f32 %v4786, %v4787
        %v4789 = vand.u32 %v4788, 4294901760
        %4790 = vmatmul.mubr.f32.gmra.mrb[0].mxu0 %v4789
        %v4791 = vpop.f32.mrb[0].mxu0
        %v4792 = vadd.f32 0.0, %v4791
        %v4793 = vpop.f32.mrb[0].mxu0
        %4794 = vmatprep.mubr.f32.mxu0 0.0
        %v4795 = vand.u32 %v4520, 4294901760
        %v4796 = vsub.f32 %v4520, %v4795
        %v4797 = vand.u32 %v4796, 4294901760
        %v4798 = vsub.f32 %v4796, %v4797
        %v4799 = vand.u32 %v4798, 4294901760
        %4800 = vmatmul.mubr.f32.gmra.mrb[0].mxu0 %v4799
        %v4801 = vpop.f32.mrb[0].mxu0
        %v4802 = vadd.f32 0.0, %v4801
        %v4803 = vpop.f32.mrb[0].mxu0
        %4804 = vmatprep.mubr.f32.mxu0 0.0
        %v4805 = vand.u32 %v4521, 4294901760
        %v4806 = vsub.f32 %v4521, %v4805
        %v4807 = vand.u32 %v4806, 4294901760
        %v4808 = vsub.f32 %v4806, %v4807
        %v4809 = vand.u32 %v4808, 4294901760
        %4810 = vmatmul.mubr.f32.gmra.mrb[0].mxu0 %v4809
        %v4811 = vpop.f32.mrb[0].mxu0
        %v4812 = vadd.f32 0.0, %v4811
        %v4813 = vpop.f32.mrb[0].mxu0
        %4814 = vmatprep.mubr.f32.mxu0 0.0
        %v4815 = vand.u32 %v4522, 4294901760
        %v4816 = vsub.f32 %v4522, %v4815
        %v4817 = vand.u32 %v4816, 4294901760
        %v4818 = vsub.f32 %v4816, %v4817
        %v4819 = vand.u32 %v4818, 4294901760
        %4820 = vmatmul.mubr.f32.gmra.mrb[0].mxu0 %v4819
        %v4821 = vpop.f32.mrb[0].mxu0
        %v4822 = vadd.f32 0.0, %v4821
        %v4823 = vpop.f32.mrb[0].mxu0
        %4824 = vmatprep.mubr.f32.mxu0 0.0
        %v4825 = vand.u32 %v4523, 4294901760
        %v4826 = vsub.f32 %v4523, %v4825
        %v4827 = vand.u32 %v4826, 4294901760
        %v4828 = vsub.f32 %v4826, %v4827
        %v4829 = vand.u32 %v4828, 4294901760
        %4830 = vmatmul.mubr.f32.gmra.mrb[0].mxu0 %v4829
        %v4831 = vpop.f32.mrb[0].mxu0
        %v4832 = vadd.f32 0.0, %v4831
        %v4833 = vpop.f32.mrb[0].mxu0
        %4834 = vmatprep.mubr.f32.mxu0 0.0
        %v4835 = vand.u32 %v4524, 4294901760
        %v4836 = vsub.f32 %v4524, %v4835
        %v4837 = vand.u32 %v4836, 4294901760
        %v4838 = vsub.f32 %v4836, %v4837
        %v4839 = vand.u32 %v4838, 4294901760
        %4840 = vmatmul.mubr.f32.gmra.mrb[0].mxu0 %v4839
        %v4841 = vpop.f32.mrb[0].mxu0
        %v4842 = vadd.f32 0.0, %v4841
        %v4843 = vpop.f32.mrb[0].mxu0
        %4844 = vmatprep.mubr.f32.mxu0 0.0
        %v4845 = vand.u32 %v4525, 4294901760
        %v4846 = vsub.f32 %v4525, %v4845
        %v4847 = vand.u32 %v4846, 4294901760
        %v4848 = vsub.f32 %v4846, %v4847
        %v4849 = vand.u32 %v4848, 4294901760
        %4850 = vmatmul.mubr.f32.gmra.mrb[0].mxu0 %v4849
        %v4851 = vpop.f32.mrb[0].mxu0
        %v4852 = vadd.f32 0.0, %v4851
        %v4853 = vpop.f32.mrb[0].mxu0
        %4854 = vmatprep.mubr.f32.mxu0 0.0
        %v4855 = vand.u32 %v4526, 4294901760
        %v4856 = vsub.f32 %v4526, %v4855
        %v4857 = vand.u32 %v4856, 4294901760
        %v4858 = vsub.f32 %v4856, %v4857
        %v4859 = vand.u32 %v4858, 4294901760
        %4860 = vmatmul.mubr.f32.gmra.mrb[0].mxu0 %v4859
        %v4861 = vpop.f32.mrb[0].mxu0
        %v4862 = vadd.f32 0.0, %v4861
        %v4863 = vpop.f32.mrb[0].mxu0
        %4864 = vmatprep.mubr.f32.mxu0 0.0
        %v4865 = vand.u32 %v4527, 4294901760
        %v4866 = vsub.f32 %v4527, %v4865
        %v4867 = vand.u32 %v4866, 4294901760
        %v4868 = vsub.f32 %v4866, %v4867
        %v4869 = vand.u32 %v4868, 4294901760
        %4870 = vmatmul.mubr.f32.gmra.mrb[0].mxu0 %v4869
        %v4871 = vpop.f32.mrb[0].mxu0
        %v4872 = vadd.f32 0.0, %v4871
        %v4873 = vpop.f32.mrb[0].mxu0
        %4874 = vmatprep.mubr.f32.mxu0 0.0
        %v4875 = vand.u32 %v4528, 4294901760
        %v4876 = vsub.f32 %v4528, %v4875
        %v4877 = vand.u32 %v4876, 4294901760
        %v4878 = vsub.f32 %v4876, %v4877
        %v4879 = vand.u32 %v4878, 4294901760
        %4880 = vmatmul.mubr.f32.gmra.mrb[0].mxu0 %v4879
        %v4881 = vpop.f32.mrb[0].mxu0
        %v4882 = vadd.f32 0.0, %v4881
        %v4883 = vpop.f32.mrb[0].mxu0
        %4884 = vmatprep.mubr.f32.mxu0 0.0
        %v4885 = vand.u32 %v4529, 4294901760
        %v4886 = vsub.f32 %v4529, %v4885
        %v4887 = vand.u32 %v4886, 4294901760
        %v4888 = vsub.f32 %v4886, %v4887
        %v4889 = vand.u32 %v4888, 4294901760
        %4890 = vmatmul.mubr.f32.gmra.mrb[0].mxu0 %v4889
        %v4891 = vpop.f32.mrb[0].mxu0
        %v4892 = vadd.f32 0.0, %v4891
        %v4893 = vpop.f32.mrb[0].mxu0
        %4894 = vmatprep.mubr.f32.mxu0 0.0
        %v4895 = vand.u32 %v4530, 4294901760
        %v4896 = vsub.f32 %v4530, %v4895
        %v4897 = vand.u32 %v4896, 4294901760
        %v4898 = vsub.f32 %v4896, %v4897
        %v4899 = vand.u32 %v4898, 4294901760
        %4900 = vmatmul.mubr.f32.gmra.mrb[0].mxu0 %v4899
        %v4901 = vpop.f32.mrb[0].mxu0
        %v4902 = vadd.f32 0.0, %v4901
        %v4903 = vpop.f32.mrb[0].mxu0
        %4904 = vmatprep.mubr.f32.mxu0 0.0
        %v4905 = vand.u32 %v4531, 4294901760
        %v4906 = vsub.f32 %v4531, %v4905
        %v4907 = vand.u32 %v4906, 4294901760
        %v4908 = vsub.f32 %v4906, %v4907
        %v4909 = vand.u32 %v4908, 4294901760
        %4910 = vmatmul.mubr.f32.gmra.mrb[0].mxu0 %v4909
        %v4911 = vpop.f32.mrb[0].mxu0
        %v4912 = vadd.f32 0.0, %v4911
        %v4913 = vpop.f32.mrb[0].mxu0
        %4914 = vmatprep.mubr.f32.mxu0 0.0
        %v4915 = vand.u32 %v4532, 4294901760
        %v4916 = vsub.f32 %v4532, %v4915
        %v4917 = vand.u32 %v4916, 4294901760
        %v4918 = vsub.f32 %v4916, %v4917
        %v4919 = vand.u32 %v4918, 4294901760
        %4920 = vmatmul.mubr.f32.gmra.mrb[0].mxu0 %v4919
        %v4921 = vpop.f32.mrb[0].mxu0
        %v4922 = vadd.f32 0.0, %v4921
        %v4923 = vpop.f32.mrb[0].mxu0
        %4924 = vmatprep.mubr.f32.mxu0 0.0
        %v4925 = vand.u32 %v4533, 4294901760
        %v4926 = vsub.f32 %v4533, %v4925
        %v4927 = vand.u32 %v4926, 4294901760
        %v4928 = vsub.f32 %v4926, %v4927
        %v4929 = vand.u32 %v4928, 4294901760
        %4930 = vmatmul.mubr.f32.gmra.mrb[0].mxu0 %v4929
        %v4931 = vpop.f32.mrb[0].mxu0
        %v4932 = vadd.f32 0.0, %v4931
        %v4933 = vpop.f32.mrb[0].mxu0
        %4934 = vdwg.mxu0
        %4935 = vmatprep.subr.mxu0 0.0
        %v4936 = vand.u32 %v567, 4294901760
        %v4937 = vsub.f32 %v567, %v4936
        %v4938 = vand.u32 %v4937, 4294901760
        %v4939 = vsub.f32 %v4937, %v4938
        %v4940 = vand.u32 %v4939, 4294901760
        %4941 = vmatpush1.msra.mxu0 %v4940
        %4942 = vmatprep.subr.mxu0 0.0
        %v4943 = vand.u32 %v568, 4294901760
        %v4944 = vsub.f32 %v568, %v4943
        %v4945 = vand.u32 %v4944, 4294901760
        %v4946 = vsub.f32 %v4944, %v4945
        %v4947 = vand.u32 %v4946, 4294901760
        %4948 = vmatpush1.msra.mxu0 %v4947
        %4949 = vmatprep.subr.mxu0 0.0
        %v4950 = vand.u32 %v569, 4294901760
        %v4951 = vsub.f32 %v569, %v4950
        %v4952 = vand.u32 %v4951, 4294901760
        %v4953 = vsub.f32 %v4951, %v4952
        %v4954 = vand.u32 %v4953, 4294901760
        %4955 = vmatpush1.msra.mxu0 %v4954
        %4956 = vmatprep.subr.mxu0 0.0
        %v4957 = vand.u32 %v570, 4294901760
        %v4958 = vsub.f32 %v570, %v4957
        %v4959 = vand.u32 %v4958, 4294901760
        %v4960 = vsub.f32 %v4958, %v4959
        %v4961 = vand.u32 %v4960, 4294901760
        %4962 = vmatpush1.msra.mxu0 %v4961
        %4963 = vmatprep.subr.mxu0 0.0
        %v4964 = vand.u32 %v571, 4294901760
        %v4965 = vsub.f32 %v571, %v4964
        %v4966 = vand.u32 %v4965, 4294901760
        %v4967 = vsub.f32 %v4965, %v4966
        %v4968 = vand.u32 %v4967, 4294901760
        %4969 = vmatpush1.msra.mxu0 %v4968
        %4970 = vmatprep.subr.mxu0 0.0
        %v4971 = vand.u32 %v572, 4294901760
        %v4972 = vsub.f32 %v572, %v4971
        %v4973 = vand.u32 %v4972, 4294901760
        %v4974 = vsub.f32 %v4972, %v4973
        %v4975 = vand.u32 %v4974, 4294901760
        %4976 = vmatpush1.msra.mxu0 %v4975
        %4977 = vmatprep.subr.mxu0 0.0
        %v4978 = vand.u32 %v573, 4294901760
        %v4979 = vsub.f32 %v573, %v4978
        %v4980 = vand.u32 %v4979, 4294901760
        %v4981 = vsub.f32 %v4979, %v4980
        %v4982 = vand.u32 %v4981, 4294901760
        %4983 = vmatpush1.msra.mxu0 %v4982
        %4984 = vmatprep.subr.mxu0 0.0
        %v4985 = vand.u32 %v574, 4294901760
        %v4986 = vsub.f32 %v574, %v4985
        %v4987 = vand.u32 %v4986, 4294901760
        %v4988 = vsub.f32 %v4986, %v4987
        %v4989 = vand.u32 %v4988, 4294901760
        %4990 = vmatpush1.msra.mxu0 %v4989
        %4991 = vmatprep.subr.mxu0 0.0
        %v4992 = vand.u32 %v575, 4294901760
        %v4993 = vsub.f32 %v575, %v4992
        %v4994 = vand.u32 %v4993, 4294901760
        %v4995 = vsub.f32 %v4993, %v4994
        %v4996 = vand.u32 %v4995, 4294901760
        %4997 = vmatpush1.msra.mxu0 %v4996
        %4998 = vmatprep.subr.mxu0 0.0
        %v4999 = vand.u32 %v576, 4294901760
        %v5000 = vsub.f32 %v576, %v4999
        %v5001 = vand.u32 %v5000, 4294901760
        %v5002 = vsub.f32 %v5000, %v5001
        %v5003 = vand.u32 %v5002, 4294901760
        %5004 = vmatpush1.msra.mxu0 %v5003
        %5005 = vmatprep.subr.mxu0 0.0
        %v5006 = vand.u32 %v577, 4294901760
        %v5007 = vsub.f32 %v577, %v5006
        %v5008 = vand.u32 %v5007, 4294901760
        %v5009 = vsub.f32 %v5007, %v5008
        %v5010 = vand.u32 %v5009, 4294901760
        %5011 = vmatpush1.msra.mxu0 %v5010
        %5012 = vmatprep.subr.mxu0 0.0
        %v5013 = vand.u32 %v578, 4294901760
        %v5014 = vsub.f32 %v578, %v5013
        %v5015 = vand.u32 %v5014, 4294901760
        %v5016 = vsub.f32 %v5014, %v5015
        %v5017 = vand.u32 %v5016, 4294901760
        %5018 = vmatpush1.msra.mxu0 %v5017
        %5019 = vmatprep.subr.mxu0 0.0
        %v5020 = vand.u32 %v579, 4294901760
        %v5021 = vsub.f32 %v579, %v5020
        %v5022 = vand.u32 %v5021, 4294901760
        %v5023 = vsub.f32 %v5021, %v5022
        %v5024 = vand.u32 %v5023, 4294901760
        %5025 = vmatpush1.msra.mxu0 %v5024
        %5026 = vmatprep.subr.mxu0 0.0
        %v5027 = vand.u32 %v580, 4294901760
        %v5028 = vsub.f32 %v580, %v5027
        %v5029 = vand.u32 %v5028, 4294901760
        %v5030 = vsub.f32 %v5028, %v5029
        %v5031 = vand.u32 %v5030, 4294901760
        %5032 = vmatpush1.msra.mxu0 %v5031
        %5033 = vmatprep.subr.mxu0 0.0
        %v5034 = vand.u32 %v581, 4294901760
        %v5035 = vsub.f32 %v581, %v5034
        %v5036 = vand.u32 %v5035, 4294901760
        %v5037 = vsub.f32 %v5035, %v5036
        %v5038 = vand.u32 %v5037, 4294901760
        %5039 = vmatpush1.msra.mxu0 %v5038
        %5040 = vmatprep.subr.mxu0 0.0
        %v5041 = vand.u32 %v582, 4294901760
        %v5042 = vsub.f32 %v582, %v5041
        %v5043 = vand.u32 %v5042, 4294901760
        %v5044 = vsub.f32 %v5042, %v5043
        %v5045 = vand.u32 %v5044, 4294901760
        %5046 = vmatpush1.msra.mxu0 %v5045
        %5047 = vmatprep.subr.mxu0 0.0
        %5048 = vmatpush1.msra.mxu0 0.0
        %5049 = vmatprep.subr.mxu0 0.0
        %5050 = vmatpush1.msra.mxu0 0.0
        %5051 = vmatprep.subr.mxu0 0.0
        %5052 = vmatpush1.msra.mxu0 0.0
        %5053 = vmatprep.subr.mxu0 0.0
        %5054 = vmatpush1.msra.mxu0 0.0
        %5055 = vmatprep.subr.mxu0 0.0
        %5056 = vmatpush1.msra.mxu0 0.0
        %5057 = vmatprep.subr.mxu0 0.0
        %5058 = vmatpush1.msra.mxu0 0.0
        %5059 = vmatprep.subr.mxu0 0.0
        %5060 = vmatpush1.msra.mxu0 0.0
        %5061 = vmatprep.subr.mxu0 0.0
        %5062 = vmatpush1.msra.mxu0 0.0
        %5063 = vmatprep.subr.mxu0 0.0
        %5064 = vmatpush1.msra.mxu0 0.0
        %5065 = vmatprep.subr.mxu0 0.0
        %5066 = vmatpush1.msra.mxu0 0.0
        %5067 = vmatprep.subr.mxu0 0.0
        %5068 = vmatpush1.msra.mxu0 0.0
        %5069 = vmatprep.subr.mxu0 0.0
        %5070 = vmatpush1.msra.mxu0 0.0
        %5071 = vmatprep.subr.mxu0 0.0
        %5072 = vmatpush1.msra.mxu0 0.0
        %5073 = vmatprep.subr.mxu0 0.0
        %5074 = vmatpush1.msra.mxu0 0.0
        %5075 = vmatprep.subr.mxu0 0.0
        %5076 = vmatpush1.msra.mxu0 0.0
        %5077 = vmatprep.subr.mxu0 0.0
        %5078 = vmatpush1.msra.mxu0 0.0
        %5079 = vmatprep.mubr.f32.mxu0 0.0
        %v5080 = vand.u32 %v4502, 4294901760
        %5081 = vmatmul.mubr.f32.gmra.mrb[0].mxu0 %v5080
        %v5082 = vpop.f32.mrb[0].mxu0
        %v5083 = vadd.f32 %v4622, %v5082
        %v5084 = vpop.f32.mrb[0].mxu0
        %5085 = vmatprep.mubr.f32.mxu0 0.0
        %v5086 = vand.u32 %v4503, 4294901760
        %5087 = vmatmul.mubr.f32.gmra.mrb[0].mxu0 %v5086
        %v5088 = vpop.f32.mrb[0].mxu0
        %v5089 = vadd.f32 %v4632, %v5088
        %v5090 = vpop.f32.mrb[0].mxu0
        %5091 = vmatprep.mubr.f32.mxu0 0.0
        %v5092 = vand.u32 %v4504, 4294901760
        %5093 = vmatmul.mubr.f32.gmra.mrb[0].mxu0 %v5092
        %v5094 = vpop.f32.mrb[0].mxu0
        %v5095 = vadd.f32 %v4642, %v5094
        %v5096 = vpop.f32.mrb[0].mxu0
        %5097 = vmatprep.mubr.f32.mxu0 0.0
        %v5098 = vand.u32 %v4505, 4294901760
        %5099 = vmatmul.mubr.f32.gmra.mrb[0].mxu0 %v5098
        %v5100 = vpop.f32.mrb[0].mxu0
        %v5101 = vadd.f32 %v4652, %v5100
        %v5102 = vpop.f32.mrb[0].mxu0
        %5103 = vmatprep.mubr.f32.mxu0 0.0
        %v5104 = vand.u32 %v4506, 4294901760
        %5105 = vmatmul.mubr.f32.gmra.mrb[0].mxu0 %v5104
        %v5106 = vpop.f32.mrb[0].mxu0
        %v5107 = vadd.f32 %v4662, %v5106
        %v5108 = vpop.f32.mrb[0].mxu0
        %5109 = vmatprep.mubr.f32.mxu0 0.0
        %v5110 = vand.u32 %v4507, 4294901760
        %5111 = vmatmul.mubr.f32.gmra.mrb[0].mxu0 %v5110
        %v5112 = vpop.f32.mrb[0].mxu0
        %v5113 = vadd.f32 %v4672, %v5112
        %v5114 = vpop.f32.mrb[0].mxu0
        %5115 = vmatprep.mubr.f32.mxu0 0.0
        %v5116 = vand.u32 %v4508, 4294901760
        %5117 = vmatmul.mubr.f32.gmra.mrb[0].mxu0 %v5116
        %v5118 = vpop.f32.mrb[0].mxu0
        %v5119 = vadd.f32 %v4682, %v5118
        %v5120 = vpop.f32.mrb[0].mxu0
        %5121 = vmatprep.mubr.f32.mxu0 0.0
        %v5122 = vand.u32 %v4509, 4294901760
        %5123 = vmatmul.mubr.f32.gmra.mrb[0].mxu0 %v5122
        %v5124 = vpop.f32.mrb[0].mxu0
        %v5125 = vadd.f32 %v4692, %v5124
        %v5126 = vpop.f32.mrb[0].mxu0
        %5127 = vmatprep.mubr.f32.mxu0 0.0
        %v5128 = vand.u32 %v4510, 4294901760
        %5129 = vmatmul.mubr.f32.gmra.mrb[0].mxu0 %v5128
        %v5130 = vpop.f32.mrb[0].mxu0
        %v5131 = vadd.f32 %v4702, %v5130
        %v5132 = vpop.f32.mrb[0].mxu0
        %5133 = vmatprep.mubr.f32.mxu0 0.0
        %v5134 = vand.u32 %v4511, 4294901760
        %5135 = vmatmul.mubr.f32.gmra.mrb[0].mxu0 %v5134
        %v5136 = vpop.f32.mrb[0].mxu0
        %v5137 = vadd.f32 %v4712, %v5136
        %v5138 = vpop.f32.mrb[0].mxu0
        %5139 = vmatprep.mubr.f32.mxu0 0.0
        %v5140 = vand.u32 %v4512, 4294901760
        %5141 = vmatmul.mubr.f32.gmra.mrb[0].mxu0 %v5140
        %v5142 = vpop.f32.mrb[0].mxu0
        %v5143 = vadd.f32 %v4722, %v5142
        %v5144 = vpop.f32.mrb[0].mxu0
        %5145 = vmatprep.mubr.f32.mxu0 0.0
        %v5146 = vand.u32 %v4513, 4294901760
        %5147 = vmatmul.mubr.f32.gmra.mrb[0].mxu0 %v5146
        %v5148 = vpop.f32.mrb[0].mxu0
        %v5149 = vadd.f32 %v4732, %v5148
        %v5150 = vpop.f32.mrb[0].mxu0
        %5151 = vmatprep.mubr.f32.mxu0 0.0
        %v5152 = vand.u32 %v4514, 4294901760
        %5153 = vmatmul.mubr.f32.gmra.mrb[0].mxu0 %v5152
        %v5154 = vpop.f32.mrb[0].mxu0
        %v5155 = vadd.f32 %v4742, %v5154
        %v5156 = vpop.f32.mrb[0].mxu0
        %5157 = vmatprep.mubr.f32.mxu0 0.0
        %v5158 = vand.u32 %v4515, 4294901760
        %5159 = vmatmul.mubr.f32.gmra.mrb[0].mxu0 %v5158
        %v5160 = vpop.f32.mrb[0].mxu0
        %v5161 = vadd.f32 %v4752, %v5160
        %v5162 = vpop.f32.mrb[0].mxu0
        %5163 = vmatprep.mubr.f32.mxu0 0.0
        %v5164 = vand.u32 %v4516, 4294901760
        %5165 = vmatmul.mubr.f32.gmra.mrb[0].mxu0 %v5164
        %v5166 = vpop.f32.mrb[0].mxu0
        %v5167 = vadd.f32 %v4762, %v5166
        %v5168 = vpop.f32.mrb[0].mxu0
        %5169 = vmatprep.mubr.f32.mxu0 0.0
        %v5170 = vand.u32 %v4517, 4294901760
        %5171 = vmatmul.mubr.f32.gmra.mrb[0].mxu0 %v5170
        %v5172 = vpop.f32.mrb[0].mxu0
        %v5173 = vadd.f32 %v4772, %v5172
        %v5174 = vpop.f32.mrb[0].mxu0
        %5175 = vmatprep.mubr.f32.mxu0 0.0
        %v5176 = vand.u32 %v4518, 4294901760
        %5177 = vmatmul.mubr.f32.gmra.mrb[0].mxu0 %v5176
        %v5178 = vpop.f32.mrb[0].mxu0
        %v5179 = vadd.f32 %v4782, %v5178
        %v5180 = vpop.f32.mrb[0].mxu0
        %5181 = vmatprep.mubr.f32.mxu0 0.0
        %v5182 = vand.u32 %v4519, 4294901760
        %5183 = vmatmul.mubr.f32.gmra.mrb[0].mxu0 %v5182
        %v5184 = vpop.f32.mrb[0].mxu0
        %v5185 = vadd.f32 %v4792, %v5184
        %v5186 = vpop.f32.mrb[0].mxu0
        %5187 = vmatprep.mubr.f32.mxu0 0.0
        %v5188 = vand.u32 %v4520, 4294901760
        %5189 = vmatmul.mubr.f32.gmra.mrb[0].mxu0 %v5188
        %v5190 = vpop.f32.mrb[0].mxu0
        %v5191 = vadd.f32 %v4802, %v5190
        %v5192 = vpop.f32.mrb[0].mxu0
        %5193 = vmatprep.mubr.f32.mxu0 0.0
        %v5194 = vand.u32 %v4521, 4294901760
        %5195 = vmatmul.mubr.f32.gmra.mrb[0].mxu0 %v5194
        %v5196 = vpop.f32.mrb[0].mxu0
        %v5197 = vadd.f32 %v4812, %v5196
        %v5198 = vpop.f32.mrb[0].mxu0
        %5199 = vmatprep.mubr.f32.mxu0 0.0
        %v5200 = vand.u32 %v4522, 4294901760
        %5201 = vmatmul.mubr.f32.gmra.mrb[0].mxu0 %v5200
        %v5202 = vpop.f32.mrb[0].mxu0
        %v5203 = vadd.f32 %v4822, %v5202
        %v5204 = vpop.f32.mrb[0].mxu0
        %5205 = vmatprep.mubr.f32.mxu0 0.0
        %v5206 = vand.u32 %v4523, 4294901760
        %5207 = vmatmul.mubr.f32.gmra.mrb[0].mxu0 %v5206
        %v5208 = vpop.f32.mrb[0].mxu0
        %v5209 = vadd.f32 %v4832, %v5208
        %v5210 = vpop.f32.mrb[0].mxu0
        %5211 = vmatprep.mubr.f32.mxu0 0.0
        %v5212 = vand.u32 %v4524, 4294901760
        %5213 = vmatmul.mubr.f32.gmra.mrb[0].mxu0 %v5212
        %v5214 = vpop.f32.mrb[0].mxu0
        %v5215 = vadd.f32 %v4842, %v5214
        %v5216 = vpop.f32.mrb[0].mxu0
        %5217 = vmatprep.mubr.f32.mxu0 0.0
        %v5218 = vand.u32 %v4525, 4294901760
        %5219 = vmatmul.mubr.f32.gmra.mrb[0].mxu0 %v5218
        %v5220 = vpop.f32.mrb[0].mxu0
        %v5221 = vadd.f32 %v4852, %v5220
        %v5222 = vpop.f32.mrb[0].mxu0
        %5223 = vmatprep.mubr.f32.mxu0 0.0
        %v5224 = vand.u32 %v4526, 4294901760
        %5225 = vmatmul.mubr.f32.gmra.mrb[0].mxu0 %v5224
        %v5226 = vpop.f32.mrb[0].mxu0
        %v5227 = vadd.f32 %v4862, %v5226
        %v5228 = vpop.f32.mrb[0].mxu0
        %5229 = vmatprep.mubr.f32.mxu0 0.0
        %v5230 = vand.u32 %v4527, 4294901760
        %5231 = vmatmul.mubr.f32.gmra.mrb[0].mxu0 %v5230
        %v5232 = vpop.f32.mrb[0].mxu0
        %v5233 = vadd.f32 %v4872, %v5232
        %v5234 = vpop.f32.mrb[0].mxu0
        %5235 = vmatprep.mubr.f32.mxu0 0.0
        %v5236 = vand.u32 %v4528, 4294901760
        %5237 = vmatmul.mubr.f32.gmra.mrb[0].mxu0 %v5236
        %v5238 = vpop.f32.mrb[0].mxu0
        %v5239 = vadd.f32 %v4882, %v5238
        %v5240 = vpop.f32.mrb[0].mxu0
        %5241 = vmatprep.mubr.f32.mxu0 0.0
        %v5242 = vand.u32 %v4529, 4294901760
        %5243 = vmatmul.mubr.f32.gmra.mrb[0].mxu0 %v5242
        %v5244 = vpop.f32.mrb[0].mxu0
        %v5245 = vadd.f32 %v4892, %v5244
        %v5246 = vpop.f32.mrb[0].mxu0
        %5247 = vmatprep.mubr.f32.mxu0 0.0
        %v5248 = vand.u32 %v4530, 4294901760
        %5249 = vmatmul.mubr.f32.gmra.mrb[0].mxu0 %v5248
        %v5250 = vpop.f32.mrb[0].mxu0
        %v5251 = vadd.f32 %v4902, %v5250
        %v5252 = vpop.f32.mrb[0].mxu0
        %5253 = vmatprep.mubr.f32.mxu0 0.0
        %v5254 = vand.u32 %v4531, 4294901760
        %5255 = vmatmul.mubr.f32.gmra.mrb[0].mxu0 %v5254
        %v5256 = vpop.f32.mrb[0].mxu0
        %v5257 = vadd.f32 %v4912, %v5256
        %v5258 = vpop.f32.mrb[0].mxu0
        %5259 = vmatprep.mubr.f32.mxu0 0.0
        %v5260 = vand.u32 %v4532, 4294901760
        %5261 = vmatmul.mubr.f32.gmra.mrb[0].mxu0 %v5260
        %v5262 = vpop.f32.mrb[0].mxu0
        %v5263 = vadd.f32 %v4922, %v5262
        %v5264 = vpop.f32.mrb[0].mxu0
        %5265 = vmatprep.mubr.f32.mxu0 0.0
        %v5266 = vand.u32 %v4533, 4294901760
        %5267 = vmatmul.mubr.f32.gmra.mrb[0].mxu0 %v5266
        %v5268 = vpop.f32.mrb[0].mxu0
        %v5269 = vadd.f32 %v4932, %v5268
        %v5270 = vpop.f32.mrb[0].mxu0
        %5271 = vdwg.mxu0
        %5272 = vmatprep.subr.mxu0 0.0
        %v5273 = vand.u32 %v567, 4294901760
        %v5274 = vsub.f32 %v567, %v5273
        %5275 = vmatpush1.msra.mxu0 %v5274
        %5276 = vmatprep.subr.mxu0 0.0
        %v5277 = vand.u32 %v568, 4294901760
        %v5278 = vsub.f32 %v568, %v5277
        %5279 = vmatpush1.msra.mxu0 %v5278
        %5280 = vmatprep.subr.mxu0 0.0
        %v5281 = vand.u32 %v569, 4294901760
        %v5282 = vsub.f32 %v569, %v5281
        %5283 = vmatpush1.msra.mxu0 %v5282
        %5284 = vmatprep.subr.mxu0 0.0
        %v5285 = vand.u32 %v570, 4294901760
        %v5286 = vsub.f32 %v570, %v5285
        %5287 = vmatpush1.msra.mxu0 %v5286
        %5288 = vmatprep.subr.mxu0 0.0
        %v5289 = vand.u32 %v571, 4294901760
        %v5290 = vsub.f32 %v571, %v5289
        %5291 = vmatpush1.msra.mxu0 %v5290
        %5292 = vmatprep.subr.mxu0 0.0
        %v5293 = vand.u32 %v572, 4294901760
        %v5294 = vsub.f32 %v572, %v5293
        %5295 = vmatpush1.msra.mxu0 %v5294
        %5296 = vmatprep.subr.mxu0 0.0
        %v5297 = vand.u32 %v573, 4294901760
        %v5298 = vsub.f32 %v573, %v5297
        %5299 = vmatpush1.msra.mxu0 %v5298
        %5300 = vmatprep.subr.mxu0 0.0
        %v5301 = vand.u32 %v574, 4294901760
        %v5302 = vsub.f32 %v574, %v5301
        %5303 = vmatpush1.msra.mxu0 %v5302
        %5304 = vmatprep.subr.mxu0 0.0
        %v5305 = vand.u32 %v575, 4294901760
        %v5306 = vsub.f32 %v575, %v5305
        %5307 = vmatpush1.msra.mxu0 %v5306
        %5308 = vmatprep.subr.mxu0 0.0
        %v5309 = vand.u32 %v576, 4294901760
        %v5310 = vsub.f32 %v576, %v5309
        %5311 = vmatpush1.msra.mxu0 %v5310
        %5312 = vmatprep.subr.mxu0 0.0
        %v5313 = vand.u32 %v577, 4294901760
        %v5314 = vsub.f32 %v577, %v5313
        %5315 = vmatpush1.msra.mxu0 %v5314
        %5316 = vmatprep.subr.mxu0 0.0
        %v5317 = vand.u32 %v578, 4294901760
        %v5318 = vsub.f32 %v578, %v5317
        %5319 = vmatpush1.msra.mxu0 %v5318
        %5320 = vmatprep.subr.mxu0 0.0
        %v5321 = vand.u32 %v579, 4294901760
        %v5322 = vsub.f32 %v579, %v5321
        %5323 = vmatpush1.msra.mxu0 %v5322
        %5324 = vmatprep.subr.mxu0 0.0
        %v5325 = vand.u32 %v580, 4294901760
        %v5326 = vsub.f32 %v580, %v5325
        %5327 = vmatpush1.msra.mxu0 %v5326
        %5328 = vmatprep.subr.mxu0 0.0
        %v5329 = vand.u32 %v581, 4294901760
        %v5330 = vsub.f32 %v581, %v5329
        %5331 = vmatpush1.msra.mxu0 %v5330
        %5332 = vmatprep.subr.mxu0 0.0
        %v5333 = vand.u32 %v582, 4294901760
        %v5334 = vsub.f32 %v582, %v5333
        %5335 = vmatpush1.msra.mxu0 %v5334
        %5336 = vmatprep.subr.mxu0 0.0
        %5337 = vmatpush1.msra.mxu0 0.0
        %5338 = vmatprep.subr.mxu0 0.0
        %5339 = vmatpush1.msra.mxu0 0.0
        %5340 = vmatprep.subr.mxu0 0.0
        %5341 = vmatpush1.msra.mxu0 0.0
        %5342 = vmatprep.subr.mxu0 0.0
        %5343 = vmatpush1.msra.mxu0 0.0
        %5344 = vmatprep.subr.mxu0 0.0
        %5345 = vmatpush1.msra.mxu0 0.0
        %5346 = vmatprep.subr.mxu0 0.0
        %5347 = vmatpush1.msra.mxu0 0.0
        %5348 = vmatprep.subr.mxu0 0.0
        %5349 = vmatpush1.msra.mxu0 0.0
        %5350 = vmatprep.subr.mxu0 0.0
        %5351 = vmatpush1.msra.mxu0 0.0
        %5352 = vmatprep.subr.mxu0 0.0
        %5353 = vmatpush1.msra.mxu0 0.0
        %5354 = vmatprep.subr.mxu0 0.0
        %5355 = vmatpush1.msra.mxu0 0.0
        %5356 = vmatprep.subr.mxu0 0.0
        %5357 = vmatpush1.msra.mxu0 0.0
        %5358 = vmatprep.subr.mxu0 0.0
        %5359 = vmatpush1.msra.mxu0 0.0
        %5360 = vmatprep.subr.mxu0 0.0
        %5361 = vmatpush1.msra.mxu0 0.0
        %5362 = vmatprep.subr.mxu0 0.0
        %5363 = vmatpush1.msra.mxu0 0.0
        %5364 = vmatprep.subr.mxu0 0.0
        %5365 = vmatpush1.msra.mxu0 0.0
        %5366 = vmatprep.subr.mxu0 0.0
        %5367 = vmatpush1.msra.mxu0 0.0
        %5368 = vmatprep.mubr.f32.mxu0 0.0
        %v5369 = vand.u32 %v4502, 4294901760
        %v5370 = vsub.f32 %v4502, %v5369
        %5371 = vmatmul.mubr.f32.gmra.mrb[0].mxu0 %v5370
        %v5372 = vpop.f32.mrb[0].mxu0
        %v5373 = vadd.f32 %v5083, %v5372
        %v5374 = vpop.f32.mrb[0].mxu0
        %5375 = vmatprep.mubr.f32.mxu0 0.0
        %v5376 = vand.u32 %v4503, 4294901760
        %v5377 = vsub.f32 %v4503, %v5376
        %5378 = vmatmul.mubr.f32.gmra.mrb[0].mxu0 %v5377
        %v5379 = vpop.f32.mrb[0].mxu0
        %v5380 = vadd.f32 %v5089, %v5379
        %v5381 = vpop.f32.mrb[0].mxu0
        %5382 = vmatprep.mubr.f32.mxu0 0.0
        %v5383 = vand.u32 %v4504, 4294901760
        %v5384 = vsub.f32 %v4504, %v5383
        %5385 = vmatmul.mubr.f32.gmra.mrb[0].mxu0 %v5384
        %v5386 = vpop.f32.mrb[0].mxu0
        %v5387 = vadd.f32 %v5095, %v5386
        %v5388 = vpop.f32.mrb[0].mxu0
        %5389 = vmatprep.mubr.f32.mxu0 0.0
        %v5390 = vand.u32 %v4505, 4294901760
        %v5391 = vsub.f32 %v4505, %v5390
        %5392 = vmatmul.mubr.f32.gmra.mrb[0].mxu0 %v5391
        %v5393 = vpop.f32.mrb[0].mxu0
        %v5394 = vadd.f32 %v5101, %v5393
        %v5395 = vpop.f32.mrb[0].mxu0
        %5396 = vmatprep.mubr.f32.mxu0 0.0
        %v5397 = vand.u32 %v4506, 4294901760
        %v5398 = vsub.f32 %v4506, %v5397
        %5399 = vmatmul.mubr.f32.gmra.mrb[0].mxu0 %v5398
        %v5400 = vpop.f32.mrb[0].mxu0
        %v5401 = vadd.f32 %v5107, %v5400
        %v5402 = vpop.f32.mrb[0].mxu0
        %5403 = vmatprep.mubr.f32.mxu0 0.0
        %v5404 = vand.u32 %v4507, 4294901760
        %v5405 = vsub.f32 %v4507, %v5404
        %5406 = vmatmul.mubr.f32.gmra.mrb[0].mxu0 %v5405
        %v5407 = vpop.f32.mrb[0].mxu0
        %v5408 = vadd.f32 %v5113, %v5407
        %v5409 = vpop.f32.mrb[0].mxu0
        %5410 = vmatprep.mubr.f32.mxu0 0.0
        %v5411 = vand.u32 %v4508, 4294901760
        %v5412 = vsub.f32 %v4508, %v5411
        %5413 = vmatmul.mubr.f32.gmra.mrb[0].mxu0 %v5412
        %v5414 = vpop.f32.mrb[0].mxu0
        %v5415 = vadd.f32 %v5119, %v5414
        %v5416 = vpop.f32.mrb[0].mxu0
        %5417 = vmatprep.mubr.f32.mxu0 0.0
        %v5418 = vand.u32 %v4509, 4294901760
        %v5419 = vsub.f32 %v4509, %v5418
        %5420 = vmatmul.mubr.f32.gmra.mrb[0].mxu0 %v5419
        %v5421 = vpop.f32.mrb[0].mxu0
        %v5422 = vadd.f32 %v5125, %v5421
        %v5423 = vpop.f32.mrb[0].mxu0
        %5424 = vmatprep.mubr.f32.mxu0 0.0
        %v5425 = vand.u32 %v4510, 4294901760
        %v5426 = vsub.f32 %v4510, %v5425
        %5427 = vmatmul.mubr.f32.gmra.mrb[0].mxu0 %v5426
        %v5428 = vpop.f32.mrb[0].mxu0
        %v5429 = vadd.f32 %v5131, %v5428
        %v5430 = vpop.f32.mrb[0].mxu0
        %5431 = vmatprep.mubr.f32.mxu0 0.0
        %v5432 = vand.u32 %v4511, 4294901760
        %v5433 = vsub.f32 %v4511, %v5432
        %5434 = vmatmul.mubr.f32.gmra.mrb[0].mxu0 %v5433
        %v5435 = vpop.f32.mrb[0].mxu0
        %v5436 = vadd.f32 %v5137, %v5435
        %v5437 = vpop.f32.mrb[0].mxu0
        %5438 = vmatprep.mubr.f32.mxu0 0.0
        %v5439 = vand.u32 %v4512, 4294901760
        %v5440 = vsub.f32 %v4512, %v5439
        %5441 = vmatmul.mubr.f32.gmra.mrb[0].mxu0 %v5440
        %v5442 = vpop.f32.mrb[0].mxu0
        %v5443 = vadd.f32 %v5143, %v5442
        %v5444 = vpop.f32.mrb[0].mxu0
        %5445 = vmatprep.mubr.f32.mxu0 0.0
        %v5446 = vand.u32 %v4513, 4294901760
        %v5447 = vsub.f32 %v4513, %v5446
        %5448 = vmatmul.mubr.f32.gmra.mrb[0].mxu0 %v5447
        %v5449 = vpop.f32.mrb[0].mxu0
        %v5450 = vadd.f32 %v5149, %v5449
        %v5451 = vpop.f32.mrb[0].mxu0
        %5452 = vmatprep.mubr.f32.mxu0 0.0
        %v5453 = vand.u32 %v4514, 4294901760
        %v5454 = vsub.f32 %v4514, %v5453
        %5455 = vmatmul.mubr.f32.gmra.mrb[0].mxu0 %v5454
        %v5456 = vpop.f32.mrb[0].mxu0
        %v5457 = vadd.f32 %v5155, %v5456
        %v5458 = vpop.f32.mrb[0].mxu0
        %5459 = vmatprep.mubr.f32.mxu0 0.0
        %v5460 = vand.u32 %v4515, 4294901760
        %v5461 = vsub.f32 %v4515, %v5460
        %5462 = vmatmul.mubr.f32.gmra.mrb[0].mxu0 %v5461
        %v5463 = vpop.f32.mrb[0].mxu0
        %v5464 = vadd.f32 %v5161, %v5463
        %v5465 = vpop.f32.mrb[0].mxu0
        %5466 = vmatprep.mubr.f32.mxu0 0.0
        %v5467 = vand.u32 %v4516, 4294901760
        %v5468 = vsub.f32 %v4516, %v5467
        %5469 = vmatmul.mubr.f32.gmra.mrb[0].mxu0 %v5468
        %v5470 = vpop.f32.mrb[0].mxu0
        %v5471 = vadd.f32 %v5167, %v5470
        %v5472 = vpop.f32.mrb[0].mxu0
        %5473 = vmatprep.mubr.f32.mxu0 0.0
        %v5474 = vand.u32 %v4517, 4294901760
        %v5475 = vsub.f32 %v4517, %v5474
        %5476 = vmatmul.mubr.f32.gmra.mrb[0].mxu0 %v5475
        %v5477 = vpop.f32.mrb[0].mxu0
        %v5478 = vadd.f32 %v5173, %v5477
        %v5479 = vpop.f32.mrb[0].mxu0
        %5480 = vmatprep.mubr.f32.mxu0 0.0
        %v5481 = vand.u32 %v4518, 4294901760
        %v5482 = vsub.f32 %v4518, %v5481
        %5483 = vmatmul.mubr.f32.gmra.mrb[0].mxu0 %v5482
        %v5484 = vpop.f32.mrb[0].mxu0
        %v5485 = vadd.f32 %v5179, %v5484
        %v5486 = vpop.f32.mrb[0].mxu0
        %5487 = vmatprep.mubr.f32.mxu0 0.0
        %v5488 = vand.u32 %v4519, 4294901760
        %v5489 = vsub.f32 %v4519, %v5488
        %5490 = vmatmul.mubr.f32.gmra.mrb[0].mxu0 %v5489
        %v5491 = vpop.f32.mrb[0].mxu0
        %v5492 = vadd.f32 %v5185, %v5491
        %v5493 = vpop.f32.mrb[0].mxu0
        %5494 = vmatprep.mubr.f32.mxu0 0.0
        %v5495 = vand.u32 %v4520, 4294901760
        %v5496 = vsub.f32 %v4520, %v5495
        %5497 = vmatmul.mubr.f32.gmra.mrb[0].mxu0 %v5496
        %v5498 = vpop.f32.mrb[0].mxu0
        %v5499 = vadd.f32 %v5191, %v5498
        %v5500 = vpop.f32.mrb[0].mxu0
        %5501 = vmatprep.mubr.f32.mxu0 0.0
        %v5502 = vand.u32 %v4521, 4294901760
        %v5503 = vsub.f32 %v4521, %v5502
        %5504 = vmatmul.mubr.f32.gmra.mrb[0].mxu0 %v5503
        %v5505 = vpop.f32.mrb[0].mxu0
        %v5506 = vadd.f32 %v5197, %v5505
        %v5507 = vpop.f32.mrb[0].mxu0
        %5508 = vmatprep.mubr.f32.mxu0 0.0
        %v5509 = vand.u32 %v4522, 4294901760
        %v5510 = vsub.f32 %v4522, %v5509
        %5511 = vmatmul.mubr.f32.gmra.mrb[0].mxu0 %v5510
        %v5512 = vpop.f32.mrb[0].mxu0
        %v5513 = vadd.f32 %v5203, %v5512
        %v5514 = vpop.f32.mrb[0].mxu0
        %5515 = vmatprep.mubr.f32.mxu0 0.0
        %v5516 = vand.u32 %v4523, 4294901760
        %v5517 = vsub.f32 %v4523, %v5516
        %5518 = vmatmul.mubr.f32.gmra.mrb[0].mxu0 %v5517
        %v5519 = vpop.f32.mrb[0].mxu0
        %v5520 = vadd.f32 %v5209, %v5519
        %v5521 = vpop.f32.mrb[0].mxu0
        %5522 = vmatprep.mubr.f32.mxu0 0.0
        %v5523 = vand.u32 %v4524, 4294901760
        %v5524 = vsub.f32 %v4524, %v5523
        %5525 = vmatmul.mubr.f32.gmra.mrb[0].mxu0 %v5524
        %v5526 = vpop.f32.mrb[0].mxu0
        %v5527 = vadd.f32 %v5215, %v5526
        %v5528 = vpop.f32.mrb[0].mxu0
        %5529 = vmatprep.mubr.f32.mxu0 0.0
        %v5530 = vand.u32 %v4525, 4294901760
        %v5531 = vsub.f32 %v4525, %v5530
        %5532 = vmatmul.mubr.f32.gmra.mrb[0].mxu0 %v5531
        %v5533 = vpop.f32.mrb[0].mxu0
        %v5534 = vadd.f32 %v5221, %v5533
        %v5535 = vpop.f32.mrb[0].mxu0
        %5536 = vmatprep.mubr.f32.mxu0 0.0
        %v5537 = vand.u32 %v4526, 4294901760
        %v5538 = vsub.f32 %v4526, %v5537
        %5539 = vmatmul.mubr.f32.gmra.mrb[0].mxu0 %v5538
        %v5540 = vpop.f32.mrb[0].mxu0
        %v5541 = vadd.f32 %v5227, %v5540
        %v5542 = vpop.f32.mrb[0].mxu0
        %5543 = vmatprep.mubr.f32.mxu0 0.0
        %v5544 = vand.u32 %v4527, 4294901760
        %v5545 = vsub.f32 %v4527, %v5544
        %5546 = vmatmul.mubr.f32.gmra.mrb[0].mxu0 %v5545
        %v5547 = vpop.f32.mrb[0].mxu0
        %v5548 = vadd.f32 %v5233, %v5547
        %v5549 = vpop.f32.mrb[0].mxu0
        %5550 = vmatprep.mubr.f32.mxu0 0.0
        %v5551 = vand.u32 %v4528, 4294901760
        %v5552 = vsub.f32 %v4528, %v5551
        %5553 = vmatmul.mubr.f32.gmra.mrb[0].mxu0 %v5552
        %v5554 = vpop.f32.mrb[0].mxu0
        %v5555 = vadd.f32 %v5239, %v5554
        %v5556 = vpop.f32.mrb[0].mxu0
        %5557 = vmatprep.mubr.f32.mxu0 0.0
        %v5558 = vand.u32 %v4529, 4294901760
        %v5559 = vsub.f32 %v4529, %v5558
        %5560 = vmatmul.mubr.f32.gmra.mrb[0].mxu0 %v5559
        %v5561 = vpop.f32.mrb[0].mxu0
        %v5562 = vadd.f32 %v5245, %v5561
        %v5563 = vpop.f32.mrb[0].mxu0
        %5564 = vmatprep.mubr.f32.mxu0 0.0
        %v5565 = vand.u32 %v4530, 4294901760
        %v5566 = vsub.f32 %v4530, %v5565
        %5567 = vmatmul.mubr.f32.gmra.mrb[0].mxu0 %v5566
        %v5568 = vpop.f32.mrb[0].mxu0
        %v5569 = vadd.f32 %v5251, %v5568
        %v5570 = vpop.f32.mrb[0].mxu0
        %5571 = vmatprep.mubr.f32.mxu0 0.0
        %v5572 = vand.u32 %v4531, 4294901760
        %v5573 = vsub.f32 %v4531, %v5572
        %5574 = vmatmul.mubr.f32.gmra.mrb[0].mxu0 %v5573
        %v5575 = vpop.f32.mrb[0].mxu0
        %v5576 = vadd.f32 %v5257, %v5575
        %v5577 = vpop.f32.mrb[0].mxu0
        %5578 = vmatprep.mubr.f32.mxu0 0.0
        %v5579 = vand.u32 %v4532, 4294901760
        %v5580 = vsub.f32 %v4532, %v5579
        %5581 = vmatmul.mubr.f32.gmra.mrb[0].mxu0 %v5580
        %v5582 = vpop.f32.mrb[0].mxu0
        %v5583 = vadd.f32 %v5263, %v5582
        %v5584 = vpop.f32.mrb[0].mxu0
        %5585 = vmatprep.mubr.f32.mxu0 0.0
        %v5586 = vand.u32 %v4533, 4294901760
        %v5587 = vsub.f32 %v4533, %v5586
        %5588 = vmatmul.mubr.f32.gmra.mrb[0].mxu0 %v5587
        %v5589 = vpop.f32.mrb[0].mxu0
        %v5590 = vadd.f32 %v5269, %v5589
        %v5591 = vpop.f32.mrb[0].mxu0
        %5592 = vdwg.mxu0
        %5593 = vmatprep.subr.mxu0 0.0
        %v5594 = vand.u32 %v567, 4294901760
        %5595 = vmatpush1.msra.mxu0 %v5594
        %5596 = vmatprep.subr.mxu0 0.0
        %v5597 = vand.u32 %v568, 4294901760
        %5598 = vmatpush1.msra.mxu0 %v5597
        %5599 = vmatprep.subr.mxu0 0.0
        %v5600 = vand.u32 %v569, 4294901760
        %5601 = vmatpush1.msra.mxu0 %v5600
        %5602 = vmatprep.subr.mxu0 0.0
        %v5603 = vand.u32 %v570, 4294901760
        %5604 = vmatpush1.msra.mxu0 %v5603
        %5605 = vmatprep.subr.mxu0 0.0
        %v5606 = vand.u32 %v571, 4294901760
        %5607 = vmatpush1.msra.mxu0 %v5606
        %5608 = vmatprep.subr.mxu0 0.0
        %v5609 = vand.u32 %v572, 4294901760
        %5610 = vmatpush1.msra.mxu0 %v5609
        %5611 = vmatprep.subr.mxu0 0.0
        %v5612 = vand.u32 %v573, 4294901760
        %5613 = vmatpush1.msra.mxu0 %v5612
        %5614 = vmatprep.subr.mxu0 0.0
        %v5615 = vand.u32 %v574, 4294901760
        %5616 = vmatpush1.msra.mxu0 %v5615
        %5617 = vmatprep.subr.mxu0 0.0
        %v5618 = vand.u32 %v575, 4294901760
        %5619 = vmatpush1.msra.mxu0 %v5618
        %5620 = vmatprep.subr.mxu0 0.0
        %v5621 = vand.u32 %v576, 4294901760
        %5622 = vmatpush1.msra.mxu0 %v5621
        %5623 = vmatprep.subr.mxu0 0.0
        %v5624 = vand.u32 %v577, 4294901760
        %5625 = vmatpush1.msra.mxu0 %v5624
        %5626 = vmatprep.subr.mxu0 0.0
        %v5627 = vand.u32 %v578, 4294901760
        %5628 = vmatpush1.msra.mxu0 %v5627
        %5629 = vmatprep.subr.mxu0 0.0
        %v5630 = vand.u32 %v579, 4294901760
        %5631 = vmatpush1.msra.mxu0 %v5630
        %5632 = vmatprep.subr.mxu0 0.0
        %v5633 = vand.u32 %v580, 4294901760
        %5634 = vmatpush1.msra.mxu0 %v5633
        %5635 = vmatprep.subr.mxu0 0.0
        %v5636 = vand.u32 %v581, 4294901760
        %5637 = vmatpush1.msra.mxu0 %v5636
        %5638 = vmatprep.subr.mxu0 0.0
        %v5639 = vand.u32 %v582, 4294901760
        %5640 = vmatpush1.msra.mxu0 %v5639
        %5641 = vmatprep.subr.mxu0 0.0
        %5642 = vmatpush1.msra.mxu0 0.0
        %5643 = vmatprep.subr.mxu0 0.0
        %5644 = vmatpush1.msra.mxu0 0.0
        %5645 = vmatprep.subr.mxu0 0.0
        %5646 = vmatpush1.msra.mxu0 0.0
        %5647 = vmatprep.subr.mxu0 0.0
        %5648 = vmatpush1.msra.mxu0 0.0
        %5649 = vmatprep.subr.mxu0 0.0
        %5650 = vmatpush1.msra.mxu0 0.0
        %5651 = vmatprep.subr.mxu0 0.0
        %5652 = vmatpush1.msra.mxu0 0.0
        %5653 = vmatprep.subr.mxu0 0.0
        %5654 = vmatpush1.msra.mxu0 0.0
        %5655 = vmatprep.subr.mxu0 0.0
        %5656 = vmatpush1.msra.mxu0 0.0
        %5657 = vmatprep.subr.mxu0 0.0
        %5658 = vmatpush1.msra.mxu0 0.0
        %5659 = vmatprep.subr.mxu0 0.0
        %5660 = vmatpush1.msra.mxu0 0.0
        %5661 = vmatprep.subr.mxu0 0.0
        %5662 = vmatpush1.msra.mxu0 0.0
        %5663 = vmatprep.subr.mxu0 0.0
        %5664 = vmatpush1.msra.mxu0 0.0
        %5665 = vmatprep.subr.mxu0 0.0
        %5666 = vmatpush1.msra.mxu0 0.0
        %5667 = vmatprep.subr.mxu0 0.0
        %5668 = vmatpush1.msra.mxu0 0.0
        %5669 = vmatprep.subr.mxu0 0.0
        %5670 = vmatpush1.msra.mxu0 0.0
        %5671 = vmatprep.subr.mxu0 0.0
        %5672 = vmatpush1.msra.mxu0 0.0
        %5673 = vmatprep.mubr.f32.mxu0 0.0
        %v5674 = vand.u32 %v4502, 4294901760
        %v5675 = vsub.f32 %v4502, %v5674
        %v5676 = vand.u32 %v5675, 4294901760
        %5677 = vmatmul.mubr.f32.gmra.mrb[0].mxu0 %v5676
        %v5678 = vpop.f32.mrb[0].mxu0
        %v5679 = vadd.f32 %v5373, %v5678
        %v5680 = vpop.f32.mrb[0].mxu0
        %5681 = vmatprep.mubr.f32.mxu0 0.0
        %v5682 = vand.u32 %v4503, 4294901760
        %v5683 = vsub.f32 %v4503, %v5682
        %v5684 = vand.u32 %v5683, 4294901760
        %5685 = vmatmul.mubr.f32.gmra.mrb[0].mxu0 %v5684
        %v5686 = vpop.f32.mrb[0].mxu0
        %v5687 = vadd.f32 %v5380, %v5686
        %v5688 = vpop.f32.mrb[0].mxu0
        %5689 = vmatprep.mubr.f32.mxu0 0.0
        %v5690 = vand.u32 %v4504, 4294901760
        %v5691 = vsub.f32 %v4504, %v5690
        %v5692 = vand.u32 %v5691, 4294901760
        %5693 = vmatmul.mubr.f32.gmra.mrb[0].mxu0 %v5692
        %v5694 = vpop.f32.mrb[0].mxu0
        %v5695 = vadd.f32 %v5387, %v5694
        %v5696 = vpop.f32.mrb[0].mxu0
        %5697 = vmatprep.mubr.f32.mxu0 0.0
        %v5698 = vand.u32 %v4505, 4294901760
        %v5699 = vsub.f32 %v4505, %v5698
        %v5700 = vand.u32 %v5699, 4294901760
        %5701 = vmatmul.mubr.f32.gmra.mrb[0].mxu0 %v5700
        %v5702 = vpop.f32.mrb[0].mxu0
        %v5703 = vadd.f32 %v5394, %v5702
        %v5704 = vpop.f32.mrb[0].mxu0
        %5705 = vmatprep.mubr.f32.mxu0 0.0
        %v5706 = vand.u32 %v4506, 4294901760
        %v5707 = vsub.f32 %v4506, %v5706
        %v5708 = vand.u32 %v5707, 4294901760
        %5709 = vmatmul.mubr.f32.gmra.mrb[0].mxu0 %v5708
        %v5710 = vpop.f32.mrb[0].mxu0
        %v5711 = vadd.f32 %v5401, %v5710
        %v5712 = vpop.f32.mrb[0].mxu0
        %5713 = vmatprep.mubr.f32.mxu0 0.0
        %v5714 = vand.u32 %v4507, 4294901760
        %v5715 = vsub.f32 %v4507, %v5714
        %v5716 = vand.u32 %v5715, 4294901760
        %5717 = vmatmul.mubr.f32.gmra.mrb[0].mxu0 %v5716
        %v5718 = vpop.f32.mrb[0].mxu0
        %v5719 = vadd.f32 %v5408, %v5718
        %v5720 = vpop.f32.mrb[0].mxu0
        %5721 = vmatprep.mubr.f32.mxu0 0.0
        %v5722 = vand.u32 %v4508, 4294901760
        %v5723 = vsub.f32 %v4508, %v5722
        %v5724 = vand.u32 %v5723, 4294901760
        %5725 = vmatmul.mubr.f32.gmra.mrb[0].mxu0 %v5724
        %v5726 = vpop.f32.mrb[0].mxu0
        %v5727 = vadd.f32 %v5415, %v5726
        %v5728 = vpop.f32.mrb[0].mxu0
        %5729 = vmatprep.mubr.f32.mxu0 0.0
        %v5730 = vand.u32 %v4509, 4294901760
        %v5731 = vsub.f32 %v4509, %v5730
        %v5732 = vand.u32 %v5731, 4294901760
        %5733 = vmatmul.mubr.f32.gmra.mrb[0].mxu0 %v5732
        %v5734 = vpop.f32.mrb[0].mxu0
        %v5735 = vadd.f32 %v5422, %v5734
        %v5736 = vpop.f32.mrb[0].mxu0
        %5737 = vmatprep.mubr.f32.mxu0 0.0
        %v5738 = vand.u32 %v4510, 4294901760
        %v5739 = vsub.f32 %v4510, %v5738
        %v5740 = vand.u32 %v5739, 4294901760
        %5741 = vmatmul.mubr.f32.gmra.mrb[0].mxu0 %v5740
        %v5742 = vpop.f32.mrb[0].mxu0
        %v5743 = vadd.f32 %v5429, %v5742
        %v5744 = vpop.f32.mrb[0].mxu0
        %5745 = vmatprep.mubr.f32.mxu0 0.0
        %v5746 = vand.u32 %v4511, 4294901760
        %v5747 = vsub.f32 %v4511, %v5746
        %v5748 = vand.u32 %v5747, 4294901760
        %5749 = vmatmul.mubr.f32.gmra.mrb[0].mxu0 %v5748
        %v5750 = vpop.f32.mrb[0].mxu0
        %v5751 = vadd.f32 %v5436, %v5750
        %v5752 = vpop.f32.mrb[0].mxu0
        %5753 = vmatprep.mubr.f32.mxu0 0.0
        %v5754 = vand.u32 %v4512, 4294901760
        %v5755 = vsub.f32 %v4512, %v5754
        %v5756 = vand.u32 %v5755, 4294901760
        %5757 = vmatmul.mubr.f32.gmra.mrb[0].mxu0 %v5756
        %v5758 = vpop.f32.mrb[0].mxu0
        %v5759 = vadd.f32 %v5443, %v5758
        %v5760 = vpop.f32.mrb[0].mxu0
        %5761 = vmatprep.mubr.f32.mxu0 0.0
        %v5762 = vand.u32 %v4513, 4294901760
        %v5763 = vsub.f32 %v4513, %v5762
        %v5764 = vand.u32 %v5763, 4294901760
        %5765 = vmatmul.mubr.f32.gmra.mrb[0].mxu0 %v5764
        %v5766 = vpop.f32.mrb[0].mxu0
        %v5767 = vadd.f32 %v5450, %v5766
        %v5768 = vpop.f32.mrb[0].mxu0
        %5769 = vmatprep.mubr.f32.mxu0 0.0
        %v5770 = vand.u32 %v4514, 4294901760
        %v5771 = vsub.f32 %v4514, %v5770
        %v5772 = vand.u32 %v5771, 4294901760
        %5773 = vmatmul.mubr.f32.gmra.mrb[0].mxu0 %v5772
        %v5774 = vpop.f32.mrb[0].mxu0
        %v5775 = vadd.f32 %v5457, %v5774
        %v5776 = vpop.f32.mrb[0].mxu0
        %5777 = vmatprep.mubr.f32.mxu0 0.0
        %v5778 = vand.u32 %v4515, 4294901760
        %v5779 = vsub.f32 %v4515, %v5778
        %v5780 = vand.u32 %v5779, 4294901760
        %5781 = vmatmul.mubr.f32.gmra.mrb[0].mxu0 %v5780
        %v5782 = vpop.f32.mrb[0].mxu0
        %v5783 = vadd.f32 %v5464, %v5782
        %v5784 = vpop.f32.mrb[0].mxu0
        %5785 = vmatprep.mubr.f32.mxu0 0.0
        %v5786 = vand.u32 %v4516, 4294901760
        %v5787 = vsub.f32 %v4516, %v5786
        %v5788 = vand.u32 %v5787, 4294901760
        %5789 = vmatmul.mubr.f32.gmra.mrb[0].mxu0 %v5788
        %v5790 = vpop.f32.mrb[0].mxu0
        %v5791 = vadd.f32 %v5471, %v5790
        %v5792 = vpop.f32.mrb[0].mxu0
        %5793 = vmatprep.mubr.f32.mxu0 0.0
        %v5794 = vand.u32 %v4517, 4294901760
        %v5795 = vsub.f32 %v4517, %v5794
        %v5796 = vand.u32 %v5795, 4294901760
        %5797 = vmatmul.mubr.f32.gmra.mrb[0].mxu0 %v5796
        %v5798 = vpop.f32.mrb[0].mxu0
        %v5799 = vadd.f32 %v5478, %v5798
        %v5800 = vpop.f32.mrb[0].mxu0
        %5801 = vmatprep.mubr.f32.mxu0 0.0
        %v5802 = vand.u32 %v4518, 4294901760
        %v5803 = vsub.f32 %v4518, %v5802
        %v5804 = vand.u32 %v5803, 4294901760
        %5805 = vmatmul.mubr.f32.gmra.mrb[0].mxu0 %v5804
        %v5806 = vpop.f32.mrb[0].mxu0
        %v5807 = vadd.f32 %v5485, %v5806
        %v5808 = vpop.f32.mrb[0].mxu0
        %5809 = vmatprep.mubr.f32.mxu0 0.0
        %v5810 = vand.u32 %v4519, 4294901760
        %v5811 = vsub.f32 %v4519, %v5810
        %v5812 = vand.u32 %v5811, 4294901760
        %5813 = vmatmul.mubr.f32.gmra.mrb[0].mxu0 %v5812
        %v5814 = vpop.f32.mrb[0].mxu0
        %v5815 = vadd.f32 %v5492, %v5814
        %v5816 = vpop.f32.mrb[0].mxu0
        %5817 = vmatprep.mubr.f32.mxu0 0.0
        %v5818 = vand.u32 %v4520, 4294901760
        %v5819 = vsub.f32 %v4520, %v5818
        %v5820 = vand.u32 %v5819, 4294901760
        %5821 = vmatmul.mubr.f32.gmra.mrb[0].mxu0 %v5820
        %v5822 = vpop.f32.mrb[0].mxu0
        %v5823 = vadd.f32 %v5499, %v5822
        %v5824 = vpop.f32.mrb[0].mxu0
        %5825 = vmatprep.mubr.f32.mxu0 0.0
        %v5826 = vand.u32 %v4521, 4294901760
        %v5827 = vsub.f32 %v4521, %v5826
        %v5828 = vand.u32 %v5827, 4294901760
        %5829 = vmatmul.mubr.f32.gmra.mrb[0].mxu0 %v5828
        %v5830 = vpop.f32.mrb[0].mxu0
        %v5831 = vadd.f32 %v5506, %v5830
        %v5832 = vpop.f32.mrb[0].mxu0
        %5833 = vmatprep.mubr.f32.mxu0 0.0
        %v5834 = vand.u32 %v4522, 4294901760
        %v5835 = vsub.f32 %v4522, %v5834
        %v5836 = vand.u32 %v5835, 4294901760
        %5837 = vmatmul.mubr.f32.gmra.mrb[0].mxu0 %v5836
        %v5838 = vpop.f32.mrb[0].mxu0
        %v5839 = vadd.f32 %v5513, %v5838
        %v5840 = vpop.f32.mrb[0].mxu0
        %5841 = vmatprep.mubr.f32.mxu0 0.0
        %v5842 = vand.u32 %v4523, 4294901760
        %v5843 = vsub.f32 %v4523, %v5842
        %v5844 = vand.u32 %v5843, 4294901760
        %5845 = vmatmul.mubr.f32.gmra.mrb[0].mxu0 %v5844
        %v5846 = vpop.f32.mrb[0].mxu0
        %v5847 = vadd.f32 %v5520, %v5846
        %v5848 = vpop.f32.mrb[0].mxu0
        %5849 = vmatprep.mubr.f32.mxu0 0.0
        %v5850 = vand.u32 %v4524, 4294901760
        %v5851 = vsub.f32 %v4524, %v5850
        %v5852 = vand.u32 %v5851, 4294901760
        %5853 = vmatmul.mubr.f32.gmra.mrb[0].mxu0 %v5852
        %v5854 = vpop.f32.mrb[0].mxu0
        %v5855 = vadd.f32 %v5527, %v5854
        %v5856 = vpop.f32.mrb[0].mxu0
        %5857 = vmatprep.mubr.f32.mxu0 0.0
        %v5858 = vand.u32 %v4525, 4294901760
        %v5859 = vsub.f32 %v4525, %v5858
        %v5860 = vand.u32 %v5859, 4294901760
        %5861 = vmatmul.mubr.f32.gmra.mrb[0].mxu0 %v5860
        %v5862 = vpop.f32.mrb[0].mxu0
        %v5863 = vadd.f32 %v5534, %v5862
        %v5864 = vpop.f32.mrb[0].mxu0
        %5865 = vmatprep.mubr.f32.mxu0 0.0
        %v5866 = vand.u32 %v4526, 4294901760
        %v5867 = vsub.f32 %v4526, %v5866
        %v5868 = vand.u32 %v5867, 4294901760
        %5869 = vmatmul.mubr.f32.gmra.mrb[0].mxu0 %v5868
        %v5870 = vpop.f32.mrb[0].mxu0
        %v5871 = vadd.f32 %v5541, %v5870
        %v5872 = vpop.f32.mrb[0].mxu0
        %5873 = vmatprep.mubr.f32.mxu0 0.0
        %v5874 = vand.u32 %v4527, 4294901760
        %v5875 = vsub.f32 %v4527, %v5874
        %v5876 = vand.u32 %v5875, 4294901760
        %5877 = vmatmul.mubr.f32.gmra.mrb[0].mxu0 %v5876
        %v5878 = vpop.f32.mrb[0].mxu0
        %v5879 = vadd.f32 %v5548, %v5878
        %v5880 = vpop.f32.mrb[0].mxu0
        %5881 = vmatprep.mubr.f32.mxu0 0.0
        %v5882 = vand.u32 %v4528, 4294901760
        %v5883 = vsub.f32 %v4528, %v5882
        %v5884 = vand.u32 %v5883, 4294901760
        %5885 = vmatmul.mubr.f32.gmra.mrb[0].mxu0 %v5884
        %v5886 = vpop.f32.mrb[0].mxu0
        %v5887 = vadd.f32 %v5555, %v5886
        %v5888 = vpop.f32.mrb[0].mxu0
        %5889 = vmatprep.mubr.f32.mxu0 0.0
        %v5890 = vand.u32 %v4529, 4294901760
        %v5891 = vsub.f32 %v4529, %v5890
        %v5892 = vand.u32 %v5891, 4294901760
        %5893 = vmatmul.mubr.f32.gmra.mrb[0].mxu0 %v5892
        %v5894 = vpop.f32.mrb[0].mxu0
        %v5895 = vadd.f32 %v5562, %v5894
        %v5896 = vpop.f32.mrb[0].mxu0
        %5897 = vmatprep.mubr.f32.mxu0 0.0
        %v5898 = vand.u32 %v4530, 4294901760
        %v5899 = vsub.f32 %v4530, %v5898
        %v5900 = vand.u32 %v5899, 4294901760
        %5901 = vmatmul.mubr.f32.gmra.mrb[0].mxu0 %v5900
        %v5902 = vpop.f32.mrb[0].mxu0
        %v5903 = vadd.f32 %v5569, %v5902
        %v5904 = vpop.f32.mrb[0].mxu0
        %5905 = vmatprep.mubr.f32.mxu0 0.0
        %v5906 = vand.u32 %v4531, 4294901760
        %v5907 = vsub.f32 %v4531, %v5906
        %v5908 = vand.u32 %v5907, 4294901760
        %5909 = vmatmul.mubr.f32.gmra.mrb[0].mxu0 %v5908
        %v5910 = vpop.f32.mrb[0].mxu0
        %v5911 = vadd.f32 %v5576, %v5910
        %v5912 = vpop.f32.mrb[0].mxu0
        %5913 = vmatprep.mubr.f32.mxu0 0.0
        %v5914 = vand.u32 %v4532, 4294901760
        %v5915 = vsub.f32 %v4532, %v5914
        %v5916 = vand.u32 %v5915, 4294901760
        %5917 = vmatmul.mubr.f32.gmra.mrb[0].mxu0 %v5916
        %v5918 = vpop.f32.mrb[0].mxu0
        %v5919 = vadd.f32 %v5583, %v5918
        %v5920 = vpop.f32.mrb[0].mxu0
        %5921 = vmatprep.mubr.f32.mxu0 0.0
        %v5922 = vand.u32 %v4533, 4294901760
        %v5923 = vsub.f32 %v4533, %v5922
        %v5924 = vand.u32 %v5923, 4294901760
        %5925 = vmatmul.mubr.f32.gmra.mrb[0].mxu0 %v5924
        %v5926 = vpop.f32.mrb[0].mxu0
        %v5927 = vadd.f32 %v5590, %v5926
        %v5928 = vpop.f32.mrb[0].mxu0
        %5929 = vdwg.mxu0
        %5930 = vmatprep.subr.mxu0 0.0
        %v5931 = vand.u32 %v567, 4294901760
        %v5932 = vsub.f32 %v567, %v5931
        %v5933 = vand.u32 %v5932, 4294901760
        %5934 = vmatpush1.msra.mxu0 %v5933
        %5935 = vmatprep.subr.mxu0 0.0
        %v5936 = vand.u32 %v568, 4294901760
        %v5937 = vsub.f32 %v568, %v5936
        %v5938 = vand.u32 %v5937, 4294901760
        %5939 = vmatpush1.msra.mxu0 %v5938
        %5940 = vmatprep.subr.mxu0 0.0
        %v5941 = vand.u32 %v569, 4294901760
        %v5942 = vsub.f32 %v569, %v5941
        %v5943 = vand.u32 %v5942, 4294901760
        %5944 = vmatpush1.msra.mxu0 %v5943
        %5945 = vmatprep.subr.mxu0 0.0
        %v5946 = vand.u32 %v570, 4294901760
        %v5947 = vsub.f32 %v570, %v5946
        %v5948 = vand.u32 %v5947, 4294901760
        %5949 = vmatpush1.msra.mxu0 %v5948
        %5950 = vmatprep.subr.mxu0 0.0
        %v5951 = vand.u32 %v571, 4294901760
        %v5952 = vsub.f32 %v571, %v5951
        %v5953 = vand.u32 %v5952, 4294901760
        %5954 = vmatpush1.msra.mxu0 %v5953
        %5955 = vmatprep.subr.mxu0 0.0
        %v5956 = vand.u32 %v572, 4294901760
        %v5957 = vsub.f32 %v572, %v5956
        %v5958 = vand.u32 %v5957, 4294901760
        %5959 = vmatpush1.msra.mxu0 %v5958
        %5960 = vmatprep.subr.mxu0 0.0
        %v5961 = vand.u32 %v573, 4294901760
        %v5962 = vsub.f32 %v573, %v5961
        %v5963 = vand.u32 %v5962, 4294901760
        %5964 = vmatpush1.msra.mxu0 %v5963
        %5965 = vmatprep.subr.mxu0 0.0
        %v5966 = vand.u32 %v574, 4294901760
        %v5967 = vsub.f32 %v574, %v5966
        %v5968 = vand.u32 %v5967, 4294901760
        %5969 = vmatpush1.msra.mxu0 %v5968
        %5970 = vmatprep.subr.mxu0 0.0
        %v5971 = vand.u32 %v575, 4294901760
        %v5972 = vsub.f32 %v575, %v5971
        %v5973 = vand.u32 %v5972, 4294901760
        %5974 = vmatpush1.msra.mxu0 %v5973
        %5975 = vmatprep.subr.mxu0 0.0
        %v5976 = vand.u32 %v576, 4294901760
        %v5977 = vsub.f32 %v576, %v5976
        %v5978 = vand.u32 %v5977, 4294901760
        %5979 = vmatpush1.msra.mxu0 %v5978
        %5980 = vmatprep.subr.mxu0 0.0
        %v5981 = vand.u32 %v577, 4294901760
        %v5982 = vsub.f32 %v577, %v5981
        %v5983 = vand.u32 %v5982, 4294901760
        %5984 = vmatpush1.msra.mxu0 %v5983
        %5985 = vmatprep.subr.mxu0 0.0
        %v5986 = vand.u32 %v578, 4294901760
        %v5987 = vsub.f32 %v578, %v5986
        %v5988 = vand.u32 %v5987, 4294901760
        %5989 = vmatpush1.msra.mxu0 %v5988
        %5990 = vmatprep.subr.mxu0 0.0
        %v5991 = vand.u32 %v579, 4294901760
        %v5992 = vsub.f32 %v579, %v5991
        %v5993 = vand.u32 %v5992, 4294901760
        %5994 = vmatpush1.msra.mxu0 %v5993
        %5995 = vmatprep.subr.mxu0 0.0
        %v5996 = vand.u32 %v580, 4294901760
        %v5997 = vsub.f32 %v580, %v5996
        %v5998 = vand.u32 %v5997, 4294901760
        %5999 = vmatpush1.msra.mxu0 %v5998
        %6000 = vmatprep.subr.mxu0 0.0
        %v6001 = vand.u32 %v581, 4294901760
        %v6002 = vsub.f32 %v581, %v6001
        %v6003 = vand.u32 %v6002, 4294901760
        %6004 = vmatpush1.msra.mxu0 %v6003
        %6005 = vmatprep.subr.mxu0 0.0
        %v6006 = vand.u32 %v582, 4294901760
        %v6007 = vsub.f32 %v582, %v6006
        %v6008 = vand.u32 %v6007, 4294901760
        %6009 = vmatpush1.msra.mxu0 %v6008
        %6010 = vmatprep.subr.mxu0 0.0
        %6011 = vmatpush1.msra.mxu0 0.0
        %6012 = vmatprep.subr.mxu0 0.0
        %6013 = vmatpush1.msra.mxu0 0.0
        %6014 = vmatprep.subr.mxu0 0.0
        %6015 = vmatpush1.msra.mxu0 0.0
        %6016 = vmatprep.subr.mxu0 0.0
        %6017 = vmatpush1.msra.mxu0 0.0
        %6018 = vmatprep.subr.mxu0 0.0
        %6019 = vmatpush1.msra.mxu0 0.0
        %6020 = vmatprep.subr.mxu0 0.0
        %6021 = vmatpush1.msra.mxu0 0.0
        %6022 = vmatprep.subr.mxu0 0.0
        %6023 = vmatpush1.msra.mxu0 0.0
        %6024 = vmatprep.subr.mxu0 0.0
        %6025 = vmatpush1.msra.mxu0 0.0
        %6026 = vmatprep.subr.mxu0 0.0
        %6027 = vmatpush1.msra.mxu0 0.0
        %6028 = vmatprep.subr.mxu0 0.0
        %6029 = vmatpush1.msra.mxu0 0.0
        %6030 = vmatprep.subr.mxu0 0.0
        %6031 = vmatpush1.msra.mxu0 0.0
        %6032 = vmatprep.subr.mxu0 0.0
        %6033 = vmatpush1.msra.mxu0 0.0
        %6034 = vmatprep.subr.mxu0 0.0
        %6035 = vmatpush1.msra.mxu0 0.0
        %6036 = vmatprep.subr.mxu0 0.0
        %6037 = vmatpush1.msra.mxu0 0.0
        %6038 = vmatprep.subr.mxu0 0.0
        %6039 = vmatpush1.msra.mxu0 0.0
        %6040 = vmatprep.subr.mxu0 0.0
        %6041 = vmatpush1.msra.mxu0 0.0
        %6042 = vmatprep.mubr.f32.mxu0 0.0
        %v6043 = vand.u32 %v4502, 4294901760
        %6044 = vmatmul.mubr.f32.gmra.mrb[0].mxu0 %v6043
        %v6045 = vpop.f32.mrb[0].mxu0
        %v6046 = vadd.f32 %v5679, %v6045
        %v6047 = vpop.f32.mrb[0].mxu0
        %6048 = vmatprep.mubr.f32.mxu0 0.0
        %v6049 = vand.u32 %v4503, 4294901760
        %6050 = vmatmul.mubr.f32.gmra.mrb[0].mxu0 %v6049
        %v6051 = vpop.f32.mrb[0].mxu0
        %v6052 = vadd.f32 %v5687, %v6051
        %v6053 = vpop.f32.mrb[0].mxu0
        %6054 = vmatprep.mubr.f32.mxu0 0.0
        %v6055 = vand.u32 %v4504, 4294901760
        %6056 = vmatmul.mubr.f32.gmra.mrb[0].mxu0 %v6055
        %v6057 = vpop.f32.mrb[0].mxu0
        %v6058 = vadd.f32 %v5695, %v6057
        %v6059 = vpop.f32.mrb[0].mxu0
        %6060 = vmatprep.mubr.f32.mxu0 0.0
        %v6061 = vand.u32 %v4505, 4294901760
        %6062 = vmatmul.mubr.f32.gmra.mrb[0].mxu0 %v6061
        %v6063 = vpop.f32.mrb[0].mxu0
        %v6064 = vadd.f32 %v5703, %v6063
        %v6065 = vpop.f32.mrb[0].mxu0
        %6066 = vmatprep.mubr.f32.mxu0 0.0
        %v6067 = vand.u32 %v4506, 4294901760
        %6068 = vmatmul.mubr.f32.gmra.mrb[0].mxu0 %v6067
        %v6069 = vpop.f32.mrb[0].mxu0
        %v6070 = vadd.f32 %v5711, %v6069
        %v6071 = vpop.f32.mrb[0].mxu0
        %6072 = vmatprep.mubr.f32.mxu0 0.0
        %v6073 = vand.u32 %v4507, 4294901760
        %6074 = vmatmul.mubr.f32.gmra.mrb[0].mxu0 %v6073
        %v6075 = vpop.f32.mrb[0].mxu0
        %v6076 = vadd.f32 %v5719, %v6075
        %v6077 = vpop.f32.mrb[0].mxu0
        %6078 = vmatprep.mubr.f32.mxu0 0.0
        %v6079 = vand.u32 %v4508, 4294901760
        %6080 = vmatmul.mubr.f32.gmra.mrb[0].mxu0 %v6079
        %v6081 = vpop.f32.mrb[0].mxu0
        %v6082 = vadd.f32 %v5727, %v6081
        %v6083 = vpop.f32.mrb[0].mxu0
        %6084 = vmatprep.mubr.f32.mxu0 0.0
        %v6085 = vand.u32 %v4509, 4294901760
        %6086 = vmatmul.mubr.f32.gmra.mrb[0].mxu0 %v6085
        %v6087 = vpop.f32.mrb[0].mxu0
        %v6088 = vadd.f32 %v5735, %v6087
        %v6089 = vpop.f32.mrb[0].mxu0
        %6090 = vmatprep.mubr.f32.mxu0 0.0
        %v6091 = vand.u32 %v4510, 4294901760
        %6092 = vmatmul.mubr.f32.gmra.mrb[0].mxu0 %v6091
        %v6093 = vpop.f32.mrb[0].mxu0
        %v6094 = vadd.f32 %v5743, %v6093
        %v6095 = vpop.f32.mrb[0].mxu0
        %6096 = vmatprep.mubr.f32.mxu0 0.0
        %v6097 = vand.u32 %v4511, 4294901760
        %6098 = vmatmul.mubr.f32.gmra.mrb[0].mxu0 %v6097
        %v6099 = vpop.f32.mrb[0].mxu0
        %v6100 = vadd.f32 %v5751, %v6099
        %v6101 = vpop.f32.mrb[0].mxu0
        %6102 = vmatprep.mubr.f32.mxu0 0.0
        %v6103 = vand.u32 %v4512, 4294901760
        %6104 = vmatmul.mubr.f32.gmra.mrb[0].mxu0 %v6103
        %v6105 = vpop.f32.mrb[0].mxu0
        %v6106 = vadd.f32 %v5759, %v6105
        %v6107 = vpop.f32.mrb[0].mxu0
        %6108 = vmatprep.mubr.f32.mxu0 0.0
        %v6109 = vand.u32 %v4513, 4294901760
        %6110 = vmatmul.mubr.f32.gmra.mrb[0].mxu0 %v6109
        %v6111 = vpop.f32.mrb[0].mxu0
        %v6112 = vadd.f32 %v5767, %v6111
        %v6113 = vpop.f32.mrb[0].mxu0
        %6114 = vmatprep.mubr.f32.mxu0 0.0
        %v6115 = vand.u32 %v4514, 4294901760
        %6116 = vmatmul.mubr.f32.gmra.mrb[0].mxu0 %v6115
        %v6117 = vpop.f32.mrb[0].mxu0
        %v6118 = vadd.f32 %v5775, %v6117
        %v6119 = vpop.f32.mrb[0].mxu0
        %6120 = vmatprep.mubr.f32.mxu0 0.0
        %v6121 = vand.u32 %v4515, 4294901760
        %6122 = vmatmul.mubr.f32.gmra.mrb[0].mxu0 %v6121
        %v6123 = vpop.f32.mrb[0].mxu0
        %v6124 = vadd.f32 %v5783, %v6123
        %v6125 = vpop.f32.mrb[0].mxu0
        %6126 = vmatprep.mubr.f32.mxu0 0.0
        %v6127 = vand.u32 %v4516, 4294901760
        %6128 = vmatmul.mubr.f32.gmra.mrb[0].mxu0 %v6127
        %v6129 = vpop.f32.mrb[0].mxu0
        %v6130 = vadd.f32 %v5791, %v6129
        %v6131 = vpop.f32.mrb[0].mxu0
        %6132 = vmatprep.mubr.f32.mxu0 0.0
        %v6133 = vand.u32 %v4517, 4294901760
        %6134 = vmatmul.mubr.f32.gmra.mrb[0].mxu0 %v6133
        %v6135 = vpop.f32.mrb[0].mxu0
        %v6136 = vadd.f32 %v5799, %v6135
        %v6137 = vpop.f32.mrb[0].mxu0
        %6138 = vmatprep.mubr.f32.mxu0 0.0
        %v6139 = vand.u32 %v4518, 4294901760
        %6140 = vmatmul.mubr.f32.gmra.mrb[0].mxu0 %v6139
        %v6141 = vpop.f32.mrb[0].mxu0
        %v6142 = vadd.f32 %v5807, %v6141
        %v6143 = vpop.f32.mrb[0].mxu0
        %6144 = vmatprep.mubr.f32.mxu0 0.0
        %v6145 = vand.u32 %v4519, 4294901760
        %6146 = vmatmul.mubr.f32.gmra.mrb[0].mxu0 %v6145
        %v6147 = vpop.f32.mrb[0].mxu0
        %v6148 = vadd.f32 %v5815, %v6147
        %v6149 = vpop.f32.mrb[0].mxu0
        %6150 = vmatprep.mubr.f32.mxu0 0.0
        %v6151 = vand.u32 %v4520, 4294901760
        %6152 = vmatmul.mubr.f32.gmra.mrb[0].mxu0 %v6151
        %v6153 = vpop.f32.mrb[0].mxu0
        %v6154 = vadd.f32 %v5823, %v6153
        %v6155 = vpop.f32.mrb[0].mxu0
        %6156 = vmatprep.mubr.f32.mxu0 0.0
        %v6157 = vand.u32 %v4521, 4294901760
        %6158 = vmatmul.mubr.f32.gmra.mrb[0].mxu0 %v6157
        %v6159 = vpop.f32.mrb[0].mxu0
        %v6160 = vadd.f32 %v5831, %v6159
        %v6161 = vpop.f32.mrb[0].mxu0
        %6162 = vmatprep.mubr.f32.mxu0 0.0
        %v6163 = vand.u32 %v4522, 4294901760
        %6164 = vmatmul.mubr.f32.gmra.mrb[0].mxu0 %v6163
        %v6165 = vpop.f32.mrb[0].mxu0
        %v6166 = vadd.f32 %v5839, %v6165
        %v6167 = vpop.f32.mrb[0].mxu0
        %6168 = vmatprep.mubr.f32.mxu0 0.0
        %v6169 = vand.u32 %v4523, 4294901760
        %6170 = vmatmul.mubr.f32.gmra.mrb[0].mxu0 %v6169
        %v6171 = vpop.f32.mrb[0].mxu0
        %v6172 = vadd.f32 %v5847, %v6171
        %v6173 = vpop.f32.mrb[0].mxu0
        %6174 = vmatprep.mubr.f32.mxu0 0.0
        %v6175 = vand.u32 %v4524, 4294901760
        %6176 = vmatmul.mubr.f32.gmra.mrb[0].mxu0 %v6175
        %v6177 = vpop.f32.mrb[0].mxu0
        %v6178 = vadd.f32 %v5855, %v6177
        %v6179 = vpop.f32.mrb[0].mxu0
        %6180 = vmatprep.mubr.f32.mxu0 0.0
        %v6181 = vand.u32 %v4525, 4294901760
        %6182 = vmatmul.mubr.f32.gmra.mrb[0].mxu0 %v6181
        %v6183 = vpop.f32.mrb[0].mxu0
        %v6184 = vadd.f32 %v5863, %v6183
        %v6185 = vpop.f32.mrb[0].mxu0
        %6186 = vmatprep.mubr.f32.mxu0 0.0
        %v6187 = vand.u32 %v4526, 4294901760
        %6188 = vmatmul.mubr.f32.gmra.mrb[0].mxu0 %v6187
        %v6189 = vpop.f32.mrb[0].mxu0
        %v6190 = vadd.f32 %v5871, %v6189
        %v6191 = vpop.f32.mrb[0].mxu0
        %6192 = vmatprep.mubr.f32.mxu0 0.0
        %v6193 = vand.u32 %v4527, 4294901760
        %6194 = vmatmul.mubr.f32.gmra.mrb[0].mxu0 %v6193
        %v6195 = vpop.f32.mrb[0].mxu0
        %v6196 = vadd.f32 %v5879, %v6195
        %v6197 = vpop.f32.mrb[0].mxu0
        %6198 = vmatprep.mubr.f32.mxu0 0.0
        %v6199 = vand.u32 %v4528, 4294901760
        %6200 = vmatmul.mubr.f32.gmra.mrb[0].mxu0 %v6199
        %v6201 = vpop.f32.mrb[0].mxu0
        %v6202 = vadd.f32 %v5887, %v6201
        %v6203 = vpop.f32.mrb[0].mxu0
        %6204 = vmatprep.mubr.f32.mxu0 0.0
        %v6205 = vand.u32 %v4529, 4294901760
        %6206 = vmatmul.mubr.f32.gmra.mrb[0].mxu0 %v6205
        %v6207 = vpop.f32.mrb[0].mxu0
        %v6208 = vadd.f32 %v5895, %v6207
        %v6209 = vpop.f32.mrb[0].mxu0
        %6210 = vmatprep.mubr.f32.mxu0 0.0
        %v6211 = vand.u32 %v4530, 4294901760
        %6212 = vmatmul.mubr.f32.gmra.mrb[0].mxu0 %v6211
        %v6213 = vpop.f32.mrb[0].mxu0
        %v6214 = vadd.f32 %v5903, %v6213
        %v6215 = vpop.f32.mrb[0].mxu0
        %6216 = vmatprep.mubr.f32.mxu0 0.0
        %v6217 = vand.u32 %v4531, 4294901760
        %6218 = vmatmul.mubr.f32.gmra.mrb[0].mxu0 %v6217
        %v6219 = vpop.f32.mrb[0].mxu0
        %v6220 = vadd.f32 %v5911, %v6219
        %v6221 = vpop.f32.mrb[0].mxu0
        %6222 = vmatprep.mubr.f32.mxu0 0.0
        %v6223 = vand.u32 %v4532, 4294901760
        %6224 = vmatmul.mubr.f32.gmra.mrb[0].mxu0 %v6223
        %v6225 = vpop.f32.mrb[0].mxu0
        %v6226 = vadd.f32 %v5919, %v6225
        %v6227 = vpop.f32.mrb[0].mxu0
        %6228 = vmatprep.mubr.f32.mxu0 0.0
        %v6229 = vand.u32 %v4533, 4294901760
        %6230 = vmatmul.mubr.f32.gmra.mrb[0].mxu0 %v6229
        %v6231 = vpop.f32.mrb[0].mxu0
        %v6232 = vadd.f32 %v5927, %v6231
        %v6233 = vpop.f32.mrb[0].mxu0
        %6234 = vdwg.mxu0
        %6235 = vmatprep.subr.mxu0 0.0
        %v6236 = vand.u32 %v567, 4294901760
        %6237 = vmatpush1.msra.mxu0 %v6236
        %6238 = vmatprep.subr.mxu0 0.0
        %v6239 = vand.u32 %v568, 4294901760
        %6240 = vmatpush1.msra.mxu0 %v6239
        %6241 = vmatprep.subr.mxu0 0.0
        %v6242 = vand.u32 %v569, 4294901760
        %6243 = vmatpush1.msra.mxu0 %v6242
        %6244 = vmatprep.subr.mxu0 0.0
        %v6245 = vand.u32 %v570, 4294901760
        %6246 = vmatpush1.msra.mxu0 %v6245
        %6247 = vmatprep.subr.mxu0 0.0
        %v6248 = vand.u32 %v571, 4294901760
        %6249 = vmatpush1.msra.mxu0 %v6248
        %6250 = vmatprep.subr.mxu0 0.0
        %v6251 = vand.u32 %v572, 4294901760
        %6252 = vmatpush1.msra.mxu0 %v6251
        %6253 = vmatprep.subr.mxu0 0.0
        %v6254 = vand.u32 %v573, 4294901760
        %6255 = vmatpush1.msra.mxu0 %v6254
        %6256 = vmatprep.subr.mxu0 0.0
        %v6257 = vand.u32 %v574, 4294901760
        %6258 = vmatpush1.msra.mxu0 %v6257
        %6259 = vmatprep.subr.mxu0 0.0
        %v6260 = vand.u32 %v575, 4294901760
        %6261 = vmatpush1.msra.mxu0 %v6260
        %6262 = vmatprep.subr.mxu0 0.0
        %v6263 = vand.u32 %v576, 4294901760
        %6264 = vmatpush1.msra.mxu0 %v6263
        %6265 = vmatprep.subr.mxu0 0.0
        %v6266 = vand.u32 %v577, 4294901760
        %6267 = vmatpush1.msra.mxu0 %v6266
        %6268 = vmatprep.subr.mxu0 0.0
        %v6269 = vand.u32 %v578, 4294901760
        %6270 = vmatpush1.msra.mxu0 %v6269
        %6271 = vmatprep.subr.mxu0 0.0
        %v6272 = vand.u32 %v579, 4294901760
        %6273 = vmatpush1.msra.mxu0 %v6272
        %6274 = vmatprep.subr.mxu0 0.0
        %v6275 = vand.u32 %v580, 4294901760
        %6276 = vmatpush1.msra.mxu0 %v6275
        %6277 = vmatprep.subr.mxu0 0.0
        %v6278 = vand.u32 %v581, 4294901760
        %6279 = vmatpush1.msra.mxu0 %v6278
        %6280 = vmatprep.subr.mxu0 0.0
        %v6281 = vand.u32 %v582, 4294901760
        %6282 = vmatpush1.msra.mxu0 %v6281
        %6283 = vmatprep.subr.mxu0 0.0
        %6284 = vmatpush1.msra.mxu0 0.0
        %6285 = vmatprep.subr.mxu0 0.0
        %6286 = vmatpush1.msra.mxu0 0.0
        %6287 = vmatprep.subr.mxu0 0.0
        %6288 = vmatpush1.msra.mxu0 0.0
        %6289 = vmatprep.subr.mxu0 0.0
        %6290 = vmatpush1.msra.mxu0 0.0
        %6291 = vmatprep.subr.mxu0 0.0
        %6292 = vmatpush1.msra.mxu0 0.0
        %6293 = vmatprep.subr.mxu0 0.0
        %6294 = vmatpush1.msra.mxu0 0.0
        %6295 = vmatprep.subr.mxu0 0.0
        %6296 = vmatpush1.msra.mxu0 0.0
        %6297 = vmatprep.subr.mxu0 0.0
        %6298 = vmatpush1.msra.mxu0 0.0
        %6299 = vmatprep.subr.mxu0 0.0
        %6300 = vmatpush1.msra.mxu0 0.0
        %6301 = vmatprep.subr.mxu0 0.0
        %6302 = vmatpush1.msra.mxu0 0.0
        %6303 = vmatprep.subr.mxu0 0.0
        %6304 = vmatpush1.msra.mxu0 0.0
        %6305 = vmatprep.subr.mxu0 0.0
        %6306 = vmatpush1.msra.mxu0 0.0
        %6307 = vmatprep.subr.mxu0 0.0
        %6308 = vmatpush1.msra.mxu0 0.0
        %6309 = vmatprep.subr.mxu0 0.0
        %6310 = vmatpush1.msra.mxu0 0.0
        %6311 = vmatprep.subr.mxu0 0.0
        %6312 = vmatpush1.msra.mxu0 0.0
        %6313 = vmatprep.subr.mxu0 0.0
        %6314 = vmatpush1.msra.mxu0 0.0
        %6315 = vmatprep.mubr.f32.mxu0 0.0
        %v6316 = vand.u32 %v4502, 4294901760
        %6317 = vmatmul.mubr.f32.gmra.mrb[0].mxu0 %v6316
        %v6318 = vpop.f32.mrb[0].mxu0
        %v6319 = vadd.f32 %v6046, %v6318
        %v6320 = vpop.f32.mrb[0].mxu0
        %6321 = vmatprep.mubr.f32.mxu0 0.0
        %v6322 = vand.u32 %v4503, 4294901760
        %6323 = vmatmul.mubr.f32.gmra.mrb[0].mxu0 %v6322
        %v6324 = vpop.f32.mrb[0].mxu0
        %v6325 = vadd.f32 %v6052, %v6324
        %v6326 = vpop.f32.mrb[0].mxu0
        %6327 = vmatprep.mubr.f32.mxu0 0.0
        %v6328 = vand.u32 %v4504, 4294901760
        %6329 = vmatmul.mubr.f32.gmra.mrb[0].mxu0 %v6328
        %v6330 = vpop.f32.mrb[0].mxu0
        %v6331 = vadd.f32 %v6058, %v6330
        %v6332 = vpop.f32.mrb[0].mxu0
        %6333 = vmatprep.mubr.f32.mxu0 0.0
        %v6334 = vand.u32 %v4505, 4294901760
        %6335 = vmatmul.mubr.f32.gmra.mrb[0].mxu0 %v6334
        %v6336 = vpop.f32.mrb[0].mxu0
        %v6337 = vadd.f32 %v6064, %v6336
        %v6338 = vpop.f32.mrb[0].mxu0
        %6339 = vmatprep.mubr.f32.mxu0 0.0
        %v6340 = vand.u32 %v4506, 4294901760
        %6341 = vmatmul.mubr.f32.gmra.mrb[0].mxu0 %v6340
        %v6342 = vpop.f32.mrb[0].mxu0
        %v6343 = vadd.f32 %v6070, %v6342
        %v6344 = vpop.f32.mrb[0].mxu0
        %6345 = vmatprep.mubr.f32.mxu0 0.0
        %v6346 = vand.u32 %v4507, 4294901760
        %6347 = vmatmul.mubr.f32.gmra.mrb[0].mxu0 %v6346
        %v6348 = vpop.f32.mrb[0].mxu0
        %v6349 = vadd.f32 %v6076, %v6348
        %v6350 = vpop.f32.mrb[0].mxu0
        %6351 = vmatprep.mubr.f32.mxu0 0.0
        %v6352 = vand.u32 %v4508, 4294901760
        %6353 = vmatmul.mubr.f32.gmra.mrb[0].mxu0 %v6352
        %v6354 = vpop.f32.mrb[0].mxu0
        %v6355 = vadd.f32 %v6082, %v6354
        %v6356 = vpop.f32.mrb[0].mxu0
        %6357 = vmatprep.mubr.f32.mxu0 0.0
        %v6358 = vand.u32 %v4509, 4294901760
        %6359 = vmatmul.mubr.f32.gmra.mrb[0].mxu0 %v6358
        %v6360 = vpop.f32.mrb[0].mxu0
        %v6361 = vadd.f32 %v6088, %v6360
        %v6362 = vpop.f32.mrb[0].mxu0
        %6363 = vmatprep.mubr.f32.mxu0 0.0
        %v6364 = vand.u32 %v4510, 4294901760
        %6365 = vmatmul.mubr.f32.gmra.mrb[0].mxu0 %v6364
        %v6366 = vpop.f32.mrb[0].mxu0
        %v6367 = vadd.f32 %v6094, %v6366
        %v6368 = vpop.f32.mrb[0].mxu0
        %6369 = vmatprep.mubr.f32.mxu0 0.0
        %v6370 = vand.u32 %v4511, 4294901760
        %6371 = vmatmul.mubr.f32.gmra.mrb[0].mxu0 %v6370
        %v6372 = vpop.f32.mrb[0].mxu0
        %v6373 = vadd.f32 %v6100, %v6372
        %v6374 = vpop.f32.mrb[0].mxu0
        %6375 = vmatprep.mubr.f32.mxu0 0.0
        %v6376 = vand.u32 %v4512, 4294901760
        %6377 = vmatmul.mubr.f32.gmra.mrb[0].mxu0 %v6376
        %v6378 = vpop.f32.mrb[0].mxu0
        %v6379 = vadd.f32 %v6106, %v6378
        %v6380 = vpop.f32.mrb[0].mxu0
        %6381 = vmatprep.mubr.f32.mxu0 0.0
        %v6382 = vand.u32 %v4513, 4294901760
        %6383 = vmatmul.mubr.f32.gmra.mrb[0].mxu0 %v6382
        %v6384 = vpop.f32.mrb[0].mxu0
        %v6385 = vadd.f32 %v6112, %v6384
        %v6386 = vpop.f32.mrb[0].mxu0
        %6387 = vmatprep.mubr.f32.mxu0 0.0
        %v6388 = vand.u32 %v4514, 4294901760
        %6389 = vmatmul.mubr.f32.gmra.mrb[0].mxu0 %v6388
        %v6390 = vpop.f32.mrb[0].mxu0
        %v6391 = vadd.f32 %v6118, %v6390
        %v6392 = vpop.f32.mrb[0].mxu0
        %6393 = vmatprep.mubr.f32.mxu0 0.0
        %v6394 = vand.u32 %v4515, 4294901760
        %6395 = vmatmul.mubr.f32.gmra.mrb[0].mxu0 %v6394
        %v6396 = vpop.f32.mrb[0].mxu0
        %v6397 = vadd.f32 %v6124, %v6396
        %v6398 = vpop.f32.mrb[0].mxu0
        %6399 = vmatprep.mubr.f32.mxu0 0.0
        %v6400 = vand.u32 %v4516, 4294901760
        %6401 = vmatmul.mubr.f32.gmra.mrb[0].mxu0 %v6400
        %v6402 = vpop.f32.mrb[0].mxu0
        %v6403 = vadd.f32 %v6130, %v6402
        %v6404 = vpop.f32.mrb[0].mxu0
        %6405 = vmatprep.mubr.f32.mxu0 0.0
        %v6406 = vand.u32 %v4517, 4294901760
        %6407 = vmatmul.mubr.f32.gmra.mrb[0].mxu0 %v6406
        %v6408 = vpop.f32.mrb[0].mxu0
        %v6409 = vadd.f32 %v6136, %v6408
        %v6410 = vpop.f32.mrb[0].mxu0
        %6411 = vmatprep.mubr.f32.mxu0 0.0
        %v6412 = vand.u32 %v4518, 4294901760
        %6413 = vmatmul.mubr.f32.gmra.mrb[0].mxu0 %v6412
        %v6414 = vpop.f32.mrb[0].mxu0
        %v6415 = vadd.f32 %v6142, %v6414
        %v6416 = vpop.f32.mrb[0].mxu0
        %6417 = vmatprep.mubr.f32.mxu0 0.0
        %v6418 = vand.u32 %v4519, 4294901760
        %6419 = vmatmul.mubr.f32.gmra.mrb[0].mxu0 %v6418
        %v6420 = vpop.f32.mrb[0].mxu0
        %v6421 = vadd.f32 %v6148, %v6420
        %v6422 = vpop.f32.mrb[0].mxu0
        %6423 = vmatprep.mubr.f32.mxu0 0.0
        %v6424 = vand.u32 %v4520, 4294901760
        %6425 = vmatmul.mubr.f32.gmra.mrb[0].mxu0 %v6424
        %v6426 = vpop.f32.mrb[0].mxu0
        %v6427 = vadd.f32 %v6154, %v6426
        %v6428 = vpop.f32.mrb[0].mxu0
        %6429 = vmatprep.mubr.f32.mxu0 0.0
        %v6430 = vand.u32 %v4521, 4294901760
        %6431 = vmatmul.mubr.f32.gmra.mrb[0].mxu0 %v6430
        %v6432 = vpop.f32.mrb[0].mxu0
        %v6433 = vadd.f32 %v6160, %v6432
        %v6434 = vpop.f32.mrb[0].mxu0
        %6435 = vmatprep.mubr.f32.mxu0 0.0
        %v6436 = vand.u32 %v4522, 4294901760
        %6437 = vmatmul.mubr.f32.gmra.mrb[0].mxu0 %v6436
        %v6438 = vpop.f32.mrb[0].mxu0
        %v6439 = vadd.f32 %v6166, %v6438
        %v6440 = vpop.f32.mrb[0].mxu0
        %6441 = vmatprep.mubr.f32.mxu0 0.0
        %v6442 = vand.u32 %v4523, 4294901760
        %6443 = vmatmul.mubr.f32.gmra.mrb[0].mxu0 %v6442
        %v6444 = vpop.f32.mrb[0].mxu0
        %v6445 = vadd.f32 %v6172, %v6444
        %v6446 = vpop.f32.mrb[0].mxu0
        %6447 = vmatprep.mubr.f32.mxu0 0.0
        %v6448 = vand.u32 %v4524, 4294901760
        %6449 = vmatmul.mubr.f32.gmra.mrb[0].mxu0 %v6448
        %v6450 = vpop.f32.mrb[0].mxu0
        %v6451 = vadd.f32 %v6178, %v6450
        %v6452 = vpop.f32.mrb[0].mxu0
        %6453 = vmatprep.mubr.f32.mxu0 0.0
        %v6454 = vand.u32 %v4525, 4294901760
        %6455 = vmatmul.mubr.f32.gmra.mrb[0].mxu0 %v6454
        %v6456 = vpop.f32.mrb[0].mxu0
        %v6457 = vadd.f32 %v6184, %v6456
        %v6458 = vpop.f32.mrb[0].mxu0
        %6459 = vmatprep.mubr.f32.mxu0 0.0
        %v6460 = vand.u32 %v4526, 4294901760
        %6461 = vmatmul.mubr.f32.gmra.mrb[0].mxu0 %v6460
        %v6462 = vpop.f32.mrb[0].mxu0
        %v6463 = vadd.f32 %v6190, %v6462
        %v6464 = vpop.f32.mrb[0].mxu0
        %6465 = vmatprep.mubr.f32.mxu0 0.0
        %v6466 = vand.u32 %v4527, 4294901760
        %6467 = vmatmul.mubr.f32.gmra.mrb[0].mxu0 %v6466
        %v6468 = vpop.f32.mrb[0].mxu0
        %v6469 = vadd.f32 %v6196, %v6468
        %v6470 = vpop.f32.mrb[0].mxu0
        %6471 = vmatprep.mubr.f32.mxu0 0.0
        %v6472 = vand.u32 %v4528, 4294901760
        %6473 = vmatmul.mubr.f32.gmra.mrb[0].mxu0 %v6472
        %v6474 = vpop.f32.mrb[0].mxu0
        %v6475 = vadd.f32 %v6202, %v6474
        %v6476 = vpop.f32.mrb[0].mxu0
        %6477 = vmatprep.mubr.f32.mxu0 0.0
        %v6478 = vand.u32 %v4529, 4294901760
        %6479 = vmatmul.mubr.f32.gmra.mrb[0].mxu0 %v6478
        %v6480 = vpop.f32.mrb[0].mxu0
        %v6481 = vadd.f32 %v6208, %v6480
        %v6482 = vpop.f32.mrb[0].mxu0
        %6483 = vmatprep.mubr.f32.mxu0 0.0
        %v6484 = vand.u32 %v4530, 4294901760
        %6485 = vmatmul.mubr.f32.gmra.mrb[0].mxu0 %v6484
        %v6486 = vpop.f32.mrb[0].mxu0
        %v6487 = vadd.f32 %v6214, %v6486
        %v6488 = vpop.f32.mrb[0].mxu0
        %6489 = vmatprep.mubr.f32.mxu0 0.0
        %v6490 = vand.u32 %v4531, 4294901760
        %6491 = vmatmul.mubr.f32.gmra.mrb[0].mxu0 %v6490
        %v6492 = vpop.f32.mrb[0].mxu0
        %v6493 = vadd.f32 %v6220, %v6492
        %v6494 = vpop.f32.mrb[0].mxu0
        %6495 = vmatprep.mubr.f32.mxu0 0.0
        %v6496 = vand.u32 %v4532, 4294901760
        %6497 = vmatmul.mubr.f32.gmra.mrb[0].mxu0 %v6496
        %v6498 = vpop.f32.mrb[0].mxu0
        %v6499 = vadd.f32 %v6226, %v6498
        %v6500 = vpop.f32.mrb[0].mxu0
        %6501 = vmatprep.mubr.f32.mxu0 0.0
        %v6502 = vand.u32 %v4533, 4294901760
        %6503 = vmatmul.mubr.f32.gmra.mrb[0].mxu0 %v6502
        %v6504 = vpop.f32.mrb[0].mxu0
        %v6505 = vadd.f32 %v6232, %v6504
        %v6506 = vpop.f32.mrb[0].mxu0
        %6507 = vdwg.mxu0
        %v6508 = vmul.f32 %v6319, 0.03125
        %v6509 = vmul.f32 %v6325, 0.03125
        %v6510 = vmul.f32 %v6331, 0.03125
        %v6511 = vmul.f32 %v6337, 0.03125
        %v6512 = vmul.f32 %v6343, 0.03125
        %v6513 = vmul.f32 %v6349, 0.03125
        %v6514 = vmul.f32 %v6355, 0.03125
        %v6515 = vmul.f32 %v6361, 0.03125
        %v6516 = vmul.f32 %v6367, 0.03125
        %v6517 = vmul.f32 %v6373, 0.03125
        %v6518 = vmul.f32 %v6379, 0.03125
        %v6519 = vmul.f32 %v6385, 0.03125
        %v6520 = vmul.f32 %v6391, 0.03125
        %v6521 = vmul.f32 %v6397, 0.03125
        %v6522 = vmul.f32 %v6403, 0.03125
        %v6523 = vmul.f32 %v6409, 0.03125
        %v6524 = vmul.f32 %v6415, 0.03125
        %v6525 = vmul.f32 %v6421, 0.03125
        %v6526 = vmul.f32 %v6427, 0.03125
        %v6527 = vmul.f32 %v6433, 0.03125
        %v6528 = vmul.f32 %v6439, 0.03125
        %v6529 = vmul.f32 %v6445, 0.03125
        %v6530 = vmul.f32 %v6451, 0.03125
        %v6531 = vmul.f32 %v6457, 0.03125
        %v6532 = vmul.f32 %v6463, 0.03125
        %v6533 = vmul.f32 %v6469, 0.03125
        %v6534 = vmul.f32 %v6475, 0.03125
        %v6535 = vmul.f32 %v6481, 0.03125
        %v6536 = vmul.f32 %v6487, 0.03125
        %v6537 = vmul.f32 %v6493, 0.03125
        %v6538 = vmul.f32 %v6499, 0.03125
        %v6539 = vmul.f32 %v6505, 0.03125
        %v6540 = vadd.f32 %v6508, 1e-05
        %v6541 = vadd.f32 %v6509, 1e-05
        %v6542 = vadd.f32 %v6510, 1e-05
        %v6543 = vadd.f32 %v6511, 1e-05
        %v6544 = vadd.f32 %v6512, 1e-05
        %v6545 = vadd.f32 %v6513, 1e-05
        %v6546 = vadd.f32 %v6514, 1e-05
        %v6547 = vadd.f32 %v6515, 1e-05
        %v6548 = vadd.f32 %v6516, 1e-05
        %v6549 = vadd.f32 %v6517, 1e-05
        %v6550 = vadd.f32 %v6518, 1e-05
        %v6551 = vadd.f32 %v6519, 1e-05
        %v6552 = vadd.f32 %v6520, 1e-05
        %v6553 = vadd.f32 %v6521, 1e-05
        %v6554 = vadd.f32 %v6522, 1e-05
        %v6555 = vadd.f32 %v6523, 1e-05
        %v6556 = vadd.f32 %v6524, 1e-05
        %v6557 = vadd.f32 %v6525, 1e-05
        %v6558 = vadd.f32 %v6526, 1e-05
        %v6559 = vadd.f32 %v6527, 1e-05
        %v6560 = vadd.f32 %v6528, 1e-05
        %v6561 = vadd.f32 %v6529, 1e-05
        %v6562 = vadd.f32 %v6530, 1e-05
        %v6563 = vadd.f32 %v6531, 1e-05
        %v6564 = vadd.f32 %v6532, 1e-05
        %v6565 = vadd.f32 %v6533, 1e-05
        %v6566 = vadd.f32 %v6534, 1e-05
        %v6567 = vadd.f32 %v6535, 1e-05
        %v6568 = vadd.f32 %v6536, 1e-05
        %v6569 = vadd.f32 %v6537, 1e-05
        %v6570 = vadd.f32 %v6538, 1e-05
        %v6571 = vadd.f32 %v6539, 1e-05
        %v6572 = vrsqrt.pop %v6540
        %v6573 = vrsqrt.pop %v6541
        %v6574 = vrsqrt.pop %v6542
        %v6575 = vrsqrt.pop %v6543
        %v6576 = vrsqrt.pop %v6544
        %v6577 = vrsqrt.pop %v6545
        %v6578 = vrsqrt.pop %v6546
        %v6579 = vrsqrt.pop %v6547
        %v6580 = vrsqrt.pop %v6548
        %v6581 = vrsqrt.pop %v6549
        %v6582 = vrsqrt.pop %v6550
        %v6583 = vrsqrt.pop %v6551
        %v6584 = vrsqrt.pop %v6552
        %v6585 = vrsqrt.pop %v6553
        %v6586 = vrsqrt.pop %v6554
        %v6587 = vrsqrt.pop %v6555
        %v6588 = vrsqrt.pop %v6556
        %v6589 = vrsqrt.pop %v6557
        %v6590 = vrsqrt.pop %v6558
        %v6591 = vrsqrt.pop %v6559
        %v6592 = vrsqrt.pop %v6560
        %v6593 = vrsqrt.pop %v6561
        %v6594 = vrsqrt.pop %v6562
        %v6595 = vrsqrt.pop %v6563
        %v6596 = vrsqrt.pop %v6564
        %v6597 = vrsqrt.pop %v6565
        %v6598 = vrsqrt.pop %v6566
        %v6599 = vrsqrt.pop %v6567
        %v6600 = vrsqrt.pop %v6568
        %v6601 = vrsqrt.pop %v6569
        %v6602 = vrsqrt.pop %v6570
        %v6603 = vrsqrt.pop %v6571
        %v6605 = vsel %vm2590, %v6572, 0
        %v6608 = vsel %vm2590, %v6573, 0
        %v6611 = vsel %vm2590, %v6574, 0
        %v6614 = vsel %vm2590, %v6575, 0
        %v6617 = vsel %vm2590, %v6576, 0
        %v6620 = vsel %vm2590, %v6577, 0
        %v6623 = vsel %vm2590, %v6578, 0
        %v6626 = vsel %vm2590, %v6579, 0
        %v6629 = vsel %vm2590, %v6580, 0
        %v6632 = vsel %vm2590, %v6581, 0
        %v6635 = vsel %vm2590, %v6582, 0
        %v6638 = vsel %vm2590, %v6583, 0
        %v6641 = vsel %vm2590, %v6584, 0
        %v6644 = vsel %vm2590, %v6585, 0
        %v6647 = vsel %vm2590, %v6586, 0
        %v6650 = vsel %vm2590, %v6587, 0
        %v6653 = vsel %vm2590, %v6588, 0
        %v6656 = vsel %vm2590, %v6589, 0
        %v6659 = vsel %vm2590, %v6590, 0
        %v6662 = vsel %vm2590, %v6591, 0
        %v6665 = vsel %vm2590, %v6592, 0
        %v6668 = vsel %vm2590, %v6593, 0
        %v6671 = vsel %vm2590, %v6594, 0
        %v6674 = vsel %vm2590, %v6595, 0
        %v6677 = vsel %vm2590, %v6596, 0
        %v6680 = vsel %vm2590, %v6597, 0
        %v6683 = vsel %vm2590, %v6598, 0
        %v6686 = vsel %vm2590, %v6599, 0
        %v6689 = vsel %vm2590, %v6600, 0
        %v6692 = vsel %vm2590, %v6601, 0
        %v6695 = vsel %vm2590, %v6602, 0
        %v6698 = vsel %vm2590, %v6603, 0
        %6700 = vmatprep.subr.mxu0 0.0
        %v6701 = vand.u32 %v2689, 4294901760
        %6702 = vmatpush1.msra.mxu0 %v6701
        %6703 = vmatprep.subr.mxu0 0.0
        %6704 = vmatpush1.msra.mxu0 0.0
        %6705 = vmatprep.subr.mxu0 0.0
        %6706 = vmatpush1.msra.mxu0 0.0
        %6707 = vmatprep.subr.mxu0 0.0
        %6708 = vmatpush1.msra.mxu0 0.0
        %6709 = vmatprep.subr.mxu0 0.0
        %6710 = vmatpush1.msra.mxu0 0.0
        %6711 = vmatprep.subr.mxu0 0.0
        %6712 = vmatpush1.msra.mxu0 0.0
        %6713 = vmatprep.subr.mxu0 0.0
        %6714 = vmatpush1.msra.mxu0 0.0
        %6715 = vmatprep.subr.mxu0 0.0
        %6716 = vmatpush1.msra.mxu0 0.0
        %6717 = vmatprep.subr.mxu0 0.0
        %6718 = vmatpush1.msra.mxu0 0.0
        %6719 = vmatprep.subr.mxu0 0.0
        %6720 = vmatpush1.msra.mxu0 0.0
        %6721 = vmatprep.subr.mxu0 0.0
        %6722 = vmatpush1.msra.mxu0 0.0
        %6723 = vmatprep.subr.mxu0 0.0
        %6724 = vmatpush1.msra.mxu0 0.0
        %6725 = vmatprep.subr.mxu0 0.0
        %6726 = vmatpush1.msra.mxu0 0.0
        %6727 = vmatprep.subr.mxu0 0.0
        %6728 = vmatpush1.msra.mxu0 0.0
        %6729 = vmatprep.subr.mxu0 0.0
        %6730 = vmatpush1.msra.mxu0 0.0
        %6731 = vmatprep.subr.mxu0 0.0
        %6732 = vmatpush1.msra.mxu0 0.0
        %6733 = vmatprep.subr.mxu0 0.0
        %6734 = vmatpush1.msra.mxu0 0.0
        %6735 = vmatprep.subr.mxu0 0.0
        %6736 = vmatpush1.msra.mxu0 0.0
        %6737 = vmatprep.subr.mxu0 0.0
        %6738 = vmatpush1.msra.mxu0 0.0
        %6739 = vmatprep.subr.mxu0 0.0
        %6740 = vmatpush1.msra.mxu0 0.0
        %6741 = vmatprep.subr.mxu0 0.0
        %6742 = vmatpush1.msra.mxu0 0.0
        %6743 = vmatprep.subr.mxu0 0.0
        %6744 = vmatpush1.msra.mxu0 0.0
        %6745 = vmatprep.subr.mxu0 0.0
        %6746 = vmatpush1.msra.mxu0 0.0
        %6747 = vmatprep.subr.mxu0 0.0
        %6748 = vmatpush1.msra.mxu0 0.0
        %6749 = vmatprep.subr.mxu0 0.0
        %6750 = vmatpush1.msra.mxu0 0.0
        %6751 = vmatprep.subr.mxu0 0.0
        %6752 = vmatpush1.msra.mxu0 0.0
        %6753 = vmatprep.subr.mxu0 0.0
        %6754 = vmatpush1.msra.mxu0 0.0
        %6755 = vmatprep.subr.mxu0 0.0
        %6756 = vmatpush1.msra.mxu0 0.0
        %6757 = vmatprep.subr.mxu0 0.0
        %6758 = vmatpush1.msra.mxu0 0.0
        %6759 = vmatprep.subr.mxu0 0.0
        %6760 = vmatpush1.msra.mxu0 0.0
        %6761 = vmatprep.subr.mxu0 0.0
        %6762 = vmatpush1.msra.mxu0 0.0
        %6763 = vmatprep.subr.mxu0 0.0
        %6764 = vmatpush1.msra.mxu0 0.0
        %6765 = vmatprep.mubr.f32.mxu0 0.0
        %v6766 = vand.u32 %v6605, 4294901760
        %v6767 = vsub.f32 %v6605, %v6766
        %v6768 = vand.u32 %v6767, 4294901760
        %v6769 = vsub.f32 %v6767, %v6768
        %v6770 = vand.u32 %v6769, 4294901760
        %6771 = vmatmul.mubr.f32.gmra.mrb[0].mxu0 %v6770
        %v6772 = vpop.f32.mrb[0].mxu0
        %v6773 = vadd.f32 0.0, %v6772
        %v6774 = vpop.f32.mrb[0].mxu0
        %6775 = vmatprep.mubr.f32.mxu0 0.0
        %v6776 = vand.u32 %v6608, 4294901760
        %v6777 = vsub.f32 %v6608, %v6776
        %v6778 = vand.u32 %v6777, 4294901760
        %v6779 = vsub.f32 %v6777, %v6778
        %v6780 = vand.u32 %v6779, 4294901760
        %6781 = vmatmul.mubr.f32.gmra.mrb[0].mxu0 %v6780
        %v6782 = vpop.f32.mrb[0].mxu0
        %v6783 = vadd.f32 0.0, %v6782
        %v6784 = vpop.f32.mrb[0].mxu0
        %6785 = vmatprep.mubr.f32.mxu0 0.0
        %v6786 = vand.u32 %v6611, 4294901760
        %v6787 = vsub.f32 %v6611, %v6786
        %v6788 = vand.u32 %v6787, 4294901760
        %v6789 = vsub.f32 %v6787, %v6788
        %v6790 = vand.u32 %v6789, 4294901760
        %6791 = vmatmul.mubr.f32.gmra.mrb[0].mxu0 %v6790
        %v6792 = vpop.f32.mrb[0].mxu0
        %v6793 = vadd.f32 0.0, %v6792
        %v6794 = vpop.f32.mrb[0].mxu0
        %6795 = vmatprep.mubr.f32.mxu0 0.0
        %v6796 = vand.u32 %v6614, 4294901760
        %v6797 = vsub.f32 %v6614, %v6796
        %v6798 = vand.u32 %v6797, 4294901760
        %v6799 = vsub.f32 %v6797, %v6798
        %v6800 = vand.u32 %v6799, 4294901760
        %6801 = vmatmul.mubr.f32.gmra.mrb[0].mxu0 %v6800
        %v6802 = vpop.f32.mrb[0].mxu0
        %v6803 = vadd.f32 0.0, %v6802
        %v6804 = vpop.f32.mrb[0].mxu0
        %6805 = vmatprep.mubr.f32.mxu0 0.0
        %v6806 = vand.u32 %v6617, 4294901760
        %v6807 = vsub.f32 %v6617, %v6806
        %v6808 = vand.u32 %v6807, 4294901760
        %v6809 = vsub.f32 %v6807, %v6808
        %v6810 = vand.u32 %v6809, 4294901760
        %6811 = vmatmul.mubr.f32.gmra.mrb[0].mxu0 %v6810
        %v6812 = vpop.f32.mrb[0].mxu0
        %v6813 = vadd.f32 0.0, %v6812
        %v6814 = vpop.f32.mrb[0].mxu0
        %6815 = vmatprep.mubr.f32.mxu0 0.0
        %v6816 = vand.u32 %v6620, 4294901760
        %v6817 = vsub.f32 %v6620, %v6816
        %v6818 = vand.u32 %v6817, 4294901760
        %v6819 = vsub.f32 %v6817, %v6818
        %v6820 = vand.u32 %v6819, 4294901760
        %6821 = vmatmul.mubr.f32.gmra.mrb[0].mxu0 %v6820
        %v6822 = vpop.f32.mrb[0].mxu0
        %v6823 = vadd.f32 0.0, %v6822
        %v6824 = vpop.f32.mrb[0].mxu0
        %6825 = vmatprep.mubr.f32.mxu0 0.0
        %v6826 = vand.u32 %v6623, 4294901760
        %v6827 = vsub.f32 %v6623, %v6826
        %v6828 = vand.u32 %v6827, 4294901760
        %v6829 = vsub.f32 %v6827, %v6828
        %v6830 = vand.u32 %v6829, 4294901760
        %6831 = vmatmul.mubr.f32.gmra.mrb[0].mxu0 %v6830
        %v6832 = vpop.f32.mrb[0].mxu0
        %v6833 = vadd.f32 0.0, %v6832
        %v6834 = vpop.f32.mrb[0].mxu0
        %6835 = vmatprep.mubr.f32.mxu0 0.0
        %v6836 = vand.u32 %v6626, 4294901760
        %v6837 = vsub.f32 %v6626, %v6836
        %v6838 = vand.u32 %v6837, 4294901760
        %v6839 = vsub.f32 %v6837, %v6838
        %v6840 = vand.u32 %v6839, 4294901760
        %6841 = vmatmul.mubr.f32.gmra.mrb[0].mxu0 %v6840
        %v6842 = vpop.f32.mrb[0].mxu0
        %v6843 = vadd.f32 0.0, %v6842
        %v6844 = vpop.f32.mrb[0].mxu0
        %6845 = vmatprep.mubr.f32.mxu0 0.0
        %v6846 = vand.u32 %v6629, 4294901760
        %v6847 = vsub.f32 %v6629, %v6846
        %v6848 = vand.u32 %v6847, 4294901760
        %v6849 = vsub.f32 %v6847, %v6848
        %v6850 = vand.u32 %v6849, 4294901760
        %6851 = vmatmul.mubr.f32.gmra.mrb[0].mxu0 %v6850
        %v6852 = vpop.f32.mrb[0].mxu0
        %v6853 = vadd.f32 0.0, %v6852
        %v6854 = vpop.f32.mrb[0].mxu0
        %6855 = vmatprep.mubr.f32.mxu0 0.0
        %v6856 = vand.u32 %v6632, 4294901760
        %v6857 = vsub.f32 %v6632, %v6856
        %v6858 = vand.u32 %v6857, 4294901760
        %v6859 = vsub.f32 %v6857, %v6858
        %v6860 = vand.u32 %v6859, 4294901760
        %6861 = vmatmul.mubr.f32.gmra.mrb[0].mxu0 %v6860
        %v6862 = vpop.f32.mrb[0].mxu0
        %v6863 = vadd.f32 0.0, %v6862
        %v6864 = vpop.f32.mrb[0].mxu0
        %6865 = vmatprep.mubr.f32.mxu0 0.0
        %v6866 = vand.u32 %v6635, 4294901760
        %v6867 = vsub.f32 %v6635, %v6866
        %v6868 = vand.u32 %v6867, 4294901760
        %v6869 = vsub.f32 %v6867, %v6868
        %v6870 = vand.u32 %v6869, 4294901760
        %6871 = vmatmul.mubr.f32.gmra.mrb[0].mxu0 %v6870
        %v6872 = vpop.f32.mrb[0].mxu0
        %v6873 = vadd.f32 0.0, %v6872
        %v6874 = vpop.f32.mrb[0].mxu0
        %6875 = vmatprep.mubr.f32.mxu0 0.0
        %v6876 = vand.u32 %v6638, 4294901760
        %v6877 = vsub.f32 %v6638, %v6876
        %v6878 = vand.u32 %v6877, 4294901760
        %v6879 = vsub.f32 %v6877, %v6878
        %v6880 = vand.u32 %v6879, 4294901760
        %6881 = vmatmul.mubr.f32.gmra.mrb[0].mxu0 %v6880
        %v6882 = vpop.f32.mrb[0].mxu0
        %v6883 = vadd.f32 0.0, %v6882
        %v6884 = vpop.f32.mrb[0].mxu0
        %6885 = vmatprep.mubr.f32.mxu0 0.0
        %v6886 = vand.u32 %v6641, 4294901760
        %v6887 = vsub.f32 %v6641, %v6886
        %v6888 = vand.u32 %v6887, 4294901760
        %v6889 = vsub.f32 %v6887, %v6888
        %v6890 = vand.u32 %v6889, 4294901760
        %6891 = vmatmul.mubr.f32.gmra.mrb[0].mxu0 %v6890
        %v6892 = vpop.f32.mrb[0].mxu0
        %v6893 = vadd.f32 0.0, %v6892
        %v6894 = vpop.f32.mrb[0].mxu0
        %6895 = vmatprep.mubr.f32.mxu0 0.0
        %v6896 = vand.u32 %v6644, 4294901760
        %v6897 = vsub.f32 %v6644, %v6896
        %v6898 = vand.u32 %v6897, 4294901760
        %v6899 = vsub.f32 %v6897, %v6898
        %v6900 = vand.u32 %v6899, 4294901760
        %6901 = vmatmul.mubr.f32.gmra.mrb[0].mxu0 %v6900
        %v6902 = vpop.f32.mrb[0].mxu0
        %v6903 = vadd.f32 0.0, %v6902
        %v6904 = vpop.f32.mrb[0].mxu0
        %6905 = vmatprep.mubr.f32.mxu0 0.0
        %v6906 = vand.u32 %v6647, 4294901760
        %v6907 = vsub.f32 %v6647, %v6906
        %v6908 = vand.u32 %v6907, 4294901760
        %v6909 = vsub.f32 %v6907, %v6908
        %v6910 = vand.u32 %v6909, 4294901760
        %6911 = vmatmul.mubr.f32.gmra.mrb[0].mxu0 %v6910
        %v6912 = vpop.f32.mrb[0].mxu0
        %v6913 = vadd.f32 0.0, %v6912
        %v6914 = vpop.f32.mrb[0].mxu0
        %6915 = vmatprep.mubr.f32.mxu0 0.0
        %v6916 = vand.u32 %v6650, 4294901760
        %v6917 = vsub.f32 %v6650, %v6916
        %v6918 = vand.u32 %v6917, 4294901760
        %v6919 = vsub.f32 %v6917, %v6918
        %v6920 = vand.u32 %v6919, 4294901760
        %6921 = vmatmul.mubr.f32.gmra.mrb[0].mxu0 %v6920
        %v6922 = vpop.f32.mrb[0].mxu0
        %v6923 = vadd.f32 0.0, %v6922
        %v6924 = vpop.f32.mrb[0].mxu0
        %6925 = vmatprep.mubr.f32.mxu0 0.0
        %v6926 = vand.u32 %v6653, 4294901760
        %v6927 = vsub.f32 %v6653, %v6926
        %v6928 = vand.u32 %v6927, 4294901760
        %v6929 = vsub.f32 %v6927, %v6928
        %v6930 = vand.u32 %v6929, 4294901760
        %6931 = vmatmul.mubr.f32.gmra.mrb[0].mxu0 %v6930
        %v6932 = vpop.f32.mrb[0].mxu0
        %v6933 = vadd.f32 0.0, %v6932
        %v6934 = vpop.f32.mrb[0].mxu0
        %6935 = vmatprep.mubr.f32.mxu0 0.0
        %v6936 = vand.u32 %v6656, 4294901760
        %v6937 = vsub.f32 %v6656, %v6936
        %v6938 = vand.u32 %v6937, 4294901760
        %v6939 = vsub.f32 %v6937, %v6938
        %v6940 = vand.u32 %v6939, 4294901760
        %6941 = vmatmul.mubr.f32.gmra.mrb[0].mxu0 %v6940
        %v6942 = vpop.f32.mrb[0].mxu0
        %v6943 = vadd.f32 0.0, %v6942
        %v6944 = vpop.f32.mrb[0].mxu0
        %6945 = vmatprep.mubr.f32.mxu0 0.0
        %v6946 = vand.u32 %v6659, 4294901760
        %v6947 = vsub.f32 %v6659, %v6946
        %v6948 = vand.u32 %v6947, 4294901760
        %v6949 = vsub.f32 %v6947, %v6948
        %v6950 = vand.u32 %v6949, 4294901760
        %6951 = vmatmul.mubr.f32.gmra.mrb[0].mxu0 %v6950
        %v6952 = vpop.f32.mrb[0].mxu0
        %v6953 = vadd.f32 0.0, %v6952
        %v6954 = vpop.f32.mrb[0].mxu0
        %6955 = vmatprep.mubr.f32.mxu0 0.0
        %v6956 = vand.u32 %v6662, 4294901760
        %v6957 = vsub.f32 %v6662, %v6956
        %v6958 = vand.u32 %v6957, 4294901760
        %v6959 = vsub.f32 %v6957, %v6958
        %v6960 = vand.u32 %v6959, 4294901760
        %6961 = vmatmul.mubr.f32.gmra.mrb[0].mxu0 %v6960
        %v6962 = vpop.f32.mrb[0].mxu0
        %v6963 = vadd.f32 0.0, %v6962
        %v6964 = vpop.f32.mrb[0].mxu0
        %6965 = vmatprep.mubr.f32.mxu0 0.0
        %v6966 = vand.u32 %v6665, 4294901760
        %v6967 = vsub.f32 %v6665, %v6966
        %v6968 = vand.u32 %v6967, 4294901760
        %v6969 = vsub.f32 %v6967, %v6968
        %v6970 = vand.u32 %v6969, 4294901760
        %6971 = vmatmul.mubr.f32.gmra.mrb[0].mxu0 %v6970
        %v6972 = vpop.f32.mrb[0].mxu0
        %v6973 = vadd.f32 0.0, %v6972
        %v6974 = vpop.f32.mrb[0].mxu0
        %6975 = vmatprep.mubr.f32.mxu0 0.0
        %v6976 = vand.u32 %v6668, 4294901760
        %v6977 = vsub.f32 %v6668, %v6976
        %v6978 = vand.u32 %v6977, 4294901760
        %v6979 = vsub.f32 %v6977, %v6978
        %v6980 = vand.u32 %v6979, 4294901760
        %6981 = vmatmul.mubr.f32.gmra.mrb[0].mxu0 %v6980
        %v6982 = vpop.f32.mrb[0].mxu0
        %v6983 = vadd.f32 0.0, %v6982
        %v6984 = vpop.f32.mrb[0].mxu0
        %6985 = vmatprep.mubr.f32.mxu0 0.0
        %v6986 = vand.u32 %v6671, 4294901760
        %v6987 = vsub.f32 %v6671, %v6986
        %v6988 = vand.u32 %v6987, 4294901760
        %v6989 = vsub.f32 %v6987, %v6988
        %v6990 = vand.u32 %v6989, 4294901760
        %6991 = vmatmul.mubr.f32.gmra.mrb[0].mxu0 %v6990
        %v6992 = vpop.f32.mrb[0].mxu0
        %v6993 = vadd.f32 0.0, %v6992
        %v6994 = vpop.f32.mrb[0].mxu0
        %6995 = vmatprep.mubr.f32.mxu0 0.0
        %v6996 = vand.u32 %v6674, 4294901760
        %v6997 = vsub.f32 %v6674, %v6996
        %v6998 = vand.u32 %v6997, 4294901760
        %v6999 = vsub.f32 %v6997, %v6998
        %v7000 = vand.u32 %v6999, 4294901760
        %7001 = vmatmul.mubr.f32.gmra.mrb[0].mxu0 %v7000
        %v7002 = vpop.f32.mrb[0].mxu0
        %v7003 = vadd.f32 0.0, %v7002
        %v7004 = vpop.f32.mrb[0].mxu0
        %7005 = vmatprep.mubr.f32.mxu0 0.0
        %v7006 = vand.u32 %v6677, 4294901760
        %v7007 = vsub.f32 %v6677, %v7006
        %v7008 = vand.u32 %v7007, 4294901760
        %v7009 = vsub.f32 %v7007, %v7008
        %v7010 = vand.u32 %v7009, 4294901760
        %7011 = vmatmul.mubr.f32.gmra.mrb[0].mxu0 %v7010
        %v7012 = vpop.f32.mrb[0].mxu0
        %v7013 = vadd.f32 0.0, %v7012
        %v7014 = vpop.f32.mrb[0].mxu0
        %7015 = vmatprep.mubr.f32.mxu0 0.0
        %v7016 = vand.u32 %v6680, 4294901760
        %v7017 = vsub.f32 %v6680, %v7016
        %v7018 = vand.u32 %v7017, 4294901760
        %v7019 = vsub.f32 %v7017, %v7018
        %v7020 = vand.u32 %v7019, 4294901760
        %7021 = vmatmul.mubr.f32.gmra.mrb[0].mxu0 %v7020
        %v7022 = vpop.f32.mrb[0].mxu0
        %v7023 = vadd.f32 0.0, %v7022
        %v7024 = vpop.f32.mrb[0].mxu0
        %7025 = vmatprep.mubr.f32.mxu0 0.0
        %v7026 = vand.u32 %v6683, 4294901760
        %v7027 = vsub.f32 %v6683, %v7026
        %v7028 = vand.u32 %v7027, 4294901760
        %v7029 = vsub.f32 %v7027, %v7028
        %v7030 = vand.u32 %v7029, 4294901760
        %7031 = vmatmul.mubr.f32.gmra.mrb[0].mxu0 %v7030
        %v7032 = vpop.f32.mrb[0].mxu0
        %v7033 = vadd.f32 0.0, %v7032
        %v7034 = vpop.f32.mrb[0].mxu0
        %7035 = vmatprep.mubr.f32.mxu0 0.0
        %v7036 = vand.u32 %v6686, 4294901760
        %v7037 = vsub.f32 %v6686, %v7036
        %v7038 = vand.u32 %v7037, 4294901760
        %v7039 = vsub.f32 %v7037, %v7038
        %v7040 = vand.u32 %v7039, 4294901760
        %7041 = vmatmul.mubr.f32.gmra.mrb[0].mxu0 %v7040
        %v7042 = vpop.f32.mrb[0].mxu0
        %v7043 = vadd.f32 0.0, %v7042
        %v7044 = vpop.f32.mrb[0].mxu0
        %7045 = vmatprep.mubr.f32.mxu0 0.0
        %v7046 = vand.u32 %v6689, 4294901760
        %v7047 = vsub.f32 %v6689, %v7046
        %v7048 = vand.u32 %v7047, 4294901760
        %v7049 = vsub.f32 %v7047, %v7048
        %v7050 = vand.u32 %v7049, 4294901760
        %7051 = vmatmul.mubr.f32.gmra.mrb[0].mxu0 %v7050
        %v7052 = vpop.f32.mrb[0].mxu0
        %v7053 = vadd.f32 0.0, %v7052
        %v7054 = vpop.f32.mrb[0].mxu0
        %7055 = vmatprep.mubr.f32.mxu0 0.0
        %v7056 = vand.u32 %v6692, 4294901760
        %v7057 = vsub.f32 %v6692, %v7056
        %v7058 = vand.u32 %v7057, 4294901760
        %v7059 = vsub.f32 %v7057, %v7058
        %v7060 = vand.u32 %v7059, 4294901760
        %7061 = vmatmul.mubr.f32.gmra.mrb[0].mxu0 %v7060
        %v7062 = vpop.f32.mrb[0].mxu0
        %v7063 = vadd.f32 0.0, %v7062
        %v7064 = vpop.f32.mrb[0].mxu0
        %7065 = vmatprep.mubr.f32.mxu0 0.0
        %v7066 = vand.u32 %v6695, 4294901760
        %v7067 = vsub.f32 %v6695, %v7066
        %v7068 = vand.u32 %v7067, 4294901760
        %v7069 = vsub.f32 %v7067, %v7068
        %v7070 = vand.u32 %v7069, 4294901760
        %7071 = vmatmul.mubr.f32.gmra.mrb[0].mxu0 %v7070
        %v7072 = vpop.f32.mrb[0].mxu0
        %v7073 = vadd.f32 0.0, %v7072
        %v7074 = vpop.f32.mrb[0].mxu0
        %7075 = vmatprep.mubr.f32.mxu0 0.0
        %v7076 = vand.u32 %v6698, 4294901760
        %v7077 = vsub.f32 %v6698, %v7076
        %v7078 = vand.u32 %v7077, 4294901760
        %v7079 = vsub.f32 %v7077, %v7078
        %v7080 = vand.u32 %v7079, 4294901760
        %7081 = vmatmul.mubr.f32.gmra.mrb[0].mxu0 %v7080
        %v7082 = vpop.f32.mrb[0].mxu0
        %v7083 = vadd.f32 0.0, %v7082
        %v7084 = vpop.f32.mrb[0].mxu0
        %7085 = vdwg.mxu0
        %7086 = vmatprep.subr.mxu0 0.0
        %v7087 = vand.u32 %v2689, 4294901760
        %v7088 = vsub.f32 %v2689, %v7087
        %v7089 = vand.u32 %v7088, 4294901760
        %v7090 = vsub.f32 %v7088, %v7089
        %v7091 = vand.u32 %v7090, 4294901760
        %7092 = vmatpush1.msra.mxu0 %v7091
        %7093 = vmatprep.subr.mxu0 0.0
        %7094 = vmatpush1.msra.mxu0 0.0
        %7095 = vmatprep.subr.mxu0 0.0
        %7096 = vmatpush1.msra.mxu0 0.0
        %7097 = vmatprep.subr.mxu0 0.0
        %7098 = vmatpush1.msra.mxu0 0.0
        %7099 = vmatprep.subr.mxu0 0.0
        %7100 = vmatpush1.msra.mxu0 0.0
        %7101 = vmatprep.subr.mxu0 0.0
        %7102 = vmatpush1.msra.mxu0 0.0
        %7103 = vmatprep.subr.mxu0 0.0
        %7104 = vmatpush1.msra.mxu0 0.0
        %7105 = vmatprep.subr.mxu0 0.0
        %7106 = vmatpush1.msra.mxu0 0.0
        %7107 = vmatprep.subr.mxu0 0.0
        %7108 = vmatpush1.msra.mxu0 0.0
        %7109 = vmatprep.subr.mxu0 0.0
        %7110 = vmatpush1.msra.mxu0 0.0
        %7111 = vmatprep.subr.mxu0 0.0
        %7112 = vmatpush1.msra.mxu0 0.0
        %7113 = vmatprep.subr.mxu0 0.0
        %7114 = vmatpush1.msra.mxu0 0.0
        %7115 = vmatprep.subr.mxu0 0.0
        %7116 = vmatpush1.msra.mxu0 0.0
        %7117 = vmatprep.subr.mxu0 0.0
        %7118 = vmatpush1.msra.mxu0 0.0
        %7119 = vmatprep.subr.mxu0 0.0
        %7120 = vmatpush1.msra.mxu0 0.0
        %7121 = vmatprep.subr.mxu0 0.0
        %7122 = vmatpush1.msra.mxu0 0.0
        %7123 = vmatprep.subr.mxu0 0.0
        %7124 = vmatpush1.msra.mxu0 0.0
        %7125 = vmatprep.subr.mxu0 0.0
        %7126 = vmatpush1.msra.mxu0 0.0
        %7127 = vmatprep.subr.mxu0 0.0
        %7128 = vmatpush1.msra.mxu0 0.0
        %7129 = vmatprep.subr.mxu0 0.0
        %7130 = vmatpush1.msra.mxu0 0.0
        %7131 = vmatprep.subr.mxu0 0.0
        %7132 = vmatpush1.msra.mxu0 0.0
        %7133 = vmatprep.subr.mxu0 0.0
        %7134 = vmatpush1.msra.mxu0 0.0
        %7135 = vmatprep.subr.mxu0 0.0
        %7136 = vmatpush1.msra.mxu0 0.0
        %7137 = vmatprep.subr.mxu0 0.0
        %7138 = vmatpush1.msra.mxu0 0.0
        %7139 = vmatprep.subr.mxu0 0.0
        %7140 = vmatpush1.msra.mxu0 0.0
        %7141 = vmatprep.subr.mxu0 0.0
        %7142 = vmatpush1.msra.mxu0 0.0
        %7143 = vmatprep.subr.mxu0 0.0
        %7144 = vmatpush1.msra.mxu0 0.0
        %7145 = vmatprep.subr.mxu0 0.0
        %7146 = vmatpush1.msra.mxu0 0.0
        %7147 = vmatprep.subr.mxu0 0.0
        %7148 = vmatpush1.msra.mxu0 0.0
        %7149 = vmatprep.subr.mxu0 0.0
        %7150 = vmatpush1.msra.mxu0 0.0
        %7151 = vmatprep.subr.mxu0 0.0
        %7152 = vmatpush1.msra.mxu0 0.0
        %7153 = vmatprep.subr.mxu0 0.0
        %7154 = vmatpush1.msra.mxu0 0.0
        %7155 = vmatprep.mubr.f32.mxu0 0.0
        %v7156 = vand.u32 %v6605, 4294901760
        %7157 = vmatmul.mubr.f32.gmra.mrb[0].mxu0 %v7156
        %v7158 = vpop.f32.mrb[0].mxu0
        %v7159 = vadd.f32 %v6773, %v7158
        %v7160 = vpop.f32.mrb[0].mxu0
        %7161 = vmatprep.mubr.f32.mxu0 0.0
        %v7162 = vand.u32 %v6608, 4294901760
        %7163 = vmatmul.mubr.f32.gmra.mrb[0].mxu0 %v7162
        %v7164 = vpop.f32.mrb[0].mxu0
        %v7165 = vadd.f32 %v6783, %v7164
        %v7166 = vpop.f32.mrb[0].mxu0
        %7167 = vmatprep.mubr.f32.mxu0 0.0
        %v7168 = vand.u32 %v6611, 4294901760
        %7169 = vmatmul.mubr.f32.gmra.mrb[0].mxu0 %v7168
        %v7170 = vpop.f32.mrb[0].mxu0
        %v7171 = vadd.f32 %v6793, %v7170
        %v7172 = vpop.f32.mrb[0].mxu0
        %7173 = vmatprep.mubr.f32.mxu0 0.0
        %v7174 = vand.u32 %v6614, 4294901760
        %7175 = vmatmul.mubr.f32.gmra.mrb[0].mxu0 %v7174
        %v7176 = vpop.f32.mrb[0].mxu0
        %v7177 = vadd.f32 %v6803, %v7176
        %v7178 = vpop.f32.mrb[0].mxu0
        %7179 = vmatprep.mubr.f32.mxu0 0.0
        %v7180 = vand.u32 %v6617, 4294901760
        %7181 = vmatmul.mubr.f32.gmra.mrb[0].mxu0 %v7180
        %v7182 = vpop.f32.mrb[0].mxu0
        %v7183 = vadd.f32 %v6813, %v7182
        %v7184 = vpop.f32.mrb[0].mxu0
        %7185 = vmatprep.mubr.f32.mxu0 0.0
        %v7186 = vand.u32 %v6620, 4294901760
        %7187 = vmatmul.mubr.f32.gmra.mrb[0].mxu0 %v7186
        %v7188 = vpop.f32.mrb[0].mxu0
        %v7189 = vadd.f32 %v6823, %v7188
        %v7190 = vpop.f32.mrb[0].mxu0
        %7191 = vmatprep.mubr.f32.mxu0 0.0
        %v7192 = vand.u32 %v6623, 4294901760
        %7193 = vmatmul.mubr.f32.gmra.mrb[0].mxu0 %v7192
        %v7194 = vpop.f32.mrb[0].mxu0
        %v7195 = vadd.f32 %v6833, %v7194
        %v7196 = vpop.f32.mrb[0].mxu0
        %7197 = vmatprep.mubr.f32.mxu0 0.0
        %v7198 = vand.u32 %v6626, 4294901760
        %7199 = vmatmul.mubr.f32.gmra.mrb[0].mxu0 %v7198
        %v7200 = vpop.f32.mrb[0].mxu0
        %v7201 = vadd.f32 %v6843, %v7200
        %v7202 = vpop.f32.mrb[0].mxu0
        %7203 = vmatprep.mubr.f32.mxu0 0.0
        %v7204 = vand.u32 %v6629, 4294901760
        %7205 = vmatmul.mubr.f32.gmra.mrb[0].mxu0 %v7204
        %v7206 = vpop.f32.mrb[0].mxu0
        %v7207 = vadd.f32 %v6853, %v7206
        %v7208 = vpop.f32.mrb[0].mxu0
        %7209 = vmatprep.mubr.f32.mxu0 0.0
        %v7210 = vand.u32 %v6632, 4294901760
        %7211 = vmatmul.mubr.f32.gmra.mrb[0].mxu0 %v7210
        %v7212 = vpop.f32.mrb[0].mxu0
        %v7213 = vadd.f32 %v6863, %v7212
        %v7214 = vpop.f32.mrb[0].mxu0
        %7215 = vmatprep.mubr.f32.mxu0 0.0
        %v7216 = vand.u32 %v6635, 4294901760
        %7217 = vmatmul.mubr.f32.gmra.mrb[0].mxu0 %v7216
        %v7218 = vpop.f32.mrb[0].mxu0
        %v7219 = vadd.f32 %v6873, %v7218
        %v7220 = vpop.f32.mrb[0].mxu0
        %7221 = vmatprep.mubr.f32.mxu0 0.0
        %v7222 = vand.u32 %v6638, 4294901760
        %7223 = vmatmul.mubr.f32.gmra.mrb[0].mxu0 %v7222
        %v7224 = vpop.f32.mrb[0].mxu0
        %v7225 = vadd.f32 %v6883, %v7224
        %v7226 = vpop.f32.mrb[0].mxu0
        %7227 = vmatprep.mubr.f32.mxu0 0.0
        %v7228 = vand.u32 %v6641, 4294901760
        %7229 = vmatmul.mubr.f32.gmra.mrb[0].mxu0 %v7228
        %v7230 = vpop.f32.mrb[0].mxu0
        %v7231 = vadd.f32 %v6893, %v7230
        %v7232 = vpop.f32.mrb[0].mxu0
        %7233 = vmatprep.mubr.f32.mxu0 0.0
        %v7234 = vand.u32 %v6644, 4294901760
        %7235 = vmatmul.mubr.f32.gmra.mrb[0].mxu0 %v7234
        %v7236 = vpop.f32.mrb[0].mxu0
        %v7237 = vadd.f32 %v6903, %v7236
        %v7238 = vpop.f32.mrb[0].mxu0
        %7239 = vmatprep.mubr.f32.mxu0 0.0
        %v7240 = vand.u32 %v6647, 4294901760
        %7241 = vmatmul.mubr.f32.gmra.mrb[0].mxu0 %v7240
        %v7242 = vpop.f32.mrb[0].mxu0
        %v7243 = vadd.f32 %v6913, %v7242
        %v7244 = vpop.f32.mrb[0].mxu0
        %7245 = vmatprep.mubr.f32.mxu0 0.0
        %v7246 = vand.u32 %v6650, 4294901760
        %7247 = vmatmul.mubr.f32.gmra.mrb[0].mxu0 %v7246
        %v7248 = vpop.f32.mrb[0].mxu0
        %v7249 = vadd.f32 %v6923, %v7248
        %v7250 = vpop.f32.mrb[0].mxu0
        %7251 = vmatprep.mubr.f32.mxu0 0.0
        %v7252 = vand.u32 %v6653, 4294901760
        %7253 = vmatmul.mubr.f32.gmra.mrb[0].mxu0 %v7252
        %v7254 = vpop.f32.mrb[0].mxu0
        %v7255 = vadd.f32 %v6933, %v7254
        %v7256 = vpop.f32.mrb[0].mxu0
        %7257 = vmatprep.mubr.f32.mxu0 0.0
        %v7258 = vand.u32 %v6656, 4294901760
        %7259 = vmatmul.mubr.f32.gmra.mrb[0].mxu0 %v7258
        %v7260 = vpop.f32.mrb[0].mxu0
        %v7261 = vadd.f32 %v6943, %v7260
        %v7262 = vpop.f32.mrb[0].mxu0
        %7263 = vmatprep.mubr.f32.mxu0 0.0
        %v7264 = vand.u32 %v6659, 4294901760
        %7265 = vmatmul.mubr.f32.gmra.mrb[0].mxu0 %v7264
        %v7266 = vpop.f32.mrb[0].mxu0
        %v7267 = vadd.f32 %v6953, %v7266
        %v7268 = vpop.f32.mrb[0].mxu0
        %7269 = vmatprep.mubr.f32.mxu0 0.0
        %v7270 = vand.u32 %v6662, 4294901760
        %7271 = vmatmul.mubr.f32.gmra.mrb[0].mxu0 %v7270
        %v7272 = vpop.f32.mrb[0].mxu0
        %v7273 = vadd.f32 %v6963, %v7272
        %v7274 = vpop.f32.mrb[0].mxu0
        %7275 = vmatprep.mubr.f32.mxu0 0.0
        %v7276 = vand.u32 %v6665, 4294901760
        %7277 = vmatmul.mubr.f32.gmra.mrb[0].mxu0 %v7276
        %v7278 = vpop.f32.mrb[0].mxu0
        %v7279 = vadd.f32 %v6973, %v7278
        %v7280 = vpop.f32.mrb[0].mxu0
        %7281 = vmatprep.mubr.f32.mxu0 0.0
        %v7282 = vand.u32 %v6668, 4294901760
        %7283 = vmatmul.mubr.f32.gmra.mrb[0].mxu0 %v7282
        %v7284 = vpop.f32.mrb[0].mxu0
        %v7285 = vadd.f32 %v6983, %v7284
        %v7286 = vpop.f32.mrb[0].mxu0
        %7287 = vmatprep.mubr.f32.mxu0 0.0
        %v7288 = vand.u32 %v6671, 4294901760
        %7289 = vmatmul.mubr.f32.gmra.mrb[0].mxu0 %v7288
        %v7290 = vpop.f32.mrb[0].mxu0
        %v7291 = vadd.f32 %v6993, %v7290
        %v7292 = vpop.f32.mrb[0].mxu0
        %7293 = vmatprep.mubr.f32.mxu0 0.0
        %v7294 = vand.u32 %v6674, 4294901760
        %7295 = vmatmul.mubr.f32.gmra.mrb[0].mxu0 %v7294
        %v7296 = vpop.f32.mrb[0].mxu0
        %v7297 = vadd.f32 %v7003, %v7296
        %v7298 = vpop.f32.mrb[0].mxu0
        %7299 = vmatprep.mubr.f32.mxu0 0.0
        %v7300 = vand.u32 %v6677, 4294901760
        %7301 = vmatmul.mubr.f32.gmra.mrb[0].mxu0 %v7300
        %v7302 = vpop.f32.mrb[0].mxu0
        %v7303 = vadd.f32 %v7013, %v7302
        %v7304 = vpop.f32.mrb[0].mxu0
        %7305 = vmatprep.mubr.f32.mxu0 0.0
        %v7306 = vand.u32 %v6680, 4294901760
        %7307 = vmatmul.mubr.f32.gmra.mrb[0].mxu0 %v7306
        %v7308 = vpop.f32.mrb[0].mxu0
        %v7309 = vadd.f32 %v7023, %v7308
        %v7310 = vpop.f32.mrb[0].mxu0
        %7311 = vmatprep.mubr.f32.mxu0 0.0
        %v7312 = vand.u32 %v6683, 4294901760
        %7313 = vmatmul.mubr.f32.gmra.mrb[0].mxu0 %v7312
        %v7314 = vpop.f32.mrb[0].mxu0
        %v7315 = vadd.f32 %v7033, %v7314
        %v7316 = vpop.f32.mrb[0].mxu0
        %7317 = vmatprep.mubr.f32.mxu0 0.0
        %v7318 = vand.u32 %v6686, 4294901760
        %7319 = vmatmul.mubr.f32.gmra.mrb[0].mxu0 %v7318
        %v7320 = vpop.f32.mrb[0].mxu0
        %v7321 = vadd.f32 %v7043, %v7320
        %v7322 = vpop.f32.mrb[0].mxu0
        %7323 = vmatprep.mubr.f32.mxu0 0.0
        %v7324 = vand.u32 %v6689, 4294901760
        %7325 = vmatmul.mubr.f32.gmra.mrb[0].mxu0 %v7324
        %v7326 = vpop.f32.mrb[0].mxu0
        %v7327 = vadd.f32 %v7053, %v7326
        %v7328 = vpop.f32.mrb[0].mxu0
        %7329 = vmatprep.mubr.f32.mxu0 0.0
        %v7330 = vand.u32 %v6692, 4294901760
        %7331 = vmatmul.mubr.f32.gmra.mrb[0].mxu0 %v7330
        %v7332 = vpop.f32.mrb[0].mxu0
        %v7333 = vadd.f32 %v7063, %v7332
        %v7334 = vpop.f32.mrb[0].mxu0
        %7335 = vmatprep.mubr.f32.mxu0 0.0
        %v7336 = vand.u32 %v6695, 4294901760
        %7337 = vmatmul.mubr.f32.gmra.mrb[0].mxu0 %v7336
        %v7338 = vpop.f32.mrb[0].mxu0
        %v7339 = vadd.f32 %v7073, %v7338
        %v7340 = vpop.f32.mrb[0].mxu0
        %7341 = vmatprep.mubr.f32.mxu0 0.0
        %v7342 = vand.u32 %v6698, 4294901760
        %7343 = vmatmul.mubr.f32.gmra.mrb[0].mxu0 %v7342
        %v7344 = vpop.f32.mrb[0].mxu0
        %v7345 = vadd.f32 %v7083, %v7344
        %v7346 = vpop.f32.mrb[0].mxu0
        %7347 = vdwg.mxu0
        %7348 = vmatprep.subr.mxu0 0.0
        %v7349 = vand.u32 %v2689, 4294901760
        %v7350 = vsub.f32 %v2689, %v7349
        %7351 = vmatpush1.msra.mxu0 %v7350
        %7352 = vmatprep.subr.mxu0 0.0
        %7353 = vmatpush1.msra.mxu0 0.0
        %7354 = vmatprep.subr.mxu0 0.0
        %7355 = vmatpush1.msra.mxu0 0.0
        %7356 = vmatprep.subr.mxu0 0.0
        %7357 = vmatpush1.msra.mxu0 0.0
        %7358 = vmatprep.subr.mxu0 0.0
        %7359 = vmatpush1.msra.mxu0 0.0
        %7360 = vmatprep.subr.mxu0 0.0
        %7361 = vmatpush1.msra.mxu0 0.0
        %7362 = vmatprep.subr.mxu0 0.0
        %7363 = vmatpush1.msra.mxu0 0.0
        %7364 = vmatprep.subr.mxu0 0.0
        %7365 = vmatpush1.msra.mxu0 0.0
        %7366 = vmatprep.subr.mxu0 0.0
        %7367 = vmatpush1.msra.mxu0 0.0
        %7368 = vmatprep.subr.mxu0 0.0
        %7369 = vmatpush1.msra.mxu0 0.0
        %7370 = vmatprep.subr.mxu0 0.0
        %7371 = vmatpush1.msra.mxu0 0.0
        %7372 = vmatprep.subr.mxu0 0.0
        %7373 = vmatpush1.msra.mxu0 0.0
        %7374 = vmatprep.subr.mxu0 0.0
        %7375 = vmatpush1.msra.mxu0 0.0
        %7376 = vmatprep.subr.mxu0 0.0
        %7377 = vmatpush1.msra.mxu0 0.0
        %7378 = vmatprep.subr.mxu0 0.0
        %7379 = vmatpush1.msra.mxu0 0.0
        %7380 = vmatprep.subr.mxu0 0.0
        %7381 = vmatpush1.msra.mxu0 0.0
        %7382 = vmatprep.subr.mxu0 0.0
        %7383 = vmatpush1.msra.mxu0 0.0
        %7384 = vmatprep.subr.mxu0 0.0
        %7385 = vmatpush1.msra.mxu0 0.0
        %7386 = vmatprep.subr.mxu0 0.0
        %7387 = vmatpush1.msra.mxu0 0.0
        %7388 = vmatprep.subr.mxu0 0.0
        %7389 = vmatpush1.msra.mxu0 0.0
        %7390 = vmatprep.subr.mxu0 0.0
        %7391 = vmatpush1.msra.mxu0 0.0
        %7392 = vmatprep.subr.mxu0 0.0
        %7393 = vmatpush1.msra.mxu0 0.0
        %7394 = vmatprep.subr.mxu0 0.0
        %7395 = vmatpush1.msra.mxu0 0.0
        %7396 = vmatprep.subr.mxu0 0.0
        %7397 = vmatpush1.msra.mxu0 0.0
        %7398 = vmatprep.subr.mxu0 0.0
        %7399 = vmatpush1.msra.mxu0 0.0
        %7400 = vmatprep.subr.mxu0 0.0
        %7401 = vmatpush1.msra.mxu0 0.0
        %7402 = vmatprep.subr.mxu0 0.0
        %7403 = vmatpush1.msra.mxu0 0.0
        %7404 = vmatprep.subr.mxu0 0.0
        %7405 = vmatpush1.msra.mxu0 0.0
        %7406 = vmatprep.subr.mxu0 0.0
        %7407 = vmatpush1.msra.mxu0 0.0
        %7408 = vmatprep.subr.mxu0 0.0
        %7409 = vmatpush1.msra.mxu0 0.0
        %7410 = vmatprep.subr.mxu0 0.0
        %7411 = vmatpush1.msra.mxu0 0.0
        %7412 = vmatprep.subr.mxu0 0.0
        %7413 = vmatpush1.msra.mxu0 0.0
        %7414 = vmatprep.mubr.f32.mxu0 0.0
        %v7415 = vand.u32 %v6605, 4294901760
        %v7416 = vsub.f32 %v6605, %v7415
        %7417 = vmatmul.mubr.f32.gmra.mrb[0].mxu0 %v7416
        %v7418 = vpop.f32.mrb[0].mxu0
        %v7419 = vadd.f32 %v7159, %v7418
        %v7420 = vpop.f32.mrb[0].mxu0
        %7421 = vmatprep.mubr.f32.mxu0 0.0
        %v7422 = vand.u32 %v6608, 4294901760
        %v7423 = vsub.f32 %v6608, %v7422
        %7424 = vmatmul.mubr.f32.gmra.mrb[0].mxu0 %v7423
        %v7425 = vpop.f32.mrb[0].mxu0
        %v7426 = vadd.f32 %v7165, %v7425
        %v7427 = vpop.f32.mrb[0].mxu0
        %7428 = vmatprep.mubr.f32.mxu0 0.0
        %v7429 = vand.u32 %v6611, 4294901760
        %v7430 = vsub.f32 %v6611, %v7429
        %7431 = vmatmul.mubr.f32.gmra.mrb[0].mxu0 %v7430
        %v7432 = vpop.f32.mrb[0].mxu0
        %v7433 = vadd.f32 %v7171, %v7432
        %v7434 = vpop.f32.mrb[0].mxu0
        %7435 = vmatprep.mubr.f32.mxu0 0.0
        %v7436 = vand.u32 %v6614, 4294901760
        %v7437 = vsub.f32 %v6614, %v7436
        %7438 = vmatmul.mubr.f32.gmra.mrb[0].mxu0 %v7437
        %v7439 = vpop.f32.mrb[0].mxu0
        %v7440 = vadd.f32 %v7177, %v7439
        %v7441 = vpop.f32.mrb[0].mxu0
        %7442 = vmatprep.mubr.f32.mxu0 0.0
        %v7443 = vand.u32 %v6617, 4294901760
        %v7444 = vsub.f32 %v6617, %v7443
        %7445 = vmatmul.mubr.f32.gmra.mrb[0].mxu0 %v7444
        %v7446 = vpop.f32.mrb[0].mxu0
        %v7447 = vadd.f32 %v7183, %v7446
        %v7448 = vpop.f32.mrb[0].mxu0
        %7449 = vmatprep.mubr.f32.mxu0 0.0
        %v7450 = vand.u32 %v6620, 4294901760
        %v7451 = vsub.f32 %v6620, %v7450
        %7452 = vmatmul.mubr.f32.gmra.mrb[0].mxu0 %v7451
        %v7453 = vpop.f32.mrb[0].mxu0
        %v7454 = vadd.f32 %v7189, %v7453
        %v7455 = vpop.f32.mrb[0].mxu0
        %7456 = vmatprep.mubr.f32.mxu0 0.0
        %v7457 = vand.u32 %v6623, 4294901760
        %v7458 = vsub.f32 %v6623, %v7457
        %7459 = vmatmul.mubr.f32.gmra.mrb[0].mxu0 %v7458
        %v7460 = vpop.f32.mrb[0].mxu0
        %v7461 = vadd.f32 %v7195, %v7460
        %v7462 = vpop.f32.mrb[0].mxu0
        %7463 = vmatprep.mubr.f32.mxu0 0.0
        %v7464 = vand.u32 %v6626, 4294901760
        %v7465 = vsub.f32 %v6626, %v7464
        %7466 = vmatmul.mubr.f32.gmra.mrb[0].mxu0 %v7465
        %v7467 = vpop.f32.mrb[0].mxu0
        %v7468 = vadd.f32 %v7201, %v7467
        %v7469 = vpop.f32.mrb[0].mxu0
        %7470 = vmatprep.mubr.f32.mxu0 0.0
        %v7471 = vand.u32 %v6629, 4294901760
        %v7472 = vsub.f32 %v6629, %v7471
        %7473 = vmatmul.mubr.f32.gmra.mrb[0].mxu0 %v7472
        %v7474 = vpop.f32.mrb[0].mxu0
        %v7475 = vadd.f32 %v7207, %v7474
        %v7476 = vpop.f32.mrb[0].mxu0
        %7477 = vmatprep.mubr.f32.mxu0 0.0
        %v7478 = vand.u32 %v6632, 4294901760
        %v7479 = vsub.f32 %v6632, %v7478
        %7480 = vmatmul.mubr.f32.gmra.mrb[0].mxu0 %v7479
        %v7481 = vpop.f32.mrb[0].mxu0
        %v7482 = vadd.f32 %v7213, %v7481
        %v7483 = vpop.f32.mrb[0].mxu0
        %7484 = vmatprep.mubr.f32.mxu0 0.0
        %v7485 = vand.u32 %v6635, 4294901760
        %v7486 = vsub.f32 %v6635, %v7485
        %7487 = vmatmul.mubr.f32.gmra.mrb[0].mxu0 %v7486
        %v7488 = vpop.f32.mrb[0].mxu0
        %v7489 = vadd.f32 %v7219, %v7488
        %v7490 = vpop.f32.mrb[0].mxu0
        %7491 = vmatprep.mubr.f32.mxu0 0.0
        %v7492 = vand.u32 %v6638, 4294901760
        %v7493 = vsub.f32 %v6638, %v7492
        %7494 = vmatmul.mubr.f32.gmra.mrb[0].mxu0 %v7493
        %v7495 = vpop.f32.mrb[0].mxu0
        %v7496 = vadd.f32 %v7225, %v7495
        %v7497 = vpop.f32.mrb[0].mxu0
        %7498 = vmatprep.mubr.f32.mxu0 0.0
        %v7499 = vand.u32 %v6641, 4294901760
        %v7500 = vsub.f32 %v6641, %v7499
        %7501 = vmatmul.mubr.f32.gmra.mrb[0].mxu0 %v7500
        %v7502 = vpop.f32.mrb[0].mxu0
        %v7503 = vadd.f32 %v7231, %v7502
        %v7504 = vpop.f32.mrb[0].mxu0
        %7505 = vmatprep.mubr.f32.mxu0 0.0
        %v7506 = vand.u32 %v6644, 4294901760
        %v7507 = vsub.f32 %v6644, %v7506
        %7508 = vmatmul.mubr.f32.gmra.mrb[0].mxu0 %v7507
        %v7509 = vpop.f32.mrb[0].mxu0
        %v7510 = vadd.f32 %v7237, %v7509
        %v7511 = vpop.f32.mrb[0].mxu0
        %7512 = vmatprep.mubr.f32.mxu0 0.0
        %v7513 = vand.u32 %v6647, 4294901760
        %v7514 = vsub.f32 %v6647, %v7513
        %7515 = vmatmul.mubr.f32.gmra.mrb[0].mxu0 %v7514
        %v7516 = vpop.f32.mrb[0].mxu0
        %v7517 = vadd.f32 %v7243, %v7516
        %v7518 = vpop.f32.mrb[0].mxu0
        %7519 = vmatprep.mubr.f32.mxu0 0.0
        %v7520 = vand.u32 %v6650, 4294901760
        %v7521 = vsub.f32 %v6650, %v7520
        %7522 = vmatmul.mubr.f32.gmra.mrb[0].mxu0 %v7521
        %v7523 = vpop.f32.mrb[0].mxu0
        %v7524 = vadd.f32 %v7249, %v7523
        %v7525 = vpop.f32.mrb[0].mxu0
        %7526 = vmatprep.mubr.f32.mxu0 0.0
        %v7527 = vand.u32 %v6653, 4294901760
        %v7528 = vsub.f32 %v6653, %v7527
        %7529 = vmatmul.mubr.f32.gmra.mrb[0].mxu0 %v7528
        %v7530 = vpop.f32.mrb[0].mxu0
        %v7531 = vadd.f32 %v7255, %v7530
        %v7532 = vpop.f32.mrb[0].mxu0
        %7533 = vmatprep.mubr.f32.mxu0 0.0
        %v7534 = vand.u32 %v6656, 4294901760
        %v7535 = vsub.f32 %v6656, %v7534
        %7536 = vmatmul.mubr.f32.gmra.mrb[0].mxu0 %v7535
        %v7537 = vpop.f32.mrb[0].mxu0
        %v7538 = vadd.f32 %v7261, %v7537
        %v7539 = vpop.f32.mrb[0].mxu0
        %7540 = vmatprep.mubr.f32.mxu0 0.0
        %v7541 = vand.u32 %v6659, 4294901760
        %v7542 = vsub.f32 %v6659, %v7541
        %7543 = vmatmul.mubr.f32.gmra.mrb[0].mxu0 %v7542
        %v7544 = vpop.f32.mrb[0].mxu0
        %v7545 = vadd.f32 %v7267, %v7544
        %v7546 = vpop.f32.mrb[0].mxu0
        %7547 = vmatprep.mubr.f32.mxu0 0.0
        %v7548 = vand.u32 %v6662, 4294901760
        %v7549 = vsub.f32 %v6662, %v7548
        %7550 = vmatmul.mubr.f32.gmra.mrb[0].mxu0 %v7549
        %v7551 = vpop.f32.mrb[0].mxu0
        %v7552 = vadd.f32 %v7273, %v7551
        %v7553 = vpop.f32.mrb[0].mxu0
        %7554 = vmatprep.mubr.f32.mxu0 0.0
        %v7555 = vand.u32 %v6665, 4294901760
        %v7556 = vsub.f32 %v6665, %v7555
        %7557 = vmatmul.mubr.f32.gmra.mrb[0].mxu0 %v7556
        %v7558 = vpop.f32.mrb[0].mxu0
        %v7559 = vadd.f32 %v7279, %v7558
        %v7560 = vpop.f32.mrb[0].mxu0
        %7561 = vmatprep.mubr.f32.mxu0 0.0
        %v7562 = vand.u32 %v6668, 4294901760
        %v7563 = vsub.f32 %v6668, %v7562
        %7564 = vmatmul.mubr.f32.gmra.mrb[0].mxu0 %v7563
        %v7565 = vpop.f32.mrb[0].mxu0
        %v7566 = vadd.f32 %v7285, %v7565
        %v7567 = vpop.f32.mrb[0].mxu0
        %7568 = vmatprep.mubr.f32.mxu0 0.0
        %v7569 = vand.u32 %v6671, 4294901760
        %v7570 = vsub.f32 %v6671, %v7569
        %7571 = vmatmul.mubr.f32.gmra.mrb[0].mxu0 %v7570
        %v7572 = vpop.f32.mrb[0].mxu0
        %v7573 = vadd.f32 %v7291, %v7572
        %v7574 = vpop.f32.mrb[0].mxu0
        %7575 = vmatprep.mubr.f32.mxu0 0.0
        %v7576 = vand.u32 %v6674, 4294901760
        %v7577 = vsub.f32 %v6674, %v7576
        %7578 = vmatmul.mubr.f32.gmra.mrb[0].mxu0 %v7577
        %v7579 = vpop.f32.mrb[0].mxu0
        %v7580 = vadd.f32 %v7297, %v7579
        %v7581 = vpop.f32.mrb[0].mxu0
        %7582 = vmatprep.mubr.f32.mxu0 0.0
        %v7583 = vand.u32 %v6677, 4294901760
        %v7584 = vsub.f32 %v6677, %v7583
        %7585 = vmatmul.mubr.f32.gmra.mrb[0].mxu0 %v7584
        %v7586 = vpop.f32.mrb[0].mxu0
        %v7587 = vadd.f32 %v7303, %v7586
        %v7588 = vpop.f32.mrb[0].mxu0
        %7589 = vmatprep.mubr.f32.mxu0 0.0
        %v7590 = vand.u32 %v6680, 4294901760
        %v7591 = vsub.f32 %v6680, %v7590
        %7592 = vmatmul.mubr.f32.gmra.mrb[0].mxu0 %v7591
        %v7593 = vpop.f32.mrb[0].mxu0
        %v7594 = vadd.f32 %v7309, %v7593
        %v7595 = vpop.f32.mrb[0].mxu0
        %7596 = vmatprep.mubr.f32.mxu0 0.0
        %v7597 = vand.u32 %v6683, 4294901760
        %v7598 = vsub.f32 %v6683, %v7597
        %7599 = vmatmul.mubr.f32.gmra.mrb[0].mxu0 %v7598
        %v7600 = vpop.f32.mrb[0].mxu0
        %v7601 = vadd.f32 %v7315, %v7600
        %v7602 = vpop.f32.mrb[0].mxu0
        %7603 = vmatprep.mubr.f32.mxu0 0.0
        %v7604 = vand.u32 %v6686, 4294901760
        %v7605 = vsub.f32 %v6686, %v7604
        %7606 = vmatmul.mubr.f32.gmra.mrb[0].mxu0 %v7605
        %v7607 = vpop.f32.mrb[0].mxu0
        %v7608 = vadd.f32 %v7321, %v7607
        %v7609 = vpop.f32.mrb[0].mxu0
        %7610 = vmatprep.mubr.f32.mxu0 0.0
        %v7611 = vand.u32 %v6689, 4294901760
        %v7612 = vsub.f32 %v6689, %v7611
        %7613 = vmatmul.mubr.f32.gmra.mrb[0].mxu0 %v7612
        %v7614 = vpop.f32.mrb[0].mxu0
        %v7615 = vadd.f32 %v7327, %v7614
        %v7616 = vpop.f32.mrb[0].mxu0
        %7617 = vmatprep.mubr.f32.mxu0 0.0
        %v7618 = vand.u32 %v6692, 4294901760
        %v7619 = vsub.f32 %v6692, %v7618
        %7620 = vmatmul.mubr.f32.gmra.mrb[0].mxu0 %v7619
        %v7621 = vpop.f32.mrb[0].mxu0
        %v7622 = vadd.f32 %v7333, %v7621
        %v7623 = vpop.f32.mrb[0].mxu0
        %7624 = vmatprep.mubr.f32.mxu0 0.0
        %v7625 = vand.u32 %v6695, 4294901760
        %v7626 = vsub.f32 %v6695, %v7625
        %7627 = vmatmul.mubr.f32.gmra.mrb[0].mxu0 %v7626
        %v7628 = vpop.f32.mrb[0].mxu0
        %v7629 = vadd.f32 %v7339, %v7628
        %v7630 = vpop.f32.mrb[0].mxu0
        %7631 = vmatprep.mubr.f32.mxu0 0.0
        %v7632 = vand.u32 %v6698, 4294901760
        %v7633 = vsub.f32 %v6698, %v7632
        %7634 = vmatmul.mubr.f32.gmra.mrb[0].mxu0 %v7633
        %v7635 = vpop.f32.mrb[0].mxu0
        %v7636 = vadd.f32 %v7345, %v7635
        %v7637 = vpop.f32.mrb[0].mxu0
        %7638 = vdwg.mxu0
        %7639 = vmatprep.subr.mxu0 0.0
        %v7640 = vand.u32 %v2689, 4294901760
        %7641 = vmatpush1.msra.mxu0 %v7640
        %7642 = vmatprep.subr.mxu0 0.0
        %7643 = vmatpush1.msra.mxu0 0.0
        %7644 = vmatprep.subr.mxu0 0.0
        %7645 = vmatpush1.msra.mxu0 0.0
        %7646 = vmatprep.subr.mxu0 0.0
        %7647 = vmatpush1.msra.mxu0 0.0
        %7648 = vmatprep.subr.mxu0 0.0
        %7649 = vmatpush1.msra.mxu0 0.0
        %7650 = vmatprep.subr.mxu0 0.0
        %7651 = vmatpush1.msra.mxu0 0.0
        %7652 = vmatprep.subr.mxu0 0.0
        %7653 = vmatpush1.msra.mxu0 0.0
        %7654 = vmatprep.subr.mxu0 0.0
        %7655 = vmatpush1.msra.mxu0 0.0
        %7656 = vmatprep.subr.mxu0 0.0
        %7657 = vmatpush1.msra.mxu0 0.0
        %7658 = vmatprep.subr.mxu0 0.0
        %7659 = vmatpush1.msra.mxu0 0.0
        %7660 = vmatprep.subr.mxu0 0.0
        %7661 = vmatpush1.msra.mxu0 0.0
        %7662 = vmatprep.subr.mxu0 0.0
        %7663 = vmatpush1.msra.mxu0 0.0
        %7664 = vmatprep.subr.mxu0 0.0
        %7665 = vmatpush1.msra.mxu0 0.0
        %7666 = vmatprep.subr.mxu0 0.0
        %7667 = vmatpush1.msra.mxu0 0.0
        %7668 = vmatprep.subr.mxu0 0.0
        %7669 = vmatpush1.msra.mxu0 0.0
        %7670 = vmatprep.subr.mxu0 0.0
        %7671 = vmatpush1.msra.mxu0 0.0
        %7672 = vmatprep.subr.mxu0 0.0
        %7673 = vmatpush1.msra.mxu0 0.0
        %7674 = vmatprep.subr.mxu0 0.0
        %7675 = vmatpush1.msra.mxu0 0.0
        %7676 = vmatprep.subr.mxu0 0.0
        %7677 = vmatpush1.msra.mxu0 0.0
        %7678 = vmatprep.subr.mxu0 0.0
        %7679 = vmatpush1.msra.mxu0 0.0
        %7680 = vmatprep.subr.mxu0 0.0
        %7681 = vmatpush1.msra.mxu0 0.0
        %7682 = vmatprep.subr.mxu0 0.0
        %7683 = vmatpush1.msra.mxu0 0.0
        %7684 = vmatprep.subr.mxu0 0.0
        %7685 = vmatpush1.msra.mxu0 0.0
        %7686 = vmatprep.subr.mxu0 0.0
        %7687 = vmatpush1.msra.mxu0 0.0
        %7688 = vmatprep.subr.mxu0 0.0
        %7689 = vmatpush1.msra.mxu0 0.0
        %7690 = vmatprep.subr.mxu0 0.0
        %7691 = vmatpush1.msra.mxu0 0.0
        %7692 = vmatprep.subr.mxu0 0.0
        %7693 = vmatpush1.msra.mxu0 0.0
        %7694 = vmatprep.subr.mxu0 0.0
        %7695 = vmatpush1.msra.mxu0 0.0
        %7696 = vmatprep.subr.mxu0 0.0
        %7697 = vmatpush1.msra.mxu0 0.0
        %7698 = vmatprep.subr.mxu0 0.0
        %7699 = vmatpush1.msra.mxu0 0.0
        %7700 = vmatprep.subr.mxu0 0.0
        %7701 = vmatpush1.msra.mxu0 0.0
        %7702 = vmatprep.subr.mxu0 0.0
        %7703 = vmatpush1.msra.mxu0 0.0
        %7704 = vmatprep.mubr.f32.mxu0 0.0
        %v7705 = vand.u32 %v6605, 4294901760
        %v7706 = vsub.f32 %v6605, %v7705
        %v7707 = vand.u32 %v7706, 4294901760
        %7708 = vmatmul.mubr.f32.gmra.mrb[0].mxu0 %v7707
        %v7709 = vpop.f32.mrb[0].mxu0
        %v7710 = vadd.f32 %v7419, %v7709
        %v7711 = vpop.f32.mrb[0].mxu0
        %7712 = vmatprep.mubr.f32.mxu0 0.0
        %v7713 = vand.u32 %v6608, 4294901760
        %v7714 = vsub.f32 %v6608, %v7713
        %v7715 = vand.u32 %v7714, 4294901760
        %7716 = vmatmul.mubr.f32.gmra.mrb[0].mxu0 %v7715
        %v7717 = vpop.f32.mrb[0].mxu0
        %v7718 = vadd.f32 %v7426, %v7717
        %v7719 = vpop.f32.mrb[0].mxu0
        %7720 = vmatprep.mubr.f32.mxu0 0.0
        %v7721 = vand.u32 %v6611, 4294901760
        %v7722 = vsub.f32 %v6611, %v7721
        %v7723 = vand.u32 %v7722, 4294901760
        %7724 = vmatmul.mubr.f32.gmra.mrb[0].mxu0 %v7723
        %v7725 = vpop.f32.mrb[0].mxu0
        %v7726 = vadd.f32 %v7433, %v7725
        %v7727 = vpop.f32.mrb[0].mxu0
        %7728 = vmatprep.mubr.f32.mxu0 0.0
        %v7729 = vand.u32 %v6614, 4294901760
        %v7730 = vsub.f32 %v6614, %v7729
        %v7731 = vand.u32 %v7730, 4294901760
        %7732 = vmatmul.mubr.f32.gmra.mrb[0].mxu0 %v7731
        %v7733 = vpop.f32.mrb[0].mxu0
        %v7734 = vadd.f32 %v7440, %v7733
        %v7735 = vpop.f32.mrb[0].mxu0
        %7736 = vmatprep.mubr.f32.mxu0 0.0
        %v7737 = vand.u32 %v6617, 4294901760
        %v7738 = vsub.f32 %v6617, %v7737
        %v7739 = vand.u32 %v7738, 4294901760
        %7740 = vmatmul.mubr.f32.gmra.mrb[0].mxu0 %v7739
        %v7741 = vpop.f32.mrb[0].mxu0
        %v7742 = vadd.f32 %v7447, %v7741
        %v7743 = vpop.f32.mrb[0].mxu0
        %7744 = vmatprep.mubr.f32.mxu0 0.0
        %v7745 = vand.u32 %v6620, 4294901760
        %v7746 = vsub.f32 %v6620, %v7745
        %v7747 = vand.u32 %v7746, 4294901760
        %7748 = vmatmul.mubr.f32.gmra.mrb[0].mxu0 %v7747
        %v7749 = vpop.f32.mrb[0].mxu0
        %v7750 = vadd.f32 %v7454, %v7749
        %v7751 = vpop.f32.mrb[0].mxu0
        %7752 = vmatprep.mubr.f32.mxu0 0.0
        %v7753 = vand.u32 %v6623, 4294901760
        %v7754 = vsub.f32 %v6623, %v7753
        %v7755 = vand.u32 %v7754, 4294901760
        %7756 = vmatmul.mubr.f32.gmra.mrb[0].mxu0 %v7755
        %v7757 = vpop.f32.mrb[0].mxu0
        %v7758 = vadd.f32 %v7461, %v7757
        %v7759 = vpop.f32.mrb[0].mxu0
        %7760 = vmatprep.mubr.f32.mxu0 0.0
        %v7761 = vand.u32 %v6626, 4294901760
        %v7762 = vsub.f32 %v6626, %v7761
        %v7763 = vand.u32 %v7762, 4294901760
        %7764 = vmatmul.mubr.f32.gmra.mrb[0].mxu0 %v7763
        %v7765 = vpop.f32.mrb[0].mxu0
        %v7766 = vadd.f32 %v7468, %v7765
        %v7767 = vpop.f32.mrb[0].mxu0
        %7768 = vmatprep.mubr.f32.mxu0 0.0
        %v7769 = vand.u32 %v6629, 4294901760
        %v7770 = vsub.f32 %v6629, %v7769
        %v7771 = vand.u32 %v7770, 4294901760
        %7772 = vmatmul.mubr.f32.gmra.mrb[0].mxu0 %v7771
        %v7773 = vpop.f32.mrb[0].mxu0
        %v7774 = vadd.f32 %v7475, %v7773
        %v7775 = vpop.f32.mrb[0].mxu0
        %7776 = vmatprep.mubr.f32.mxu0 0.0
        %v7777 = vand.u32 %v6632, 4294901760
        %v7778 = vsub.f32 %v6632, %v7777
        %v7779 = vand.u32 %v7778, 4294901760
        %7780 = vmatmul.mubr.f32.gmra.mrb[0].mxu0 %v7779
        %v7781 = vpop.f32.mrb[0].mxu0
        %v7782 = vadd.f32 %v7482, %v7781
        %v7783 = vpop.f32.mrb[0].mxu0
        %7784 = vmatprep.mubr.f32.mxu0 0.0
        %v7785 = vand.u32 %v6635, 4294901760
        %v7786 = vsub.f32 %v6635, %v7785
        %v7787 = vand.u32 %v7786, 4294901760
        %7788 = vmatmul.mubr.f32.gmra.mrb[0].mxu0 %v7787
        %v7789 = vpop.f32.mrb[0].mxu0
        %v7790 = vadd.f32 %v7489, %v7789
        %v7791 = vpop.f32.mrb[0].mxu0
        %7792 = vmatprep.mubr.f32.mxu0 0.0
        %v7793 = vand.u32 %v6638, 4294901760
        %v7794 = vsub.f32 %v6638, %v7793
        %v7795 = vand.u32 %v7794, 4294901760
        %7796 = vmatmul.mubr.f32.gmra.mrb[0].mxu0 %v7795
        %v7797 = vpop.f32.mrb[0].mxu0
        %v7798 = vadd.f32 %v7496, %v7797
        %v7799 = vpop.f32.mrb[0].mxu0
        %7800 = vmatprep.mubr.f32.mxu0 0.0
        %v7801 = vand.u32 %v6641, 4294901760
        %v7802 = vsub.f32 %v6641, %v7801
        %v7803 = vand.u32 %v7802, 4294901760
        %7804 = vmatmul.mubr.f32.gmra.mrb[0].mxu0 %v7803
        %v7805 = vpop.f32.mrb[0].mxu0
        %v7806 = vadd.f32 %v7503, %v7805
        %v7807 = vpop.f32.mrb[0].mxu0
        %7808 = vmatprep.mubr.f32.mxu0 0.0
        %v7809 = vand.u32 %v6644, 4294901760
        %v7810 = vsub.f32 %v6644, %v7809
        %v7811 = vand.u32 %v7810, 4294901760
        %7812 = vmatmul.mubr.f32.gmra.mrb[0].mxu0 %v7811
        %v7813 = vpop.f32.mrb[0].mxu0
        %v7814 = vadd.f32 %v7510, %v7813
        %v7815 = vpop.f32.mrb[0].mxu0
        %7816 = vmatprep.mubr.f32.mxu0 0.0
        %v7817 = vand.u32 %v6647, 4294901760
        %v7818 = vsub.f32 %v6647, %v7817
        %v7819 = vand.u32 %v7818, 4294901760
        %7820 = vmatmul.mubr.f32.gmra.mrb[0].mxu0 %v7819
        %v7821 = vpop.f32.mrb[0].mxu0
        %v7822 = vadd.f32 %v7517, %v7821
        %v7823 = vpop.f32.mrb[0].mxu0
        %7824 = vmatprep.mubr.f32.mxu0 0.0
        %v7825 = vand.u32 %v6650, 4294901760
        %v7826 = vsub.f32 %v6650, %v7825
        %v7827 = vand.u32 %v7826, 4294901760
        %7828 = vmatmul.mubr.f32.gmra.mrb[0].mxu0 %v7827
        %v7829 = vpop.f32.mrb[0].mxu0
        %v7830 = vadd.f32 %v7524, %v7829
        %v7831 = vpop.f32.mrb[0].mxu0
        %7832 = vmatprep.mubr.f32.mxu0 0.0
        %v7833 = vand.u32 %v6653, 4294901760
        %v7834 = vsub.f32 %v6653, %v7833
        %v7835 = vand.u32 %v7834, 4294901760
        %7836 = vmatmul.mubr.f32.gmra.mrb[0].mxu0 %v7835
        %v7837 = vpop.f32.mrb[0].mxu0
        %v7838 = vadd.f32 %v7531, %v7837
        %v7839 = vpop.f32.mrb[0].mxu0
        %7840 = vmatprep.mubr.f32.mxu0 0.0
        %v7841 = vand.u32 %v6656, 4294901760
        %v7842 = vsub.f32 %v6656, %v7841
        %v7843 = vand.u32 %v7842, 4294901760
        %7844 = vmatmul.mubr.f32.gmra.mrb[0].mxu0 %v7843
        %v7845 = vpop.f32.mrb[0].mxu0
        %v7846 = vadd.f32 %v7538, %v7845
        %v7847 = vpop.f32.mrb[0].mxu0
        %7848 = vmatprep.mubr.f32.mxu0 0.0
        %v7849 = vand.u32 %v6659, 4294901760
        %v7850 = vsub.f32 %v6659, %v7849
        %v7851 = vand.u32 %v7850, 4294901760
        %7852 = vmatmul.mubr.f32.gmra.mrb[0].mxu0 %v7851
        %v7853 = vpop.f32.mrb[0].mxu0
        %v7854 = vadd.f32 %v7545, %v7853
        %v7855 = vpop.f32.mrb[0].mxu0
        %7856 = vmatprep.mubr.f32.mxu0 0.0
        %v7857 = vand.u32 %v6662, 4294901760
        %v7858 = vsub.f32 %v6662, %v7857
        %v7859 = vand.u32 %v7858, 4294901760
        %7860 = vmatmul.mubr.f32.gmra.mrb[0].mxu0 %v7859
        %v7861 = vpop.f32.mrb[0].mxu0
        %v7862 = vadd.f32 %v7552, %v7861
        %v7863 = vpop.f32.mrb[0].mxu0
        %7864 = vmatprep.mubr.f32.mxu0 0.0
        %v7865 = vand.u32 %v6665, 4294901760
        %v7866 = vsub.f32 %v6665, %v7865
        %v7867 = vand.u32 %v7866, 4294901760
        %7868 = vmatmul.mubr.f32.gmra.mrb[0].mxu0 %v7867
        %v7869 = vpop.f32.mrb[0].mxu0
        %v7870 = vadd.f32 %v7559, %v7869
        %v7871 = vpop.f32.mrb[0].mxu0
        %7872 = vmatprep.mubr.f32.mxu0 0.0
        %v7873 = vand.u32 %v6668, 4294901760
        %v7874 = vsub.f32 %v6668, %v7873
        %v7875 = vand.u32 %v7874, 4294901760
        %7876 = vmatmul.mubr.f32.gmra.mrb[0].mxu0 %v7875
        %v7877 = vpop.f32.mrb[0].mxu0
        %v7878 = vadd.f32 %v7566, %v7877
        %v7879 = vpop.f32.mrb[0].mxu0
        %7880 = vmatprep.mubr.f32.mxu0 0.0
        %v7881 = vand.u32 %v6671, 4294901760
        %v7882 = vsub.f32 %v6671, %v7881
        %v7883 = vand.u32 %v7882, 4294901760
        %7884 = vmatmul.mubr.f32.gmra.mrb[0].mxu0 %v7883
        %v7885 = vpop.f32.mrb[0].mxu0
        %v7886 = vadd.f32 %v7573, %v7885
        %v7887 = vpop.f32.mrb[0].mxu0
        %7888 = vmatprep.mubr.f32.mxu0 0.0
        %v7889 = vand.u32 %v6674, 4294901760
        %v7890 = vsub.f32 %v6674, %v7889
        %v7891 = vand.u32 %v7890, 4294901760
        %7892 = vmatmul.mubr.f32.gmra.mrb[0].mxu0 %v7891
        %v7893 = vpop.f32.mrb[0].mxu0
        %v7894 = vadd.f32 %v7580, %v7893
        %v7895 = vpop.f32.mrb[0].mxu0
        %7896 = vmatprep.mubr.f32.mxu0 0.0
        %v7897 = vand.u32 %v6677, 4294901760
        %v7898 = vsub.f32 %v6677, %v7897
        %v7899 = vand.u32 %v7898, 4294901760
        %7900 = vmatmul.mubr.f32.gmra.mrb[0].mxu0 %v7899
        %v7901 = vpop.f32.mrb[0].mxu0
        %v7902 = vadd.f32 %v7587, %v7901
        %v7903 = vpop.f32.mrb[0].mxu0
        %7904 = vmatprep.mubr.f32.mxu0 0.0
        %v7905 = vand.u32 %v6680, 4294901760
        %v7906 = vsub.f32 %v6680, %v7905
        %v7907 = vand.u32 %v7906, 4294901760
        %7908 = vmatmul.mubr.f32.gmra.mrb[0].mxu0 %v7907
        %v7909 = vpop.f32.mrb[0].mxu0
        %v7910 = vadd.f32 %v7594, %v7909
        %v7911 = vpop.f32.mrb[0].mxu0
        %7912 = vmatprep.mubr.f32.mxu0 0.0
        %v7913 = vand.u32 %v6683, 4294901760
        %v7914 = vsub.f32 %v6683, %v7913
        %v7915 = vand.u32 %v7914, 4294901760
        %7916 = vmatmul.mubr.f32.gmra.mrb[0].mxu0 %v7915
        %v7917 = vpop.f32.mrb[0].mxu0
        %v7918 = vadd.f32 %v7601, %v7917
        %v7919 = vpop.f32.mrb[0].mxu0
        %7920 = vmatprep.mubr.f32.mxu0 0.0
        %v7921 = vand.u32 %v6686, 4294901760
        %v7922 = vsub.f32 %v6686, %v7921
        %v7923 = vand.u32 %v7922, 4294901760
        %7924 = vmatmul.mubr.f32.gmra.mrb[0].mxu0 %v7923
        %v7925 = vpop.f32.mrb[0].mxu0
        %v7926 = vadd.f32 %v7608, %v7925
        %v7927 = vpop.f32.mrb[0].mxu0
        %7928 = vmatprep.mubr.f32.mxu0 0.0
        %v7929 = vand.u32 %v6689, 4294901760
        %v7930 = vsub.f32 %v6689, %v7929
        %v7931 = vand.u32 %v7930, 4294901760
        %7932 = vmatmul.mubr.f32.gmra.mrb[0].mxu0 %v7931
        %v7933 = vpop.f32.mrb[0].mxu0
        %v7934 = vadd.f32 %v7615, %v7933
        %v7935 = vpop.f32.mrb[0].mxu0
        %7936 = vmatprep.mubr.f32.mxu0 0.0
        %v7937 = vand.u32 %v6692, 4294901760
        %v7938 = vsub.f32 %v6692, %v7937
        %v7939 = vand.u32 %v7938, 4294901760
        %7940 = vmatmul.mubr.f32.gmra.mrb[0].mxu0 %v7939
        %v7941 = vpop.f32.mrb[0].mxu0
        %v7942 = vadd.f32 %v7622, %v7941
        %v7943 = vpop.f32.mrb[0].mxu0
        %7944 = vmatprep.mubr.f32.mxu0 0.0
        %v7945 = vand.u32 %v6695, 4294901760
        %v7946 = vsub.f32 %v6695, %v7945
        %v7947 = vand.u32 %v7946, 4294901760
        %7948 = vmatmul.mubr.f32.gmra.mrb[0].mxu0 %v7947
        %v7949 = vpop.f32.mrb[0].mxu0
        %v7950 = vadd.f32 %v7629, %v7949
        %v7951 = vpop.f32.mrb[0].mxu0
        %7952 = vmatprep.mubr.f32.mxu0 0.0
        %v7953 = vand.u32 %v6698, 4294901760
        %v7954 = vsub.f32 %v6698, %v7953
        %v7955 = vand.u32 %v7954, 4294901760
        %7956 = vmatmul.mubr.f32.gmra.mrb[0].mxu0 %v7955
        %v7957 = vpop.f32.mrb[0].mxu0
        %v7958 = vadd.f32 %v7636, %v7957
        %v7959 = vpop.f32.mrb[0].mxu0
        %7960 = vdwg.mxu0
        %7961 = vmatprep.subr.mxu0 0.0
        %v7962 = vand.u32 %v2689, 4294901760
        %v7963 = vsub.f32 %v2689, %v7962
        %v7964 = vand.u32 %v7963, 4294901760
        %7965 = vmatpush1.msra.mxu0 %v7964
        %7966 = vmatprep.subr.mxu0 0.0
        %7967 = vmatpush1.msra.mxu0 0.0
        %7968 = vmatprep.subr.mxu0 0.0
        %7969 = vmatpush1.msra.mxu0 0.0
        %7970 = vmatprep.subr.mxu0 0.0
        %7971 = vmatpush1.msra.mxu0 0.0
        %7972 = vmatprep.subr.mxu0 0.0
        %7973 = vmatpush1.msra.mxu0 0.0
        %7974 = vmatprep.subr.mxu0 0.0
        %7975 = vmatpush1.msra.mxu0 0.0
        %7976 = vmatprep.subr.mxu0 0.0
        %7977 = vmatpush1.msra.mxu0 0.0
        %7978 = vmatprep.subr.mxu0 0.0
        %7979 = vmatpush1.msra.mxu0 0.0
        %7980 = vmatprep.subr.mxu0 0.0
        %7981 = vmatpush1.msra.mxu0 0.0
        %7982 = vmatprep.subr.mxu0 0.0
        %7983 = vmatpush1.msra.mxu0 0.0
        %7984 = vmatprep.subr.mxu0 0.0
        %7985 = vmatpush1.msra.mxu0 0.0
        %7986 = vmatprep.subr.mxu0 0.0
        %7987 = vmatpush1.msra.mxu0 0.0
        %7988 = vmatprep.subr.mxu0 0.0
        %7989 = vmatpush1.msra.mxu0 0.0
        %7990 = vmatprep.subr.mxu0 0.0
        %7991 = vmatpush1.msra.mxu0 0.0
        %7992 = vmatprep.subr.mxu0 0.0
        %7993 = vmatpush1.msra.mxu0 0.0
        %7994 = vmatprep.subr.mxu0 0.0
        %7995 = vmatpush1.msra.mxu0 0.0
        %7996 = vmatprep.subr.mxu0 0.0
        %7997 = vmatpush1.msra.mxu0 0.0
        %7998 = vmatprep.subr.mxu0 0.0
        %7999 = vmatpush1.msra.mxu0 0.0
        %8000 = vmatprep.subr.mxu0 0.0
        %8001 = vmatpush1.msra.mxu0 0.0
        %8002 = vmatprep.subr.mxu0 0.0
        %8003 = vmatpush1.msra.mxu0 0.0
        %8004 = vmatprep.subr.mxu0 0.0
        %8005 = vmatpush1.msra.mxu0 0.0
        %8006 = vmatprep.subr.mxu0 0.0
        %8007 = vmatpush1.msra.mxu0 0.0
        %8008 = vmatprep.subr.mxu0 0.0
        %8009 = vmatpush1.msra.mxu0 0.0
        %8010 = vmatprep.subr.mxu0 0.0
        %8011 = vmatpush1.msra.mxu0 0.0
        %8012 = vmatprep.subr.mxu0 0.0
        %8013 = vmatpush1.msra.mxu0 0.0
        %8014 = vmatprep.subr.mxu0 0.0
        %8015 = vmatpush1.msra.mxu0 0.0
        %8016 = vmatprep.subr.mxu0 0.0
        %8017 = vmatpush1.msra.mxu0 0.0
        %8018 = vmatprep.subr.mxu0 0.0
        %8019 = vmatpush1.msra.mxu0 0.0
        %8020 = vmatprep.subr.mxu0 0.0
        %8021 = vmatpush1.msra.mxu0 0.0
        %8022 = vmatprep.subr.mxu0 0.0
        %8023 = vmatpush1.msra.mxu0 0.0
        %8024 = vmatprep.subr.mxu0 0.0
        %8025 = vmatpush1.msra.mxu0 0.0
        %8026 = vmatprep.subr.mxu0 0.0
        %8027 = vmatpush1.msra.mxu0 0.0
        %8028 = vmatprep.mubr.f32.mxu0 0.0
        %v8029 = vand.u32 %v6605, 4294901760
        %8030 = vmatmul.mubr.f32.gmra.mrb[0].mxu0 %v8029
        %v8031 = vpop.f32.mrb[0].mxu0
        %v8032 = vadd.f32 %v7710, %v8031
        %v8033 = vpop.f32.mrb[0].mxu0
        %8034 = vmatprep.mubr.f32.mxu0 0.0
        %v8035 = vand.u32 %v6608, 4294901760
        %8036 = vmatmul.mubr.f32.gmra.mrb[0].mxu0 %v8035
        %v8037 = vpop.f32.mrb[0].mxu0
        %v8038 = vadd.f32 %v7718, %v8037
        %v8039 = vpop.f32.mrb[0].mxu0
        %8040 = vmatprep.mubr.f32.mxu0 0.0
        %v8041 = vand.u32 %v6611, 4294901760
        %8042 = vmatmul.mubr.f32.gmra.mrb[0].mxu0 %v8041
        %v8043 = vpop.f32.mrb[0].mxu0
        %v8044 = vadd.f32 %v7726, %v8043
        %v8045 = vpop.f32.mrb[0].mxu0
        %8046 = vmatprep.mubr.f32.mxu0 0.0
        %v8047 = vand.u32 %v6614, 4294901760
        %8048 = vmatmul.mubr.f32.gmra.mrb[0].mxu0 %v8047
        %v8049 = vpop.f32.mrb[0].mxu0
        %v8050 = vadd.f32 %v7734, %v8049
        %v8051 = vpop.f32.mrb[0].mxu0
        %8052 = vmatprep.mubr.f32.mxu0 0.0
        %v8053 = vand.u32 %v6617, 4294901760
        %8054 = vmatmul.mubr.f32.gmra.mrb[0].mxu0 %v8053
        %v8055 = vpop.f32.mrb[0].mxu0
        %v8056 = vadd.f32 %v7742, %v8055
        %v8057 = vpop.f32.mrb[0].mxu0
        %8058 = vmatprep.mubr.f32.mxu0 0.0
        %v8059 = vand.u32 %v6620, 4294901760
        %8060 = vmatmul.mubr.f32.gmra.mrb[0].mxu0 %v8059
        %v8061 = vpop.f32.mrb[0].mxu0
        %v8062 = vadd.f32 %v7750, %v8061
        %v8063 = vpop.f32.mrb[0].mxu0
        %8064 = vmatprep.mubr.f32.mxu0 0.0
        %v8065 = vand.u32 %v6623, 4294901760
        %8066 = vmatmul.mubr.f32.gmra.mrb[0].mxu0 %v8065
        %v8067 = vpop.f32.mrb[0].mxu0
        %v8068 = vadd.f32 %v7758, %v8067
        %v8069 = vpop.f32.mrb[0].mxu0
        %8070 = vmatprep.mubr.f32.mxu0 0.0
        %v8071 = vand.u32 %v6626, 4294901760
        %8072 = vmatmul.mubr.f32.gmra.mrb[0].mxu0 %v8071
        %v8073 = vpop.f32.mrb[0].mxu0
        %v8074 = vadd.f32 %v7766, %v8073
        %v8075 = vpop.f32.mrb[0].mxu0
        %8076 = vmatprep.mubr.f32.mxu0 0.0
        %v8077 = vand.u32 %v6629, 4294901760
        %8078 = vmatmul.mubr.f32.gmra.mrb[0].mxu0 %v8077
        %v8079 = vpop.f32.mrb[0].mxu0
        %v8080 = vadd.f32 %v7774, %v8079
        %v8081 = vpop.f32.mrb[0].mxu0
        %8082 = vmatprep.mubr.f32.mxu0 0.0
        %v8083 = vand.u32 %v6632, 4294901760
        %8084 = vmatmul.mubr.f32.gmra.mrb[0].mxu0 %v8083
        %v8085 = vpop.f32.mrb[0].mxu0
        %v8086 = vadd.f32 %v7782, %v8085
        %v8087 = vpop.f32.mrb[0].mxu0
        %8088 = vmatprep.mubr.f32.mxu0 0.0
        %v8089 = vand.u32 %v6635, 4294901760
        %8090 = vmatmul.mubr.f32.gmra.mrb[0].mxu0 %v8089
        %v8091 = vpop.f32.mrb[0].mxu0
        %v8092 = vadd.f32 %v7790, %v8091
        %v8093 = vpop.f32.mrb[0].mxu0
        %8094 = vmatprep.mubr.f32.mxu0 0.0
        %v8095 = vand.u32 %v6638, 4294901760
        %8096 = vmatmul.mubr.f32.gmra.mrb[0].mxu0 %v8095
        %v8097 = vpop.f32.mrb[0].mxu0
        %v8098 = vadd.f32 %v7798, %v8097
        %v8099 = vpop.f32.mrb[0].mxu0
        %8100 = vmatprep.mubr.f32.mxu0 0.0
        %v8101 = vand.u32 %v6641, 4294901760
        %8102 = vmatmul.mubr.f32.gmra.mrb[0].mxu0 %v8101
        %v8103 = vpop.f32.mrb[0].mxu0
        %v8104 = vadd.f32 %v7806, %v8103
        %v8105 = vpop.f32.mrb[0].mxu0
        %8106 = vmatprep.mubr.f32.mxu0 0.0
        %v8107 = vand.u32 %v6644, 4294901760
        %8108 = vmatmul.mubr.f32.gmra.mrb[0].mxu0 %v8107
        %v8109 = vpop.f32.mrb[0].mxu0
        %v8110 = vadd.f32 %v7814, %v8109
        %v8111 = vpop.f32.mrb[0].mxu0
        %8112 = vmatprep.mubr.f32.mxu0 0.0
        %v8113 = vand.u32 %v6647, 4294901760
        %8114 = vmatmul.mubr.f32.gmra.mrb[0].mxu0 %v8113
        %v8115 = vpop.f32.mrb[0].mxu0
        %v8116 = vadd.f32 %v7822, %v8115
        %v8117 = vpop.f32.mrb[0].mxu0
        %8118 = vmatprep.mubr.f32.mxu0 0.0
        %v8119 = vand.u32 %v6650, 4294901760
        %8120 = vmatmul.mubr.f32.gmra.mrb[0].mxu0 %v8119
        %v8121 = vpop.f32.mrb[0].mxu0
        %v8122 = vadd.f32 %v7830, %v8121
        %v8123 = vpop.f32.mrb[0].mxu0
        %8124 = vmatprep.mubr.f32.mxu0 0.0
        %v8125 = vand.u32 %v6653, 4294901760
        %8126 = vmatmul.mubr.f32.gmra.mrb[0].mxu0 %v8125
        %v8127 = vpop.f32.mrb[0].mxu0
        %v8128 = vadd.f32 %v7838, %v8127
        %v8129 = vpop.f32.mrb[0].mxu0
        %8130 = vmatprep.mubr.f32.mxu0 0.0
        %v8131 = vand.u32 %v6656, 4294901760
        %8132 = vmatmul.mubr.f32.gmra.mrb[0].mxu0 %v8131
        %v8133 = vpop.f32.mrb[0].mxu0
        %v8134 = vadd.f32 %v7846, %v8133
        %v8135 = vpop.f32.mrb[0].mxu0
        %8136 = vmatprep.mubr.f32.mxu0 0.0
        %v8137 = vand.u32 %v6659, 4294901760
        %8138 = vmatmul.mubr.f32.gmra.mrb[0].mxu0 %v8137
        %v8139 = vpop.f32.mrb[0].mxu0
        %v8140 = vadd.f32 %v7854, %v8139
        %v8141 = vpop.f32.mrb[0].mxu0
        %8142 = vmatprep.mubr.f32.mxu0 0.0
        %v8143 = vand.u32 %v6662, 4294901760
        %8144 = vmatmul.mubr.f32.gmra.mrb[0].mxu0 %v8143
        %v8145 = vpop.f32.mrb[0].mxu0
        %v8146 = vadd.f32 %v7862, %v8145
        %v8147 = vpop.f32.mrb[0].mxu0
        %8148 = vmatprep.mubr.f32.mxu0 0.0
        %v8149 = vand.u32 %v6665, 4294901760
        %8150 = vmatmul.mubr.f32.gmra.mrb[0].mxu0 %v8149
        %v8151 = vpop.f32.mrb[0].mxu0
        %v8152 = vadd.f32 %v7870, %v8151
        %v8153 = vpop.f32.mrb[0].mxu0
        %8154 = vmatprep.mubr.f32.mxu0 0.0
        %v8155 = vand.u32 %v6668, 4294901760
        %8156 = vmatmul.mubr.f32.gmra.mrb[0].mxu0 %v8155
        %v8157 = vpop.f32.mrb[0].mxu0
        %v8158 = vadd.f32 %v7878, %v8157
        %v8159 = vpop.f32.mrb[0].mxu0
        %8160 = vmatprep.mubr.f32.mxu0 0.0
        %v8161 = vand.u32 %v6671, 4294901760
        %8162 = vmatmul.mubr.f32.gmra.mrb[0].mxu0 %v8161
        %v8163 = vpop.f32.mrb[0].mxu0
        %v8164 = vadd.f32 %v7886, %v8163
        %v8165 = vpop.f32.mrb[0].mxu0
        %8166 = vmatprep.mubr.f32.mxu0 0.0
        %v8167 = vand.u32 %v6674, 4294901760
        %8168 = vmatmul.mubr.f32.gmra.mrb[0].mxu0 %v8167
        %v8169 = vpop.f32.mrb[0].mxu0
        %v8170 = vadd.f32 %v7894, %v8169
        %v8171 = vpop.f32.mrb[0].mxu0
        %8172 = vmatprep.mubr.f32.mxu0 0.0
        %v8173 = vand.u32 %v6677, 4294901760
        %8174 = vmatmul.mubr.f32.gmra.mrb[0].mxu0 %v8173
        %v8175 = vpop.f32.mrb[0].mxu0
        %v8176 = vadd.f32 %v7902, %v8175
        %v8177 = vpop.f32.mrb[0].mxu0
        %8178 = vmatprep.mubr.f32.mxu0 0.0
        %v8179 = vand.u32 %v6680, 4294901760
        %8180 = vmatmul.mubr.f32.gmra.mrb[0].mxu0 %v8179
        %v8181 = vpop.f32.mrb[0].mxu0
        %v8182 = vadd.f32 %v7910, %v8181
        %v8183 = vpop.f32.mrb[0].mxu0
        %8184 = vmatprep.mubr.f32.mxu0 0.0
        %v8185 = vand.u32 %v6683, 4294901760
        %8186 = vmatmul.mubr.f32.gmra.mrb[0].mxu0 %v8185
        %v8187 = vpop.f32.mrb[0].mxu0
        %v8188 = vadd.f32 %v7918, %v8187
        %v8189 = vpop.f32.mrb[0].mxu0
        %8190 = vmatprep.mubr.f32.mxu0 0.0
        %v8191 = vand.u32 %v6686, 4294901760
        %8192 = vmatmul.mubr.f32.gmra.mrb[0].mxu0 %v8191
        %v8193 = vpop.f32.mrb[0].mxu0
        %v8194 = vadd.f32 %v7926, %v8193
        %v8195 = vpop.f32.mrb[0].mxu0
        %8196 = vmatprep.mubr.f32.mxu0 0.0
        %v8197 = vand.u32 %v6689, 4294901760
        %8198 = vmatmul.mubr.f32.gmra.mrb[0].mxu0 %v8197
        %v8199 = vpop.f32.mrb[0].mxu0
        %v8200 = vadd.f32 %v7934, %v8199
        %v8201 = vpop.f32.mrb[0].mxu0
        %8202 = vmatprep.mubr.f32.mxu0 0.0
        %v8203 = vand.u32 %v6692, 4294901760
        %8204 = vmatmul.mubr.f32.gmra.mrb[0].mxu0 %v8203
        %v8205 = vpop.f32.mrb[0].mxu0
        %v8206 = vadd.f32 %v7942, %v8205
        %v8207 = vpop.f32.mrb[0].mxu0
        %8208 = vmatprep.mubr.f32.mxu0 0.0
        %v8209 = vand.u32 %v6695, 4294901760
        %8210 = vmatmul.mubr.f32.gmra.mrb[0].mxu0 %v8209
        %v8211 = vpop.f32.mrb[0].mxu0
        %v8212 = vadd.f32 %v7950, %v8211
        %v8213 = vpop.f32.mrb[0].mxu0
        %8214 = vmatprep.mubr.f32.mxu0 0.0
        %v8215 = vand.u32 %v6698, 4294901760
        %8216 = vmatmul.mubr.f32.gmra.mrb[0].mxu0 %v8215
        %v8217 = vpop.f32.mrb[0].mxu0
        %v8218 = vadd.f32 %v7958, %v8217
        %v8219 = vpop.f32.mrb[0].mxu0
        %8220 = vdwg.mxu0
        %8221 = vmatprep.subr.mxu0 0.0
        %v8222 = vand.u32 %v2689, 4294901760
        %8223 = vmatpush1.msra.mxu0 %v8222
        %8224 = vmatprep.subr.mxu0 0.0
        %8225 = vmatpush1.msra.mxu0 0.0
        %8226 = vmatprep.subr.mxu0 0.0
        %8227 = vmatpush1.msra.mxu0 0.0
        %8228 = vmatprep.subr.mxu0 0.0
        %8229 = vmatpush1.msra.mxu0 0.0
        %8230 = vmatprep.subr.mxu0 0.0
        %8231 = vmatpush1.msra.mxu0 0.0
        %8232 = vmatprep.subr.mxu0 0.0
        %8233 = vmatpush1.msra.mxu0 0.0
        %8234 = vmatprep.subr.mxu0 0.0
        %8235 = vmatpush1.msra.mxu0 0.0
        %8236 = vmatprep.subr.mxu0 0.0
        %8237 = vmatpush1.msra.mxu0 0.0
        %8238 = vmatprep.subr.mxu0 0.0
        %8239 = vmatpush1.msra.mxu0 0.0
        %8240 = vmatprep.subr.mxu0 0.0
        %8241 = vmatpush1.msra.mxu0 0.0
        %8242 = vmatprep.subr.mxu0 0.0
        %8243 = vmatpush1.msra.mxu0 0.0
        %8244 = vmatprep.subr.mxu0 0.0
        %8245 = vmatpush1.msra.mxu0 0.0
        %8246 = vmatprep.subr.mxu0 0.0
        %8247 = vmatpush1.msra.mxu0 0.0
        %8248 = vmatprep.subr.mxu0 0.0
        %8249 = vmatpush1.msra.mxu0 0.0
        %8250 = vmatprep.subr.mxu0 0.0
        %8251 = vmatpush1.msra.mxu0 0.0
        %8252 = vmatprep.subr.mxu0 0.0
        %8253 = vmatpush1.msra.mxu0 0.0
        %8254 = vmatprep.subr.mxu0 0.0
        %8255 = vmatpush1.msra.mxu0 0.0
        %8256 = vmatprep.subr.mxu0 0.0
        %8257 = vmatpush1.msra.mxu0 0.0
        %8258 = vmatprep.subr.mxu0 0.0
        %8259 = vmatpush1.msra.mxu0 0.0
        %8260 = vmatprep.subr.mxu0 0.0
        %8261 = vmatpush1.msra.mxu0 0.0
        %8262 = vmatprep.subr.mxu0 0.0
        %8263 = vmatpush1.msra.mxu0 0.0
        %8264 = vmatprep.subr.mxu0 0.0
        %8265 = vmatpush1.msra.mxu0 0.0
        %8266 = vmatprep.subr.mxu0 0.0
        %8267 = vmatpush1.msra.mxu0 0.0
        %8268 = vmatprep.subr.mxu0 0.0
        %8269 = vmatpush1.msra.mxu0 0.0
        %8270 = vmatprep.subr.mxu0 0.0
        %8271 = vmatpush1.msra.mxu0 0.0
        %8272 = vmatprep.subr.mxu0 0.0
        %8273 = vmatpush1.msra.mxu0 0.0
        %8274 = vmatprep.subr.mxu0 0.0
        %8275 = vmatpush1.msra.mxu0 0.0
        %8276 = vmatprep.subr.mxu0 0.0
        %8277 = vmatpush1.msra.mxu0 0.0
        %8278 = vmatprep.subr.mxu0 0.0
        %8279 = vmatpush1.msra.mxu0 0.0
        %8280 = vmatprep.subr.mxu0 0.0
        %8281 = vmatpush1.msra.mxu0 0.0
        %8282 = vmatprep.subr.mxu0 0.0
        %8283 = vmatpush1.msra.mxu0 0.0
        %8284 = vmatprep.subr.mxu0 0.0
        %8285 = vmatpush1.msra.mxu0 0.0
        %8286 = vmatprep.mubr.f32.mxu0 0.0
        %v8287 = vand.u32 %v6605, 4294901760
        %8288 = vmatmul.mubr.f32.gmra.mrb[0].mxu0 %v8287
        %v8289 = vpop.f32.mrb[0].mxu0
        %v8290 = vadd.f32 %v8032, %v8289
        %v8291 = vpop.f32.mrb[0].mxu0
        %8292 = vmatprep.mubr.f32.mxu0 0.0
        %v8293 = vand.u32 %v6608, 4294901760
        %8294 = vmatmul.mubr.f32.gmra.mrb[0].mxu0 %v8293
        %v8295 = vpop.f32.mrb[0].mxu0
        %v8296 = vadd.f32 %v8038, %v8295
        %v8297 = vpop.f32.mrb[0].mxu0
        %8298 = vmatprep.mubr.f32.mxu0 0.0
        %v8299 = vand.u32 %v6611, 4294901760
        %8300 = vmatmul.mubr.f32.gmra.mrb[0].mxu0 %v8299
        %v8301 = vpop.f32.mrb[0].mxu0
        %v8302 = vadd.f32 %v8044, %v8301
        %v8303 = vpop.f32.mrb[0].mxu0
        %8304 = vmatprep.mubr.f32.mxu0 0.0
        %v8305 = vand.u32 %v6614, 4294901760
        %8306 = vmatmul.mubr.f32.gmra.mrb[0].mxu0 %v8305
        %v8307 = vpop.f32.mrb[0].mxu0
        %v8308 = vadd.f32 %v8050, %v8307
        %v8309 = vpop.f32.mrb[0].mxu0
        %8310 = vmatprep.mubr.f32.mxu0 0.0
        %v8311 = vand.u32 %v6617, 4294901760
        %8312 = vmatmul.mubr.f32.gmra.mrb[0].mxu0 %v8311
        %v8313 = vpop.f32.mrb[0].mxu0
        %v8314 = vadd.f32 %v8056, %v8313
        %v8315 = vpop.f32.mrb[0].mxu0
        %8316 = vmatprep.mubr.f32.mxu0 0.0
        %v8317 = vand.u32 %v6620, 4294901760
        %8318 = vmatmul.mubr.f32.gmra.mrb[0].mxu0 %v8317
        %v8319 = vpop.f32.mrb[0].mxu0
        %v8320 = vadd.f32 %v8062, %v8319
        %v8321 = vpop.f32.mrb[0].mxu0
        %8322 = vmatprep.mubr.f32.mxu0 0.0
        %v8323 = vand.u32 %v6623, 4294901760
        %8324 = vmatmul.mubr.f32.gmra.mrb[0].mxu0 %v8323
        %v8325 = vpop.f32.mrb[0].mxu0
        %v8326 = vadd.f32 %v8068, %v8325
        %v8327 = vpop.f32.mrb[0].mxu0
        %8328 = vmatprep.mubr.f32.mxu0 0.0
        %v8329 = vand.u32 %v6626, 4294901760
        %8330 = vmatmul.mubr.f32.gmra.mrb[0].mxu0 %v8329
        %v8331 = vpop.f32.mrb[0].mxu0
        %v8332 = vadd.f32 %v8074, %v8331
        %v8333 = vpop.f32.mrb[0].mxu0
        %8334 = vmatprep.mubr.f32.mxu0 0.0
        %v8335 = vand.u32 %v6629, 4294901760
        %8336 = vmatmul.mubr.f32.gmra.mrb[0].mxu0 %v8335
        %v8337 = vpop.f32.mrb[0].mxu0
        %v8338 = vadd.f32 %v8080, %v8337
        %v8339 = vpop.f32.mrb[0].mxu0
        %8340 = vmatprep.mubr.f32.mxu0 0.0
        %v8341 = vand.u32 %v6632, 4294901760
        %8342 = vmatmul.mubr.f32.gmra.mrb[0].mxu0 %v8341
        %v8343 = vpop.f32.mrb[0].mxu0
        %v8344 = vadd.f32 %v8086, %v8343
        %v8345 = vpop.f32.mrb[0].mxu0
        %8346 = vmatprep.mubr.f32.mxu0 0.0
        %v8347 = vand.u32 %v6635, 4294901760
        %8348 = vmatmul.mubr.f32.gmra.mrb[0].mxu0 %v8347
        %v8349 = vpop.f32.mrb[0].mxu0
        %v8350 = vadd.f32 %v8092, %v8349
        %v8351 = vpop.f32.mrb[0].mxu0
        %8352 = vmatprep.mubr.f32.mxu0 0.0
        %v8353 = vand.u32 %v6638, 4294901760
        %8354 = vmatmul.mubr.f32.gmra.mrb[0].mxu0 %v8353
        %v8355 = vpop.f32.mrb[0].mxu0
        %v8356 = vadd.f32 %v8098, %v8355
        %v8357 = vpop.f32.mrb[0].mxu0
        %8358 = vmatprep.mubr.f32.mxu0 0.0
        %v8359 = vand.u32 %v6641, 4294901760
        %8360 = vmatmul.mubr.f32.gmra.mrb[0].mxu0 %v8359
        %v8361 = vpop.f32.mrb[0].mxu0
        %v8362 = vadd.f32 %v8104, %v8361
        %v8363 = vpop.f32.mrb[0].mxu0
        %8364 = vmatprep.mubr.f32.mxu0 0.0
        %v8365 = vand.u32 %v6644, 4294901760
        %8366 = vmatmul.mubr.f32.gmra.mrb[0].mxu0 %v8365
        %v8367 = vpop.f32.mrb[0].mxu0
        %v8368 = vadd.f32 %v8110, %v8367
        %v8369 = vpop.f32.mrb[0].mxu0
        %8370 = vmatprep.mubr.f32.mxu0 0.0
        %v8371 = vand.u32 %v6647, 4294901760
        %8372 = vmatmul.mubr.f32.gmra.mrb[0].mxu0 %v8371
        %v8373 = vpop.f32.mrb[0].mxu0
        %v8374 = vadd.f32 %v8116, %v8373
        %v8375 = vpop.f32.mrb[0].mxu0
        %8376 = vmatprep.mubr.f32.mxu0 0.0
        %v8377 = vand.u32 %v6650, 4294901760
        %8378 = vmatmul.mubr.f32.gmra.mrb[0].mxu0 %v8377
        %v8379 = vpop.f32.mrb[0].mxu0
        %v8380 = vadd.f32 %v8122, %v8379
        %v8381 = vpop.f32.mrb[0].mxu0
        %8382 = vmatprep.mubr.f32.mxu0 0.0
        %v8383 = vand.u32 %v6653, 4294901760
        %8384 = vmatmul.mubr.f32.gmra.mrb[0].mxu0 %v8383
        %v8385 = vpop.f32.mrb[0].mxu0
        %v8386 = vadd.f32 %v8128, %v8385
        %v8387 = vpop.f32.mrb[0].mxu0
        %8388 = vmatprep.mubr.f32.mxu0 0.0
        %v8389 = vand.u32 %v6656, 4294901760
        %8390 = vmatmul.mubr.f32.gmra.mrb[0].mxu0 %v8389
        %v8391 = vpop.f32.mrb[0].mxu0
        %v8392 = vadd.f32 %v8134, %v8391
        %v8393 = vpop.f32.mrb[0].mxu0
        %8394 = vmatprep.mubr.f32.mxu0 0.0
        %v8395 = vand.u32 %v6659, 4294901760
        %8396 = vmatmul.mubr.f32.gmra.mrb[0].mxu0 %v8395
        %v8397 = vpop.f32.mrb[0].mxu0
        %v8398 = vadd.f32 %v8140, %v8397
        %v8399 = vpop.f32.mrb[0].mxu0
        %8400 = vmatprep.mubr.f32.mxu0 0.0
        %v8401 = vand.u32 %v6662, 4294901760
        %8402 = vmatmul.mubr.f32.gmra.mrb[0].mxu0 %v8401
        %v8403 = vpop.f32.mrb[0].mxu0
        %v8404 = vadd.f32 %v8146, %v8403
        %v8405 = vpop.f32.mrb[0].mxu0
        %8406 = vmatprep.mubr.f32.mxu0 0.0
        %v8407 = vand.u32 %v6665, 4294901760
        %8408 = vmatmul.mubr.f32.gmra.mrb[0].mxu0 %v8407
        %v8409 = vpop.f32.mrb[0].mxu0
        %v8410 = vadd.f32 %v8152, %v8409
        %v8411 = vpop.f32.mrb[0].mxu0
        %8412 = vmatprep.mubr.f32.mxu0 0.0
        %v8413 = vand.u32 %v6668, 4294901760
        %8414 = vmatmul.mubr.f32.gmra.mrb[0].mxu0 %v8413
        %v8415 = vpop.f32.mrb[0].mxu0
        %v8416 = vadd.f32 %v8158, %v8415
        %v8417 = vpop.f32.mrb[0].mxu0
        %8418 = vmatprep.mubr.f32.mxu0 0.0
        %v8419 = vand.u32 %v6671, 4294901760
        %8420 = vmatmul.mubr.f32.gmra.mrb[0].mxu0 %v8419
        %v8421 = vpop.f32.mrb[0].mxu0
        %v8422 = vadd.f32 %v8164, %v8421
        %v8423 = vpop.f32.mrb[0].mxu0
        %8424 = vmatprep.mubr.f32.mxu0 0.0
        %v8425 = vand.u32 %v6674, 4294901760
        %8426 = vmatmul.mubr.f32.gmra.mrb[0].mxu0 %v8425
        %v8427 = vpop.f32.mrb[0].mxu0
        %v8428 = vadd.f32 %v8170, %v8427
        %v8429 = vpop.f32.mrb[0].mxu0
        %8430 = vmatprep.mubr.f32.mxu0 0.0
        %v8431 = vand.u32 %v6677, 4294901760
        %8432 = vmatmul.mubr.f32.gmra.mrb[0].mxu0 %v8431
        %v8433 = vpop.f32.mrb[0].mxu0
        %v8434 = vadd.f32 %v8176, %v8433
        %v8435 = vpop.f32.mrb[0].mxu0
        %8436 = vmatprep.mubr.f32.mxu0 0.0
        %v8437 = vand.u32 %v6680, 4294901760
        %8438 = vmatmul.mubr.f32.gmra.mrb[0].mxu0 %v8437
        %v8439 = vpop.f32.mrb[0].mxu0
        %v8440 = vadd.f32 %v8182, %v8439
        %v8441 = vpop.f32.mrb[0].mxu0
        %8442 = vmatprep.mubr.f32.mxu0 0.0
        %v8443 = vand.u32 %v6683, 4294901760
        %8444 = vmatmul.mubr.f32.gmra.mrb[0].mxu0 %v8443
        %v8445 = vpop.f32.mrb[0].mxu0
        %v8446 = vadd.f32 %v8188, %v8445
        %v8447 = vpop.f32.mrb[0].mxu0
        %8448 = vmatprep.mubr.f32.mxu0 0.0
        %v8449 = vand.u32 %v6686, 4294901760
        %8450 = vmatmul.mubr.f32.gmra.mrb[0].mxu0 %v8449
        %v8451 = vpop.f32.mrb[0].mxu0
        %v8452 = vadd.f32 %v8194, %v8451
        %v8453 = vpop.f32.mrb[0].mxu0
        %8454 = vmatprep.mubr.f32.mxu0 0.0
        %v8455 = vand.u32 %v6689, 4294901760
        %8456 = vmatmul.mubr.f32.gmra.mrb[0].mxu0 %v8455
        %v8457 = vpop.f32.mrb[0].mxu0
        %v8458 = vadd.f32 %v8200, %v8457
        %v8459 = vpop.f32.mrb[0].mxu0
        %8460 = vmatprep.mubr.f32.mxu0 0.0
        %v8461 = vand.u32 %v6692, 4294901760
        %8462 = vmatmul.mubr.f32.gmra.mrb[0].mxu0 %v8461
        %v8463 = vpop.f32.mrb[0].mxu0
        %v8464 = vadd.f32 %v8206, %v8463
        %v8465 = vpop.f32.mrb[0].mxu0
        %8466 = vmatprep.mubr.f32.mxu0 0.0
        %v8467 = vand.u32 %v6695, 4294901760
        %8468 = vmatmul.mubr.f32.gmra.mrb[0].mxu0 %v8467
        %v8469 = vpop.f32.mrb[0].mxu0
        %v8470 = vadd.f32 %v8212, %v8469
        %v8471 = vpop.f32.mrb[0].mxu0
        %8472 = vmatprep.mubr.f32.mxu0 0.0
        %v8473 = vand.u32 %v6698, 4294901760
        %8474 = vmatmul.mubr.f32.gmra.mrb[0].mxu0 %v8473
        %v8475 = vpop.f32.mrb[0].mxu0
        %v8476 = vadd.f32 %v8218, %v8475
        %v8477 = vpop.f32.mrb[0].mxu0
        %8478 = vdwg.mxu0
        %v8479 = vmul.f32 %v4470, %v8290
        %v8480 = vmul.f32 %v4471, %v8296
        %v8481 = vmul.f32 %v4472, %v8302
        %v8482 = vmul.f32 %v4473, %v8308
        %v8483 = vmul.f32 %v4474, %v8314
        %v8484 = vmul.f32 %v4475, %v8320
        %v8485 = vmul.f32 %v4476, %v8326
        %v8486 = vmul.f32 %v4477, %v8332
        %v8487 = vmul.f32 %v4478, %v8338
        %v8488 = vmul.f32 %v4479, %v8344
        %v8489 = vmul.f32 %v4480, %v8350
        %v8490 = vmul.f32 %v4481, %v8356
        %v8491 = vmul.f32 %v4482, %v8362
        %v8492 = vmul.f32 %v4483, %v8368
        %v8493 = vmul.f32 %v4484, %v8374
        %v8494 = vmul.f32 %v4485, %v8380
        %v8495 = vmul.f32 %v4486, %v8386
        %v8496 = vmul.f32 %v4487, %v8392
        %v8497 = vmul.f32 %v4488, %v8398
        %v8498 = vmul.f32 %v4489, %v8404
        %v8499 = vmul.f32 %v4490, %v8410
        %v8500 = vmul.f32 %v4491, %v8416
        %v8501 = vmul.f32 %v4492, %v8422
        %v8502 = vmul.f32 %v4493, %v8428
        %v8503 = vmul.f32 %v4494, %v8434
        %v8504 = vmul.f32 %v4495, %v8440
        %v8505 = vmul.f32 %v4496, %v8446
        %v8506 = vmul.f32 %v4497, %v8452
        %v8507 = vmul.f32 %v4498, %v8458
        %v8508 = vmul.f32 %v4499, %v8464
        %v8509 = vmul.f32 %v4500, %v8470
        %v8510 = vmul.f32 %v4501, %v8476
        %v8511 = vld [vmem:[%s4] sm:$0x1]
        %v8513 = vlaneseq
        %v8514 = vshrl.u32 %v8513, 7
        %v8515 = vsub.s32 0, %v8514
        %v8516 = vrot.slane %v8511, %v8515
        %v8518 = vmul.f32 %v8479, %v8516
        %v8519 = vmul.f32 %v8480, %v8516
        %v8520 = vmul.f32 %v8481, %v8516
        %v8521 = vmul.f32 %v8482, %v8516
        %v8522 = vmul.f32 %v8483, %v8516
        %v8523 = vmul.f32 %v8484, %v8516
        %v8524 = vmul.f32 %v8485, %v8516
        %v8525 = vmul.f32 %v8486, %v8516
        %v8526 = vmul.f32 %v8487, %v8516
        %v8527 = vmul.f32 %v8488, %v8516
        %v8528 = vmul.f32 %v8489, %v8516
        %v8529 = vmul.f32 %v8490, %v8516
        %v8530 = vmul.f32 %v8491, %v8516
        %v8531 = vmul.f32 %v8492, %v8516
        %v8532 = vmul.f32 %v8493, %v8516
        %v8533 = vmul.f32 %v8494, %v8516
        %v8534 = vmul.f32 %v8495, %v8516
        %v8535 = vmul.f32 %v8496, %v8516
        %v8536 = vmul.f32 %v8497, %v8516
        %v8537 = vmul.f32 %v8498, %v8516
        %v8538 = vmul.f32 %v8499, %v8516
        %v8539 = vmul.f32 %v8500, %v8516
        %v8540 = vmul.f32 %v8501, %v8516
        %v8541 = vmul.f32 %v8502, %v8516
        %v8542 = vmul.f32 %v8503, %v8516
        %v8543 = vmul.f32 %v8504, %v8516
        %v8544 = vmul.f32 %v8505, %v8516
        %v8545 = vmul.f32 %v8506, %v8516
        %v8546 = vmul.f32 %v8507, %v8516
        %v8547 = vmul.f32 %v8508, %v8516
        %v8548 = vmul.f32 %v8509, %v8516
        %v8549 = vmul.f32 %v8510, %v8516
        %v8550 = vld [vmem:[%s5] sm:$0x1]
        %v8552 = vlaneseq
        %v8553 = vshrl.u32 %v8552, 7
        %v8554 = vsub.s32 0, %v8553
        %v8555 = vrot.slane %v8550, %v8554
        %v8557 = vadd.f32 %v8518, %v8555
        %v8558 = vadd.f32 %v8519, %v8555
        %v8559 = vadd.f32 %v8520, %v8555
        %v8560 = vadd.f32 %v8521, %v8555
        %v8561 = vadd.f32 %v8522, %v8555
        %v8562 = vadd.f32 %v8523, %v8555
        %v8563 = vadd.f32 %v8524, %v8555
        %v8564 = vadd.f32 %v8525, %v8555
        %v8565 = vadd.f32 %v8526, %v8555
        %v8566 = vadd.f32 %v8527, %v8555
        %v8567 = vadd.f32 %v8528, %v8555
        %v8568 = vadd.f32 %v8529, %v8555
        %v8569 = vadd.f32 %v8530, %v8555
        %v8570 = vadd.f32 %v8531, %v8555
        %v8571 = vadd.f32 %v8532, %v8555
        %v8572 = vadd.f32 %v8533, %v8555
        %v8573 = vadd.f32 %v8534, %v8555
        %v8574 = vadd.f32 %v8535, %v8555
        %v8575 = vadd.f32 %v8536, %v8555
        %v8576 = vadd.f32 %v8537, %v8555
        %v8577 = vadd.f32 %v8538, %v8555
        %v8578 = vadd.f32 %v8539, %v8555
        %v8579 = vadd.f32 %v8540, %v8555
        %v8580 = vadd.f32 %v8541, %v8555
        %v8581 = vadd.f32 %v8542, %v8555
        %v8582 = vadd.f32 %v8543, %v8555
        %v8583 = vadd.f32 %v8544, %v8555
        %v8584 = vadd.f32 %v8545, %v8555
        %v8585 = vadd.f32 %v8546, %v8555
        %v8586 = vadd.f32 %v8547, %v8555
        %v8587 = vadd.f32 %v8548, %v8555
        %v8588 = vadd.f32 %v8549, %v8555
        %8589 = vst.msk [vmem:[%s274] sm:$0xff] %vm357, %v8557
        %8590 = vst.msk [vmem:[%s274 + $0x8] sm:$0xff] %vm357, %v8558
        %8591 = vst.msk [vmem:[%s274 + $0x20] sm:$0xff] %vm357, %v8559
        %8592 = vst.msk [vmem:[%s274 + $0x28] sm:$0xff] %vm357, %v8560
        %8593 = vst.msk [vmem:[%s274 + $0x40] sm:$0xff] %vm357, %v8561
        %8594 = vst.msk [vmem:[%s274 + $0x48] sm:$0xff] %vm357, %v8562
        %8595 = vst.msk [vmem:[%s274 + $0x60] sm:$0xff] %vm357, %v8563
        %8596 = vst.msk [vmem:[%s274 + $0x68] sm:$0xff] %vm357, %v8564
        %8597 = vst.msk [vmem:[%s274 + $0x80] sm:$0xff] %vm357, %v8565
        %8598 = vst.msk [vmem:[%s274 + $0x88] sm:$0xff] %vm357, %v8566
        %8599 = vst.msk [vmem:[%s274 + $0xa0] sm:$0xff] %vm357, %v8567
        %8600 = vst.msk [vmem:[%s274 + $0xa8] sm:$0xff] %vm357, %v8568
        %8601 = vst.msk [vmem:[%s274 + $0xc0] sm:$0xff] %vm357, %v8569
        %8602 = vst.msk [vmem:[%s274 + $0xc8] sm:$0xff] %vm357, %v8570
        %8603 = vst.msk [vmem:[%s274 + $0xe0] sm:$0xff] %vm357, %v8571
        %8604 = vst.msk [vmem:[%s274 + $0xe8] sm:$0xff] %vm357, %v8572
        %8605 = vst.msk [vmem:[%s274 + $0x100] sm:$0xff] %vm357, %v8573
        %8606 = vst.msk [vmem:[%s274 + $0x108] sm:$0xff] %vm357, %v8574
        %8607 = vst.msk [vmem:[%s274 + $0x120] sm:$0xff] %vm357, %v8575
        %8608 = vst.msk [vmem:[%s274 + $0x128] sm:$0xff] %vm357, %v8576
        %8609 = vst.msk [vmem:[%s274 + $0x140] sm:$0xff] %vm357, %v8577
        %8610 = vst.msk [vmem:[%s274 + $0x148] sm:$0xff] %vm357, %v8578
        %8611 = vst.msk [vmem:[%s274 + $0x160] sm:$0xff] %vm357, %v8579
        %8612 = vst.msk [vmem:[%s274 + $0x168] sm:$0xff] %vm357, %v8580
        %8613 = vst.msk [vmem:[%s274 + $0x180] sm:$0xff] %vm357, %v8581
        %8614 = vst.msk [vmem:[%s274 + $0x188] sm:$0xff] %vm357, %v8582
        %8615 = vst.msk [vmem:[%s274 + $0x1a0] sm:$0xff] %vm357, %v8583
        %8616 = vst.msk [vmem:[%s274 + $0x1a8] sm:$0xff] %vm357, %v8584
        %8617 = vst.msk [vmem:[%s274 + $0x1c0] sm:$0xff] %vm357, %v8585
        %8618 = vst.msk [vmem:[%s274 + $0x1c8] sm:$0xff] %vm357, %v8586
        %8619 = vst.msk [vmem:[%s274 + $0x1e0] sm:$0xff] %vm357, %v8587
        %8620 = vst.msk [vmem:[%s274 + $0x1e8] sm:$0xff] %vm357, %v8588
        %8653 = vrot.lane.b32.xlu0 %v8557, 64
        %v8654 = vpop.permute.xlu0 %8653
        %8655 = vrot.lane.b32.xlu0 %v8558, 64
        %v8656 = vpop.permute.xlu0 %8655
        %8657 = vrot.lane.b32.xlu0 %v8559, 64
        %v8658 = vpop.permute.xlu0 %8657
        %8659 = vrot.lane.b32.xlu0 %v8560, 64
        %v8660 = vpop.permute.xlu0 %8659
        %8661 = vrot.lane.b32.xlu0 %v8561, 64
        %v8662 = vpop.permute.xlu0 %8661
        %8663 = vrot.lane.b32.xlu0 %v8562, 64
        %v8664 = vpop.permute.xlu0 %8663
        %8665 = vrot.lane.b32.xlu0 %v8563, 64
        %v8666 = vpop.permute.xlu0 %8665
        %8667 = vrot.lane.b32.xlu0 %v8564, 64
        %v8668 = vpop.permute.xlu0 %8667
        %8669 = vrot.lane.b32.xlu0 %v8565, 64
        %v8670 = vpop.permute.xlu0 %8669
        %8671 = vrot.lane.b32.xlu0 %v8566, 64
        %v8672 = vpop.permute.xlu0 %8671
        %8673 = vrot.lane.b32.xlu0 %v8567, 64
        %v8674 = vpop.permute.xlu0 %8673
        %8675 = vrot.lane.b32.xlu0 %v8568, 64
        %v8676 = vpop.permute.xlu0 %8675
        %8677 = vrot.lane.b32.xlu0 %v8569, 64
        %v8678 = vpop.permute.xlu0 %8677
        %8679 = vrot.lane.b32.xlu0 %v8570, 64
        %v8680 = vpop.permute.xlu0 %8679
        %8681 = vrot.lane.b32.xlu0 %v8571, 64
        %v8682 = vpop.permute.xlu0 %8681
        %8683 = vrot.lane.b32.xlu0 %v8572, 64
        %v8684 = vpop.permute.xlu0 %8683
        %8685 = vrot.lane.b32.xlu0 %v8573, 64
        %v8686 = vpop.permute.xlu0 %8685
        %8687 = vrot.lane.b32.xlu0 %v8574, 64
        %v8688 = vpop.permute.xlu0 %8687
        %8689 = vrot.lane.b32.xlu0 %v8575, 64
        %v8690 = vpop.permute.xlu0 %8689
        %8691 = vrot.lane.b32.xlu0 %v8576, 64
        %v8692 = vpop.permute.xlu0 %8691
        %8693 = vrot.lane.b32.xlu0 %v8577, 64
        %v8694 = vpop.permute.xlu0 %8693
        %8695 = vrot.lane.b32.xlu0 %v8578, 64
        %v8696 = vpop.permute.xlu0 %8695
        %8697 = vrot.lane.b32.xlu0 %v8579, 64
        %v8698 = vpop.permute.xlu0 %8697
        %8699 = vrot.lane.b32.xlu0 %v8580, 64
        %v8700 = vpop.permute.xlu0 %8699
        %8701 = vrot.lane.b32.xlu0 %v8581, 64
        %v8702 = vpop.permute.xlu0 %8701
        %8703 = vrot.lane.b32.xlu0 %v8582, 64
        %v8704 = vpop.permute.xlu0 %8703
        %8705 = vrot.lane.b32.xlu0 %v8583, 64
        %v8706 = vpop.permute.xlu0 %8705
        %8707 = vrot.lane.b32.xlu0 %v8584, 64
        %v8708 = vpop.permute.xlu0 %8707
        %8709 = vrot.lane.b32.xlu0 %v8585, 64
        %v8710 = vpop.permute.xlu0 %8709
        %8711 = vrot.lane.b32.xlu0 %v8586, 64
        %v8712 = vpop.permute.xlu0 %8711
        %8713 = vrot.lane.b32.xlu0 %v8587, 64
        %v8714 = vpop.permute.xlu0 %8713
        %8715 = vrot.lane.b32.xlu0 %v8588, 64
        %v8716 = vpop.permute.xlu0 %8715
        %s8749 = scalar_lea.vmem %s274, 16
        %8750 = vst.msk [vmem:[%s8749] sm:$0xff] %vm357, %v8654
        %8751 = vst.msk [vmem:[%s8749 + $0x8] sm:$0xff] %vm357, %v8656
        %8752 = vst.msk [vmem:[%s8749 + $0x20] sm:$0xff] %vm357, %v8658
        %8753 = vst.msk [vmem:[%s8749 + $0x28] sm:$0xff] %vm357, %v8660
        %8754 = vst.msk [vmem:[%s8749 + $0x40] sm:$0xff] %vm357, %v8662
        %8755 = vst.msk [vmem:[%s8749 + $0x48] sm:$0xff] %vm357, %v8664
        %8756 = vst.msk [vmem:[%s8749 + $0x60] sm:$0xff] %vm357, %v8666
        %8757 = vst.msk [vmem:[%s8749 + $0x68] sm:$0xff] %vm357, %v8668
        %8758 = vst.msk [vmem:[%s8749 + $0x80] sm:$0xff] %vm357, %v8670
        %8759 = vst.msk [vmem:[%s8749 + $0x88] sm:$0xff] %vm357, %v8672
        %8760 = vst.msk [vmem:[%s8749 + $0xa0] sm:$0xff] %vm357, %v8674
        %8761 = vst.msk [vmem:[%s8749 + $0xa8] sm:$0xff] %vm357, %v8676
        %8762 = vst.msk [vmem:[%s8749 + $0xc0] sm:$0xff] %vm357, %v8678
        %8763 = vst.msk [vmem:[%s8749 + $0xc8] sm:$0xff] %vm357, %v8680
        %8764 = vst.msk [vmem:[%s8749 + $0xe0] sm:$0xff] %vm357, %v8682
        %8765 = vst.msk [vmem:[%s8749 + $0xe8] sm:$0xff] %vm357, %v8684
        %8766 = vst.msk [vmem:[%s8749 + $0x100] sm:$0xff] %vm357, %v8686
        %8767 = vst.msk [vmem:[%s8749 + $0x108] sm:$0xff] %vm357, %v8688
        %8768 = vst.msk [vmem:[%s8749 + $0x120] sm:$0xff] %vm357, %v8690
        %8769 = vst.msk [vmem:[%s8749 + $0x128] sm:$0xff] %vm357, %v8692
        %8770 = vst.msk [vmem:[%s8749 + $0x140] sm:$0xff] %vm357, %v8694
        %8771 = vst.msk [vmem:[%s8749 + $0x148] sm:$0xff] %vm357, %v8696
        %8772 = vst.msk [vmem:[%s8749 + $0x160] sm:$0xff] %vm357, %v8698
        %8773 = vst.msk [vmem:[%s8749 + $0x168] sm:$0xff] %vm357, %v8700
        %8774 = vst.msk [vmem:[%s8749 + $0x180] sm:$0xff] %vm357, %v8702
        %8775 = vst.msk [vmem:[%s8749 + $0x188] sm:$0xff] %vm357, %v8704
        %8776 = vst.msk [vmem:[%s8749 + $0x1a0] sm:$0xff] %vm357, %v8706
        %8777 = vst.msk [vmem:[%s8749 + $0x1a8] sm:$0xff] %vm357, %v8708
        %8778 = vst.msk [vmem:[%s8749 + $0x1c0] sm:$0xff] %vm357, %v8710
        %8779 = vst.msk [vmem:[%s8749 + $0x1c8] sm:$0xff] %vm357, %v8712
        %8780 = vst.msk [vmem:[%s8749 + $0x1e0] sm:$0xff] %vm357, %v8714
        %8781 = vst.msk [vmem:[%s8749 + $0x1e8] sm:$0xff] %vm357, %v8716
        %s8782 = smul.u32 16, %s20
        %p8783 = scmp.lt.s32.totalorder %s8782, 31
        %s8784 = scalar_select %p8783, %s8782, 31
        %s8785 = smul.addr %s8784, 4
        %s8786 = smul.addr %s8785, 8
        %s8787 = scalar_lea.vmem %s6, %s8786
        // Predicated region
        $region49: #{patch_expand2d.1} parent=43 // pred_check
          %p8788 = pneg %p169
        $region50: #{patch_expand2d.1} parent=43 // pred_check_branch
          %8790 = sbr.rel (%p8788) target = $region52
        $region51: #{patch_expand2d.1} parent=43 // pred_region
          %s8791 = smul.u32 16, %s20
        $region52: #{patch_expand2d.1} parent=43 // pred_fallthru
          _
      $region44: #{patch_expand2d.1} parent=5 // pred_fallthru
        _
      %p8792 = scmp.le.s32.totalorder 2, %s15
      // Predicated region
      $region53: #{patch_expand2d.1} parent=5 // pred_check
        %p8793 = pneg %p8792
      $region54: #{patch_expand2d.1} parent=5 // pred_check_branch
        %8795 = sbr.rel (%p8793) target = $region56
      $region55: #{patch_expand2d.1} parent=5 // pred_region
        %s8796 = ssub.s32 %s15, 2
        // Predicated region
        $region57: #{patch_expand2d.1} parent=55 // pred_check
          %p8797 = pneg %p175
        $region58: #{patch_expand2d.1} parent=55 // pred_check_branch
          %8799 = sbr.rel (%p8797) target = $region60
        $region59: #{patch_expand2d.1} parent=55 // pred_region
          %s8800 = smul.u32 16, %s21
          %p8801 = scmp.lt.s32.totalorder %s8800, 31
          %s8802 = scalar_select %p8801, %s8800, 31
          %s8803 = smul.addr %s8802, 4
          %s8804 = smul.addr %s8803, 8
          %s8805 = scalar_lea.vmem %s6, %s8804
        $region60: #{patch_expand2d.1} parent=55 // pred_fallthru
          _
      $region56: #{patch_expand2d.1} parent=5 // pred_fallthru
        _
    $region6: #{patch_expand2d.1} parent=1 // loop_footer
      %s19 = sadd.s32 1, %s15
    $region7: #{patch_expand2d.1} parent=1 // loop_footer_branch
      %14 = sbr.rel target = $region3
    $region8: #{patch_expand2d.1} parent=1 // loop_exit
      _
    %8806 = vsyncpa [#allocation3], 1
    %s8807 = scalar_lea.sflag [#allocation3], 1
    %8808 = vsyncpa %s8807, 1

</llo_original>
